<compile_context>
chip_gen: v7x
topology: tpu7x:2x2x1
jax: 0.10.0
libtpu: 0.0.40
codegen_flags: <defaults>
</compile_context>

<pallas_src>
import functools

import jax
import jax.numpy as jnp
from jax import lax
from jax.experimental import pallas as pl
from jax.experimental.pallas import tpu as pltpu

EPS = 1e-5


def _two_conv_bn_relu_kernel(x_ref, wb1_ref, g1_ref, bt1_ref,
                             wb2_ref, g2_ref, bt2_ref, out_ref, *, H, W):
    R = x_ref.shape[0]                 # N*H rows; lanes are (w, c) packed
    inv_p = 1.0 / (R * W)              # 1 / (N*H*W) pixels

    # Row-validity masks for the two shifted vertical taps.  Geometry-only,
    # computed once and reused by both convs (hoisted out of the tap loops).
    h = lax.broadcasted_iota(jnp.int32, (R, 1), 0) % H
    valid_up = h >= 1                  # source row h-1 is inside this image
    valid_dn = h <= H - 2              # source row h+1 is inside this image

    def conv3x3(src, wb_ref):
        # src: (R, W*Cin) lane-dense.  Vertical taps = sublane roll + row
        # mask (kills cross-image rows and realizes vertical 'same' padding);
        # horizontal taps + horizontal padding are pre-folded into the
        # block-tridiagonal weights, so the whole conv is 3 MXU matmuls.
        up = jnp.where(valid_up, pltpu.roll(src, shift=1, axis=0), 0.0)
        dn = jnp.where(valid_dn, pltpu.roll(src, shift=R - 1, axis=0), 0.0)
        acc = jnp.dot(up, wb_ref[0], preferred_element_type=jnp.float32)
        acc = acc + jnp.dot(src, wb_ref[1], preferred_element_type=jnp.float32)
        acc = acc + jnp.dot(dn, wb_ref[2], preferred_element_type=jnp.float32)
        return acc                     # (R, W*Cout)

    def bn_relu(acc, gamma, beta):
        # Train-mode BatchNorm2d (biased variance, eps=1e-5): one-pass stats
        # followed by a single FMA-style normalize pass fused with ReLU.
        C = gamma.shape[-1]
        s1 = jnp.sum(acc, axis=0, keepdims=True)             # (1, W*C)
        s2 = jnp.sum(acc * acc, axis=0, keepdims=True)       # (1, W*C)
        cs1 = s1[:, 0:C]
        cs2 = s2[:, 0:C]
        for w in range(1, W):          # exact f32 fold of the W lane groups
            cs1 = cs1 + s1[:, w * C:(w + 1) * C]
            cs2 = cs2 + s2[:, w * C:(w + 1) * C]
        mean = cs1 * inv_p                                    # (1, C)
        var = cs2 * inv_p - mean * mean
        scale = gamma * lax.rsqrt(var + EPS)
        shift = beta - mean * scale
        scale_t = jnp.concatenate([scale] * W, axis=-1)       # (1, W*C)
        shift_t = jnp.concatenate([shift] * W, axis=-1)
        return jnp.maximum(acc * scale_t + shift_t, 0.0)

    y = bn_relu(conv3x3(x_ref[...], wb1_ref), g1_ref[...], bt1_ref[...])
    out_ref[...] = bn_relu(conv3x3(y, wb2_ref), g2_ref[...], bt2_ref[...])


def _banded_weights(w_hwio, W):
    """Fold the horizontal taps + horizontal 'same' padding of a 3x3 kernel
    into three block-tridiagonal (W*Cin, W*Cout) matrices, one per vertical
    tap dy, matching the lane-dense (rows=(n,h), lanes=(w,c)) layout."""
    kh, kw, ci, co = w_hwio.shape
    w_in = jnp.arange(W)[:, None]
    w_out = jnp.arange(W)[None, :]
    d = w_in - w_out                                        # (W, W)
    sel = (jnp.abs(d) <= 1)[..., None, None]
    kx = jnp.clip(d + 1, 0, kw - 1)                         # horizontal tap id
    mats = []
    for dy in range(kh):
        blk = jnp.where(sel, w_hwio[dy][kx], 0.0)           # (W, W, ci, co)
        mats.append(jnp.transpose(blk, (0, 2, 1, 3)).reshape(W * ci, W * co))
    return jnp.stack(mats)                                  # (3, W*ci, W*co)


def two_conv_bn_relu(x_nchw, params):
    """Pallas implementation of two_ConvBnRule.forward. Input/output NCHW."""
    (w1, cb1, g1, bt1, w2, cb2, g2, bt2) = params
    # Conv biases intentionally unused: a per-channel constant is exactly
    # removed by the train-mode BN mean subtraction that follows each conv.
    del cb1, cb2
    N, Cin, H, W = x_nchw.shape
    Cout = w1.shape[-1]
    R = N * H

    # Lane-dense layout: rows = (n, h), lanes = (w, c).
    x_ld = (jnp.transpose(x_nchw, (0, 2, 3, 1))
            .reshape(R, W * Cin).astype(jnp.float32))
    wb1 = _banded_weights(w1.astype(jnp.float32), W)        # (3, W*Cin,  W*Cout)
    wb2 = _banded_weights(w2.astype(jnp.float32), W)        # (3, W*Cout, W*Cout)

    vmem = pl.BlockSpec(memory_space=pltpu.MemorySpace.VMEM)
    kernel = functools.partial(_two_conv_bn_relu_kernel, H=H, W=W)
    out = pl.pallas_call(
        kernel,
        out_shape=jax.ShapeDtypeStruct((R, W * Cout), jnp.float32),
        in_specs=[vmem] * 7,
        out_specs=vmem,
        compiler_params=pltpu.CompilerParams(
            vmem_limit_bytes=48 * 1024 * 1024),
    )(x_ld, wb1, g1.astype(jnp.float32), bt1.astype(jnp.float32),
      wb2, g2.astype(jnp.float32), bt2.astype(jnp.float32))

    return jnp.transpose(out.reshape(N, H, W, Cout), (0, 3, 1, 2))  # NCHW


# ---------------------------- pure-JAX reference ----------------------------
def _ref_forward(x_nchw, params):
    (w1, cb1, g1, bt1, w2, cb2, g2, bt2) = params
    x = jnp.transpose(x_nchw, (0, 2, 3, 1)).astype(jnp.float32)

    def conv_bn_relu(h, w, cb, g, bt):
        y = lax.conv_general_dilated(
            h, w, window_strides=(1, 1), padding="SAME",
            dimension_numbers=("NHWC", "HWIO", "NHWC")) + cb[0]
        m = jnp.mean(y, axis=(0, 1, 2))
        v = jnp.mean((y - m) ** 2, axis=(0, 1, 2))
        y = (y - m) * lax.rsqrt(v + EPS) * g[0] + bt[0]
        return jnp.maximum(y, 0.0)

    h = conv_bn_relu(x, w1, cb1, g1, bt1)
    h = conv_bn_relu(h, w2, cb2, g2, bt2)
    return jnp.transpose(h, (0, 3, 1, 2))


# --------------------------------- driver -----------------------------------
if __name__ == "__main__":
    key = jax.random.PRNGKey(0)
    N, Cin, H, W = 2, 4, 16, 16
    Cout = 64   # module default out_chan=64

    ks = jax.random.split(key, 9)
    x = jax.random.normal(ks[0], (N, Cin, H, W), jnp.float32)

    # deterministic parameter init (synthetic; shapes from the module __init__)
    w1 = 0.1 * jax.random.normal(ks[1], (3, 3, Cin, Cout), jnp.float32)   # HWIO
    cb1 = 0.05 * jax.random.normal(ks[2], (1, Cout), jnp.float32)
    g1 = 1.0 + 0.1 * jax.random.normal(ks[3], (1, Cout), jnp.float32)
    bt1 = 0.1 * jax.random.normal(ks[4], (1, Cout), jnp.float32)
    w2 = 0.1 * jax.random.normal(ks[5], (3, 3, Cout, Cout), jnp.float32)  # HWIO
    cb2 = 0.05 * jax.random.normal(ks[6], (1, Cout), jnp.float32)
    g2 = 1.0 + 0.1 * jax.random.normal(ks[7], (1, Cout), jnp.float32)
    bt2 = 0.1 * jax.random.normal(ks[8], (1, Cout), jnp.float32)

    params = (w1, cb1, g1, bt1, w2, cb2, g2, bt2)

    out = jax.block_until_ready(two_conv_bn_relu(x, params))
    ref = jax.block_until_ready(_ref_forward(x, params))

    assert out.shape == (N, Cout, H, W), out.shape
    assert jnp.allclose(out, ref, atol=1e-3, rtol=1e-3), \
        float(jnp.max(jnp.abs(out - ref)))
    print("KERNEL_OK")
</pallas_src>

<mosaic_0001>
module attributes {stable_mosaic.version = 11 : i64} {
  func.func @_two_conv_bn_relu_kernel(%arg0: memref<32x64xf32, #tpu.memory_space<vmem>>, %arg1: memref<3x64x1024xf32, #tpu.memory_space<vmem>>, %arg2: memref<1x64xf32, #tpu.memory_space<vmem>>, %arg3: memref<1x64xf32, #tpu.memory_space<vmem>>, %arg4: memref<3x1024x1024xf32, #tpu.memory_space<vmem>>, %arg5: memref<1x64xf32, #tpu.memory_space<vmem>>, %arg6: memref<1x64xf32, #tpu.memory_space<vmem>>, %arg7: memref<32x1024xf32, #tpu.memory_space<vmem>>) attributes {dimension_semantics = [], scalar_prefetch = 0 : i64, scratch_operands = 0 : i64, tpu.core_type = #tpu.core_type<tc>} {
    %0 = tpu.iota {dimensions = array<i32: 0>} : vector<32x1xi32>
    %c16_i32 = arith.constant 16 : i32
    %c0_i32 = arith.constant 0 : i32
    %1 = arith.cmpi eq, %c16_i32, %c0_i32 : i32
    %c1_i32 = arith.constant 1 : i32
    %2 = arith.select %1, %c1_i32, %c16_i32 : i32
    %3 = vector.broadcast %2 : i32 to vector<32x1xi32>
    %4 = arith.remsi %0, %3 : vector<32x1xi32>
    %c0_i32_0 = arith.constant 0 : i32
    %5 = vector.broadcast %c0_i32_0 : i32 to vector<32x1xi32>
    %6 = arith.cmpi ne, %4, %5 : vector<32x1xi32>
    %c0_i32_1 = arith.constant 0 : i32
    %7 = vector.broadcast %c0_i32_1 : i32 to vector<32x1xi32>
    %8 = arith.cmpi slt, %4, %7 : vector<32x1xi32>
    %c0_i32_2 = arith.constant 0 : i32
    %9 = arith.cmpi slt, %2, %c0_i32_2 : i32
    %10 = vector.broadcast %9 : i1 to vector<32x1xi1>
    %11 = vector.broadcast %10 : vector<32x1xi1> to vector<32x1xi1>
    %12 = arith.xori %8, %11 : vector<32x1xi1>
    %13 = arith.andi %12, %6 : vector<32x1xi1>
    %14 = vector.broadcast %2 : i32 to vector<32x1xi32>
    %15 = arith.addi %4, %14 : vector<32x1xi32>
    %16 = arith.select %13, %15, %4 : vector<32x1xi1>, vector<32x1xi32>
    %c1_i32_3 = arith.constant 1 : i32
    %17 = vector.broadcast %c1_i32_3 : i32 to vector<32x1xi32>
    %18 = arith.cmpi sge, %16, %17 : vector<32x1xi32>
    %c14_i32 = arith.constant 14 : i32
    %19 = vector.broadcast %c14_i32 : i32 to vector<32x1xi32>
    %20 = arith.cmpi sle, %16, %19 : vector<32x1xi32>
    %c0 = arith.constant 0 : index
    %c0_4 = arith.constant 0 : index
    %21 = vector.load %arg0[%c0, %c0_4] : memref<32x64xf32, #tpu.memory_space<vmem>>, vector<32x64xf32>
    %c1_i32_5 = arith.constant 1 : i32
    %22 = tpu.dynamic_rotate %21 by %c1_i32_5 dim 0 : vector<32x64xf32>, i32 -> vector<32x64xf32>
    %cst = arith.constant 0.000000e+00 : f32
    %23 = vector.shape_cast %18 : vector<32x1xi1> to vector<32x1xi1>
    %24 = vector.broadcast %23 : vector<32x1xi1> to vector<32x64xi1>
    %25 = vector.broadcast %cst : f32 to vector<32x64xf32>
    %26 = arith.select %24, %22, %25 : vector<32x64xi1>, vector<32x64xf32>
    %c31_i32 = arith.constant 31 : i32
    %27 = tpu.dynamic_rotate %21 by %c31_i32 dim 0 : vector<32x64xf32>, i32 -> vector<32x64xf32>
    %cst_6 = arith.constant 0.000000e+00 : f32
    %28 = vector.shape_cast %20 : vector<32x1xi1> to vector<32x1xi1>
    %29 = vector.broadcast %28 : vector<32x1xi1> to vector<32x64xi1>
    %30 = vector.broadcast %cst_6 : f32 to vector<32x64xf32>
    %31 = arith.select %29, %27, %30 : vector<32x64xi1>, vector<32x64xf32>
    %c0_7 = arith.constant 0 : index
    %c0_8 = arith.constant 0 : index
    %c0_9 = arith.constant 0 : index
    %32 = vector.load %arg1[%c0_7, %c0_8, %c0_9] : memref<3x64x1024xf32, #tpu.memory_space<vmem>>, vector<1x64x1024xf32>
    %33 = vector.shape_cast %32 : vector<1x64x1024xf32> to vector<64x1024xf32>
    %cst_10 = arith.constant dense<0.000000e+00> : vector<32x1024xf32>
    %34 = tpu.matmul %26, %33, %cst_10 {dimension_numbers = #tpu.dot_dimension_numbers<[1], [0], [0], [1], [0, 0, 1, 1], [], []>} : vector<32x64xf32>, vector<64x1024xf32>, vector<32x1024xf32> -> vector<32x1024xf32>
    %c1 = arith.constant 1 : index
    %c0_11 = arith.constant 0 : index
    %c0_12 = arith.constant 0 : index
    %35 = vector.load %arg1[%c1, %c0_11, %c0_12] : memref<3x64x1024xf32, #tpu.memory_space<vmem>>, vector<1x64x1024xf32>
    %36 = vector.shape_cast %35 : vector<1x64x1024xf32> to vector<64x1024xf32>
    %cst_13 = arith.constant dense<0.000000e+00> : vector<32x1024xf32>
    %37 = tpu.matmul %21, %36, %cst_13 {dimension_numbers = #tpu.dot_dimension_numbers<[1], [0], [0], [1], [0, 0, 1, 1], [], []>} : vector<32x64xf32>, vector<64x1024xf32>, vector<32x1024xf32> -> vector<32x1024xf32>
    %38 = arith.addf %34, %37 : vector<32x1024xf32>
    %c2 = arith.constant 2 : index
    %c0_14 = arith.constant 0 : index
    %c0_15 = arith.constant 0 : index
    %39 = vector.load %arg1[%c2, %c0_14, %c0_15] : memref<3x64x1024xf32, #tpu.memory_space<vmem>>, vector<1x64x1024xf32>
    %40 = vector.shape_cast %39 : vector<1x64x1024xf32> to vector<64x1024xf32>
    %cst_16 = arith.constant dense<0.000000e+00> : vector<32x1024xf32>
    %41 = tpu.matmul %31, %40, %cst_16 {dimension_numbers = #tpu.dot_dimension_numbers<[1], [0], [0], [1], [0, 0, 1, 1], [], []>} : vector<32x64xf32>, vector<64x1024xf32>, vector<32x1024xf32> -> vector<32x1024xf32>
    %42 = arith.addf %38, %41 : vector<32x1024xf32>
    %c0_17 = arith.constant 0 : index
    %c0_18 = arith.constant 0 : index
    %43 = vector.load %arg2[%c0_17, %c0_18] : memref<1x64xf32, #tpu.memory_space<vmem>>, vector<1x64xf32>
    %c0_19 = arith.constant 0 : index
    %c0_20 = arith.constant 0 : index
    %44 = vector.load %arg3[%c0_19, %c0_20] : memref<1x64xf32, #tpu.memory_space<vmem>>, vector<1x64xf32>
    %cst_21 = arith.constant dense<0.000000e+00> : vector<1024xf32>
    %45 = vector.multi_reduction <add>, %42, %cst_21 [0] : vector<32x1024xf32> to vector<1024xf32>
    %46 = vector.shape_cast %45 : vector<1024xf32> to vector<1x1024xf32>
    %47 = arith.mulf %42, %42 : vector<32x1024xf32>
    %cst_22 = arith.constant dense<0.000000e+00> : vector<1024xf32>
    %48 = vector.multi_reduction <add>, %47, %cst_22 [0] : vector<32x1024xf32> to vector<1024xf32>
    %49 = vector.shape_cast %48 : vector<1024xf32> to vector<1x1024xf32>
    %50 = vector.extract_strided_slice %46 {offsets = [0, 0], sizes = [1, 64], strides = [1, 1]} : vector<1x1024xf32> to vector<1x64xf32>
    %51 = vector.extract_strided_slice %49 {offsets = [0, 0], sizes = [1, 64], strides = [1, 1]} : vector<1x1024xf32> to vector<1x64xf32>
    %52 = vector.extract_strided_slice %46 {offsets = [0, 64], sizes = [1, 64], strides = [1, 1]} : vector<1x1024xf32> to vector<1x64xf32>
    %53 = arith.addf %50, %52 : vector<1x64xf32>
    %54 = vector.extract_strided_slice %49 {offsets = [0, 64], sizes = [1, 64], strides = [1, 1]} : vector<1x1024xf32> to vector<1x64xf32>
    %55 = arith.addf %51, %54 : vector<1x64xf32>
    %56 = vector.extract_strided_slice %46 {offsets = [0, 128], sizes = [1, 64], strides = [1, 1]} : vector<1x1024xf32> to vector<1x64xf32>
    %57 = arith.addf %53, %56 : vector<1x64xf32>
    %58 = vector.extract_strided_slice %49 {offsets = [0, 128], sizes = [1, 64], strides = [1, 1]} : vector<1x1024xf32> to vector<1x64xf32>
    %59 = arith.addf %55, %58 : vector<1x64xf32>
    %60 = vector.extract_strided_slice %46 {offsets = [0, 192], sizes = [1, 64], strides = [1, 1]} : vector<1x1024xf32> to vector<1x64xf32>
    %61 = arith.addf %57, %60 : vector<1x64xf32>
    %62 = vector.extract_strided_slice %49 {offsets = [0, 192], sizes = [1, 64], strides = [1, 1]} : vector<1x1024xf32> to vector<1x64xf32>
    %63 = arith.addf %59, %62 : vector<1x64xf32>
    %64 = vector.extract_strided_slice %46 {offsets = [0, 256], sizes = [1, 64], strides = [1, 1]} : vector<1x1024xf32> to vector<1x64xf32>
    %65 = arith.addf %61, %64 : vector<1x64xf32>
    %66 = vector.extract_strided_slice %49 {offsets = [0, 256], sizes = [1, 64], strides = [1, 1]} : vector<1x1024xf32> to vector<1x64xf32>
    %67 = arith.addf %63, %66 : vector<1x64xf32>
    %68 = vector.extract_strided_slice %46 {offsets = [0, 320], sizes = [1, 64], strides = [1, 1]} : vector<1x1024xf32> to vector<1x64xf32>
    %69 = arith.addf %65, %68 : vector<1x64xf32>
    %70 = vector.extract_strided_slice %49 {offsets = [0, 320], sizes = [1, 64], strides = [1, 1]} : vector<1x1024xf32> to vector<1x64xf32>
    %71 = arith.addf %67, %70 : vector<1x64xf32>
    %72 = vector.extract_strided_slice %46 {offsets = [0, 384], sizes = [1, 64], strides = [1, 1]} : vector<1x1024xf32> to vector<1x64xf32>
    %73 = arith.addf %69, %72 : vector<1x64xf32>
    %74 = vector.extract_strided_slice %49 {offsets = [0, 384], sizes = [1, 64], strides = [1, 1]} : vector<1x1024xf32> to vector<1x64xf32>
    %75 = arith.addf %71, %74 : vector<1x64xf32>
    %76 = vector.extract_strided_slice %46 {offsets = [0, 448], sizes = [1, 64], strides = [1, 1]} : vector<1x1024xf32> to vector<1x64xf32>
    %77 = arith.addf %73, %76 : vector<1x64xf32>
    %78 = vector.extract_strided_slice %49 {offsets = [0, 448], sizes = [1, 64], strides = [1, 1]} : vector<1x1024xf32> to vector<1x64xf32>
    %79 = arith.addf %75, %78 : vector<1x64xf32>
    %80 = vector.extract_strided_slice %46 {offsets = [0, 512], sizes = [1, 64], strides = [1, 1]} : vector<1x1024xf32> to vector<1x64xf32>
    %81 = arith.addf %77, %80 : vector<1x64xf32>
    %82 = vector.extract_strided_slice %49 {offsets = [0, 512], sizes = [1, 64], strides = [1, 1]} : vector<1x1024xf32> to vector<1x64xf32>
    %83 = arith.addf %79, %82 : vector<1x64xf32>
    %84 = vector.extract_strided_slice %46 {offsets = [0, 576], sizes = [1, 64], strides = [1, 1]} : vector<1x1024xf32> to vector<1x64xf32>
    %85 = arith.addf %81, %84 : vector<1x64xf32>
    %86 = vector.extract_strided_slice %49 {offsets = [0, 576], sizes = [1, 64], strides = [1, 1]} : vector<1x1024xf32> to vector<1x64xf32>
    %87 = arith.addf %83, %86 : vector<1x64xf32>
    %88 = vector.extract_strided_slice %46 {offsets = [0, 640], sizes = [1, 64], strides = [1, 1]} : vector<1x1024xf32> to vector<1x64xf32>
    %89 = arith.addf %85, %88 : vector<1x64xf32>
    %90 = vector.extract_strided_slice %49 {offsets = [0, 640], sizes = [1, 64], strides = [1, 1]} : vector<1x1024xf32> to vector<1x64xf32>
    %91 = arith.addf %87, %90 : vector<1x64xf32>
    %92 = vector.extract_strided_slice %46 {offsets = [0, 704], sizes = [1, 64], strides = [1, 1]} : vector<1x1024xf32> to vector<1x64xf32>
    %93 = arith.addf %89, %92 : vector<1x64xf32>
    %94 = vector.extract_strided_slice %49 {offsets = [0, 704], sizes = [1, 64], strides = [1, 1]} : vector<1x1024xf32> to vector<1x64xf32>
    %95 = arith.addf %91, %94 : vector<1x64xf32>
    %96 = vector.extract_strided_slice %46 {offsets = [0, 768], sizes = [1, 64], strides = [1, 1]} : vector<1x1024xf32> to vector<1x64xf32>
    %97 = arith.addf %93, %96 : vector<1x64xf32>
    %98 = vector.extract_strided_slice %49 {offsets = [0, 768], sizes = [1, 64], strides = [1, 1]} : vector<1x1024xf32> to vector<1x64xf32>
    %99 = arith.addf %95, %98 : vector<1x64xf32>
    %100 = vector.extract_strided_slice %46 {offsets = [0, 832], sizes = [1, 64], strides = [1, 1]} : vector<1x1024xf32> to vector<1x64xf32>
    %101 = arith.addf %97, %100 : vector<1x64xf32>
    %102 = vector.extract_strided_slice %49 {offsets = [0, 832], sizes = [1, 64], strides = [1, 1]} : vector<1x1024xf32> to vector<1x64xf32>
    %103 = arith.addf %99, %102 : vector<1x64xf32>
    %104 = vector.extract_strided_slice %46 {offsets = [0, 896], sizes = [1, 64], strides = [1, 1]} : vector<1x1024xf32> to vector<1x64xf32>
    %105 = arith.addf %101, %104 : vector<1x64xf32>
    %106 = vector.extract_strided_slice %49 {offsets = [0, 896], sizes = [1, 64], strides = [1, 1]} : vector<1x1024xf32> to vector<1x64xf32>
    %107 = arith.addf %103, %106 : vector<1x64xf32>
    %108 = vector.extract_strided_slice %46 {offsets = [0, 960], sizes = [1, 64], strides = [1, 1]} : vector<1x1024xf32> to vector<1x64xf32>
    %109 = arith.addf %105, %108 : vector<1x64xf32>
    %110 = vector.extract_strided_slice %49 {offsets = [0, 960], sizes = [1, 64], strides = [1, 1]} : vector<1x1024xf32> to vector<1x64xf32>
    %111 = arith.addf %107, %110 : vector<1x64xf32>
    %cst_23 = arith.constant 0.001953125 : f32
    %112 = vector.broadcast %cst_23 : f32 to vector<1x64xf32>
    %113 = arith.mulf %109, %112 : vector<1x64xf32>
    %cst_24 = arith.constant 0.001953125 : f32
    %114 = vector.broadcast %cst_24 : f32 to vector<1x64xf32>
    %115 = arith.mulf %111, %114 : vector<1x64xf32>
    %116 = arith.mulf %113, %113 : vector<1x64xf32>
    %117 = arith.subf %115, %116 : vector<1x64xf32>
    %cst_25 = arith.constant 9.99999974E-6 : f32
    %118 = vector.broadcast %cst_25 : f32 to vector<1x64xf32>
    %119 = arith.addf %117, %118 : vector<1x64xf32>
    %120 = math.rsqrt %119 : vector<1x64xf32>
    %121 = arith.mulf %43, %120 : vector<1x64xf32>
    %122 = arith.mulf %113, %121 : vector<1x64xf32>
    %123 = arith.subf %44, %122 : vector<1x64xf32>
    %124 = tpu.concatenate %121, %121, %121, %121, %121, %121, %121, %121, %121, %121, %121, %121, %121, %121, %121, %121 in 1 : vector<1x64xf32>, vector<1x64xf32>, vector<1x64xf32>, vector<1x64xf32>, vector<1x64xf32>, vector<1x64xf32>, vector<1x64xf32>, vector<1x64xf32>, vector<1x64xf32>, vector<1x64xf32>, vector<1x64xf32>, vector<1x64xf32>, vector<1x64xf32>, vector<1x64xf32>, vector<1x64xf32>, vector<1x64xf32> -> vector<1x1024xf32>
    %125 = tpu.concatenate %123, %123, %123, %123, %123, %123, %123, %123, %123, %123, %123, %123, %123, %123, %123, %123 in 1 : vector<1x64xf32>, vector<1x64xf32>, vector<1x64xf32>, vector<1x64xf32>, vector<1x64xf32>, vector<1x64xf32>, vector<1x64xf32>, vector<1x64xf32>, vector<1x64xf32>, vector<1x64xf32>, vector<1x64xf32>, vector<1x64xf32>, vector<1x64xf32>, vector<1x64xf32>, vector<1x64xf32>, vector<1x64xf32> -> vector<1x1024xf32>
    %126 = vector.broadcast %124 : vector<1x1024xf32> to vector<32x1024xf32>
    %127 = arith.mulf %42, %126 : vector<32x1024xf32>
    %128 = vector.broadcast %125 : vector<1x1024xf32> to vector<32x1024xf32>
    %129 = arith.addf %127, %128 : vector<32x1024xf32>
    %cst_26 = arith.constant 0.000000e+00 : f32
    %130 = vector.broadcast %cst_26 : f32 to vector<32x1024xf32>
    %131 = arith.maximumf %129, %130 : vector<32x1024xf32>
    %c1_i32_27 = arith.constant 1 : i32
    %132 = tpu.dynamic_rotate %131 by %c1_i32_27 dim 0 : vector<32x1024xf32>, i32 -> vector<32x1024xf32>
    %cst_28 = arith.constant 0.000000e+00 : f32
    %133 = vector.shape_cast %18 : vector<32x1xi1> to vector<32x1xi1>
    %134 = vector.broadcast %133 : vector<32x1xi1> to vector<32x1024xi1>
    %135 = vector.broadcast %cst_28 : f32 to vector<32x1024xf32>
    %136 = arith.select %134, %132, %135 : vector<32x1024xi1>, vector<32x1024xf32>
    %c31_i32_29 = arith.constant 31 : i32
    %137 = tpu.dynamic_rotate %131 by %c31_i32_29 dim 0 : vector<32x1024xf32>, i32 -> vector<32x1024xf32>
    %cst_30 = arith.constant 0.000000e+00 : f32
    %138 = vector.shape_cast %20 : vector<32x1xi1> to vector<32x1xi1>
    %139 = vector.broadcast %138 : vector<32x1xi1> to vector<32x1024xi1>
    %140 = vector.broadcast %cst_30 : f32 to vector<32x1024xf32>
    %141 = arith.select %139, %137, %140 : vector<32x1024xi1>, vector<32x1024xf32>
    %c0_31 = arith.constant 0 : index
    %c0_32 = arith.constant 0 : index
    %c0_33 = arith.constant 0 : index
    %142 = vector.load %arg4[%c0_31, %c0_32, %c0_33] : memref<3x1024x1024xf32, #tpu.memory_space<vmem>>, vector<1x1024x1024xf32>
    %143 = vector.shape_cast %142 : vector<1x1024x1024xf32> to vector<1024x1024xf32>
    %cst_34 = arith.constant dense<0.000000e+00> : vector<32x1024xf32>
    %144 = tpu.matmul %136, %143, %cst_34 {dimension_numbers = #tpu.dot_dimension_numbers<[1], [0], [0], [1], [0, 0, 1, 1], [], []>} : vector<32x1024xf32>, vector<1024x1024xf32>, vector<32x1024xf32> -> vector<32x1024xf32>
    %c1_35 = arith.constant 1 : index
    %c0_36 = arith.constant 0 : index
    %c0_37 = arith.constant 0 : index
    %145 = vector.load %arg4[%c1_35, %c0_36, %c0_37] : memref<3x1024x1024xf32, #tpu.memory_space<vmem>>, vector<1x1024x1024xf32>
    %146 = vector.shape_cast %145 : vector<1x1024x1024xf32> to vector<1024x1024xf32>
    %cst_38 = arith.constant dense<0.000000e+00> : vector<32x1024xf32>
    %147 = tpu.matmul %131, %146, %cst_38 {dimension_numbers = #tpu.dot_dimension_numbers<[1], [0], [0], [1], [0, 0, 1, 1], [], []>} : vector<32x1024xf32>, vector<1024x1024xf32>, vector<32x1024xf32> -> vector<32x1024xf32>
    %148 = arith.addf %144, %147 : vector<32x1024xf32>
    %c2_39 = arith.constant 2 : index
    %c0_40 = arith.constant 0 : index
    %c0_41 = arith.constant 0 : index
    %149 = vector.load %arg4[%c2_39, %c0_40, %c0_41] : memref<3x1024x1024xf32, #tpu.memory_space<vmem>>, vector<1x1024x1024xf32>
    %150 = vector.shape_cast %149 : vector<1x1024x1024xf32> to vector<1024x1024xf32>
    %cst_42 = arith.constant dense<0.000000e+00> : vector<32x1024xf32>
    %151 = tpu.matmul %141, %150, %cst_42 {dimension_numbers = #tpu.dot_dimension_numbers<[1], [0], [0], [1], [0, 0, 1, 1], [], []>} : vector<32x1024xf32>, vector<1024x1024xf32>, vector<32x1024xf32> -> vector<32x1024xf32>
    %152 = arith.addf %148, %151 : vector<32x1024xf32>
    %c0_43 = arith.constant 0 : index
    %c0_44 = arith.constant 0 : index
    %153 = vector.load %arg5[%c0_43, %c0_44] : memref<1x64xf32, #tpu.memory_space<vmem>>, vector<1x64xf32>
    %c0_45 = arith.constant 0 : index
    %c0_46 = arith.constant 0 : index
    %154 = vector.load %arg6[%c0_45, %c0_46] : memref<1x64xf32, #tpu.memory_space<vmem>>, vector<1x64xf32>
    %cst_47 = arith.constant dense<0.000000e+00> : vector<1024xf32>
    %155 = vector.multi_reduction <add>, %152, %cst_47 [0] : vector<32x1024xf32> to vector<1024xf32>
    %156 = vector.shape_cast %155 : vector<1024xf32> to vector<1x1024xf32>
    %157 = arith.mulf %152, %152 : vector<32x1024xf32>
    %cst_48 = arith.constant dense<0.000000e+00> : vector<1024xf32>
    %158 = vector.multi_reduction <add>, %157, %cst_48 [0] : vector<32x1024xf32> to vector<1024xf32>
    %159 = vector.shape_cast %158 : vector<1024xf32> to vector<1x1024xf32>
    %160 = vector.extract_strided_slice %156 {offsets = [0, 0], sizes = [1, 64], strides = [1, 1]} : vector<1x1024xf32> to vector<1x64xf32>
    %161 = vector.extract_strided_slice %159 {offsets = [0, 0], sizes = [1, 64], strides = [1, 1]} : vector<1x1024xf32> to vector<1x64xf32>
    %162 = vector.extract_strided_slice %156 {offsets = [0, 64], sizes = [1, 64], strides = [1, 1]} : vector<1x1024xf32> to vector<1x64xf32>
    %163 = arith.addf %160, %162 : vector<1x64xf32>
    %164 = vector.extract_strided_slice %159 {offsets = [0, 64], sizes = [1, 64], strides = [1, 1]} : vector<1x1024xf32> to vector<1x64xf32>
    %165 = arith.addf %161, %164 : vector<1x64xf32>
    %166 = vector.extract_strided_slice %156 {offsets = [0, 128], sizes = [1, 64], strides = [1, 1]} : vector<1x1024xf32> to vector<1x64xf32>
    %167 = arith.addf %163, %166 : vector<1x64xf32>
    %168 = vector.extract_strided_slice %159 {offsets = [0, 128], sizes = [1, 64], strides = [1, 1]} : vector<1x1024xf32> to vector<1x64xf32>
    %169 = arith.addf %165, %168 : vector<1x64xf32>
    %170 = vector.extract_strided_slice %156 {offsets = [0, 192], sizes = [1, 64], strides = [1, 1]} : vector<1x1024xf32> to vector<1x64xf32>
    %171 = arith.addf %167, %170 : vector<1x64xf32>
    %172 = vector.extract_strided_slice %159 {offsets = [0, 192], sizes = [1, 64], strides = [1, 1]} : vector<1x1024xf32> to vector<1x64xf32>
    %173 = arith.addf %169, %172 : vector<1x64xf32>
    %174 = vector.extract_strided_slice %156 {offsets = [0, 256], sizes = [1, 64], strides = [1, 1]} : vector<1x1024xf32> to vector<1x64xf32>
    %175 = arith.addf %171, %174 : vector<1x64xf32>
    %176 = vector.extract_strided_slice %159 {offsets = [0, 256], sizes = [1, 64], strides = [1, 1]} : vector<1x1024xf32> to vector<1x64xf32>
    %177 = arith.addf %173, %176 : vector<1x64xf32>
    %178 = vector.extract_strided_slice %156 {offsets = [0, 320], sizes = [1, 64], strides = [1, 1]} : vector<1x1024xf32> to vector<1x64xf32>
    %179 = arith.addf %175, %178 : vector<1x64xf32>
    %180 = vector.extract_strided_slice %159 {offsets = [0, 320], sizes = [1, 64], strides = [1, 1]} : vector<1x1024xf32> to vector<1x64xf32>
    %181 = arith.addf %177, %180 : vector<1x64xf32>
    %182 = vector.extract_strided_slice %156 {offsets = [0, 384], sizes = [1, 64], strides = [1, 1]} : vector<1x1024xf32> to vector<1x64xf32>
    %183 = arith.addf %179, %182 : vector<1x64xf32>
    %184 = vector.extract_strided_slice %159 {offsets = [0, 384], sizes = [1, 64], strides = [1, 1]} : vector<1x1024xf32> to vector<1x64xf32>
    %185 = arith.addf %181, %184 : vector<1x64xf32>
    %186 = vector.extract_strided_slice %156 {offsets = [0, 448], sizes = [1, 64], strides = [1, 1]} : vector<1x1024xf32> to vector<1x64xf32>
    %187 = arith.addf %183, %186 : vector<1x64xf32>
    %188 = vector.extract_strided_slice %159 {offsets = [0, 448], sizes = [1, 64], strides = [1, 1]} : vector<1x1024xf32> to vector<1x64xf32>
    %189 = arith.addf %185, %188 : vector<1x64xf32>
    %190 = vector.extract_strided_slice %156 {offsets = [0, 512], sizes = [1, 64], strides = [1, 1]} : vector<1x1024xf32> to vector<1x64xf32>
    %191 = arith.addf %187, %190 : vector<1x64xf32>
    %192 = vector.extract_strided_slice %159 {offsets = [0, 512], sizes = [1, 64], strides = [1, 1]} : vector<1x1024xf32> to vector<1x64xf32>
    %193 = arith.addf %189, %192 : vector<1x64xf32>
    %194 = vector.extract_strided_slice %156 {offsets = [0, 576], sizes = [1, 64], strides = [1, 1]} : vector<1x1024xf32> to vector<1x64xf32>
    %195 = arith.addf %191, %194 : vector<1x64xf32>
    %196 = vector.extract_strided_slice %159 {offsets = [0, 576], sizes = [1, 64], strides = [1, 1]} : vector<1x1024xf32> to vector<1x64xf32>
    %197 = arith.addf %193, %196 : vector<1x64xf32>
    %198 = vector.extract_strided_slice %156 {offsets = [0, 640], sizes = [1, 64], strides = [1, 1]} : vector<1x1024xf32> to vector<1x64xf32>
    %199 = arith.addf %195, %198 : vector<1x64xf32>
    %200 = vector.extract_strided_slice %159 {offsets = [0, 640], sizes = [1, 64], strides = [1, 1]} : vector<1x1024xf32> to vector<1x64xf32>
    %201 = arith.addf %197, %200 : vector<1x64xf32>
    %202 = vector.extract_strided_slice %156 {offsets = [0, 704], sizes = [1, 64], strides = [1, 1]} : vector<1x1024xf32> to vector<1x64xf32>
    %203 = arith.addf %199, %202 : vector<1x64xf32>
    %204 = vector.extract_strided_slice %159 {offsets = [0, 704], sizes = [1, 64], strides = [1, 1]} : vector<1x1024xf32> to vector<1x64xf32>
    %205 = arith.addf %201, %204 : vector<1x64xf32>
    %206 = vector.extract_strided_slice %156 {offsets = [0, 768], sizes = [1, 64], strides = [1, 1]} : vector<1x1024xf32> to vector<1x64xf32>
    %207 = arith.addf %203, %206 : vector<1x64xf32>
    %208 = vector.extract_strided_slice %159 {offsets = [0, 768], sizes = [1, 64], strides = [1, 1]} : vector<1x1024xf32> to vector<1x64xf32>
    %209 = arith.addf %205, %208 : vector<1x64xf32>
    %210 = vector.extract_strided_slice %156 {offsets = [0, 832], sizes = [1, 64], strides = [1, 1]} : vector<1x1024xf32> to vector<1x64xf32>
    %211 = arith.addf %207, %210 : vector<1x64xf32>
    %212 = vector.extract_strided_slice %159 {offsets = [0, 832], sizes = [1, 64], strides = [1, 1]} : vector<1x1024xf32> to vector<1x64xf32>
    %213 = arith.addf %209, %212 : vector<1x64xf32>
    %214 = vector.extract_strided_slice %156 {offsets = [0, 896], sizes = [1, 64], strides = [1, 1]} : vector<1x1024xf32> to vector<1x64xf32>
    %215 = arith.addf %211, %214 : vector<1x64xf32>
    %216 = vector.extract_strided_slice %159 {offsets = [0, 896], sizes = [1, 64], strides = [1, 1]} : vector<1x1024xf32> to vector<1x64xf32>
    %217 = arith.addf %213, %216 : vector<1x64xf32>
    %218 = vector.extract_strided_slice %156 {offsets = [0, 960], sizes = [1, 64], strides = [1, 1]} : vector<1x1024xf32> to vector<1x64xf32>
    %219 = arith.addf %215, %218 : vector<1x64xf32>
    %220 = vector.extract_strided_slice %159 {offsets = [0, 960], sizes = [1, 64], strides = [1, 1]} : vector<1x1024xf32> to vector<1x64xf32>
    %221 = arith.addf %217, %220 : vector<1x64xf32>
    %cst_49 = arith.constant 0.001953125 : f32
    %222 = vector.broadcast %cst_49 : f32 to vector<1x64xf32>
    %223 = arith.mulf %219, %222 : vector<1x64xf32>
    %cst_50 = arith.constant 0.001953125 : f32
    %224 = vector.broadcast %cst_50 : f32 to vector<1x64xf32>
    %225 = arith.mulf %221, %224 : vector<1x64xf32>
    %226 = arith.mulf %223, %223 : vector<1x64xf32>
    %227 = arith.subf %225, %226 : vector<1x64xf32>
    %cst_51 = arith.constant 9.99999974E-6 : f32
    %228 = vector.broadcast %cst_51 : f32 to vector<1x64xf32>
    %229 = arith.addf %227, %228 : vector<1x64xf32>
    %230 = math.rsqrt %229 : vector<1x64xf32>
    %231 = arith.mulf %153, %230 : vector<1x64xf32>
    %232 = arith.mulf %223, %231 : vector<1x64xf32>
    %233 = arith.subf %154, %232 : vector<1x64xf32>
    %234 = tpu.concatenate %231, %231, %231, %231, %231, %231, %231, %231, %231, %231, %231, %231, %231, %231, %231, %231 in 1 : vector<1x64xf32>, vector<1x64xf32>, vector<1x64xf32>, vector<1x64xf32>, vector<1x64xf32>, vector<1x64xf32>, vector<1x64xf32>, vector<1x64xf32>, vector<1x64xf32>, vector<1x64xf32>, vector<1x64xf32>, vector<1x64xf32>, vector<1x64xf32>, vector<1x64xf32>, vector<1x64xf32>, vector<1x64xf32> -> vector<1x1024xf32>
    %235 = tpu.concatenate %233, %233, %233, %233, %233, %233, %233, %233, %233, %233, %233, %233, %233, %233, %233, %233 in 1 : vector<1x64xf32>, vector<1x64xf32>, vector<1x64xf32>, vector<1x64xf32>, vector<1x64xf32>, vector<1x64xf32>, vector<1x64xf32>, vector<1x64xf32>, vector<1x64xf32>, vector<1x64xf32>, vector<1x64xf32>, vector<1x64xf32>, vector<1x64xf32>, vector<1x64xf32>, vector<1x64xf32>, vector<1x64xf32> -> vector<1x1024xf32>
    %236 = vector.broadcast %234 : vector<1x1024xf32> to vector<32x1024xf32>
    %237 = arith.mulf %152, %236 : vector<32x1024xf32>
    %238 = vector.broadcast %235 : vector<1x1024xf32> to vector<32x1024xf32>
    %239 = arith.addf %237, %238 : vector<32x1024xf32>
    %cst_52 = arith.constant 0.000000e+00 : f32
    %240 = vector.broadcast %cst_52 : f32 to vector<32x1024xf32>
    %241 = arith.maximumf %239, %240 : vector<32x1024xf32>
    %c0_53 = arith.constant 0 : index
    %c0_54 = arith.constant 0 : index
    %242 = vector.load %arg7[%c0_53, %c0_54] : memref<32x1024xf32, #tpu.memory_space<vmem>>, vector<32x1024xf32>
    tpu.vector_store %arg7[%c0_53, %c0_54], %241 {strides = array<i32>} : memref<32x1024xf32, #tpu.memory_space<vmem>>, vector<32x1024xf32>,
    return
  }
}

</mosaic_0001>

<llo_original>
// kernel: tpu_custom_call.1
$region0: #{tpu_custom_call.1}
  #allocation0 [shape = 'u32[]', space=smem, size = 0x4, offset = 0x4, fixed_abs, tag = 'smem constant byte address 0x4 - core index']
  #allocation1 [shape = 'u32[144,128]{1,0:T(1,128)}', space=vmem, size = 0x12000, scoped, tag = 'internal scratch']
  %s0 = inlined_call_operand.hbm [shape: f32[32,64], index: 0, kind: input, shape index: {}]
  %s1 = inlined_call_operand.hbm [shape: f32[3,64,1024], index: 1, kind: input, shape index: {}]
  %s2 = inlined_call_operand.hbm [shape: f32[1,64], index: 2, kind: input, shape index: {}]
  %s3 = inlined_call_operand.hbm [shape: f32[1,64], index: 3, kind: input, shape index: {}]
  %s4 = inlined_call_operand.hbm [shape: f32[3,1024,1024], index: 4, kind: input, shape index: {}]
  %s5 = inlined_call_operand.hbm [shape: f32[1,64], index: 5, kind: input, shape index: {}]
  %s6 = inlined_call_operand.hbm [shape: f32[1,64], index: 6, kind: input, shape index: {}]
  %s7 = inlined_call_operand.hbm [shape: f32[32,1024], index: 7, kind: output, shape index: {}]
  %s8 = sld [smem:[#allocation0]]
  $region66: #{tpu_custom_call.1} parent=0
    _
  %s10 = ssub.s32 1, %s8
  %s11 = scalar_select 0, %s10, %s8
  $region1: #{tpu_custom_call.1} parent=0
    #allocation2 [shape = 'u8[16384]{0}', space=vmem, size = 0x4000, scoped, tag = 'input window, operand 0, single buffered']
    #allocation3 [shape = 's32[1]{0}', space=sflag, size = 0x4, scoped, tag = 'scoped memory for tpu_custom_call.1']
    #allocation4 [shape = 's32[1]{0}', space=sflag, size = 0x4, scoped, tag = 'scoped memory for tpu_custom_call.1']
    #allocation5 [shape = 'u8[786432]{0}', space=vmem, size = 0xc0000, scoped, tag = 'input window, operand 1, single buffered']
    #allocation6 [shape = 's32[1]{0}', space=sflag, size = 0x4, scoped, tag = 'scoped memory for tpu_custom_call.1']
    #allocation7 [shape = 'u8[512]{0}', space=vmem, size = 0x400, scoped, tag = 'input window, operand 2, single buffered']
    #allocation8 [shape = 'u8[512]{0}', space=vmem, size = 0x400, scoped, tag = 'input window, operand 3, single buffered']
    #allocation9 [shape = 's32[1]{0}', space=sflag, size = 0x4, scoped, tag = 'scoped memory for tpu_custom_call.1']
    #allocation10 [shape = 'u8[12582912]{0}', space=vmem, size = 0xc00000, scoped, tag = 'input window, operand 4, single buffered']
    #allocation11 [shape = 'u8[512]{0}', space=vmem, size = 0x400, scoped, tag = 'input window, operand 5, single buffered']
    #allocation12 [shape = 's32[1]{0}', space=sflag, size = 0x4, scoped, tag = 'scoped memory for tpu_custom_call.1']
    #allocation13 [shape = 'u8[512]{0}', space=vmem, size = 0x400, scoped, tag = 'input window, operand 6, single buffered']
    #allocation14 [shape = 'u8[131072]{0}', space=vmem, size = 0x20000, scoped, tag = 'output window, operand 0, single buffered']
    %12 = vsyncpa [#allocation3], 0
    %13 = vsyncpa [#allocation6], 0
    %14 = vsyncpa [#allocation9], 0
    %15 = vsyncpa [#allocation12], 0
    %16 = vsyncpa [#allocation4], 0
    // Predicated region
    $region2: #{tpu_custom_call.1} parent=1 // pred_check
      _
    $region3: #{tpu_custom_call.1} parent=1 // pred_check_branch
      %18 = sbr.rel (0) target = $region5
    $region4: #{tpu_custom_call.1} parent=1 // pred_region
      %s20 = ssub.s32 512, 512
      %21 = vsyncadd [#allocation3], %s20
      %s22 = sshll.u32 [#allocation2], 4
      %s23 = int_to_ptr.vmem [resolvable:$true] %s22
      %28 = dma.hbm_to_vmem [thread:$0]  %s0, 512, %s23, [#allocation3], 128, 128, 8
    $region5: #{tpu_custom_call.1} parent=1 // pred_fallthru
      _
    // Predicated region
    $region6: #{tpu_custom_call.1} parent=1 // pred_check
      _
    $region7: #{tpu_custom_call.1} parent=1 // pred_check_branch
      %30 = sbr.rel (0) target = $region9
    $region8: #{tpu_custom_call.1} parent=1 // pred_region
      %s32 = ssub.s32 24576, 24576
      %33 = vsyncadd [#allocation6], %s32
      %s34 = sshll.u32 [#allocation5], 4
      %s35 = int_to_ptr.vmem [resolvable:$true] %s34
      %40 = dma.hbm_to_vmem [thread:$0]  %s1, 24576, %s35, [#allocation6], 1024, 1024, 64
    $region9: #{tpu_custom_call.1} parent=1 // pred_fallthru
      _
    // Predicated region
    $region10: #{tpu_custom_call.1} parent=1 // pred_check
      _
    $region11: #{tpu_custom_call.1} parent=1 // pred_check_branch
      %42 = sbr.rel (0) target = $region13
    $region12: #{tpu_custom_call.1} parent=1 // pred_region
      %s44 = ssub.s32 16, 16
      %45 = vsyncadd [#allocation6], %s44
      %s47 = sshll.u32 [#allocation7], 4
      %s48 = int_to_ptr.vmem [resolvable:$true] %s47
      %50 = dma.hbm_to_vmem [thread:$0]  %s2, 16, %s48, [#allocation6]
    $region13: #{tpu_custom_call.1} parent=1 // pred_fallthru
      _
    // Predicated region
    $region14: #{tpu_custom_call.1} parent=1 // pred_check
      _
    $region15: #{tpu_custom_call.1} parent=1 // pred_check_branch
      %52 = sbr.rel (0) target = $region17
    $region16: #{tpu_custom_call.1} parent=1 // pred_region
      %s54 = ssub.s32 16, 16
      %55 = vsyncadd [#allocation9], %s54
      %s57 = sshll.u32 [#allocation8], 4
      %s58 = int_to_ptr.vmem [resolvable:$true] %s57
      %60 = dma.hbm_to_vmem [thread:$0]  %s3, 16, %s58, [#allocation9]
    $region17: #{tpu_custom_call.1} parent=1 // pred_fallthru
      _
    // Predicated region
    $region18: #{tpu_custom_call.1} parent=1 // pred_check
      _
    $region19: #{tpu_custom_call.1} parent=1 // pred_check_branch
      %62 = sbr.rel (0) target = $region21
    $region20: #{tpu_custom_call.1} parent=1 // pred_region
      %s64 = ssub.s32 393216, 393216
      %65 = vsyncadd [#allocation9], %s64
      %s66 = sshll.u32 [#allocation10], 4
      %s67 = int_to_ptr.vmem [resolvable:$true] %s66
      %72 = dma.hbm_to_vmem [thread:$0]  %s4, 393216, %s67, [#allocation9], 1024, 1024, 64
    $region21: #{tpu_custom_call.1} parent=1 // pred_fallthru
      _
    // Predicated region
    $region22: #{tpu_custom_call.1} parent=1 // pred_check
      _
    $region23: #{tpu_custom_call.1} parent=1 // pred_check_branch
      %74 = sbr.rel (0) target = $region25
    $region24: #{tpu_custom_call.1} parent=1 // pred_region
      %s76 = ssub.s32 16, 16
      %77 = vsyncadd [#allocation12], %s76
      %s79 = sshll.u32 [#allocation11], 4
      %s80 = int_to_ptr.vmem [resolvable:$true] %s79
      %82 = dma.hbm_to_vmem [thread:$0]  %s5, 16, %s80, [#allocation12]
    $region25: #{tpu_custom_call.1} parent=1 // pred_fallthru
      _
    // Predicated region
    $region26: #{tpu_custom_call.1} parent=1 // pred_check
      _
    $region27: #{tpu_custom_call.1} parent=1 // pred_check_branch
      %84 = sbr.rel (0) target = $region29
    $region28: #{tpu_custom_call.1} parent=1 // pred_region
      %s86 = ssub.s32 16, 16
      %87 = vsyncadd [#allocation12], %s86
      %s89 = sshll.u32 [#allocation13], 4
      %s90 = int_to_ptr.vmem [resolvable:$true] %s89
      %92 = dma.hbm_to_vmem [thread:$0]  %s6, 16, %s90, [#allocation12]
    $region29: #{tpu_custom_call.1} parent=1 // pred_fallthru
      _
    // Predicated region
    $region30: #{tpu_custom_call.1} parent=1 // pred_check
      _
    $region31: #{tpu_custom_call.1} parent=1 // pred_check_branch
      %94 = sbr.rel (0) target = $region33
    $region32: #{tpu_custom_call.1} parent=1 // pred_region
      %95 = dma.done [#allocation3], 512
    $region33: #{tpu_custom_call.1} parent=1 // pred_fallthru
      _
    // Predicated region
    $region34: #{tpu_custom_call.1} parent=1 // pred_check
      _
    $region35: #{tpu_custom_call.1} parent=1 // pred_check_branch
      %97 = sbr.rel (0) target = $region37
    $region36: #{tpu_custom_call.1} parent=1 // pred_region
      %98 = dma.done [#allocation6], 24576
    $region37: #{tpu_custom_call.1} parent=1 // pred_fallthru
      _
    // Predicated region
    $region38: #{tpu_custom_call.1} parent=1 // pred_check
      _
    $region39: #{tpu_custom_call.1} parent=1 // pred_check_branch
      %100 = sbr.rel (0) target = $region41
    $region40: #{tpu_custom_call.1} parent=1 // pred_region
      %101 = dma.done [#allocation6], 16
    $region41: #{tpu_custom_call.1} parent=1 // pred_fallthru
      _
    // Predicated region
    $region42: #{tpu_custom_call.1} parent=1 // pred_check
      _
    $region43: #{tpu_custom_call.1} parent=1 // pred_check_branch
      %103 = sbr.rel (0) target = $region45
    $region44: #{tpu_custom_call.1} parent=1 // pred_region
      %104 = dma.done [#allocation9], 16
    $region45: #{tpu_custom_call.1} parent=1 // pred_fallthru
      _
    // Predicated region
    $region46: #{tpu_custom_call.1} parent=1 // pred_check
      _
    $region47: #{tpu_custom_call.1} parent=1 // pred_check_branch
      %106 = sbr.rel (0) target = $region49
    $region48: #{tpu_custom_call.1} parent=1 // pred_region
      %107 = dma.done [#allocation9], 393216
    $region49: #{tpu_custom_call.1} parent=1 // pred_fallthru
      _
    // Predicated region
    $region50: #{tpu_custom_call.1} parent=1 // pred_check
      _
    $region51: #{tpu_custom_call.1} parent=1 // pred_check_branch
      %109 = sbr.rel (0) target = $region53
    $region52: #{tpu_custom_call.1} parent=1 // pred_region
      %110 = dma.done [#allocation12], 16
    $region53: #{tpu_custom_call.1} parent=1 // pred_fallthru
      _
    // Predicated region
    $region54: #{tpu_custom_call.1} parent=1 // pred_check
      _
    $region55: #{tpu_custom_call.1} parent=1 // pred_check_branch
      %112 = sbr.rel (0) target = $region57
    $region56: #{tpu_custom_call.1} parent=1 // pred_region
      %113 = dma.done [#allocation12], 16
    $region57: #{tpu_custom_call.1} parent=1 // pred_fallthru
      _
    %v114 = vlaneseq
    %v115 = vshrl.u32 %v114, 7
    %v116 = vadd.s32 %v115, 8
    %v117 = vadd.s32 %v115, 16
    %v118 = vadd.s32 %v115, 24
    %vm119 = vcmp.lt.s32.totalorder %v115, 0
    %v120 = vsub.s32 0, %v115
    %v121 = vsel %vm119, %v120, %v115
    %v122 = vshrl.u32 %v121, 4
    %v123 = vand.u32 %v121, 15
    %v124 = vsub.s32 0, %v123
    %v125 = vsel %vm119, %v124, %v123
    %vm126 = vcmp.lt.s32.totalorder %v116, 0
    %v127 = vsub.s32 0, %v116
    %v128 = vsel %vm126, %v127, %v116
    %v129 = vshrl.u32 %v128, 4
    %v130 = vand.u32 %v128, 15
    %v131 = vsub.s32 0, %v130
    %v132 = vsel %vm126, %v131, %v130
    %vm133 = vcmp.lt.s32.totalorder %v117, 0
    %v134 = vsub.s32 0, %v117
    %v135 = vsel %vm133, %v134, %v117
    %v136 = vshrl.u32 %v135, 4
    %v137 = vand.u32 %v135, 15
    %v138 = vsub.s32 0, %v137
    %v139 = vsel %vm133, %v138, %v137
    %vm140 = vcmp.lt.s32.totalorder %v118, 0
    %v141 = vsub.s32 0, %v118
    %v142 = vsel %vm140, %v141, %v118
    %v143 = vshrl.u32 %v142, 4
    %v144 = vand.u32 %v142, 15
    %v145 = vsub.s32 0, %v144
    %v146 = vsel %vm140, %v145, %v144
    %vm147 = vcmp.ne.s32.totalorder %v125, 0
    %vm148 = vcmp.ne.s32.totalorder %v132, 0
    %vm149 = vcmp.ne.s32.totalorder %v139, 0
    %vm150 = vcmp.ne.s32.totalorder %v146, 0
    %vm151 = vcmp.lt.s32.totalorder %v125, 0
    %vm152 = vcmp.lt.s32.totalorder %v132, 0
    %vm153 = vcmp.lt.s32.totalorder %v139, 0
    %vm154 = vcmp.lt.s32.totalorder %v146, 0
    %vm155 = vmand %vm151, %vm147
    %vm156 = vmand %vm152, %vm148
    %vm157 = vmand %vm153, %vm149
    %vm158 = vmand %vm154, %vm150
    %v159 = vadd.s32 %v125, 16
    %v160 = vadd.s32 %v132, 16
    %v161 = vadd.s32 %v139, 16
    %v162 = vadd.s32 %v146, 16
    %v163 = vsel %vm155, %v159, %v125
    %v164 = vsel %vm156, %v160, %v132
    %v165 = vsel %vm157, %v161, %v139
    %v166 = vsel %vm158, %v162, %v146
    %vm167 = vcmp.ge.s32.totalorder %v163, 1
    %vm168 = vcmp.ge.s32.totalorder %v164, 1
    %vm169 = vcmp.ge.s32.totalorder %v165, 1
    %vm170 = vcmp.ge.s32.totalorder %v166, 1
    %vm171 = vcmp.le.s32.totalorder %v163, 14
    %vm172 = vcmp.le.s32.totalorder %v164, 14
    %vm173 = vcmp.le.s32.totalorder %v165, 14
    %vm174 = vcmp.le.s32.totalorder %v166, 14
    %v175 = vld [vmem:[#allocation2] sm:$0xff]
    %v176 = vld [vmem:[#allocation2 + $0x8] sm:$0xff]
    %v177 = vld [vmem:[#allocation2 + $0x10] sm:$0xff]
    %v178 = vld [vmem:[#allocation2 + $0x18] sm:$0xff]
    %v179 = vrot.slane %v175, 7
    %v180 = vrot.slane %v176, 7
    %v181 = vrot.slane %v177, 7
    %v182 = vrot.slane %v178, 7
    %vm183 = vcmp.lt.s32.totalorder %v115, 1
    %v184 = vsel %vm183, %v181, %v182
    %v185 = vsel %vm183, %v180, %v181
    %v186 = vsel %vm183, %v179, %v180
    %v187 = vsel %vm183, %v182, %v179
    %v188 = vsel %vm167, 1, 0
    %v189 = vsel %vm168, 1, 0
    %v190 = vsel %vm169, 1, 0
    %v191 = vsel %vm170, 1, 0
    %vm192 = vcmp.eq.s32.totalorder %v188, 1
    %vm193 = vcmp.eq.s32.totalorder %v189, 1
    %vm194 = vcmp.eq.s32.totalorder %v190, 1
    %vm195 = vcmp.eq.s32.totalorder %v191, 1
    %v196 = vsel %vm192, %v187, 0.0
    %v197 = vsel %vm193, %v186, 0.0
    %v198 = vsel %vm194, %v185, 0.0
    %v199 = vsel %vm195, %v184, 0.0
    %v200 = vrot.slane %v175, 1
    %v201 = vrot.slane %v176, 1
    %v202 = vrot.slane %v177, 1
    %v203 = vrot.slane %v178, 1
    %vm204 = vcmp.lt.s32.totalorder %v115, 7
    %v205 = vsel %vm204, %v202, %v203
    %v206 = vsel %vm204, %v201, %v202
    %v207 = vsel %vm204, %v200, %v201
    %v208 = vsel %vm204, %v203, %v200
    %v209 = vsel %vm171, 1, 0
    %v210 = vsel %vm172, 1, 0
    %v211 = vsel %vm173, 1, 0
    %v212 = vsel %vm174, 1, 0
    %vm213 = vcmp.eq.s32.totalorder %v209, 1
    %vm214 = vcmp.eq.s32.totalorder %v210, 1
    %vm215 = vcmp.eq.s32.totalorder %v211, 1
    %vm216 = vcmp.eq.s32.totalorder %v212, 1
    %v217 = vsel %vm213, %v207, 0.0
    %v218 = vsel %vm214, %v206, 0.0
    %v219 = vsel %vm215, %v205, 0.0
    %v220 = vsel %vm216, %v208, 0.0
    %v221 = vld [vmem:[#allocation5] sm:$0xff]
    %v222 = vld [vmem:[#allocation5 + $0x8] sm:$0xff]
    %v223 = vld [vmem:[#allocation5 + $0x10] sm:$0xff]
    %v224 = vld [vmem:[#allocation5 + $0x18] sm:$0xff]
    %v225 = vld [vmem:[#allocation5 + $0x20] sm:$0xff]
    %v226 = vld [vmem:[#allocation5 + $0x28] sm:$0xff]
    %v227 = vld [vmem:[#allocation5 + $0x30] sm:$0xff]
    %v228 = vld [vmem:[#allocation5 + $0x38] sm:$0xff]
    %v229 = vld [vmem:[#allocation5 + $0x40] sm:$0xff]
    %v230 = vld [vmem:[#allocation5 + $0x48] sm:$0xff]
    %v231 = vld [vmem:[#allocation5 + $0x50] sm:$0xff]
    %v232 = vld [vmem:[#allocation5 + $0x58] sm:$0xff]
    %v233 = vld [vmem:[#allocation5 + $0x60] sm:$0xff]
    %v234 = vld [vmem:[#allocation5 + $0x68] sm:$0xff]
    %v235 = vld [vmem:[#allocation5 + $0x70] sm:$0xff]
    %v236 = vld [vmem:[#allocation5 + $0x78] sm:$0xff]
    %v237 = vld [vmem:[#allocation5 + $0x80] sm:$0xff]
    %v238 = vld [vmem:[#allocation5 + $0x88] sm:$0xff]
    %v239 = vld [vmem:[#allocation5 + $0x90] sm:$0xff]
    %v240 = vld [vmem:[#allocation5 + $0x98] sm:$0xff]
    %v241 = vld [vmem:[#allocation5 + $0xa0] sm:$0xff]
    %v242 = vld [vmem:[#allocation5 + $0xa8] sm:$0xff]
    %v243 = vld [vmem:[#allocation5 + $0xb0] sm:$0xff]
    %v244 = vld [vmem:[#allocation5 + $0xb8] sm:$0xff]
    %v245 = vld [vmem:[#allocation5 + $0xc0] sm:$0xff]
    %v246 = vld [vmem:[#allocation5 + $0xc8] sm:$0xff]
    %v247 = vld [vmem:[#allocation5 + $0xd0] sm:$0xff]
    %v248 = vld [vmem:[#allocation5 + $0xd8] sm:$0xff]
    %v249 = vld [vmem:[#allocation5 + $0xe0] sm:$0xff]
    %v250 = vld [vmem:[#allocation5 + $0xe8] sm:$0xff]
    %v251 = vld [vmem:[#allocation5 + $0xf0] sm:$0xff]
    %v252 = vld [vmem:[#allocation5 + $0xf8] sm:$0xff]
    %v253 = vld [vmem:[#allocation5 + $0x100] sm:$0xff]
    %v254 = vld [vmem:[#allocation5 + $0x108] sm:$0xff]
    %v255 = vld [vmem:[#allocation5 + $0x110] sm:$0xff]
    %v256 = vld [vmem:[#allocation5 + $0x118] sm:$0xff]
    %v257 = vld [vmem:[#allocation5 + $0x120] sm:$0xff]
    %v258 = vld [vmem:[#allocation5 + $0x128] sm:$0xff]
    %v259 = vld [vmem:[#allocation5 + $0x130] sm:$0xff]
    %v260 = vld [vmem:[#allocation5 + $0x138] sm:$0xff]
    %v261 = vld [vmem:[#allocation5 + $0x140] sm:$0xff]
    %v262 = vld [vmem:[#allocation5 + $0x148] sm:$0xff]
    %v263 = vld [vmem:[#allocation5 + $0x150] sm:$0xff]
    %v264 = vld [vmem:[#allocation5 + $0x158] sm:$0xff]
    %v265 = vld [vmem:[#allocation5 + $0x160] sm:$0xff]
    %v266 = vld [vmem:[#allocation5 + $0x168] sm:$0xff]
    %v267 = vld [vmem:[#allocation5 + $0x170] sm:$0xff]
    %v268 = vld [vmem:[#allocation5 + $0x178] sm:$0xff]
    %v269 = vld [vmem:[#allocation5 + $0x180] sm:$0xff]
    %v270 = vld [vmem:[#allocation5 + $0x188] sm:$0xff]
    %v271 = vld [vmem:[#allocation5 + $0x190] sm:$0xff]
    %v272 = vld [vmem:[#allocation5 + $0x198] sm:$0xff]
    %v273 = vld [vmem:[#allocation5 + $0x1a0] sm:$0xff]
    %v274 = vld [vmem:[#allocation5 + $0x1a8] sm:$0xff]
    %v275 = vld [vmem:[#allocation5 + $0x1b0] sm:$0xff]
    %v276 = vld [vmem:[#allocation5 + $0x1b8] sm:$0xff]
    %v277 = vld [vmem:[#allocation5 + $0x1c0] sm:$0xff]
    %v278 = vld [vmem:[#allocation5 + $0x1c8] sm:$0xff]
    %v279 = vld [vmem:[#allocation5 + $0x1d0] sm:$0xff]
    %v280 = vld [vmem:[#allocation5 + $0x1d8] sm:$0xff]
    %v281 = vld [vmem:[#allocation5 + $0x1e0] sm:$0xff]
    %v282 = vld [vmem:[#allocation5 + $0x1e8] sm:$0xff]
    %v283 = vld [vmem:[#allocation5 + $0x1f0] sm:$0xff]
    %v284 = vld [vmem:[#allocation5 + $0x1f8] sm:$0xff]
    %s285 = scalar_lea.vmem [#allocation5], 512
    %v286 = vld [vmem:[%s285] sm:$0xff]
    %v287 = vld [vmem:[%s285 + $0x8] sm:$0xff]
    %v288 = vld [vmem:[%s285 + $0x10] sm:$0xff]
    %v289 = vld [vmem:[%s285 + $0x18] sm:$0xff]
    %v290 = vld [vmem:[%s285 + $0x20] sm:$0xff]
    %v291 = vld [vmem:[%s285 + $0x28] sm:$0xff]
    %v292 = vld [vmem:[%s285 + $0x30] sm:$0xff]
    %v293 = vld [vmem:[%s285 + $0x38] sm:$0xff]
    %v294 = vld [vmem:[%s285 + $0x40] sm:$0xff]
    %v295 = vld [vmem:[%s285 + $0x48] sm:$0xff]
    %v296 = vld [vmem:[%s285 + $0x50] sm:$0xff]
    %v297 = vld [vmem:[%s285 + $0x58] sm:$0xff]
    %v298 = vld [vmem:[%s285 + $0x60] sm:$0xff]
    %v299 = vld [vmem:[%s285 + $0x68] sm:$0xff]
    %v300 = vld [vmem:[%s285 + $0x70] sm:$0xff]
    %v301 = vld [vmem:[%s285 + $0x78] sm:$0xff]
    %v302 = vld [vmem:[%s285 + $0x80] sm:$0xff]
    %v303 = vld [vmem:[%s285 + $0x88] sm:$0xff]
    %v304 = vld [vmem:[%s285 + $0x90] sm:$0xff]
    %v305 = vld [vmem:[%s285 + $0x98] sm:$0xff]
    %v306 = vld [vmem:[%s285 + $0xa0] sm:$0xff]
    %v307 = vld [vmem:[%s285 + $0xa8] sm:$0xff]
    %v308 = vld [vmem:[%s285 + $0xb0] sm:$0xff]
    %v309 = vld [vmem:[%s285 + $0xb8] sm:$0xff]
    %v310 = vld [vmem:[%s285 + $0xc0] sm:$0xff]
    %v311 = vld [vmem:[%s285 + $0xc8] sm:$0xff]
    %v312 = vld [vmem:[%s285 + $0xd0] sm:$0xff]
    %v313 = vld [vmem:[%s285 + $0xd8] sm:$0xff]
    %v314 = vld [vmem:[%s285 + $0xe0] sm:$0xff]
    %v315 = vld [vmem:[%s285 + $0xe8] sm:$0xff]
    %v316 = vld [vmem:[%s285 + $0xf0] sm:$0xff]
    %v317 = vld [vmem:[%s285 + $0xf8] sm:$0xff]
    %v318 = vld [vmem:[%s285 + $0x100] sm:$0xff]
    %v319 = vld [vmem:[%s285 + $0x108] sm:$0xff]
    %v320 = vld [vmem:[%s285 + $0x110] sm:$0xff]
    %v321 = vld [vmem:[%s285 + $0x118] sm:$0xff]
    %v322 = vld [vmem:[%s285 + $0x120] sm:$0xff]
    %v323 = vld [vmem:[%s285 + $0x128] sm:$0xff]
    %v324 = vld [vmem:[%s285 + $0x130] sm:$0xff]
    %v325 = vld [vmem:[%s285 + $0x138] sm:$0xff]
    %v326 = vld [vmem:[%s285 + $0x140] sm:$0xff]
    %v327 = vld [vmem:[%s285 + $0x148] sm:$0xff]
    %v328 = vld [vmem:[%s285 + $0x150] sm:$0xff]
    %v329 = vld [vmem:[%s285 + $0x158] sm:$0xff]
    %v330 = vld [vmem:[%s285 + $0x160] sm:$0xff]
    %v331 = vld [vmem:[%s285 + $0x168] sm:$0xff]
    %v332 = vld [vmem:[%s285 + $0x170] sm:$0xff]
    %v333 = vld [vmem:[%s285 + $0x178] sm:$0xff]
    %v334 = vld [vmem:[%s285 + $0x180] sm:$0xff]
    %v335 = vld [vmem:[%s285 + $0x188] sm:$0xff]
    %v336 = vld [vmem:[%s285 + $0x190] sm:$0xff]
    %v337 = vld [vmem:[%s285 + $0x198] sm:$0xff]
    %v338 = vld [vmem:[%s285 + $0x1a0] sm:$0xff]
    %v339 = vld [vmem:[%s285 + $0x1a8] sm:$0xff]
    %v340 = vld [vmem:[%s285 + $0x1b0] sm:$0xff]
    %v341 = vld [vmem:[%s285 + $0x1b8] sm:$0xff]
    %v342 = vld [vmem:[%s285 + $0x1c0] sm:$0xff]
    %v343 = vld [vmem:[%s285 + $0x1c8] sm:$0xff]
    %v344 = vld [vmem:[%s285 + $0x1d0] sm:$0xff]
    %v345 = vld [vmem:[%s285 + $0x1d8] sm:$0xff]
    %v346 = vld [vmem:[%s285 + $0x1e0] sm:$0xff]
    %v347 = vld [vmem:[%s285 + $0x1e8] sm:$0xff]
    %v348 = vld [vmem:[%s285 + $0x1f0] sm:$0xff]
    %v349 = vld [vmem:[%s285 + $0x1f8] sm:$0xff]
    %vm350 = vcmask 523264
    %v352 = vsel %vm350, %v175, 0
    %v355 = vsel %vm350, %v176, 0
    %v358 = vsel %vm350, %v177, 0
    %v361 = vsel %vm350, %v178, 0
    %363 = vmatprep.subr.mxu0 %v287
    %364 = vmatpush1.msra.mxu0 %v286
    %365 = vmatprep.subr.mxu0 %v295
    %366 = vmatpush1.msra.mxu0 %v294
    %367 = vmatprep.subr.mxu0 %v303
    %368 = vmatpush1.msra.mxu0 %v302
    %369 = vmatprep.subr.mxu0 %v311
    %370 = vmatpush1.msra.mxu0 %v310
    %371 = vmatprep.subr.mxu0 %v319
    %372 = vmatpush1.msra.mxu0 %v318
    %373 = vmatprep.subr.mxu0 %v327
    %374 = vmatpush1.msra.mxu0 %v326
    %375 = vmatprep.subr.mxu0 %v335
    %376 = vmatpush1.msra.mxu0 %v334
    %377 = vmatprep.subr.mxu0 %v343
    %378 = vmatpush1.msra.mxu0 %v342
    %379 = vmatprep.subr.mxu0 0.0
    %380 = vmatpush1.msra.mxu0 0.0
    %381 = vmatprep.subr.mxu0 0.0
    %382 = vmatpush1.msra.mxu0 0.0
    %383 = vmatprep.subr.mxu0 0.0
    %384 = vmatpush1.msra.mxu0 0.0
    %385 = vmatprep.subr.mxu0 0.0
    %386 = vmatpush1.msra.mxu0 0.0
    %387 = vmatprep.subr.mxu0 0.0
    %388 = vmatpush1.msra.mxu0 0.0
    %389 = vmatprep.subr.mxu0 0.0
    %390 = vmatpush1.msra.mxu0 0.0
    %391 = vmatprep.subr.mxu0 0.0
    %392 = vmatpush1.msra.mxu0 0.0
    %393 = vmatprep.subr.mxu0 0.0
    %394 = vmatpush1.msra.mxu0 0.0
    %395 = vmatprep.subr.mxu0 0.0
    %396 = vmatpush1.msra.mxu0 0.0
    %397 = vmatprep.subr.mxu0 0.0
    %398 = vmatpush1.msra.mxu0 0.0
    %399 = vmatprep.subr.mxu0 0.0
    %400 = vmatpush1.msra.mxu0 0.0
    %401 = vmatprep.subr.mxu0 0.0
    %402 = vmatpush1.msra.mxu0 0.0
    %403 = vmatprep.subr.mxu0 0.0
    %404 = vmatpush1.msra.mxu0 0.0
    %405 = vmatprep.subr.mxu0 0.0
    %406 = vmatpush1.msra.mxu0 0.0
    %407 = vmatprep.subr.mxu0 0.0
    %408 = vmatpush1.msra.mxu0 0.0
    %409 = vmatprep.subr.mxu0 0.0
    %410 = vmatpush1.msra.mxu0 0.0
    %411 = vmatprep.subr.mxu0 0.0
    %412 = vmatpush1.msra.mxu0 0.0
    %413 = vmatprep.subr.mxu0 0.0
    %414 = vmatpush1.msra.mxu0 0.0
    %415 = vmatprep.subr.mxu0 0.0
    %416 = vmatpush1.msra.mxu0 0.0
    %417 = vmatprep.subr.mxu0 0.0
    %418 = vmatpush1.msra.mxu0 0.0
    %419 = vmatprep.subr.mxu0 0.0
    %420 = vmatpush1.msra.mxu0 0.0
    %421 = vmatprep.subr.mxu0 0.0
    %422 = vmatpush1.msra.mxu0 0.0
    %423 = vmatprep.subr.mxu0 0.0
    %424 = vmatpush1.msra.mxu0 0.0
    %425 = vmatprep.subr.mxu0 0.0
    %426 = vmatpush1.msra.mxu0 0.0
    %427 = vmatprep.mubr.f32.mxu0 0.0
    %428 = vmatmul.mubr.f32.gmra.mrb[0].mxu0 %v352
    %v429 = vpop.f32.mrb[0].mxu0
    %v430 = vadd.f32 0.0, %v429
    %v431 = vpop.f32.mrb[0].mxu0
    %v432 = vadd.f32 0.0, %v431
    %433 = vmatprep.mubr.f32.mxu0 0.0
    %434 = vmatmul.mubr.f32.gmra.mrb[0].mxu0 %v355
    %v435 = vpop.f32.mrb[0].mxu0
    %v436 = vadd.f32 0.0, %v435
    %v437 = vpop.f32.mrb[0].mxu0
    %v438 = vadd.f32 0.0, %v437
    %439 = vmatprep.mubr.f32.mxu0 0.0
    %440 = vmatmul.mubr.f32.gmra.mrb[0].mxu0 %v358
    %v441 = vpop.f32.mrb[0].mxu0
    %v442 = vadd.f32 0.0, %v441
    %v443 = vpop.f32.mrb[0].mxu0
    %v444 = vadd.f32 0.0, %v443
    %445 = vmatprep.mubr.f32.mxu0 0.0
    %446 = vmatmul.mubr.f32.gmra.mrb[0].mxu0 %v361
    %v447 = vpop.f32.mrb[0].mxu0
    %v448 = vadd.f32 0.0, %v447
    %v449 = vpop.f32.mrb[0].mxu0
    %v450 = vadd.f32 0.0, %v449
    %451 = vdwg.mxu0
    %452 = vmatprep.subr.mxu0 %v289
    %453 = vmatpush1.msra.mxu0 %v288
    %454 = vmatprep.subr.mxu0 %v297
    %455 = vmatpush1.msra.mxu0 %v296
    %456 = vmatprep.subr.mxu0 %v305
    %457 = vmatpush1.msra.mxu0 %v304
    %458 = vmatprep.subr.mxu0 %v313
    %459 = vmatpush1.msra.mxu0 %v312
    %460 = vmatprep.subr.mxu0 %v321
    %461 = vmatpush1.msra.mxu0 %v320
    %462 = vmatprep.subr.mxu0 %v329
    %463 = vmatpush1.msra.mxu0 %v328
    %464 = vmatprep.subr.mxu0 %v337
    %465 = vmatpush1.msra.mxu0 %v336
    %466 = vmatprep.subr.mxu0 %v345
    %467 = vmatpush1.msra.mxu0 %v344
    %468 = vmatprep.subr.mxu0 0.0
    %469 = vmatpush1.msra.mxu0 0.0
    %470 = vmatprep.subr.mxu0 0.0
    %471 = vmatpush1.msra.mxu0 0.0
    %472 = vmatprep.subr.mxu0 0.0
    %473 = vmatpush1.msra.mxu0 0.0
    %474 = vmatprep.subr.mxu0 0.0
    %475 = vmatpush1.msra.mxu0 0.0
    %476 = vmatprep.subr.mxu0 0.0
    %477 = vmatpush1.msra.mxu0 0.0
    %478 = vmatprep.subr.mxu0 0.0
    %479 = vmatpush1.msra.mxu0 0.0
    %480 = vmatprep.subr.mxu0 0.0
    %481 = vmatpush1.msra.mxu0 0.0
    %482 = vmatprep.subr.mxu0 0.0
    %483 = vmatpush1.msra.mxu0 0.0
    %484 = vmatprep.subr.mxu0 0.0
    %485 = vmatpush1.msra.mxu0 0.0
    %486 = vmatprep.subr.mxu0 0.0
    %487 = vmatpush1.msra.mxu0 0.0
    %488 = vmatprep.subr.mxu0 0.0
    %489 = vmatpush1.msra.mxu0 0.0
    %490 = vmatprep.subr.mxu0 0.0
    %491 = vmatpush1.msra.mxu0 0.0
    %492 = vmatprep.subr.mxu0 0.0
    %493 = vmatpush1.msra.mxu0 0.0
    %494 = vmatprep.subr.mxu0 0.0
    %495 = vmatpush1.msra.mxu0 0.0
    %496 = vmatprep.subr.mxu0 0.0
    %497 = vmatpush1.msra.mxu0 0.0
    %498 = vmatprep.subr.mxu0 0.0
    %499 = vmatpush1.msra.mxu0 0.0
    %500 = vmatprep.subr.mxu0 0.0
    %501 = vmatpush1.msra.mxu0 0.0
    %502 = vmatprep.subr.mxu0 0.0
    %503 = vmatpush1.msra.mxu0 0.0
    %504 = vmatprep.subr.mxu0 0.0
    %505 = vmatpush1.msra.mxu0 0.0
    %506 = vmatprep.subr.mxu0 0.0
    %507 = vmatpush1.msra.mxu0 0.0
    %508 = vmatprep.subr.mxu0 0.0
    %509 = vmatpush1.msra.mxu0 0.0
    %510 = vmatprep.subr.mxu0 0.0
    %511 = vmatpush1.msra.mxu0 0.0
    %512 = vmatprep.subr.mxu0 0.0
    %513 = vmatpush1.msra.mxu0 0.0
    %514 = vmatprep.subr.mxu0 0.0
    %515 = vmatpush1.msra.mxu0 0.0
    %516 = vmatprep.mubr.f32.mxu0 0.0
    %517 = vmatmul.mubr.f32.gmra.mrb[0].mxu0 %v352
    %v518 = vpop.f32.mrb[0].mxu0
    %v519 = vadd.f32 0.0, %v518
    %v520 = vpop.f32.mrb[0].mxu0
    %v521 = vadd.f32 0.0, %v520
    %522 = vmatprep.mubr.f32.mxu0 0.0
    %523 = vmatmul.mubr.f32.gmra.mrb[0].mxu0 %v355
    %v524 = vpop.f32.mrb[0].mxu0
    %v525 = vadd.f32 0.0, %v524
    %v526 = vpop.f32.mrb[0].mxu0
    %v527 = vadd.f32 0.0, %v526
    %528 = vmatprep.mubr.f32.mxu0 0.0
    %529 = vmatmul.mubr.f32.gmra.mrb[0].mxu0 %v358
    %v530 = vpop.f32.mrb[0].mxu0
    %v531 = vadd.f32 0.0, %v530
    %v532 = vpop.f32.mrb[0].mxu0
    %v533 = vadd.f32 0.0, %v532
    %534 = vmatprep.mubr.f32.mxu0 0.0
    %535 = vmatmul.mubr.f32.gmra.mrb[0].mxu0 %v361
    %v536 = vpop.f32.mrb[0].mxu0
    %v537 = vadd.f32 0.0, %v536
    %v538 = vpop.f32.mrb[0].mxu0
    %v539 = vadd.f32 0.0, %v538
    %540 = vdwg.mxu0
    %541 = vmatprep.subr.mxu0 %v291
    %542 = vmatpush1.msra.mxu0 %v290
    %543 = vmatprep.subr.mxu0 %v299
    %544 = vmatpush1.msra.mxu0 %v298
    %545 = vmatprep.subr.mxu0 %v307
    %546 = vmatpush1.msra.mxu0 %v306
    %547 = vmatprep.subr.mxu0 %v315
    %548 = vmatpush1.msra.mxu0 %v314
    %549 = vmatprep.subr.mxu0 %v323
    %550 = vmatpush1.msra.mxu0 %v322
    %551 = vmatprep.subr.mxu0 %v331
    %552 = vmatpush1.msra.mxu0 %v330
    %553 = vmatprep.subr.mxu0 %v339
    %554 = vmatpush1.msra.mxu0 %v338
    %555 = vmatprep.subr.mxu0 %v347
    %556 = vmatpush1.msra.mxu0 %v346
    %557 = vmatprep.subr.mxu0 0.0
    %558 = vmatpush1.msra.mxu0 0.0
    %559 = vmatprep.subr.mxu0 0.0
    %560 = vmatpush1.msra.mxu0 0.0
    %561 = vmatprep.subr.mxu0 0.0
    %562 = vmatpush1.msra.mxu0 0.0
    %563 = vmatprep.subr.mxu0 0.0
    %564 = vmatpush1.msra.mxu0 0.0
    %565 = vmatprep.subr.mxu0 0.0
    %566 = vmatpush1.msra.mxu0 0.0
    %567 = vmatprep.subr.mxu0 0.0
    %568 = vmatpush1.msra.mxu0 0.0
    %569 = vmatprep.subr.mxu0 0.0
    %570 = vmatpush1.msra.mxu0 0.0
    %571 = vmatprep.subr.mxu0 0.0
    %572 = vmatpush1.msra.mxu0 0.0
    %573 = vmatprep.subr.mxu0 0.0
    %574 = vmatpush1.msra.mxu0 0.0
    %575 = vmatprep.subr.mxu0 0.0
    %576 = vmatpush1.msra.mxu0 0.0
    %577 = vmatprep.subr.mxu0 0.0
    %578 = vmatpush1.msra.mxu0 0.0
    %579 = vmatprep.subr.mxu0 0.0
    %580 = vmatpush1.msra.mxu0 0.0
    %581 = vmatprep.subr.mxu0 0.0
    %582 = vmatpush1.msra.mxu0 0.0
    %583 = vmatprep.subr.mxu0 0.0
    %584 = vmatpush1.msra.mxu0 0.0
    %585 = vmatprep.subr.mxu0 0.0
    %586 = vmatpush1.msra.mxu0 0.0
    %587 = vmatprep.subr.mxu0 0.0
    %588 = vmatpush1.msra.mxu0 0.0
    %589 = vmatprep.subr.mxu0 0.0
    %590 = vmatpush1.msra.mxu0 0.0
    %591 = vmatprep.subr.mxu0 0.0
    %592 = vmatpush1.msra.mxu0 0.0
    %593 = vmatprep.subr.mxu0 0.0
    %594 = vmatpush1.msra.mxu0 0.0
    %595 = vmatprep.subr.mxu0 0.0
    %596 = vmatpush1.msra.mxu0 0.0
    %597 = vmatprep.subr.mxu0 0.0
    %598 = vmatpush1.msra.mxu0 0.0
    %599 = vmatprep.subr.mxu0 0.0
    %600 = vmatpush1.msra.mxu0 0.0
    %601 = vmatprep.subr.mxu0 0.0
    %602 = vmatpush1.msra.mxu0 0.0
    %603 = vmatprep.subr.mxu0 0.0
    %604 = vmatpush1.msra.mxu0 0.0
    %605 = vmatprep.mubr.f32.mxu0 0.0
    %606 = vmatmul.mubr.f32.gmra.mrb[0].mxu0 %v352
    %v607 = vpop.f32.mrb[0].mxu0
    %v608 = vadd.f32 0.0, %v607
    %v609 = vpop.f32.mrb[0].mxu0
    %v610 = vadd.f32 0.0, %v609
    %611 = vmatprep.mubr.f32.mxu0 0.0
    %612 = vmatmul.mubr.f32.gmra.mrb[0].mxu0 %v355
    %v613 = vpop.f32.mrb[0].mxu0
    %v614 = vadd.f32 0.0, %v613
    %v615 = vpop.f32.mrb[0].mxu0
    %v616 = vadd.f32 0.0, %v615
    %617 = vmatprep.mubr.f32.mxu0 0.0
    %618 = vmatmul.mubr.f32.gmra.mrb[0].mxu0 %v358
    %v619 = vpop.f32.mrb[0].mxu0
    %v620 = vadd.f32 0.0, %v619
    %v621 = vpop.f32.mrb[0].mxu0
    %v622 = vadd.f32 0.0, %v621
    %623 = vmatprep.mubr.f32.mxu0 0.0
    %624 = vmatmul.mubr.f32.gmra.mrb[0].mxu0 %v361
    %v625 = vpop.f32.mrb[0].mxu0
    %v626 = vadd.f32 0.0, %v625
    %v627 = vpop.f32.mrb[0].mxu0
    %v628 = vadd.f32 0.0, %v627
    %629 = vdwg.mxu0
    %630 = vmatprep.subr.mxu0 %v293
    %631 = vmatpush1.msra.mxu0 %v292
    %632 = vmatprep.subr.mxu0 %v301
    %633 = vmatpush1.msra.mxu0 %v300
    %634 = vmatprep.subr.mxu0 %v309
    %635 = vmatpush1.msra.mxu0 %v308
    %636 = vmatprep.subr.mxu0 %v317
    %637 = vmatpush1.msra.mxu0 %v316
    %638 = vmatprep.subr.mxu0 %v325
    %639 = vmatpush1.msra.mxu0 %v324
    %640 = vmatprep.subr.mxu0 %v333
    %641 = vmatpush1.msra.mxu0 %v332
    %642 = vmatprep.subr.mxu0 %v341
    %643 = vmatpush1.msra.mxu0 %v340
    %644 = vmatprep.subr.mxu0 %v349
    %645 = vmatpush1.msra.mxu0 %v348
    %646 = vmatprep.subr.mxu0 0.0
    %647 = vmatpush1.msra.mxu0 0.0
    %648 = vmatprep.subr.mxu0 0.0
    %649 = vmatpush1.msra.mxu0 0.0
    %650 = vmatprep.subr.mxu0 0.0
    %651 = vmatpush1.msra.mxu0 0.0
    %652 = vmatprep.subr.mxu0 0.0
    %653 = vmatpush1.msra.mxu0 0.0
    %654 = vmatprep.subr.mxu0 0.0
    %655 = vmatpush1.msra.mxu0 0.0
    %656 = vmatprep.subr.mxu0 0.0
    %657 = vmatpush1.msra.mxu0 0.0
    %658 = vmatprep.subr.mxu0 0.0
    %659 = vmatpush1.msra.mxu0 0.0
    %660 = vmatprep.subr.mxu0 0.0
    %661 = vmatpush1.msra.mxu0 0.0
    %662 = vmatprep.subr.mxu0 0.0
    %663 = vmatpush1.msra.mxu0 0.0
    %664 = vmatprep.subr.mxu0 0.0
    %665 = vmatpush1.msra.mxu0 0.0
    %666 = vmatprep.subr.mxu0 0.0
    %667 = vmatpush1.msra.mxu0 0.0
    %668 = vmatprep.subr.mxu0 0.0
    %669 = vmatpush1.msra.mxu0 0.0
    %670 = vmatprep.subr.mxu0 0.0
    %671 = vmatpush1.msra.mxu0 0.0
    %672 = vmatprep.subr.mxu0 0.0
    %673 = vmatpush1.msra.mxu0 0.0
    %674 = vmatprep.subr.mxu0 0.0
    %675 = vmatpush1.msra.mxu0 0.0
    %676 = vmatprep.subr.mxu0 0.0
    %677 = vmatpush1.msra.mxu0 0.0
    %678 = vmatprep.subr.mxu0 0.0
    %679 = vmatpush1.msra.mxu0 0.0
    %680 = vmatprep.subr.mxu0 0.0
    %681 = vmatpush1.msra.mxu0 0.0
    %682 = vmatprep.subr.mxu0 0.0
    %683 = vmatpush1.msra.mxu0 0.0
    %684 = vmatprep.subr.mxu0 0.0
    %685 = vmatpush1.msra.mxu0 0.0
    %686 = vmatprep.subr.mxu0 0.0
    %687 = vmatpush1.msra.mxu0 0.0
    %688 = vmatprep.subr.mxu0 0.0
    %689 = vmatpush1.msra.mxu0 0.0
    %690 = vmatprep.subr.mxu0 0.0
    %691 = vmatpush1.msra.mxu0 0.0
    %692 = vmatprep.subr.mxu0 0.0
    %693 = vmatpush1.msra.mxu0 0.0
    %694 = vmatprep.mubr.f32.mxu0 0.0
    %695 = vmatmul.mubr.f32.gmra.mrb[0].mxu0 %v352
    %v696 = vpop.f32.mrb[0].mxu0
    %v697 = vadd.f32 0.0, %v696
    %v698 = vpop.f32.mrb[0].mxu0
    %v699 = vadd.f32 0.0, %v698
    %700 = vmatprep.mubr.f32.mxu0 0.0
    %701 = vmatmul.mubr.f32.gmra.mrb[0].mxu0 %v355
    %v702 = vpop.f32.mrb[0].mxu0
    %v703 = vadd.f32 0.0, %v702
    %v704 = vpop.f32.mrb[0].mxu0
    %v705 = vadd.f32 0.0, %v704
    %706 = vmatprep.mubr.f32.mxu0 0.0
    %707 = vmatmul.mubr.f32.gmra.mrb[0].mxu0 %v358
    %v708 = vpop.f32.mrb[0].mxu0
    %v709 = vadd.f32 0.0, %v708
    %v710 = vpop.f32.mrb[0].mxu0
    %v711 = vadd.f32 0.0, %v710
    %712 = vmatprep.mubr.f32.mxu0 0.0
    %713 = vmatmul.mubr.f32.gmra.mrb[0].mxu0 %v361
    %v714 = vpop.f32.mrb[0].mxu0
    %v715 = vadd.f32 0.0, %v714
    %v716 = vpop.f32.mrb[0].mxu0
    %v717 = vadd.f32 0.0, %v716
    %718 = vdwg.mxu0
    %v720 = vsel %vm350, %v196, 0
    %v723 = vsel %vm350, %v197, 0
    %v726 = vsel %vm350, %v198, 0
    %v729 = vsel %vm350, %v199, 0
    %731 = vmatprep.subr.mxu0 %v222
    %732 = vmatpush1.msra.mxu0 %v221
    %733 = vmatprep.subr.mxu0 %v230
    %734 = vmatpush1.msra.mxu0 %v229
    %735 = vmatprep.subr.mxu0 %v238
    %736 = vmatpush1.msra.mxu0 %v237
    %737 = vmatprep.subr.mxu0 %v246
    %738 = vmatpush1.msra.mxu0 %v245
    %739 = vmatprep.subr.mxu0 %v254
    %740 = vmatpush1.msra.mxu0 %v253
    %741 = vmatprep.subr.mxu0 %v262
    %742 = vmatpush1.msra.mxu0 %v261
    %743 = vmatprep.subr.mxu0 %v270
    %744 = vmatpush1.msra.mxu0 %v269
    %745 = vmatprep.subr.mxu0 %v278
    %746 = vmatpush1.msra.mxu0 %v277
    %747 = vmatprep.subr.mxu0 0.0
    %748 = vmatpush1.msra.mxu0 0.0
    %749 = vmatprep.subr.mxu0 0.0
    %750 = vmatpush1.msra.mxu0 0.0
    %751 = vmatprep.subr.mxu0 0.0
    %752 = vmatpush1.msra.mxu0 0.0
    %753 = vmatprep.subr.mxu0 0.0
    %754 = vmatpush1.msra.mxu0 0.0
    %755 = vmatprep.subr.mxu0 0.0
    %756 = vmatpush1.msra.mxu0 0.0
    %757 = vmatprep.subr.mxu0 0.0
    %758 = vmatpush1.msra.mxu0 0.0
    %759 = vmatprep.subr.mxu0 0.0
    %760 = vmatpush1.msra.mxu0 0.0
    %761 = vmatprep.subr.mxu0 0.0
    %762 = vmatpush1.msra.mxu0 0.0
    %763 = vmatprep.subr.mxu0 0.0
    %764 = vmatpush1.msra.mxu0 0.0
    %765 = vmatprep.subr.mxu0 0.0
    %766 = vmatpush1.msra.mxu0 0.0
    %767 = vmatprep.subr.mxu0 0.0
    %768 = vmatpush1.msra.mxu0 0.0
    %769 = vmatprep.subr.mxu0 0.0
    %770 = vmatpush1.msra.mxu0 0.0
    %771 = vmatprep.subr.mxu0 0.0
    %772 = vmatpush1.msra.mxu0 0.0
    %773 = vmatprep.subr.mxu0 0.0
    %774 = vmatpush1.msra.mxu0 0.0
    %775 = vmatprep.subr.mxu0 0.0
    %776 = vmatpush1.msra.mxu0 0.0
    %777 = vmatprep.subr.mxu0 0.0
    %778 = vmatpush1.msra.mxu0 0.0
    %779 = vmatprep.subr.mxu0 0.0
    %780 = vmatpush1.msra.mxu0 0.0
    %781 = vmatprep.subr.mxu0 0.0
    %782 = vmatpush1.msra.mxu0 0.0
    %783 = vmatprep.subr.mxu0 0.0
    %784 = vmatpush1.msra.mxu0 0.0
    %785 = vmatprep.subr.mxu0 0.0
    %786 = vmatpush1.msra.mxu0 0.0
    %787 = vmatprep.subr.mxu0 0.0
    %788 = vmatpush1.msra.mxu0 0.0
    %789 = vmatprep.subr.mxu0 0.0
    %790 = vmatpush1.msra.mxu0 0.0
    %791 = vmatprep.subr.mxu0 0.0
    %792 = vmatpush1.msra.mxu0 0.0
    %793 = vmatprep.subr.mxu0 0.0
    %794 = vmatpush1.msra.mxu0 0.0
    %795 = vmatprep.mubr.f32.mxu0 0.0
    %796 = vmatmul.mubr.f32.gmra.mrb[0].mxu0 %v720
    %v797 = vpop.f32.mrb[0].mxu0
    %v798 = vadd.f32 %v430, %v797
    %v799 = vpop.f32.mrb[0].mxu0
    %v800 = vadd.f32 %v432, %v799
    %801 = vmatprep.mubr.f32.mxu0 0.0
    %802 = vmatmul.mubr.f32.gmra.mrb[0].mxu0 %v723
    %v803 = vpop.f32.mrb[0].mxu0
    %v804 = vadd.f32 %v436, %v803
    %v805 = vpop.f32.mrb[0].mxu0
    %v806 = vadd.f32 %v438, %v805
    %807 = vmatprep.mubr.f32.mxu0 0.0
    %808 = vmatmul.mubr.f32.gmra.mrb[0].mxu0 %v726
    %v809 = vpop.f32.mrb[0].mxu0
    %v810 = vadd.f32 %v442, %v809
    %v811 = vpop.f32.mrb[0].mxu0
    %v812 = vadd.f32 %v444, %v811
    %813 = vmatprep.mubr.f32.mxu0 0.0
    %814 = vmatmul.mubr.f32.gmra.mrb[0].mxu0 %v729
    %v815 = vpop.f32.mrb[0].mxu0
    %v816 = vadd.f32 %v448, %v815
    %v817 = vpop.f32.mrb[0].mxu0
    %v818 = vadd.f32 %v450, %v817
    %819 = vdwg.mxu0
    %820 = vmatprep.subr.mxu0 %v224
    %821 = vmatpush1.msra.mxu0 %v223
    %822 = vmatprep.subr.mxu0 %v232
    %823 = vmatpush1.msra.mxu0 %v231
    %824 = vmatprep.subr.mxu0 %v240
    %825 = vmatpush1.msra.mxu0 %v239
    %826 = vmatprep.subr.mxu0 %v248
    %827 = vmatpush1.msra.mxu0 %v247
    %828 = vmatprep.subr.mxu0 %v256
    %829 = vmatpush1.msra.mxu0 %v255
    %830 = vmatprep.subr.mxu0 %v264
    %831 = vmatpush1.msra.mxu0 %v263
    %832 = vmatprep.subr.mxu0 %v272
    %833 = vmatpush1.msra.mxu0 %v271
    %834 = vmatprep.subr.mxu0 %v280
    %835 = vmatpush1.msra.mxu0 %v279
    %836 = vmatprep.subr.mxu0 0.0
    %837 = vmatpush1.msra.mxu0 0.0
    %838 = vmatprep.subr.mxu0 0.0
    %839 = vmatpush1.msra.mxu0 0.0
    %840 = vmatprep.subr.mxu0 0.0
    %841 = vmatpush1.msra.mxu0 0.0
    %842 = vmatprep.subr.mxu0 0.0
    %843 = vmatpush1.msra.mxu0 0.0
    %844 = vmatprep.subr.mxu0 0.0
    %845 = vmatpush1.msra.mxu0 0.0
    %846 = vmatprep.subr.mxu0 0.0
    %847 = vmatpush1.msra.mxu0 0.0
    %848 = vmatprep.subr.mxu0 0.0
    %849 = vmatpush1.msra.mxu0 0.0
    %850 = vmatprep.subr.mxu0 0.0
    %851 = vmatpush1.msra.mxu0 0.0
    %852 = vmatprep.subr.mxu0 0.0
    %853 = vmatpush1.msra.mxu0 0.0
    %854 = vmatprep.subr.mxu0 0.0
    %855 = vmatpush1.msra.mxu0 0.0
    %856 = vmatprep.subr.mxu0 0.0
    %857 = vmatpush1.msra.mxu0 0.0
    %858 = vmatprep.subr.mxu0 0.0
    %859 = vmatpush1.msra.mxu0 0.0
    %860 = vmatprep.subr.mxu0 0.0
    %861 = vmatpush1.msra.mxu0 0.0
    %862 = vmatprep.subr.mxu0 0.0
    %863 = vmatpush1.msra.mxu0 0.0
    %864 = vmatprep.subr.mxu0 0.0
    %865 = vmatpush1.msra.mxu0 0.0
    %866 = vmatprep.subr.mxu0 0.0
    %867 = vmatpush1.msra.mxu0 0.0
    %868 = vmatprep.subr.mxu0 0.0
    %869 = vmatpush1.msra.mxu0 0.0
    %870 = vmatprep.subr.mxu0 0.0
    %871 = vmatpush1.msra.mxu0 0.0
    %872 = vmatprep.subr.mxu0 0.0
    %873 = vmatpush1.msra.mxu0 0.0
    %874 = vmatprep.subr.mxu0 0.0
    %875 = vmatpush1.msra.mxu0 0.0
    %876 = vmatprep.subr.mxu0 0.0
    %877 = vmatpush1.msra.mxu0 0.0
    %878 = vmatprep.subr.mxu0 0.0
    %879 = vmatpush1.msra.mxu0 0.0
    %880 = vmatprep.subr.mxu0 0.0
    %881 = vmatpush1.msra.mxu0 0.0
    %882 = vmatprep.subr.mxu0 0.0
    %883 = vmatpush1.msra.mxu0 0.0
    %884 = vmatprep.mubr.f32.mxu0 0.0
    %885 = vmatmul.mubr.f32.gmra.mrb[0].mxu0 %v720
    %v886 = vpop.f32.mrb[0].mxu0
    %v887 = vadd.f32 %v519, %v886
    %v888 = vpop.f32.mrb[0].mxu0
    %v889 = vadd.f32 %v521, %v888
    %890 = vmatprep.mubr.f32.mxu0 0.0
    %891 = vmatmul.mubr.f32.gmra.mrb[0].mxu0 %v723
    %v892 = vpop.f32.mrb[0].mxu0
    %v893 = vadd.f32 %v525, %v892
    %v894 = vpop.f32.mrb[0].mxu0
    %v895 = vadd.f32 %v527, %v894
    %896 = vmatprep.mubr.f32.mxu0 0.0
    %897 = vmatmul.mubr.f32.gmra.mrb[0].mxu0 %v726
    %v898 = vpop.f32.mrb[0].mxu0
    %v899 = vadd.f32 %v531, %v898
    %v900 = vpop.f32.mrb[0].mxu0
    %v901 = vadd.f32 %v533, %v900
    %902 = vmatprep.mubr.f32.mxu0 0.0
    %903 = vmatmul.mubr.f32.gmra.mrb[0].mxu0 %v729
    %v904 = vpop.f32.mrb[0].mxu0
    %v905 = vadd.f32 %v537, %v904
    %v906 = vpop.f32.mrb[0].mxu0
    %v907 = vadd.f32 %v539, %v906
    %908 = vdwg.mxu0
    %909 = vmatprep.subr.mxu0 %v226
    %910 = vmatpush1.msra.mxu0 %v225
    %911 = vmatprep.subr.mxu0 %v234
    %912 = vmatpush1.msra.mxu0 %v233
    %913 = vmatprep.subr.mxu0 %v242
    %914 = vmatpush1.msra.mxu0 %v241
    %915 = vmatprep.subr.mxu0 %v250
    %916 = vmatpush1.msra.mxu0 %v249
    %917 = vmatprep.subr.mxu0 %v258
    %918 = vmatpush1.msra.mxu0 %v257
    %919 = vmatprep.subr.mxu0 %v266
    %920 = vmatpush1.msra.mxu0 %v265
    %921 = vmatprep.subr.mxu0 %v274
    %922 = vmatpush1.msra.mxu0 %v273
    %923 = vmatprep.subr.mxu0 %v282
    %924 = vmatpush1.msra.mxu0 %v281
    %925 = vmatprep.subr.mxu0 0.0
    %926 = vmatpush1.msra.mxu0 0.0
    %927 = vmatprep.subr.mxu0 0.0
    %928 = vmatpush1.msra.mxu0 0.0
    %929 = vmatprep.subr.mxu0 0.0
    %930 = vmatpush1.msra.mxu0 0.0
    %931 = vmatprep.subr.mxu0 0.0
    %932 = vmatpush1.msra.mxu0 0.0
    %933 = vmatprep.subr.mxu0 0.0
    %934 = vmatpush1.msra.mxu0 0.0
    %935 = vmatprep.subr.mxu0 0.0
    %936 = vmatpush1.msra.mxu0 0.0
    %937 = vmatprep.subr.mxu0 0.0
    %938 = vmatpush1.msra.mxu0 0.0
    %939 = vmatprep.subr.mxu0 0.0
    %940 = vmatpush1.msra.mxu0 0.0
    %941 = vmatprep.subr.mxu0 0.0
    %942 = vmatpush1.msra.mxu0 0.0
    %943 = vmatprep.subr.mxu0 0.0
    %944 = vmatpush1.msra.mxu0 0.0
    %945 = vmatprep.subr.mxu0 0.0
    %946 = vmatpush1.msra.mxu0 0.0
    %947 = vmatprep.subr.mxu0 0.0
    %948 = vmatpush1.msra.mxu0 0.0
    %949 = vmatprep.subr.mxu0 0.0
    %950 = vmatpush1.msra.mxu0 0.0
    %951 = vmatprep.subr.mxu0 0.0
    %952 = vmatpush1.msra.mxu0 0.0
    %953 = vmatprep.subr.mxu0 0.0
    %954 = vmatpush1.msra.mxu0 0.0
    %955 = vmatprep.subr.mxu0 0.0
    %956 = vmatpush1.msra.mxu0 0.0
    %957 = vmatprep.subr.mxu0 0.0
    %958 = vmatpush1.msra.mxu0 0.0
    %959 = vmatprep.subr.mxu0 0.0
    %960 = vmatpush1.msra.mxu0 0.0
    %961 = vmatprep.subr.mxu0 0.0
    %962 = vmatpush1.msra.mxu0 0.0
    %963 = vmatprep.subr.mxu0 0.0
    %964 = vmatpush1.msra.mxu0 0.0
    %965 = vmatprep.subr.mxu0 0.0
    %966 = vmatpush1.msra.mxu0 0.0
    %967 = vmatprep.subr.mxu0 0.0
    %968 = vmatpush1.msra.mxu0 0.0
    %969 = vmatprep.subr.mxu0 0.0
    %970 = vmatpush1.msra.mxu0 0.0
    %971 = vmatprep.subr.mxu0 0.0
    %972 = vmatpush1.msra.mxu0 0.0
    %973 = vmatprep.mubr.f32.mxu0 0.0
    %974 = vmatmul.mubr.f32.gmra.mrb[0].mxu0 %v720
    %v975 = vpop.f32.mrb[0].mxu0
    %v976 = vadd.f32 %v608, %v975
    %v977 = vpop.f32.mrb[0].mxu0
    %v978 = vadd.f32 %v610, %v977
    %979 = vmatprep.mubr.f32.mxu0 0.0
    %980 = vmatmul.mubr.f32.gmra.mrb[0].mxu0 %v723
    %v981 = vpop.f32.mrb[0].mxu0
    %v982 = vadd.f32 %v614, %v981
    %v983 = vpop.f32.mrb[0].mxu0
    %v984 = vadd.f32 %v616, %v983
    %985 = vmatprep.mubr.f32.mxu0 0.0
    %986 = vmatmul.mubr.f32.gmra.mrb[0].mxu0 %v726
    %v987 = vpop.f32.mrb[0].mxu0
    %v988 = vadd.f32 %v620, %v987
    %v989 = vpop.f32.mrb[0].mxu0
    %v990 = vadd.f32 %v622, %v989
    %991 = vmatprep.mubr.f32.mxu0 0.0
    %992 = vmatmul.mubr.f32.gmra.mrb[0].mxu0 %v729
    %v993 = vpop.f32.mrb[0].mxu0
    %v994 = vadd.f32 %v626, %v993
    %v995 = vpop.f32.mrb[0].mxu0
    %v996 = vadd.f32 %v628, %v995
    %997 = vdwg.mxu0
    %998 = vmatprep.subr.mxu0 %v228
    %999 = vmatpush1.msra.mxu0 %v227
    %1000 = vmatprep.subr.mxu0 %v236
    %1001 = vmatpush1.msra.mxu0 %v235
    %1002 = vmatprep.subr.mxu0 %v244
    %1003 = vmatpush1.msra.mxu0 %v243
    %1004 = vmatprep.subr.mxu0 %v252
    %1005 = vmatpush1.msra.mxu0 %v251
    %1006 = vmatprep.subr.mxu0 %v260
    %1007 = vmatpush1.msra.mxu0 %v259
    %1008 = vmatprep.subr.mxu0 %v268
    %1009 = vmatpush1.msra.mxu0 %v267
    %1010 = vmatprep.subr.mxu0 %v276
    %1011 = vmatpush1.msra.mxu0 %v275
    %1012 = vmatprep.subr.mxu0 %v284
    %1013 = vmatpush1.msra.mxu0 %v283
    %1014 = vmatprep.subr.mxu0 0.0
    %1015 = vmatpush1.msra.mxu0 0.0
    %1016 = vmatprep.subr.mxu0 0.0
    %1017 = vmatpush1.msra.mxu0 0.0
    %1018 = vmatprep.subr.mxu0 0.0
    %1019 = vmatpush1.msra.mxu0 0.0
    %1020 = vmatprep.subr.mxu0 0.0
    %1021 = vmatpush1.msra.mxu0 0.0
    %1022 = vmatprep.subr.mxu0 0.0
    %1023 = vmatpush1.msra.mxu0 0.0
    %1024 = vmatprep.subr.mxu0 0.0
    %1025 = vmatpush1.msra.mxu0 0.0
    %1026 = vmatprep.subr.mxu0 0.0
    %1027 = vmatpush1.msra.mxu0 0.0
    %1028 = vmatprep.subr.mxu0 0.0
    %1029 = vmatpush1.msra.mxu0 0.0
    %1030 = vmatprep.subr.mxu0 0.0
    %1031 = vmatpush1.msra.mxu0 0.0
    %1032 = vmatprep.subr.mxu0 0.0
    %1033 = vmatpush1.msra.mxu0 0.0
    %1034 = vmatprep.subr.mxu0 0.0
    %1035 = vmatpush1.msra.mxu0 0.0
    %1036 = vmatprep.subr.mxu0 0.0
    %1037 = vmatpush1.msra.mxu0 0.0
    %1038 = vmatprep.subr.mxu0 0.0
    %1039 = vmatpush1.msra.mxu0 0.0
    %1040 = vmatprep.subr.mxu0 0.0
    %1041 = vmatpush1.msra.mxu0 0.0
    %1042 = vmatprep.subr.mxu0 0.0
    %1043 = vmatpush1.msra.mxu0 0.0
    %1044 = vmatprep.subr.mxu0 0.0
    %1045 = vmatpush1.msra.mxu0 0.0
    %1046 = vmatprep.subr.mxu0 0.0
    %1047 = vmatpush1.msra.mxu0 0.0
    %1048 = vmatprep.subr.mxu0 0.0
    %1049 = vmatpush1.msra.mxu0 0.0
    %1050 = vmatprep.subr.mxu0 0.0
    %1051 = vmatpush1.msra.mxu0 0.0
    %1052 = vmatprep.subr.mxu0 0.0
    %1053 = vmatpush1.msra.mxu0 0.0
    %1054 = vmatprep.subr.mxu0 0.0
    %1055 = vmatpush1.msra.mxu0 0.0
    %1056 = vmatprep.subr.mxu0 0.0
    %1057 = vmatpush1.msra.mxu0 0.0
    %1058 = vmatprep.subr.mxu0 0.0
    %1059 = vmatpush1.msra.mxu0 0.0
    %1060 = vmatprep.subr.mxu0 0.0
    %1061 = vmatpush1.msra.mxu0 0.0
    %1062 = vmatprep.mubr.f32.mxu0 0.0
    %1063 = vmatmul.mubr.f32.gmra.mrb[0].mxu0 %v720
    %v1064 = vpop.f32.mrb[0].mxu0
    %v1065 = vadd.f32 %v697, %v1064
    %v1066 = vpop.f32.mrb[0].mxu0
    %v1067 = vadd.f32 %v699, %v1066
    %1068 = vmatprep.mubr.f32.mxu0 0.0
    %1069 = vmatmul.mubr.f32.gmra.mrb[0].mxu0 %v723
    %v1070 = vpop.f32.mrb[0].mxu0
    %v1071 = vadd.f32 %v703, %v1070
    %v1072 = vpop.f32.mrb[0].mxu0
    %v1073 = vadd.f32 %v705, %v1072
    %1074 = vmatprep.mubr.f32.mxu0 0.0
    %1075 = vmatmul.mubr.f32.gmra.mrb[0].mxu0 %v726
    %v1076 = vpop.f32.mrb[0].mxu0
    %v1077 = vadd.f32 %v709, %v1076
    %v1078 = vpop.f32.mrb[0].mxu0
    %v1079 = vadd.f32 %v711, %v1078
    %1080 = vmatprep.mubr.f32.mxu0 0.0
    %1081 = vmatmul.mubr.f32.gmra.mrb[0].mxu0 %v729
    %v1082 = vpop.f32.mrb[0].mxu0
    %v1083 = vadd.f32 %v715, %v1082
    %v1084 = vpop.f32.mrb[0].mxu0
    %v1085 = vadd.f32 %v717, %v1084
    %1086 = vdwg.mxu0
    %s1087 = scalar_lea.vmem [#allocation5], 1024
    %v1088 = vld [vmem:[%s1087] sm:$0xff]
    %v1089 = vld [vmem:[%s1087 + $0x8] sm:$0xff]
    %v1090 = vld [vmem:[%s1087 + $0x10] sm:$0xff]
    %v1091 = vld [vmem:[%s1087 + $0x18] sm:$0xff]
    %v1092 = vld [vmem:[%s1087 + $0x20] sm:$0xff]
    %v1093 = vld [vmem:[%s1087 + $0x28] sm:$0xff]
    %v1094 = vld [vmem:[%s1087 + $0x30] sm:$0xff]
    %v1095 = vld [vmem:[%s1087 + $0x38] sm:$0xff]
    %v1096 = vld [vmem:[%s1087 + $0x40] sm:$0xff]
    %v1097 = vld [vmem:[%s1087 + $0x48] sm:$0xff]
    %v1098 = vld [vmem:[%s1087 + $0x50] sm:$0xff]
    %v1099 = vld [vmem:[%s1087 + $0x58] sm:$0xff]
    %v1100 = vld [vmem:[%s1087 + $0x60] sm:$0xff]
    %v1101 = vld [vmem:[%s1087 + $0x68] sm:$0xff]
    %v1102 = vld [vmem:[%s1087 + $0x70] sm:$0xff]
    %v1103 = vld [vmem:[%s1087 + $0x78] sm:$0xff]
    %v1104 = vld [vmem:[%s1087 + $0x80] sm:$0xff]
    %v1105 = vld [vmem:[%s1087 + $0x88] sm:$0xff]
    %v1106 = vld [vmem:[%s1087 + $0x90] sm:$0xff]
    %v1107 = vld [vmem:[%s1087 + $0x98] sm:$0xff]
    %v1108 = vld [vmem:[%s1087 + $0xa0] sm:$0xff]
    %v1109 = vld [vmem:[%s1087 + $0xa8] sm:$0xff]
    %v1110 = vld [vmem:[%s1087 + $0xb0] sm:$0xff]
    %v1111 = vld [vmem:[%s1087 + $0xb8] sm:$0xff]
    %v1112 = vld [vmem:[%s1087 + $0xc0] sm:$0xff]
    %v1113 = vld [vmem:[%s1087 + $0xc8] sm:$0xff]
    %v1114 = vld [vmem:[%s1087 + $0xd0] sm:$0xff]
    %v1115 = vld [vmem:[%s1087 + $0xd8] sm:$0xff]
    %v1116 = vld [vmem:[%s1087 + $0xe0] sm:$0xff]
    %v1117 = vld [vmem:[%s1087 + $0xe8] sm:$0xff]
    %v1118 = vld [vmem:[%s1087 + $0xf0] sm:$0xff]
    %v1119 = vld [vmem:[%s1087 + $0xf8] sm:$0xff]
    %v1120 = vld [vmem:[%s1087 + $0x100] sm:$0xff]
    %v1121 = vld [vmem:[%s1087 + $0x108] sm:$0xff]
    %v1122 = vld [vmem:[%s1087 + $0x110] sm:$0xff]
    %v1123 = vld [vmem:[%s1087 + $0x118] sm:$0xff]
    %v1124 = vld [vmem:[%s1087 + $0x120] sm:$0xff]
    %v1125 = vld [vmem:[%s1087 + $0x128] sm:$0xff]
    %v1126 = vld [vmem:[%s1087 + $0x130] sm:$0xff]
    %v1127 = vld [vmem:[%s1087 + $0x138] sm:$0xff]
    %v1128 = vld [vmem:[%s1087 + $0x140] sm:$0xff]
    %v1129 = vld [vmem:[%s1087 + $0x148] sm:$0xff]
    %v1130 = vld [vmem:[%s1087 + $0x150] sm:$0xff]
    %v1131 = vld [vmem:[%s1087 + $0x158] sm:$0xff]
    %v1132 = vld [vmem:[%s1087 + $0x160] sm:$0xff]
    %v1133 = vld [vmem:[%s1087 + $0x168] sm:$0xff]
    %v1134 = vld [vmem:[%s1087 + $0x170] sm:$0xff]
    %v1135 = vld [vmem:[%s1087 + $0x178] sm:$0xff]
    %v1136 = vld [vmem:[%s1087 + $0x180] sm:$0xff]
    %v1137 = vld [vmem:[%s1087 + $0x188] sm:$0xff]
    %v1138 = vld [vmem:[%s1087 + $0x190] sm:$0xff]
    %v1139 = vld [vmem:[%s1087 + $0x198] sm:$0xff]
    %v1140 = vld [vmem:[%s1087 + $0x1a0] sm:$0xff]
    %v1141 = vld [vmem:[%s1087 + $0x1a8] sm:$0xff]
    %v1142 = vld [vmem:[%s1087 + $0x1b0] sm:$0xff]
    %v1143 = vld [vmem:[%s1087 + $0x1b8] sm:$0xff]
    %v1144 = vld [vmem:[%s1087 + $0x1c0] sm:$0xff]
    %v1145 = vld [vmem:[%s1087 + $0x1c8] sm:$0xff]
    %v1146 = vld [vmem:[%s1087 + $0x1d0] sm:$0xff]
    %v1147 = vld [vmem:[%s1087 + $0x1d8] sm:$0xff]
    %v1148 = vld [vmem:[%s1087 + $0x1e0] sm:$0xff]
    %v1149 = vld [vmem:[%s1087 + $0x1e8] sm:$0xff]
    %v1150 = vld [vmem:[%s1087 + $0x1f0] sm:$0xff]
    %v1151 = vld [vmem:[%s1087 + $0x1f8] sm:$0xff]
    %v1153 = vsel %vm350, %v217, 0
    %v1156 = vsel %vm350, %v218, 0
    %v1159 = vsel %vm350, %v219, 0
    %v1162 = vsel %vm350, %v220, 0
    %1164 = vmatprep.subr.mxu0 %v1089
    %1165 = vmatpush1.msra.mxu0 %v1088
    %1166 = vmatprep.subr.mxu0 %v1097
    %1167 = vmatpush1.msra.mxu0 %v1096
    %1168 = vmatprep.subr.mxu0 %v1105
    %1169 = vmatpush1.msra.mxu0 %v1104
    %1170 = vmatprep.subr.mxu0 %v1113
    %1171 = vmatpush1.msra.mxu0 %v1112
    %1172 = vmatprep.subr.mxu0 %v1121
    %1173 = vmatpush1.msra.mxu0 %v1120
    %1174 = vmatprep.subr.mxu0 %v1129
    %1175 = vmatpush1.msra.mxu0 %v1128
    %1176 = vmatprep.subr.mxu0 %v1137
    %1177 = vmatpush1.msra.mxu0 %v1136
    %1178 = vmatprep.subr.mxu0 %v1145
    %1179 = vmatpush1.msra.mxu0 %v1144
    %1180 = vmatprep.subr.mxu0 0.0
    %1181 = vmatpush1.msra.mxu0 0.0
    %1182 = vmatprep.subr.mxu0 0.0
    %1183 = vmatpush1.msra.mxu0 0.0
    %1184 = vmatprep.subr.mxu0 0.0
    %1185 = vmatpush1.msra.mxu0 0.0
    %1186 = vmatprep.subr.mxu0 0.0
    %1187 = vmatpush1.msra.mxu0 0.0
    %1188 = vmatprep.subr.mxu0 0.0
    %1189 = vmatpush1.msra.mxu0 0.0
    %1190 = vmatprep.subr.mxu0 0.0
    %1191 = vmatpush1.msra.mxu0 0.0
    %1192 = vmatprep.subr.mxu0 0.0
    %1193 = vmatpush1.msra.mxu0 0.0
    %1194 = vmatprep.subr.mxu0 0.0
    %1195 = vmatpush1.msra.mxu0 0.0
    %1196 = vmatprep.subr.mxu0 0.0
    %1197 = vmatpush1.msra.mxu0 0.0
    %1198 = vmatprep.subr.mxu0 0.0
    %1199 = vmatpush1.msra.mxu0 0.0
    %1200 = vmatprep.subr.mxu0 0.0
    %1201 = vmatpush1.msra.mxu0 0.0
    %1202 = vmatprep.subr.mxu0 0.0
    %1203 = vmatpush1.msra.mxu0 0.0
    %1204 = vmatprep.subr.mxu0 0.0
    %1205 = vmatpush1.msra.mxu0 0.0
    %1206 = vmatprep.subr.mxu0 0.0
    %1207 = vmatpush1.msra.mxu0 0.0
    %1208 = vmatprep.subr.mxu0 0.0
    %1209 = vmatpush1.msra.mxu0 0.0
    %1210 = vmatprep.subr.mxu0 0.0
    %1211 = vmatpush1.msra.mxu0 0.0
    %1212 = vmatprep.subr.mxu0 0.0
    %1213 = vmatpush1.msra.mxu0 0.0
    %1214 = vmatprep.subr.mxu0 0.0
    %1215 = vmatpush1.msra.mxu0 0.0
    %1216 = vmatprep.subr.mxu0 0.0
    %1217 = vmatpush1.msra.mxu0 0.0
    %1218 = vmatprep.subr.mxu0 0.0
    %1219 = vmatpush1.msra.mxu0 0.0
    %1220 = vmatprep.subr.mxu0 0.0
    %1221 = vmatpush1.msra.mxu0 0.0
    %1222 = vmatprep.subr.mxu0 0.0
    %1223 = vmatpush1.msra.mxu0 0.0
    %1224 = vmatprep.subr.mxu0 0.0
    %1225 = vmatpush1.msra.mxu0 0.0
    %1226 = vmatprep.subr.mxu0 0.0
    %1227 = vmatpush1.msra.mxu0 0.0
    %1228 = vmatprep.mubr.f32.mxu0 0.0
    %1229 = vmatmul.mubr.f32.gmra.mrb[0].mxu0 %v1153
    %v1230 = vpop.f32.mrb[0].mxu0
    %v1231 = vadd.f32 0.0, %v1230
    %v1232 = vpop.f32.mrb[0].mxu0
    %v1233 = vadd.f32 0.0, %v1232
    %1234 = vmatprep.mubr.f32.mxu0 0.0
    %1235 = vmatmul.mubr.f32.gmra.mrb[0].mxu0 %v1156
    %v1236 = vpop.f32.mrb[0].mxu0
    %v1237 = vadd.f32 0.0, %v1236
    %v1238 = vpop.f32.mrb[0].mxu0
    %v1239 = vadd.f32 0.0, %v1238
    %1240 = vmatprep.mubr.f32.mxu0 0.0
    %1241 = vmatmul.mubr.f32.gmra.mrb[0].mxu0 %v1159
    %v1242 = vpop.f32.mrb[0].mxu0
    %v1243 = vadd.f32 0.0, %v1242
    %v1244 = vpop.f32.mrb[0].mxu0
    %v1245 = vadd.f32 0.0, %v1244
    %1246 = vmatprep.mubr.f32.mxu0 0.0
    %1247 = vmatmul.mubr.f32.gmra.mrb[0].mxu0 %v1162
    %v1248 = vpop.f32.mrb[0].mxu0
    %v1249 = vadd.f32 0.0, %v1248
    %v1250 = vpop.f32.mrb[0].mxu0
    %v1251 = vadd.f32 0.0, %v1250
    %1252 = vdwg.mxu0
    %1253 = vmatprep.subr.mxu0 %v1091
    %1254 = vmatpush1.msra.mxu0 %v1090
    %1255 = vmatprep.subr.mxu0 %v1099
    %1256 = vmatpush1.msra.mxu0 %v1098
    %1257 = vmatprep.subr.mxu0 %v1107
    %1258 = vmatpush1.msra.mxu0 %v1106
    %1259 = vmatprep.subr.mxu0 %v1115
    %1260 = vmatpush1.msra.mxu0 %v1114
    %1261 = vmatprep.subr.mxu0 %v1123
    %1262 = vmatpush1.msra.mxu0 %v1122
    %1263 = vmatprep.subr.mxu0 %v1131
    %1264 = vmatpush1.msra.mxu0 %v1130
    %1265 = vmatprep.subr.mxu0 %v1139
    %1266 = vmatpush1.msra.mxu0 %v1138
    %1267 = vmatprep.subr.mxu0 %v1147
    %1268 = vmatpush1.msra.mxu0 %v1146
    %1269 = vmatprep.subr.mxu0 0.0
    %1270 = vmatpush1.msra.mxu0 0.0
    %1271 = vmatprep.subr.mxu0 0.0
    %1272 = vmatpush1.msra.mxu0 0.0
    %1273 = vmatprep.subr.mxu0 0.0
    %1274 = vmatpush1.msra.mxu0 0.0
    %1275 = vmatprep.subr.mxu0 0.0
    %1276 = vmatpush1.msra.mxu0 0.0
    %1277 = vmatprep.subr.mxu0 0.0
    %1278 = vmatpush1.msra.mxu0 0.0
    %1279 = vmatprep.subr.mxu0 0.0
    %1280 = vmatpush1.msra.mxu0 0.0
    %1281 = vmatprep.subr.mxu0 0.0
    %1282 = vmatpush1.msra.mxu0 0.0
    %1283 = vmatprep.subr.mxu0 0.0
    %1284 = vmatpush1.msra.mxu0 0.0
    %1285 = vmatprep.subr.mxu0 0.0
    %1286 = vmatpush1.msra.mxu0 0.0
    %1287 = vmatprep.subr.mxu0 0.0
    %1288 = vmatpush1.msra.mxu0 0.0
    %1289 = vmatprep.subr.mxu0 0.0
    %1290 = vmatpush1.msra.mxu0 0.0
    %1291 = vmatprep.subr.mxu0 0.0
    %1292 = vmatpush1.msra.mxu0 0.0
    %1293 = vmatprep.subr.mxu0 0.0
    %1294 = vmatpush1.msra.mxu0 0.0
    %1295 = vmatprep.subr.mxu0 0.0
    %1296 = vmatpush1.msra.mxu0 0.0
    %1297 = vmatprep.subr.mxu0 0.0
    %1298 = vmatpush1.msra.mxu0 0.0
    %1299 = vmatprep.subr.mxu0 0.0
    %1300 = vmatpush1.msra.mxu0 0.0
    %1301 = vmatprep.subr.mxu0 0.0
    %1302 = vmatpush1.msra.mxu0 0.0
    %1303 = vmatprep.subr.mxu0 0.0
    %1304 = vmatpush1.msra.mxu0 0.0
    %1305 = vmatprep.subr.mxu0 0.0
    %1306 = vmatpush1.msra.mxu0 0.0
    %1307 = vmatprep.subr.mxu0 0.0
    %1308 = vmatpush1.msra.mxu0 0.0
    %1309 = vmatprep.subr.mxu0 0.0
    %1310 = vmatpush1.msra.mxu0 0.0
    %1311 = vmatprep.subr.mxu0 0.0
    %1312 = vmatpush1.msra.mxu0 0.0
    %1313 = vmatprep.subr.mxu0 0.0
    %1314 = vmatpush1.msra.mxu0 0.0
    %1315 = vmatprep.subr.mxu0 0.0
    %1316 = vmatpush1.msra.mxu0 0.0
    %1317 = vmatprep.mubr.f32.mxu0 0.0
    %1318 = vmatmul.mubr.f32.gmra.mrb[0].mxu0 %v1153
    %v1319 = vpop.f32.mrb[0].mxu0
    %v1320 = vadd.f32 0.0, %v1319
    %v1321 = vpop.f32.mrb[0].mxu0
    %v1322 = vadd.f32 0.0, %v1321
    %1323 = vmatprep.mubr.f32.mxu0 0.0
    %1324 = vmatmul.mubr.f32.gmra.mrb[0].mxu0 %v1156
    %v1325 = vpop.f32.mrb[0].mxu0
    %v1326 = vadd.f32 0.0, %v1325
    %v1327 = vpop.f32.mrb[0].mxu0
    %v1328 = vadd.f32 0.0, %v1327
    %1329 = vmatprep.mubr.f32.mxu0 0.0
    %1330 = vmatmul.mubr.f32.gmra.mrb[0].mxu0 %v1159
    %v1331 = vpop.f32.mrb[0].mxu0
    %v1332 = vadd.f32 0.0, %v1331
    %v1333 = vpop.f32.mrb[0].mxu0
    %v1334 = vadd.f32 0.0, %v1333
    %1335 = vmatprep.mubr.f32.mxu0 0.0
    %1336 = vmatmul.mubr.f32.gmra.mrb[0].mxu0 %v1162
    %v1337 = vpop.f32.mrb[0].mxu0
    %v1338 = vadd.f32 0.0, %v1337
    %v1339 = vpop.f32.mrb[0].mxu0
    %v1340 = vadd.f32 0.0, %v1339
    %1341 = vdwg.mxu0
    %1342 = vmatprep.subr.mxu0 %v1093
    %1343 = vmatpush1.msra.mxu0 %v1092
    %1344 = vmatprep.subr.mxu0 %v1101
    %1345 = vmatpush1.msra.mxu0 %v1100
    %1346 = vmatprep.subr.mxu0 %v1109
    %1347 = vmatpush1.msra.mxu0 %v1108
    %1348 = vmatprep.subr.mxu0 %v1117
    %1349 = vmatpush1.msra.mxu0 %v1116
    %1350 = vmatprep.subr.mxu0 %v1125
    %1351 = vmatpush1.msra.mxu0 %v1124
    %1352 = vmatprep.subr.mxu0 %v1133
    %1353 = vmatpush1.msra.mxu0 %v1132
    %1354 = vmatprep.subr.mxu0 %v1141
    %1355 = vmatpush1.msra.mxu0 %v1140
    %1356 = vmatprep.subr.mxu0 %v1149
    %1357 = vmatpush1.msra.mxu0 %v1148
    %1358 = vmatprep.subr.mxu0 0.0
    %1359 = vmatpush1.msra.mxu0 0.0
    %1360 = vmatprep.subr.mxu0 0.0
    %1361 = vmatpush1.msra.mxu0 0.0
    %1362 = vmatprep.subr.mxu0 0.0
    %1363 = vmatpush1.msra.mxu0 0.0
    %1364 = vmatprep.subr.mxu0 0.0
    %1365 = vmatpush1.msra.mxu0 0.0
    %1366 = vmatprep.subr.mxu0 0.0
    %1367 = vmatpush1.msra.mxu0 0.0
    %1368 = vmatprep.subr.mxu0 0.0
    %1369 = vmatpush1.msra.mxu0 0.0
    %1370 = vmatprep.subr.mxu0 0.0
    %1371 = vmatpush1.msra.mxu0 0.0
    %1372 = vmatprep.subr.mxu0 0.0
    %1373 = vmatpush1.msra.mxu0 0.0
    %1374 = vmatprep.subr.mxu0 0.0
    %1375 = vmatpush1.msra.mxu0 0.0
    %1376 = vmatprep.subr.mxu0 0.0
    %1377 = vmatpush1.msra.mxu0 0.0
    %1378 = vmatprep.subr.mxu0 0.0
    %1379 = vmatpush1.msra.mxu0 0.0
    %1380 = vmatprep.subr.mxu0 0.0
    %1381 = vmatpush1.msra.mxu0 0.0
    %1382 = vmatprep.subr.mxu0 0.0
    %1383 = vmatpush1.msra.mxu0 0.0
    %1384 = vmatprep.subr.mxu0 0.0
    %1385 = vmatpush1.msra.mxu0 0.0
    %1386 = vmatprep.subr.mxu0 0.0
    %1387 = vmatpush1.msra.mxu0 0.0
    %1388 = vmatprep.subr.mxu0 0.0
    %1389 = vmatpush1.msra.mxu0 0.0
    %1390 = vmatprep.subr.mxu0 0.0
    %1391 = vmatpush1.msra.mxu0 0.0
    %1392 = vmatprep.subr.mxu0 0.0
    %1393 = vmatpush1.msra.mxu0 0.0
    %1394 = vmatprep.subr.mxu0 0.0
    %1395 = vmatpush1.msra.mxu0 0.0
    %1396 = vmatprep.subr.mxu0 0.0
    %1397 = vmatpush1.msra.mxu0 0.0
    %1398 = vmatprep.subr.mxu0 0.0
    %1399 = vmatpush1.msra.mxu0 0.0
    %1400 = vmatprep.subr.mxu0 0.0
    %1401 = vmatpush1.msra.mxu0 0.0
    %1402 = vmatprep.subr.mxu0 0.0
    %1403 = vmatpush1.msra.mxu0 0.0
    %1404 = vmatprep.subr.mxu0 0.0
    %1405 = vmatpush1.msra.mxu0 0.0
    %1406 = vmatprep.mubr.f32.mxu0 0.0
    %1407 = vmatmul.mubr.f32.gmra.mrb[0].mxu0 %v1153
    %v1408 = vpop.f32.mrb[0].mxu0
    %v1409 = vadd.f32 0.0, %v1408
    %v1410 = vpop.f32.mrb[0].mxu0
    %v1411 = vadd.f32 0.0, %v1410
    %1412 = vmatprep.mubr.f32.mxu0 0.0
    %1413 = vmatmul.mubr.f32.gmra.mrb[0].mxu0 %v1156
    %v1414 = vpop.f32.mrb[0].mxu0
    %v1415 = vadd.f32 0.0, %v1414
    %v1416 = vpop.f32.mrb[0].mxu0
    %v1417 = vadd.f32 0.0, %v1416
    %1418 = vmatprep.mubr.f32.mxu0 0.0
    %1419 = vmatmul.mubr.f32.gmra.mrb[0].mxu0 %v1159
    %v1420 = vpop.f32.mrb[0].mxu0
    %v1421 = vadd.f32 0.0, %v1420
    %v1422 = vpop.f32.mrb[0].mxu0
    %v1423 = vadd.f32 0.0, %v1422
    %1424 = vmatprep.mubr.f32.mxu0 0.0
    %1425 = vmatmul.mubr.f32.gmra.mrb[0].mxu0 %v1162
    %v1426 = vpop.f32.mrb[0].mxu0
    %v1427 = vadd.f32 0.0, %v1426
    %v1428 = vpop.f32.mrb[0].mxu0
    %v1429 = vadd.f32 0.0, %v1428
    %1430 = vdwg.mxu0
    %1431 = vmatprep.subr.mxu0 %v1095
    %1432 = vmatpush1.msra.mxu0 %v1094
    %1433 = vmatprep.subr.mxu0 %v1103
    %1434 = vmatpush1.msra.mxu0 %v1102
    %1435 = vmatprep.subr.mxu0 %v1111
    %1436 = vmatpush1.msra.mxu0 %v1110
    %1437 = vmatprep.subr.mxu0 %v1119
    %1438 = vmatpush1.msra.mxu0 %v1118
    %1439 = vmatprep.subr.mxu0 %v1127
    %1440 = vmatpush1.msra.mxu0 %v1126
    %1441 = vmatprep.subr.mxu0 %v1135
    %1442 = vmatpush1.msra.mxu0 %v1134
    %1443 = vmatprep.subr.mxu0 %v1143
    %1444 = vmatpush1.msra.mxu0 %v1142
    %1445 = vmatprep.subr.mxu0 %v1151
    %1446 = vmatpush1.msra.mxu0 %v1150
    %1447 = vmatprep.subr.mxu0 0.0
    %1448 = vmatpush1.msra.mxu0 0.0
    %1449 = vmatprep.subr.mxu0 0.0
    %1450 = vmatpush1.msra.mxu0 0.0
    %1451 = vmatprep.subr.mxu0 0.0
    %1452 = vmatpush1.msra.mxu0 0.0
    %1453 = vmatprep.subr.mxu0 0.0
    %1454 = vmatpush1.msra.mxu0 0.0
    %1455 = vmatprep.subr.mxu0 0.0
    %1456 = vmatpush1.msra.mxu0 0.0
    %1457 = vmatprep.subr.mxu0 0.0
    %1458 = vmatpush1.msra.mxu0 0.0
    %1459 = vmatprep.subr.mxu0 0.0
    %1460 = vmatpush1.msra.mxu0 0.0
    %1461 = vmatprep.subr.mxu0 0.0
    %1462 = vmatpush1.msra.mxu0 0.0
    %1463 = vmatprep.subr.mxu0 0.0
    %1464 = vmatpush1.msra.mxu0 0.0
    %1465 = vmatprep.subr.mxu0 0.0
    %1466 = vmatpush1.msra.mxu0 0.0
    %1467 = vmatprep.subr.mxu0 0.0
    %1468 = vmatpush1.msra.mxu0 0.0
    %1469 = vmatprep.subr.mxu0 0.0
    %1470 = vmatpush1.msra.mxu0 0.0
    %1471 = vmatprep.subr.mxu0 0.0
    %1472 = vmatpush1.msra.mxu0 0.0
    %1473 = vmatprep.subr.mxu0 0.0
    %1474 = vmatpush1.msra.mxu0 0.0
    %1475 = vmatprep.subr.mxu0 0.0
    %1476 = vmatpush1.msra.mxu0 0.0
    %1477 = vmatprep.subr.mxu0 0.0
    %1478 = vmatpush1.msra.mxu0 0.0
    %1479 = vmatprep.subr.mxu0 0.0
    %1480 = vmatpush1.msra.mxu0 0.0
    %1481 = vmatprep.subr.mxu0 0.0
    %1482 = vmatpush1.msra.mxu0 0.0
    %1483 = vmatprep.subr.mxu0 0.0
    %1484 = vmatpush1.msra.mxu0 0.0
    %1485 = vmatprep.subr.mxu0 0.0
    %1486 = vmatpush1.msra.mxu0 0.0
    %1487 = vmatprep.subr.mxu0 0.0
    %1488 = vmatpush1.msra.mxu0 0.0
    %1489 = vmatprep.subr.mxu0 0.0
    %1490 = vmatpush1.msra.mxu0 0.0
    %1491 = vmatprep.subr.mxu0 0.0
    %1492 = vmatpush1.msra.mxu0 0.0
    %1493 = vmatprep.subr.mxu0 0.0
    %1494 = vmatpush1.msra.mxu0 0.0
    %1495 = vmatprep.mubr.f32.mxu0 0.0
    %1496 = vmatmul.mubr.f32.gmra.mrb[0].mxu0 %v1153
    %v1497 = vpop.f32.mrb[0].mxu0
    %v1498 = vadd.f32 0.0, %v1497
    %v1499 = vpop.f32.mrb[0].mxu0
    %v1500 = vadd.f32 0.0, %v1499
    %1501 = vmatprep.mubr.f32.mxu0 0.0
    %1502 = vmatmul.mubr.f32.gmra.mrb[0].mxu0 %v1156
    %v1503 = vpop.f32.mrb[0].mxu0
    %v1504 = vadd.f32 0.0, %v1503
    %v1505 = vpop.f32.mrb[0].mxu0
    %v1506 = vadd.f32 0.0, %v1505
    %1507 = vmatprep.mubr.f32.mxu0 0.0
    %1508 = vmatmul.mubr.f32.gmra.mrb[0].mxu0 %v1159
    %v1509 = vpop.f32.mrb[0].mxu0
    %v1510 = vadd.f32 0.0, %v1509
    %v1511 = vpop.f32.mrb[0].mxu0
    %v1512 = vadd.f32 0.0, %v1511
    %1513 = vmatprep.mubr.f32.mxu0 0.0
    %1514 = vmatmul.mubr.f32.gmra.mrb[0].mxu0 %v1162
    %v1515 = vpop.f32.mrb[0].mxu0
    %v1516 = vadd.f32 0.0, %v1515
    %v1517 = vpop.f32.mrb[0].mxu0
    %v1518 = vadd.f32 0.0, %v1517
    %1519 = vdwg.mxu0
    %v1520 = vadd.f32 %v798, %v1231
    %v1521 = vadd.f32 %v800, %v1233
    %v1522 = vadd.f32 %v887, %v1320
    %v1523 = vadd.f32 %v889, %v1322
    %v1524 = vadd.f32 %v976, %v1409
    %v1525 = vadd.f32 %v978, %v1411
    %v1526 = vadd.f32 %v1065, %v1498
    %v1527 = vadd.f32 %v1067, %v1500
    %v1528 = vadd.f32 %v804, %v1237
    %v1529 = vadd.f32 %v806, %v1239
    %v1530 = vadd.f32 %v893, %v1326
    %v1531 = vadd.f32 %v895, %v1328
    %v1532 = vadd.f32 %v982, %v1415
    %v1533 = vadd.f32 %v984, %v1417
    %v1534 = vadd.f32 %v1071, %v1504
    %v1535 = vadd.f32 %v1073, %v1506
    %v1536 = vadd.f32 %v810, %v1243
    %v1537 = vadd.f32 %v812, %v1245
    %v1538 = vadd.f32 %v899, %v1332
    %v1539 = vadd.f32 %v901, %v1334
    %v1540 = vadd.f32 %v988, %v1421
    %v1541 = vadd.f32 %v990, %v1423
    %v1542 = vadd.f32 %v1077, %v1510
    %v1543 = vadd.f32 %v1079, %v1512
    %v1544 = vadd.f32 %v816, %v1249
    %v1545 = vadd.f32 %v818, %v1251
    %v1546 = vadd.f32 %v905, %v1338
    %v1547 = vadd.f32 %v907, %v1340
    %v1548 = vadd.f32 %v994, %v1427
    %v1549 = vadd.f32 %v996, %v1429
    %v1550 = vadd.f32 %v1083, %v1516
    %v1551 = vadd.f32 %v1085, %v1518
    %v1552 = vld [vmem:[#allocation7] sm:$0x1]
    %v1553 = vld [vmem:[#allocation8] sm:$0x1]
    %v1554 = vadd.f32 %v1520, %v1528
    %v1555 = vadd.f32 %v1554, %v1536
    %v1556 = vadd.f32 %v1555, %v1544
    %v1557 = vrot.slane %v1556, 4
    %v1558 = vadd.f32 %v1556, %v1557
    %v1559 = vrot.slane %v1558, 2
    %v1560 = vadd.f32 %v1558, %v1559
    %v1561 = vrot.slane %v1560, 1
    %v1562 = vadd.f32 %v1560, %v1561
    %v1563 = vadd.f32 %v1521, %v1529
    %v1564 = vadd.f32 %v1563, %v1537
    %v1565 = vadd.f32 %v1564, %v1545
    %v1566 = vrot.slane %v1565, 4
    %v1567 = vadd.f32 %v1565, %v1566
    %v1568 = vrot.slane %v1567, 2
    %v1569 = vadd.f32 %v1567, %v1568
    %v1570 = vrot.slane %v1569, 1
    %v1571 = vadd.f32 %v1569, %v1570
    %v1572 = vadd.f32 %v1522, %v1530
    %v1573 = vadd.f32 %v1572, %v1538
    %v1574 = vadd.f32 %v1573, %v1546
    %v1575 = vrot.slane %v1574, 4
    %v1576 = vadd.f32 %v1574, %v1575
    %v1577 = vrot.slane %v1576, 2
    %v1578 = vadd.f32 %v1576, %v1577
    %v1579 = vrot.slane %v1578, 1
    %v1580 = vadd.f32 %v1578, %v1579
    %v1581 = vadd.f32 %v1523, %v1531
    %v1582 = vadd.f32 %v1581, %v1539
    %v1583 = vadd.f32 %v1582, %v1547
    %v1584 = vrot.slane %v1583, 4
    %v1585 = vadd.f32 %v1583, %v1584
    %v1586 = vrot.slane %v1585, 2
    %v1587 = vadd.f32 %v1585, %v1586
    %v1588 = vrot.slane %v1587, 1
    %v1589 = vadd.f32 %v1587, %v1588
    %v1590 = vadd.f32 %v1524, %v1532
    %v1591 = vadd.f32 %v1590, %v1540
    %v1592 = vadd.f32 %v1591, %v1548
    %v1593 = vrot.slane %v1592, 4
    %v1594 = vadd.f32 %v1592, %v1593
    %v1595 = vrot.slane %v1594, 2
    %v1596 = vadd.f32 %v1594, %v1595
    %v1597 = vrot.slane %v1596, 1
    %v1598 = vadd.f32 %v1596, %v1597
    %v1599 = vadd.f32 %v1525, %v1533
    %v1600 = vadd.f32 %v1599, %v1541
    %v1601 = vadd.f32 %v1600, %v1549
    %v1602 = vrot.slane %v1601, 4
    %v1603 = vadd.f32 %v1601, %v1602
    %v1604 = vrot.slane %v1603, 2
    %v1605 = vadd.f32 %v1603, %v1604
    %v1606 = vrot.slane %v1605, 1
    %v1607 = vadd.f32 %v1605, %v1606
    %v1608 = vadd.f32 %v1526, %v1534
    %v1609 = vadd.f32 %v1608, %v1542
    %v1610 = vadd.f32 %v1609, %v1550
    %v1611 = vrot.slane %v1610, 4
    %v1612 = vadd.f32 %v1610, %v1611
    %v1613 = vrot.slane %v1612, 2
    %v1614 = vadd.f32 %v1612, %v1613
    %v1615 = vrot.slane %v1614, 1
    %v1616 = vadd.f32 %v1614, %v1615
    %v1617 = vadd.f32 %v1527, %v1535
    %v1618 = vadd.f32 %v1617, %v1543
    %v1619 = vadd.f32 %v1618, %v1551
    %v1620 = vrot.slane %v1619, 4
    %v1621 = vadd.f32 %v1619, %v1620
    %v1622 = vrot.slane %v1621, 2
    %v1623 = vadd.f32 %v1621, %v1622
    %v1624 = vrot.slane %v1623, 1
    %v1625 = vadd.f32 %v1623, %v1624
    %v1626 = vmul.f32 %v1520, %v1520
    %v1627 = vmul.f32 %v1521, %v1521
    %v1628 = vmul.f32 %v1522, %v1522
    %v1629 = vmul.f32 %v1523, %v1523
    %v1630 = vmul.f32 %v1524, %v1524
    %v1631 = vmul.f32 %v1525, %v1525
    %v1632 = vmul.f32 %v1526, %v1526
    %v1633 = vmul.f32 %v1527, %v1527
    %v1634 = vmul.f32 %v1528, %v1528
    %v1635 = vmul.f32 %v1529, %v1529
    %v1636 = vmul.f32 %v1530, %v1530
    %v1637 = vmul.f32 %v1531, %v1531
    %v1638 = vmul.f32 %v1532, %v1532
    %v1639 = vmul.f32 %v1533, %v1533
    %v1640 = vmul.f32 %v1534, %v1534
    %v1641 = vmul.f32 %v1535, %v1535
    %v1642 = vmul.f32 %v1536, %v1536
    %v1643 = vmul.f32 %v1537, %v1537
    %v1644 = vmul.f32 %v1538, %v1538
    %v1645 = vmul.f32 %v1539, %v1539
    %v1646 = vmul.f32 %v1540, %v1540
    %v1647 = vmul.f32 %v1541, %v1541
    %v1648 = vmul.f32 %v1542, %v1542
    %v1649 = vmul.f32 %v1543, %v1543
    %v1650 = vmul.f32 %v1544, %v1544
    %v1651 = vmul.f32 %v1545, %v1545
    %v1652 = vmul.f32 %v1546, %v1546
    %v1653 = vmul.f32 %v1547, %v1547
    %v1654 = vmul.f32 %v1548, %v1548
    %v1655 = vmul.f32 %v1549, %v1549
    %v1656 = vmul.f32 %v1550, %v1550
    %v1657 = vmul.f32 %v1551, %v1551
    %v1658 = vadd.f32 %v1626, %v1634
    %v1659 = vadd.f32 %v1658, %v1642
    %v1660 = vadd.f32 %v1659, %v1650
    %v1661 = vrot.slane %v1660, 4
    %v1662 = vadd.f32 %v1660, %v1661
    %v1663 = vrot.slane %v1662, 2
    %v1664 = vadd.f32 %v1662, %v1663
    %v1665 = vrot.slane %v1664, 1
    %v1666 = vadd.f32 %v1664, %v1665
    %v1667 = vadd.f32 %v1627, %v1635
    %v1668 = vadd.f32 %v1667, %v1643
    %v1669 = vadd.f32 %v1668, %v1651
    %v1670 = vrot.slane %v1669, 4
    %v1671 = vadd.f32 %v1669, %v1670
    %v1672 = vrot.slane %v1671, 2
    %v1673 = vadd.f32 %v1671, %v1672
    %v1674 = vrot.slane %v1673, 1
    %v1675 = vadd.f32 %v1673, %v1674
    %v1676 = vadd.f32 %v1628, %v1636
    %v1677 = vadd.f32 %v1676, %v1644
    %v1678 = vadd.f32 %v1677, %v1652
    %v1679 = vrot.slane %v1678, 4
    %v1680 = vadd.f32 %v1678, %v1679
    %v1681 = vrot.slane %v1680, 2
    %v1682 = vadd.f32 %v1680, %v1681
    %v1683 = vrot.slane %v1682, 1
    %v1684 = vadd.f32 %v1682, %v1683
    %v1685 = vadd.f32 %v1629, %v1637
    %v1686 = vadd.f32 %v1685, %v1645
    %v1687 = vadd.f32 %v1686, %v1653
    %v1688 = vrot.slane %v1687, 4
    %v1689 = vadd.f32 %v1687, %v1688
    %v1690 = vrot.slane %v1689, 2
    %v1691 = vadd.f32 %v1689, %v1690
    %v1692 = vrot.slane %v1691, 1
    %v1693 = vadd.f32 %v1691, %v1692
    %v1694 = vadd.f32 %v1630, %v1638
    %v1695 = vadd.f32 %v1694, %v1646
    %v1696 = vadd.f32 %v1695, %v1654
    %v1697 = vrot.slane %v1696, 4
    %v1698 = vadd.f32 %v1696, %v1697
    %v1699 = vrot.slane %v1698, 2
    %v1700 = vadd.f32 %v1698, %v1699
    %v1701 = vrot.slane %v1700, 1
    %v1702 = vadd.f32 %v1700, %v1701
    %v1703 = vadd.f32 %v1631, %v1639
    %v1704 = vadd.f32 %v1703, %v1647
    %v1705 = vadd.f32 %v1704, %v1655
    %v1706 = vrot.slane %v1705, 4
    %v1707 = vadd.f32 %v1705, %v1706
    %v1708 = vrot.slane %v1707, 2
    %v1709 = vadd.f32 %v1707, %v1708
    %v1710 = vrot.slane %v1709, 1
    %v1711 = vadd.f32 %v1709, %v1710
    %v1712 = vadd.f32 %v1632, %v1640
    %v1713 = vadd.f32 %v1712, %v1648
    %v1714 = vadd.f32 %v1713, %v1656
    %v1715 = vrot.slane %v1714, 4
    %v1716 = vadd.f32 %v1714, %v1715
    %v1717 = vrot.slane %v1716, 2
    %v1718 = vadd.f32 %v1716, %v1717
    %v1719 = vrot.slane %v1718, 1
    %v1720 = vadd.f32 %v1718, %v1719
    %v1721 = vadd.f32 %v1633, %v1641
    %v1722 = vadd.f32 %v1721, %v1649
    %v1723 = vadd.f32 %v1722, %v1657
    %v1724 = vrot.slane %v1723, 4
    %v1725 = vadd.f32 %v1723, %v1724
    %v1726 = vrot.slane %v1725, 2
    %v1727 = vadd.f32 %v1725, %v1726
    %v1728 = vrot.slane %v1727, 1
    %v1729 = vadd.f32 %v1727, %v1728
    %1731 = vrot.lane.b32.xlu0 %v1562, 64
    %v1732 = vpop.permute.xlu0 %1731
    %v1734 = vadd.f32 %v1562, %v1732
    %1736 = vrot.lane.b32.xlu0 %v1666, 64
    %v1737 = vpop.permute.xlu0 %1736
    %v1739 = vadd.f32 %v1666, %v1737
    %v1740 = vadd.f32 %v1734, %v1571
    %v1741 = vadd.f32 %v1739, %v1675
    %1743 = vrot.lane.b32.xlu0 %v1571, 64
    %v1744 = vpop.permute.xlu0 %1743
    %v1746 = vadd.f32 %v1740, %v1744
    %1748 = vrot.lane.b32.xlu0 %v1675, 64
    %v1749 = vpop.permute.xlu0 %1748
    %v1751 = vadd.f32 %v1741, %v1749
    %v1752 = vadd.f32 %v1746, %v1580
    %v1753 = vadd.f32 %v1751, %v1684
    %1755 = vrot.lane.b32.xlu0 %v1580, 64
    %v1756 = vpop.permute.xlu0 %1755
    %v1758 = vadd.f32 %v1752, %v1756
    %1760 = vrot.lane.b32.xlu0 %v1684, 64
    %v1761 = vpop.permute.xlu0 %1760
    %v1763 = vadd.f32 %v1753, %v1761
    %v1764 = vadd.f32 %v1758, %v1589
    %v1765 = vadd.f32 %v1763, %v1693
    %1767 = vrot.lane.b32.xlu0 %v1589, 64
    %v1768 = vpop.permute.xlu0 %1767
    %v1770 = vadd.f32 %v1764, %v1768
    %1772 = vrot.lane.b32.xlu0 %v1693, 64
    %v1773 = vpop.permute.xlu0 %1772
    %v1775 = vadd.f32 %v1765, %v1773
    %v1776 = vadd.f32 %v1770, %v1598
    %v1777 = vadd.f32 %v1775, %v1702
    %1779 = vrot.lane.b32.xlu0 %v1598, 64
    %v1780 = vpop.permute.xlu0 %1779
    %v1782 = vadd.f32 %v1776, %v1780
    %1784 = vrot.lane.b32.xlu0 %v1702, 64
    %v1785 = vpop.permute.xlu0 %1784
    %v1787 = vadd.f32 %v1777, %v1785
    %v1788 = vadd.f32 %v1782, %v1607
    %v1789 = vadd.f32 %v1787, %v1711
    %1791 = vrot.lane.b32.xlu0 %v1607, 64
    %v1792 = vpop.permute.xlu0 %1791
    %v1794 = vadd.f32 %v1788, %v1792
    %1796 = vrot.lane.b32.xlu0 %v1711, 64
    %v1797 = vpop.permute.xlu0 %1796
    %v1799 = vadd.f32 %v1789, %v1797
    %v1800 = vadd.f32 %v1794, %v1616
    %v1801 = vadd.f32 %v1799, %v1720
    %1803 = vrot.lane.b32.xlu0 %v1616, 64
    %v1804 = vpop.permute.xlu0 %1803
    %v1806 = vadd.f32 %v1800, %v1804
    %1808 = vrot.lane.b32.xlu0 %v1720, 64
    %v1809 = vpop.permute.xlu0 %1808
    %v1811 = vadd.f32 %v1801, %v1809
    %v1812 = vadd.f32 %v1806, %v1625
    %v1813 = vadd.f32 %v1811, %v1729
    %1815 = vrot.lane.b32.xlu0 %v1625, 64
    %v1816 = vpop.permute.xlu0 %1815
    %v1818 = vadd.f32 %v1812, %v1816
    %1820 = vrot.lane.b32.xlu0 %v1729, 64
    %v1821 = vpop.permute.xlu0 %1820
    %v1823 = vadd.f32 %v1813, %v1821
    %v1824 = vmul.f32 %v1818, 0.001953125
    %v1825 = vmul.f32 %v1823, 0.001953125
    %v1826 = vmul.f32 %v1824, %v1824
    %v1827 = vsub.f32 %v1825, %v1826
    %v1828 = vadd.f32 %v1827, 1e-05
    %v1829 = vrsqrt.pop %v1828
    %v1830 = vmul.f32 %v1552, %v1829
    %v1831 = vmul.f32 %v1824, %v1830
    %v1832 = vsub.f32 %v1553, %v1831
    %v1834 = vlaneseq
    %v1835 = vshrl.u32 %v1834, 7
    %v1836 = vsub.s32 0, %v1835
    %v1837 = vrot.slane %v1830, %v1836
    %1838 = vrot.lane.b32.xlu0 %v1837, 64
    %v1839 = vpop.permute.xlu0 %1838
    %v1841 = vsel %vm350, %v1830, %v1839
    %v1843 = vlaneseq
    %v1844 = vshrl.u32 %v1843, 7
    %v1845 = vsub.s32 0, %v1844
    %v1846 = vrot.slane %v1832, %v1845
    %1847 = vrot.lane.b32.xlu0 %v1846, 64
    %v1848 = vpop.permute.xlu0 %1847
    %v1850 = vsel %vm350, %v1832, %v1848
    %v1851 = vlaneseq
    %v1852 = vshrl.u32 %v1851, 7
    %v1853 = vsub.s32 0, %v1852
    %v1854 = vrot.slane %v1841, %v1853
    %v1855 = vmul.f32 %v1520, %v1854
    %v1856 = vmul.f32 %v1521, %v1854
    %v1857 = vmul.f32 %v1522, %v1854
    %v1858 = vmul.f32 %v1523, %v1854
    %v1859 = vmul.f32 %v1524, %v1854
    %v1860 = vmul.f32 %v1525, %v1854
    %v1861 = vmul.f32 %v1526, %v1854
    %v1862 = vmul.f32 %v1527, %v1854
    %v1863 = vmul.f32 %v1528, %v1854
    %v1864 = vmul.f32 %v1529, %v1854
    %v1865 = vmul.f32 %v1530, %v1854
    %v1866 = vmul.f32 %v1531, %v1854
    %v1867 = vmul.f32 %v1532, %v1854
    %v1868 = vmul.f32 %v1533, %v1854
    %v1869 = vmul.f32 %v1534, %v1854
    %v1870 = vmul.f32 %v1535, %v1854
    %v1871 = vmul.f32 %v1536, %v1854
    %v1872 = vmul.f32 %v1537, %v1854
    %v1873 = vmul.f32 %v1538, %v1854
    %v1874 = vmul.f32 %v1539, %v1854
    %v1875 = vmul.f32 %v1540, %v1854
    %v1876 = vmul.f32 %v1541, %v1854
    %v1877 = vmul.f32 %v1542, %v1854
    %v1878 = vmul.f32 %v1543, %v1854
    %v1879 = vmul.f32 %v1544, %v1854
    %v1880 = vmul.f32 %v1545, %v1854
    %v1881 = vmul.f32 %v1546, %v1854
    %v1882 = vmul.f32 %v1547, %v1854
    %v1883 = vmul.f32 %v1548, %v1854
    %v1884 = vmul.f32 %v1549, %v1854
    %v1885 = vmul.f32 %v1550, %v1854
    %v1886 = vmul.f32 %v1551, %v1854
    %v1887 = vlaneseq
    %v1888 = vshrl.u32 %v1887, 7
    %v1889 = vsub.s32 0, %v1888
    %v1890 = vrot.slane %v1850, %v1889
    %v1891 = vadd.f32 %v1855, %v1890
    %v1892 = vadd.f32 %v1856, %v1890
    %v1893 = vadd.f32 %v1857, %v1890
    %v1894 = vadd.f32 %v1858, %v1890
    %v1895 = vadd.f32 %v1859, %v1890
    %v1896 = vadd.f32 %v1860, %v1890
    %v1897 = vadd.f32 %v1861, %v1890
    %v1898 = vadd.f32 %v1862, %v1890
    %v1899 = vadd.f32 %v1863, %v1890
    %v1900 = vadd.f32 %v1864, %v1890
    %v1901 = vadd.f32 %v1865, %v1890
    %v1902 = vadd.f32 %v1866, %v1890
    %v1903 = vadd.f32 %v1867, %v1890
    %v1904 = vadd.f32 %v1868, %v1890
    %v1905 = vadd.f32 %v1869, %v1890
    %v1906 = vadd.f32 %v1870, %v1890
    %v1907 = vadd.f32 %v1871, %v1890
    %v1908 = vadd.f32 %v1872, %v1890
    %v1909 = vadd.f32 %v1873, %v1890
    %v1910 = vadd.f32 %v1874, %v1890
    %v1911 = vadd.f32 %v1875, %v1890
    %v1912 = vadd.f32 %v1876, %v1890
    %v1913 = vadd.f32 %v1877, %v1890
    %v1914 = vadd.f32 %v1878, %v1890
    %v1915 = vadd.f32 %v1879, %v1890
    %v1916 = vadd.f32 %v1880, %v1890
    %v1917 = vadd.f32 %v1881, %v1890
    %v1918 = vadd.f32 %v1882, %v1890
    %v1919 = vadd.f32 %v1883, %v1890
    %v1920 = vadd.f32 %v1884, %v1890
    %v1921 = vadd.f32 %v1885, %v1890
    %v1922 = vadd.f32 %v1886, %v1890
    %v1923 = vmax.f32 %v1891, 0.0
    %v1924 = vmax.f32 %v1892, 0.0
    %v1925 = vmax.f32 %v1893, 0.0
    %v1926 = vmax.f32 %v1894, 0.0
    %v1927 = vmax.f32 %v1895, 0.0
    %v1928 = vmax.f32 %v1896, 0.0
    %v1929 = vmax.f32 %v1897, 0.0
    %v1930 = vmax.f32 %v1898, 0.0
    %v1931 = vmax.f32 %v1899, 0.0
    %v1932 = vmax.f32 %v1900, 0.0
    %v1933 = vmax.f32 %v1901, 0.0
    %v1934 = vmax.f32 %v1902, 0.0
    %v1935 = vmax.f32 %v1903, 0.0
    %v1936 = vmax.f32 %v1904, 0.0
    %v1937 = vmax.f32 %v1905, 0.0
    %v1938 = vmax.f32 %v1906, 0.0
    %v1939 = vmax.f32 %v1907, 0.0
    %v1940 = vmax.f32 %v1908, 0.0
    %v1941 = vmax.f32 %v1909, 0.0
    %v1942 = vmax.f32 %v1910, 0.0
    %v1943 = vmax.f32 %v1911, 0.0
    %v1944 = vmax.f32 %v1912, 0.0
    %v1945 = vmax.f32 %v1913, 0.0
    %v1946 = vmax.f32 %v1914, 0.0
    %v1947 = vmax.f32 %v1915, 0.0
    %v1948 = vmax.f32 %v1916, 0.0
    %v1949 = vmax.f32 %v1917, 0.0
    %v1950 = vmax.f32 %v1918, 0.0
    %v1951 = vmax.f32 %v1919, 0.0
    %v1952 = vmax.f32 %v1920, 0.0
    %v1953 = vmax.f32 %v1921, 0.0
    %v1954 = vmax.f32 %v1922, 0.0
    %v1955 = vrot.slane %v1923, 7
    %v1956 = vrot.slane %v1924, 7
    %v1957 = vrot.slane %v1925, 7
    %v1958 = vrot.slane %v1926, 7
    %v1959 = vrot.slane %v1927, 7
    %v1960 = vrot.slane %v1928, 7
    %v1961 = vrot.slane %v1929, 7
    %v1962 = vrot.slane %v1930, 7
    %v1963 = vrot.slane %v1931, 7
    %v1964 = vrot.slane %v1932, 7
    %v1965 = vrot.slane %v1933, 7
    %v1966 = vrot.slane %v1934, 7
    %v1967 = vrot.slane %v1935, 7
    %v1968 = vrot.slane %v1936, 7
    %v1969 = vrot.slane %v1937, 7
    %v1970 = vrot.slane %v1938, 7
    %v1971 = vrot.slane %v1939, 7
    %v1972 = vrot.slane %v1940, 7
    %v1973 = vrot.slane %v1941, 7
    %v1974 = vrot.slane %v1942, 7
    %v1975 = vrot.slane %v1943, 7
    %v1976 = vrot.slane %v1944, 7
    %v1977 = vrot.slane %v1945, 7
    %v1978 = vrot.slane %v1946, 7
    %v1979 = vrot.slane %v1947, 7
    %v1980 = vrot.slane %v1948, 7
    %v1981 = vrot.slane %v1949, 7
    %v1982 = vrot.slane %v1950, 7
    %v1983 = vrot.slane %v1951, 7
    %v1984 = vrot.slane %v1952, 7
    %v1985 = vrot.slane %v1953, 7
    %v1986 = vrot.slane %v1954, 7
    %v1987 = vsel %vm183, %v1971, %v1979
    %v1988 = vsel %vm183, %v1972, %v1980
    %v1989 = vsel %vm183, %v1973, %v1981
    %v1990 = vsel %vm183, %v1974, %v1982
    %v1991 = vsel %vm183, %v1975, %v1983
    %v1992 = vsel %vm183, %v1976, %v1984
    %v1993 = vsel %vm183, %v1977, %v1985
    %v1994 = vsel %vm183, %v1978, %v1986
    %v1995 = vsel %vm183, %v1963, %v1971
    %v1996 = vsel %vm183, %v1964, %v1972
    %v1997 = vsel %vm183, %v1965, %v1973
    %v1998 = vsel %vm183, %v1966, %v1974
    %v1999 = vsel %vm183, %v1967, %v1975
    %v2000 = vsel %vm183, %v1968, %v1976
    %v2001 = vsel %vm183, %v1969, %v1977
    %v2002 = vsel %vm183, %v1970, %v1978
    %v2003 = vsel %vm183, %v1955, %v1963
    %v2004 = vsel %vm183, %v1956, %v1964
    %v2005 = vsel %vm183, %v1957, %v1965
    %v2006 = vsel %vm183, %v1958, %v1966
    %v2007 = vsel %vm183, %v1959, %v1967
    %v2008 = vsel %vm183, %v1960, %v1968
    %v2009 = vsel %vm183, %v1961, %v1969
    %v2010 = vsel %vm183, %v1962, %v1970
    %v2011 = vsel %vm183, %v1979, %v1955
    %v2012 = vsel %vm183, %v1980, %v1956
    %v2013 = vsel %vm183, %v1981, %v1957
    %v2014 = vsel %vm183, %v1982, %v1958
    %v2015 = vsel %vm183, %v1983, %v1959
    %v2016 = vsel %vm183, %v1984, %v1960
    %v2017 = vsel %vm183, %v1985, %v1961
    %v2018 = vsel %vm183, %v1986, %v1962
    %v2019 = vsel %vm192, %v2011, 0.0
    %v2020 = vsel %vm192, %v2012, 0.0
    %v2021 = vsel %vm192, %v2013, 0.0
    %v2022 = vsel %vm192, %v2014, 0.0
    %v2023 = vsel %vm192, %v2015, 0.0
    %v2024 = vsel %vm192, %v2016, 0.0
    %v2025 = vsel %vm192, %v2017, 0.0
    %v2026 = vsel %vm192, %v2018, 0.0
    %v2027 = vsel %vm193, %v2003, 0.0
    %v2028 = vsel %vm193, %v2004, 0.0
    %v2029 = vsel %vm193, %v2005, 0.0
    %v2030 = vsel %vm193, %v2006, 0.0
    %v2031 = vsel %vm193, %v2007, 0.0
    %v2032 = vsel %vm193, %v2008, 0.0
    %v2033 = vsel %vm193, %v2009, 0.0
    %v2034 = vsel %vm193, %v2010, 0.0
    %v2035 = vsel %vm194, %v1995, 0.0
    %v2036 = vsel %vm194, %v1996, 0.0
    %v2037 = vsel %vm194, %v1997, 0.0
    %v2038 = vsel %vm194, %v1998, 0.0
    %v2039 = vsel %vm194, %v1999, 0.0
    %v2040 = vsel %vm194, %v2000, 0.0
    %v2041 = vsel %vm194, %v2001, 0.0
    %v2042 = vsel %vm194, %v2002, 0.0
    %v2043 = vsel %vm195, %v1987, 0.0
    %v2044 = vsel %vm195, %v1988, 0.0
    %v2045 = vsel %vm195, %v1989, 0.0
    %v2046 = vsel %vm195, %v1990, 0.0
    %v2047 = vsel %vm195, %v1991, 0.0
    %v2048 = vsel %vm195, %v1992, 0.0
    %v2049 = vsel %vm195, %v1993, 0.0
    %v2050 = vsel %vm195, %v1994, 0.0
    %v2051 = vrot.slane %v1923, 1
    %v2052 = vrot.slane %v1924, 1
    %v2053 = vrot.slane %v1925, 1
    %v2054 = vrot.slane %v1926, 1
    %v2055 = vrot.slane %v1927, 1
    %v2056 = vrot.slane %v1928, 1
    %v2057 = vrot.slane %v1929, 1
    %v2058 = vrot.slane %v1930, 1
    %v2059 = vrot.slane %v1931, 1
    %v2060 = vrot.slane %v1932, 1
    %v2061 = vrot.slane %v1933, 1
    %v2062 = vrot.slane %v1934, 1
    %v2063 = vrot.slane %v1935, 1
    %v2064 = vrot.slane %v1936, 1
    %v2065 = vrot.slane %v1937, 1
    %v2066 = vrot.slane %v1938, 1
    %v2067 = vrot.slane %v1939, 1
    %v2068 = vrot.slane %v1940, 1
    %v2069 = vrot.slane %v1941, 1
    %v2070 = vrot.slane %v1942, 1
    %v2071 = vrot.slane %v1943, 1
    %v2072 = vrot.slane %v1944, 1
    %v2073 = vrot.slane %v1945, 1
    %v2074 = vrot.slane %v1946, 1
    %v2075 = vrot.slane %v1947, 1
    %v2076 = vrot.slane %v1948, 1
    %v2077 = vrot.slane %v1949, 1
    %v2078 = vrot.slane %v1950, 1
    %v2079 = vrot.slane %v1951, 1
    %v2080 = vrot.slane %v1952, 1
    %v2081 = vrot.slane %v1953, 1
    %v2082 = vrot.slane %v1954, 1
    %v2083 = vsel %vm204, %v2067, %v2075
    %v2084 = vsel %vm204, %v2068, %v2076
    %v2085 = vsel %vm204, %v2069, %v2077
    %v2086 = vsel %vm204, %v2070, %v2078
    %v2087 = vsel %vm204, %v2071, %v2079
    %v2088 = vsel %vm204, %v2072, %v2080
    %v2089 = vsel %vm204, %v2073, %v2081
    %v2090 = vsel %vm204, %v2074, %v2082
    %v2091 = vsel %vm204, %v2059, %v2067
    %v2092 = vsel %vm204, %v2060, %v2068
    %v2093 = vsel %vm204, %v2061, %v2069
    %v2094 = vsel %vm204, %v2062, %v2070
    %v2095 = vsel %vm204, %v2063, %v2071
    %v2096 = vsel %vm204, %v2064, %v2072
    %v2097 = vsel %vm204, %v2065, %v2073
    %v2098 = vsel %vm204, %v2066, %v2074
    %v2099 = vsel %vm204, %v2051, %v2059
    %v2100 = vsel %vm204, %v2052, %v2060
    %v2101 = vsel %vm204, %v2053, %v2061
    %v2102 = vsel %vm204, %v2054, %v2062
    %v2103 = vsel %vm204, %v2055, %v2063
    %v2104 = vsel %vm204, %v2056, %v2064
    %v2105 = vsel %vm204, %v2057, %v2065
    %v2106 = vsel %vm204, %v2058, %v2066
    %v2107 = vsel %vm204, %v2075, %v2051
    %v2108 = vsel %vm204, %v2076, %v2052
    %v2109 = vsel %vm204, %v2077, %v2053
    %v2110 = vsel %vm204, %v2078, %v2054
    %v2111 = vsel %vm204, %v2079, %v2055
    %v2112 = vsel %vm204, %v2080, %v2056
    %v2113 = vsel %vm204, %v2081, %v2057
    %v2114 = vsel %vm204, %v2082, %v2058
    %v2115 = vsel %vm213, %v2099, 0.0
    %v2116 = vsel %vm213, %v2100, 0.0
    %v2117 = vsel %vm213, %v2101, 0.0
    %v2118 = vsel %vm213, %v2102, 0.0
    %v2119 = vsel %vm213, %v2103, 0.0
    %v2120 = vsel %vm213, %v2104, 0.0
    %v2121 = vsel %vm213, %v2105, 0.0
    %v2122 = vsel %vm213, %v2106, 0.0
    %v2123 = vsel %vm214, %v2091, 0.0
    %v2124 = vsel %vm214, %v2092, 0.0
    %v2125 = vsel %vm214, %v2093, 0.0
    %v2126 = vsel %vm214, %v2094, 0.0
    %v2127 = vsel %vm214, %v2095, 0.0
    %v2128 = vsel %vm214, %v2096, 0.0
    %v2129 = vsel %vm214, %v2097, 0.0
    %v2130 = vsel %vm214, %v2098, 0.0
    %v2131 = vsel %vm215, %v2083, 0.0
    %v2132 = vsel %vm215, %v2084, 0.0
    %v2133 = vsel %vm215, %v2085, 0.0
    %v2134 = vsel %vm215, %v2086, 0.0
    %v2135 = vsel %vm215, %v2087, 0.0
    %v2136 = vsel %vm215, %v2088, 0.0
    %v2137 = vsel %vm215, %v2089, 0.0
    %v2138 = vsel %vm215, %v2090, 0.0
    %v2139 = vsel %vm216, %v2107, 0.0
    %v2140 = vsel %vm216, %v2108, 0.0
    %v2141 = vsel %vm216, %v2109, 0.0
    %v2142 = vsel %vm216, %v2110, 0.0
    %v2143 = vsel %vm216, %v2111, 0.0
    %v2144 = vsel %vm216, %v2112, 0.0
    %v2145 = vsel %vm216, %v2113, 0.0
    %v2146 = vsel %vm216, %v2114, 0.0
    %v2147 = vld [vmem:[#allocation10] sm:$0xff]
    %v2148 = vld [vmem:[#allocation10 + $0x8] sm:$0xff]
    %v2149 = vld [vmem:[#allocation10 + $0x10] sm:$0xff]
    %v2150 = vld [vmem:[#allocation10 + $0x18] sm:$0xff]
    %v2151 = vld [vmem:[#allocation10 + $0x20] sm:$0xff]
    %v2152 = vld [vmem:[#allocation10 + $0x28] sm:$0xff]
    %v2153 = vld [vmem:[#allocation10 + $0x30] sm:$0xff]
    %v2154 = vld [vmem:[#allocation10 + $0x38] sm:$0xff]
    %v2155 = vld [vmem:[#allocation10 + $0x40] sm:$0xff]
    %v2156 = vld [vmem:[#allocation10 + $0x48] sm:$0xff]
    %v2157 = vld [vmem:[#allocation10 + $0x50] sm:$0xff]
    %v2158 = vld [vmem:[#allocation10 + $0x58] sm:$0xff]
    %v2159 = vld [vmem:[#allocation10 + $0x60] sm:$0xff]
    %v2160 = vld [vmem:[#allocation10 + $0x68] sm:$0xff]
    %v2161 = vld [vmem:[#allocation10 + $0x70] sm:$0xff]
    %v2162 = vld [vmem:[#allocation10 + $0x78] sm:$0xff]
    %v2163 = vld [vmem:[#allocation10 + $0x80] sm:$0xff]
    %v2164 = vld [vmem:[#allocation10 + $0x88] sm:$0xff]
    %v2165 = vld [vmem:[#allocation10 + $0x90] sm:$0xff]
    %v2166 = vld [vmem:[#allocation10 + $0x98] sm:$0xff]
    %v2167 = vld [vmem:[#allocation10 + $0xa0] sm:$0xff]
    %v2168 = vld [vmem:[#allocation10 + $0xa8] sm:$0xff]
    %v2169 = vld [vmem:[#allocation10 + $0xb0] sm:$0xff]
    %v2170 = vld [vmem:[#allocation10 + $0xb8] sm:$0xff]
    %v2171 = vld [vmem:[#allocation10 + $0xc0] sm:$0xff]
    %v2172 = vld [vmem:[#allocation10 + $0xc8] sm:$0xff]
    %v2173 = vld [vmem:[#allocation10 + $0xd0] sm:$0xff]
    %v2174 = vld [vmem:[#allocation10 + $0xd8] sm:$0xff]
    %v2175 = vld [vmem:[#allocation10 + $0xe0] sm:$0xff]
    %v2176 = vld [vmem:[#allocation10 + $0xe8] sm:$0xff]
    %v2177 = vld [vmem:[#allocation10 + $0xf0] sm:$0xff]
    %v2178 = vld [vmem:[#allocation10 + $0xf8] sm:$0xff]
    %v2179 = vld [vmem:[#allocation10 + $0x100] sm:$0xff]
    %v2180 = vld [vmem:[#allocation10 + $0x108] sm:$0xff]
    %v2181 = vld [vmem:[#allocation10 + $0x110] sm:$0xff]
    %v2182 = vld [vmem:[#allocation10 + $0x118] sm:$0xff]
    %v2183 = vld [vmem:[#allocation10 + $0x120] sm:$0xff]
    %v2184 = vld [vmem:[#allocation10 + $0x128] sm:$0xff]
    %v2185 = vld [vmem:[#allocation10 + $0x130] sm:$0xff]
    %v2186 = vld [vmem:[#allocation10 + $0x138] sm:$0xff]
    %v2187 = vld [vmem:[#allocation10 + $0x140] sm:$0xff]
    %v2188 = vld [vmem:[#allocation10 + $0x148] sm:$0xff]
    %v2189 = vld [vmem:[#allocation10 + $0x150] sm:$0xff]
    %v2190 = vld [vmem:[#allocation10 + $0x158] sm:$0xff]
    %v2191 = vld [vmem:[#allocation10 + $0x160] sm:$0xff]
    %v2192 = vld [vmem:[#allocation10 + $0x168] sm:$0xff]
    %v2193 = vld [vmem:[#allocation10 + $0x170] sm:$0xff]
    %v2194 = vld [vmem:[#allocation10 + $0x178] sm:$0xff]
    %v2195 = vld [vmem:[#allocation10 + $0x180] sm:$0xff]
    %v2196 = vld [vmem:[#allocation10 + $0x188] sm:$0xff]
    %v2197 = vld [vmem:[#allocation10 + $0x190] sm:$0xff]
    %v2198 = vld [vmem:[#allocation10 + $0x198] sm:$0xff]
    %v2199 = vld [vmem:[#allocation10 + $0x1a0] sm:$0xff]
    %v2200 = vld [vmem:[#allocation10 + $0x1a8] sm:$0xff]
    %v2201 = vld [vmem:[#allocation10 + $0x1b0] sm:$0xff]
    %v2202 = vld [vmem:[#allocation10 + $0x1b8] sm:$0xff]
    %v2203 = vld [vmem:[#allocation10 + $0x1c0] sm:$0xff]
    %v2204 = vld [vmem:[#allocation10 + $0x1c8] sm:$0xff]
    %v2205 = vld [vmem:[#allocation10 + $0x1d0] sm:$0xff]
    %v2206 = vld [vmem:[#allocation10 + $0x1d8] sm:$0xff]
    %v2207 = vld [vmem:[#allocation10 + $0x1e0] sm:$0xff]
    %v2208 = vld [vmem:[#allocation10 + $0x1e8] sm:$0xff]
    %v2209 = vld [vmem:[#allocation10 + $0x1f0] sm:$0xff]
    %v2210 = vld [vmem:[#allocation10 + $0x1f8] sm:$0xff]
    %v2211 = vld [vmem:[#allocation10 + $0x200] sm:$0xff]
    %v2212 = vld [vmem:[#allocation10 + $0x208] sm:$0xff]
    %v2213 = vld [vmem:[#allocation10 + $0x210] sm:$0xff]
    %v2214 = vld [vmem:[#allocation10 + $0x218] sm:$0xff]
    %v2215 = vld [vmem:[#allocation10 + $0x220] sm:$0xff]
    %v2216 = vld [vmem:[#allocation10 + $0x228] sm:$0xff]
    %v2217 = vld [vmem:[#allocation10 + $0x230] sm:$0xff]
    %v2218 = vld [vmem:[#allocation10 + $0x238] sm:$0xff]
    %v2219 = vld [vmem:[#allocation10 + $0x240] sm:$0xff]
    %v2220 = vld [vmem:[#allocation10 + $0x248] sm:$0xff]
    %v2221 = vld [vmem:[#allocation10 + $0x250] sm:$0xff]
    %v2222 = vld [vmem:[#allocation10 + $0x258] sm:$0xff]
    %v2223 = vld [vmem:[#allocation10 + $0x260] sm:$0xff]
    %v2224 = vld [vmem:[#allocation10 + $0x268] sm:$0xff]
    %v2225 = vld [vmem:[#allocation10 + $0x270] sm:$0xff]
    %v2226 = vld [vmem:[#allocation10 + $0x278] sm:$0xff]
    %v2227 = vld [vmem:[#allocation10 + $0x280] sm:$0xff]
    %v2228 = vld [vmem:[#allocation10 + $0x288] sm:$0xff]
    %v2229 = vld [vmem:[#allocation10 + $0x290] sm:$0xff]
    %v2230 = vld [vmem:[#allocation10 + $0x298] sm:$0xff]
    %v2231 = vld [vmem:[#allocation10 + $0x2a0] sm:$0xff]
    %v2232 = vld [vmem:[#allocation10 + $0x2a8] sm:$0xff]
    %v2233 = vld [vmem:[#allocation10 + $0x2b0] sm:$0xff]
    %v2234 = vld [vmem:[#allocation10 + $0x2b8] sm:$0xff]
    %v2235 = vld [vmem:[#allocation10 + $0x2c0] sm:$0xff]
    %v2236 = vld [vmem:[#allocation10 + $0x2c8] sm:$0xff]
    %v2237 = vld [vmem:[#allocation10 + $0x2d0] sm:$0xff]
    %v2238 = vld [vmem:[#allocation10 + $0x2d8] sm:$0xff]
    %v2239 = vld [vmem:[#allocation10 + $0x2e0] sm:$0xff]
    %v2240 = vld [vmem:[#allocation10 + $0x2e8] sm:$0xff]
    %v2241 = vld [vmem:[#allocation10 + $0x2f0] sm:$0xff]
    %v2242 = vld [vmem:[#allocation10 + $0x2f8] sm:$0xff]
    %v2243 = vld [vmem:[#allocation10 + $0x300] sm:$0xff]
    %v2244 = vld [vmem:[#allocation10 + $0x308] sm:$0xff]
    %v2245 = vld [vmem:[#allocation10 + $0x310] sm:$0xff]
    %v2246 = vld [vmem:[#allocation10 + $0x318] sm:$0xff]
    %v2247 = vld [vmem:[#allocation10 + $0x320] sm:$0xff]
    %v2248 = vld [vmem:[#allocation10 + $0x328] sm:$0xff]
    %v2249 = vld [vmem:[#allocation10 + $0x330] sm:$0xff]
    %v2250 = vld [vmem:[#allocation10 + $0x338] sm:$0xff]
    %v2251 = vld [vmem:[#allocation10 + $0x340] sm:$0xff]
    %v2252 = vld [vmem:[#allocation10 + $0x348] sm:$0xff]
    %v2253 = vld [vmem:[#allocation10 + $0x350] sm:$0xff]
    %v2254 = vld [vmem:[#allocation10 + $0x358] sm:$0xff]
    %v2255 = vld [vmem:[#allocation10 + $0x360] sm:$0xff]
    %v2256 = vld [vmem:[#allocation10 + $0x368] sm:$0xff]
    %v2257 = vld [vmem:[#allocation10 + $0x370] sm:$0xff]
    %v2258 = vld [vmem:[#allocation10 + $0x378] sm:$0xff]
    %v2259 = vld [vmem:[#allocation10 + $0x380] sm:$0xff]
    %v2260 = vld [vmem:[#allocation10 + $0x388] sm:$0xff]
    %v2261 = vld [vmem:[#allocation10 + $0x390] sm:$0xff]
    %v2262 = vld [vmem:[#allocation10 + $0x398] sm:$0xff]
    %v2263 = vld [vmem:[#allocation10 + $0x3a0] sm:$0xff]
    %v2264 = vld [vmem:[#allocation10 + $0x3a8] sm:$0xff]
    %v2265 = vld [vmem:[#allocation10 + $0x3b0] sm:$0xff]
    %v2266 = vld [vmem:[#allocation10 + $0x3b8] sm:$0xff]
    %v2267 = vld [vmem:[#allocation10 + $0x3c0] sm:$0xff]
    %v2268 = vld [vmem:[#allocation10 + $0x3c8] sm:$0xff]
    %v2269 = vld [vmem:[#allocation10 + $0x3d0] sm:$0xff]
    %v2270 = vld [vmem:[#allocation10 + $0x3d8] sm:$0xff]
    %v2271 = vld [vmem:[#allocation10 + $0x3e0] sm:$0xff]
    %v2272 = vld [vmem:[#allocation10 + $0x3e8] sm:$0xff]
    %v2273 = vld [vmem:[#allocation10 + $0x3f0] sm:$0xff]
    %v2274 = vld [vmem:[#allocation10 + $0x3f8] sm:$0xff]
    %v2275 = vld [vmem:[#allocation10 + $0x400] sm:$0xff]
    %v2276 = vld [vmem:[#allocation10 + $0x408] sm:$0xff]
    %v2277 = vld [vmem:[#allocation10 + $0x410] sm:$0xff]
    %v2278 = vld [vmem:[#allocation10 + $0x418] sm:$0xff]
    %v2279 = vld [vmem:[#allocation10 + $0x420] sm:$0xff]
    %v2280 = vld [vmem:[#allocation10 + $0x428] sm:$0xff]
    %v2281 = vld [vmem:[#allocation10 + $0x430] sm:$0xff]
    %v2282 = vld [vmem:[#allocation10 + $0x438] sm:$0xff]
    %v2283 = vld [vmem:[#allocation10 + $0x440] sm:$0xff]
    %v2284 = vld [vmem:[#allocation10 + $0x448] sm:$0xff]
    %v2285 = vld [vmem:[#allocation10 + $0x450] sm:$0xff]
    %v2286 = vld [vmem:[#allocation10 + $0x458] sm:$0xff]
    %v2287 = vld [vmem:[#allocation10 + $0x460] sm:$0xff]
    %v2288 = vld [vmem:[#allocation10 + $0x468] sm:$0xff]
    %v2289 = vld [vmem:[#allocation10 + $0x470] sm:$0xff]
    %v2290 = vld [vmem:[#allocation10 + $0x478] sm:$0xff]
    %v2291 = vld [vmem:[#allocation10 + $0x480] sm:$0xff]
    %v2292 = vld [vmem:[#allocation10 + $0x488] sm:$0xff]
    %v2293 = vld [vmem:[#allocation10 + $0x490] sm:$0xff]
    %v2294 = vld [vmem:[#allocation10 + $0x498] sm:$0xff]
    %v2295 = vld [vmem:[#allocation10 + $0x4a0] sm:$0xff]
    %v2296 = vld [vmem:[#allocation10 + $0x4a8] sm:$0xff]
    %v2297 = vld [vmem:[#allocation10 + $0x4b0] sm:$0xff]
    %v2298 = vld [vmem:[#allocation10 + $0x4b8] sm:$0xff]
    %v2299 = vld [vmem:[#allocation10 + $0x4c0] sm:$0xff]
    %v2300 = vld [vmem:[#allocation10 + $0x4c8] sm:$0xff]
    %v2301 = vld [vmem:[#allocation10 + $0x4d0] sm:$0xff]
    %v2302 = vld [vmem:[#allocation10 + $0x4d8] sm:$0xff]
    %v2303 = vld [vmem:[#allocation10 + $0x4e0] sm:$0xff]
    %v2304 = vld [vmem:[#allocation10 + $0x4e8] sm:$0xff]
    %v2305 = vld [vmem:[#allocation10 + $0x4f0] sm:$0xff]
    %v2306 = vld [vmem:[#allocation10 + $0x4f8] sm:$0xff]
    %v2307 = vld [vmem:[#allocation10 + $0x500] sm:$0xff]
    %v2308 = vld [vmem:[#allocation10 + $0x508] sm:$0xff]
    %v2309 = vld [vmem:[#allocation10 + $0x510] sm:$0xff]
    %v2310 = vld [vmem:[#allocation10 + $0x518] sm:$0xff]
    %v2311 = vld [vmem:[#allocation10 + $0x520] sm:$0xff]
    %v2312 = vld [vmem:[#allocation10 + $0x528] sm:$0xff]
    %v2313 = vld [vmem:[#allocation10 + $0x530] sm:$0xff]
    %v2314 = vld [vmem:[#allocation10 + $0x538] sm:$0xff]
    %v2315 = vld [vmem:[#allocation10 + $0x540] sm:$0xff]
    %v2316 = vld [vmem:[#allocation10 + $0x548] sm:$0xff]
    %v2317 = vld [vmem:[#allocation10 + $0x550] sm:$0xff]
    %v2318 = vld [vmem:[#allocation10 + $0x558] sm:$0xff]
    %v2319 = vld [vmem:[#allocation10 + $0x560] sm:$0xff]
    %v2320 = vld [vmem:[#allocation10 + $0x568] sm:$0xff]
    %v2321 = vld [vmem:[#allocation10 + $0x570] sm:$0xff]
    %v2322 = vld [vmem:[#allocation10 + $0x578] sm:$0xff]
    %v2323 = vld [vmem:[#allocation10 + $0x580] sm:$0xff]
    %v2324 = vld [vmem:[#allocation10 + $0x588] sm:$0xff]
    %v2325 = vld [vmem:[#allocation10 + $0x590] sm:$0xff]
    %v2326 = vld [vmem:[#allocation10 + $0x598] sm:$0xff]
    %v2327 = vld [vmem:[#allocation10 + $0x5a0] sm:$0xff]
    %v2328 = vld [vmem:[#allocation10 + $0x5a8] sm:$0xff]
    %v2329 = vld [vmem:[#allocation10 + $0x5b0] sm:$0xff]
    %v2330 = vld [vmem:[#allocation10 + $0x5b8] sm:$0xff]
    %v2331 = vld [vmem:[#allocation10 + $0x5c0] sm:$0xff]
    %v2332 = vld [vmem:[#allocation10 + $0x5c8] sm:$0xff]
    %v2333 = vld [vmem:[#allocation10 + $0x5d0] sm:$0xff]
    %v2334 = vld [vmem:[#allocation10 + $0x5d8] sm:$0xff]
    %v2335 = vld [vmem:[#allocation10 + $0x5e0] sm:$0xff]
    %v2336 = vld [vmem:[#allocation10 + $0x5e8] sm:$0xff]
    %v2337 = vld [vmem:[#allocation10 + $0x5f0] sm:$0xff]
    %v2338 = vld [vmem:[#allocation10 + $0x5f8] sm:$0xff]
    %v2339 = vld [vmem:[#allocation10 + $0x600] sm:$0xff]
    %v2340 = vld [vmem:[#allocation10 + $0x608] sm:$0xff]
    %v2341 = vld [vmem:[#allocation10 + $0x610] sm:$0xff]
    %v2342 = vld [vmem:[#allocation10 + $0x618] sm:$0xff]
    %v2343 = vld [vmem:[#allocation10 + $0x620] sm:$0xff]
    %v2344 = vld [vmem:[#allocation10 + $0x628] sm:$0xff]
    %v2345 = vld [vmem:[#allocation10 + $0x630] sm:$0xff]
    %v2346 = vld [vmem:[#allocation10 + $0x638] sm:$0xff]
    %v2347 = vld [vmem:[#allocation10 + $0x640] sm:$0xff]
    %v2348 = vld [vmem:[#allocation10 + $0x648] sm:$0xff]
    %v2349 = vld [vmem:[#allocation10 + $0x650] sm:$0xff]
    %v2350 = vld [vmem:[#allocation10 + $0x658] sm:$0xff]
    %v2351 = vld [vmem:[#allocation10 + $0x660] sm:$0xff]
    %v2352 = vld [vmem:[#allocation10 + $0x668] sm:$0xff]
    %v2353 = vld [vmem:[#allocation10 + $0x670] sm:$0xff]
    %v2354 = vld [vmem:[#allocation10 + $0x678] sm:$0xff]
    %v2355 = vld [vmem:[#allocation10 + $0x680] sm:$0xff]
    %v2356 = vld [vmem:[#allocation10 + $0x688] sm:$0xff]
    %v2357 = vld [vmem:[#allocation10 + $0x690] sm:$0xff]
    %v2358 = vld [vmem:[#allocation10 + $0x698] sm:$0xff]
    %v2359 = vld [vmem:[#allocation10 + $0x6a0] sm:$0xff]
    %v2360 = vld [vmem:[#allocation10 + $0x6a8] sm:$0xff]
    %v2361 = vld [vmem:[#allocation10 + $0x6b0] sm:$0xff]
    %v2362 = vld [vmem:[#allocation10 + $0x6b8] sm:$0xff]
    %v2363 = vld [vmem:[#allocation10 + $0x6c0] sm:$0xff]
    %v2364 = vld [vmem:[#allocation10 + $0x6c8] sm:$0xff]
    %v2365 = vld [vmem:[#allocation10 + $0x6d0] sm:$0xff]
    %v2366 = vld [vmem:[#allocation10 + $0x6d8] sm:$0xff]
    %v2367 = vld [vmem:[#allocation10 + $0x6e0] sm:$0xff]
    %v2368 = vld [vmem:[#allocation10 + $0x6e8] sm:$0xff]
    %v2369 = vld [vmem:[#allocation10 + $0x6f0] sm:$0xff]
    %v2370 = vld [vmem:[#allocation10 + $0x6f8] sm:$0xff]
    %v2371 = vld [vmem:[#allocation10 + $0x700] sm:$0xff]
    %v2372 = vld [vmem:[#allocation10 + $0x708] sm:$0xff]
    %v2373 = vld [vmem:[#allocation10 + $0x710] sm:$0xff]
    %v2374 = vld [vmem:[#allocation10 + $0x718] sm:$0xff]
    %v2375 = vld [vmem:[#allocation10 + $0x720] sm:$0xff]
    %v2376 = vld [vmem:[#allocation10 + $0x728] sm:$0xff]
    %v2377 = vld [vmem:[#allocation10 + $0x730] sm:$0xff]
    %v2378 = vld [vmem:[#allocation10 + $0x738] sm:$0xff]
    %v2379 = vld [vmem:[#allocation10 + $0x740] sm:$0xff]
    %v2380 = vld [vmem:[#allocation10 + $0x748] sm:$0xff]
    %v2381 = vld [vmem:[#allocation10 + $0x750] sm:$0xff]
    %v2382 = vld [vmem:[#allocation10 + $0x758] sm:$0xff]
    %v2383 = vld [vmem:[#allocation10 + $0x760] sm:$0xff]
    %v2384 = vld [vmem:[#allocation10 + $0x768] sm:$0xff]
    %v2385 = vld [vmem:[#allocation10 + $0x770] sm:$0xff]
    %v2386 = vld [vmem:[#allocation10 + $0x778] sm:$0xff]
    %v2387 = vld [vmem:[#allocation10 + $0x780] sm:$0xff]
    %v2388 = vld [vmem:[#allocation10 + $0x788] sm:$0xff]
    %v2389 = vld [vmem:[#allocation10 + $0x790] sm:$0xff]
    %v2390 = vld [vmem:[#allocation10 + $0x798] sm:$0xff]
    %v2391 = vld [vmem:[#allocation10 + $0x7a0] sm:$0xff]
    %v2392 = vld [vmem:[#allocation10 + $0x7a8] sm:$0xff]
    %v2393 = vld [vmem:[#allocation10 + $0x7b0] sm:$0xff]
    %v2394 = vld [vmem:[#allocation10 + $0x7b8] sm:$0xff]
    %v2395 = vld [vmem:[#allocation10 + $0x7c0] sm:$0xff]
    %v2396 = vld [vmem:[#allocation10 + $0x7c8] sm:$0xff]
    %v2397 = vld [vmem:[#allocation10 + $0x7d0] sm:$0xff]
    %v2398 = vld [vmem:[#allocation10 + $0x7d8] sm:$0xff]
    %v2399 = vld [vmem:[#allocation10 + $0x7e0] sm:$0xff]
    %v2400 = vld [vmem:[#allocation10 + $0x7e8] sm:$0xff]
    %v2401 = vld [vmem:[#allocation10 + $0x7f0] sm:$0xff]
    %v2402 = vld [vmem:[#allocation10 + $0x7f8] sm:$0xff]
    %v2403 = vld [vmem:[#allocation10 + $0x800] sm:$0xff]
    %v2404 = vld [vmem:[#allocation10 + $0x808] sm:$0xff]
    %v2405 = vld [vmem:[#allocation10 + $0x810] sm:$0xff]
    %v2406 = vld [vmem:[#allocation10 + $0x818] sm:$0xff]
    %v2407 = vld [vmem:[#allocation10 + $0x820] sm:$0xff]
    %v2408 = vld [vmem:[#allocation10 + $0x828] sm:$0xff]
    %v2409 = vld [vmem:[#allocation10 + $0x830] sm:$0xff]
    %v2410 = vld [vmem:[#allocation10 + $0x838] sm:$0xff]
    %v2411 = vld [vmem:[#allocation10 + $0x840] sm:$0xff]
    %v2412 = vld [vmem:[#allocation10 + $0x848] sm:$0xff]
    %v2413 = vld [vmem:[#allocation10 + $0x850] sm:$0xff]
    %v2414 = vld [vmem:[#allocation10 + $0x858] sm:$0xff]
    %v2415 = vld [vmem:[#allocation10 + $0x860] sm:$0xff]
    %v2416 = vld [vmem:[#allocation10 + $0x868] sm:$0xff]
    %v2417 = vld [vmem:[#allocation10 + $0x870] sm:$0xff]
    %v2418 = vld [vmem:[#allocation10 + $0x878] sm:$0xff]
    %v2419 = vld [vmem:[#allocation10 + $0x880] sm:$0xff]
    %v2420 = vld [vmem:[#allocation10 + $0x888] sm:$0xff]
    %v2421 = vld [vmem:[#allocation10 + $0x890] sm:$0xff]
    %v2422 = vld [vmem:[#allocation10 + $0x898] sm:$0xff]
    %v2423 = vld [vmem:[#allocation10 + $0x8a0] sm:$0xff]
    %v2424 = vld [vmem:[#allocation10 + $0x8a8] sm:$0xff]
    %v2425 = vld [vmem:[#allocation10 + $0x8b0] sm:$0xff]
    %v2426 = vld [vmem:[#allocation10 + $0x8b8] sm:$0xff]
    %v2427 = vld [vmem:[#allocation10 + $0x8c0] sm:$0xff]
    %v2428 = vld [vmem:[#allocation10 + $0x8c8] sm:$0xff]
    %v2429 = vld [vmem:[#allocation10 + $0x8d0] sm:$0xff]
    %v2430 = vld [vmem:[#allocation10 + $0x8d8] sm:$0xff]
    %v2431 = vld [vmem:[#allocation10 + $0x8e0] sm:$0xff]
    %v2432 = vld [vmem:[#allocation10 + $0x8e8] sm:$0xff]
    %v2433 = vld [vmem:[#allocation10 + $0x8f0] sm:$0xff]
    %v2434 = vld [vmem:[#allocation10 + $0x8f8] sm:$0xff]
    %v2435 = vld [vmem:[#allocation10 + $0x900] sm:$0xff]
    %v2436 = vld [vmem:[#allocation10 + $0x908] sm:$0xff]
    %v2437 = vld [vmem:[#allocation10 + $0x910] sm:$0xff]
    %v2438 = vld [vmem:[#allocation10 + $0x918] sm:$0xff]
    %v2439 = vld [vmem:[#allocation10 + $0x920] sm:$0xff]
    %v2440 = vld [vmem:[#allocation10 + $0x928] sm:$0xff]
    %v2441 = vld [vmem:[#allocation10 + $0x930] sm:$0xff]
    %v2442 = vld [vmem:[#allocation10 + $0x938] sm:$0xff]
    %v2443 = vld [vmem:[#allocation10 + $0x940] sm:$0xff]
    %v2444 = vld [vmem:[#allocation10 + $0x948] sm:$0xff]
    %v2445 = vld [vmem:[#allocation10 + $0x950] sm:$0xff]
    %v2446 = vld [vmem:[#allocation10 + $0x958] sm:$0xff]
    %v2447 = vld [vmem:[#allocation10 + $0x960] sm:$0xff]
    %v2448 = vld [vmem:[#allocation10 + $0x968] sm:$0xff]
    %v2449 = vld [vmem:[#allocation10 + $0x970] sm:$0xff]
    %v2450 = vld [vmem:[#allocation10 + $0x978] sm:$0xff]
    %v2451 = vld [vmem:[#allocation10 + $0x980] sm:$0xff]
    %v2452 = vld [vmem:[#allocation10 + $0x988] sm:$0xff]
    %v2453 = vld [vmem:[#allocation10 + $0x990] sm:$0xff]
    %v2454 = vld [vmem:[#allocation10 + $0x998] sm:$0xff]
    %v2455 = vld [vmem:[#allocation10 + $0x9a0] sm:$0xff]
    %v2456 = vld [vmem:[#allocation10 + $0x9a8] sm:$0xff]
    %v2457 = vld [vmem:[#allocation10 + $0x9b0] sm:$0xff]
    %v2458 = vld [vmem:[#allocation10 + $0x9b8] sm:$0xff]
    %v2459 = vld [vmem:[#allocation10 + $0x9c0] sm:$0xff]
    %v2460 = vld [vmem:[#allocation10 + $0x9c8] sm:$0xff]
    %v2461 = vld [vmem:[#allocation10 + $0x9d0] sm:$0xff]
    %v2462 = vld [vmem:[#allocation10 + $0x9d8] sm:$0xff]
    %v2463 = vld [vmem:[#allocation10 + $0x9e0] sm:$0xff]
    %v2464 = vld [vmem:[#allocation10 + $0x9e8] sm:$0xff]
    %v2465 = vld [vmem:[#allocation10 + $0x9f0] sm:$0xff]
    %v2466 = vld [vmem:[#allocation10 + $0x9f8] sm:$0xff]
    %v2467 = vld [vmem:[#allocation10 + $0xa00] sm:$0xff]
    %v2468 = vld [vmem:[#allocation10 + $0xa08] sm:$0xff]
    %v2469 = vld [vmem:[#allocation10 + $0xa10] sm:$0xff]
    %v2470 = vld [vmem:[#allocation10 + $0xa18] sm:$0xff]
    %v2471 = vld [vmem:[#allocation10 + $0xa20] sm:$0xff]
    %v2472 = vld [vmem:[#allocation10 + $0xa28] sm:$0xff]
    %v2473 = vld [vmem:[#allocation10 + $0xa30] sm:$0xff]
    %v2474 = vld [vmem:[#allocation10 + $0xa38] sm:$0xff]
    %v2475 = vld [vmem:[#allocation10 + $0xa40] sm:$0xff]
    %v2476 = vld [vmem:[#allocation10 + $0xa48] sm:$0xff]
    %v2477 = vld [vmem:[#allocation10 + $0xa50] sm:$0xff]
    %v2478 = vld [vmem:[#allocation10 + $0xa58] sm:$0xff]
    %v2479 = vld [vmem:[#allocation10 + $0xa60] sm:$0xff]
    %v2480 = vld [vmem:[#allocation10 + $0xa68] sm:$0xff]
    %v2481 = vld [vmem:[#allocation10 + $0xa70] sm:$0xff]
    %v2482 = vld [vmem:[#allocation10 + $0xa78] sm:$0xff]
    %v2483 = vld [vmem:[#allocation10 + $0xa80] sm:$0xff]
    %v2484 = vld [vmem:[#allocation10 + $0xa88] sm:$0xff]
    %v2485 = vld [vmem:[#allocation10 + $0xa90] sm:$0xff]
    %v2486 = vld [vmem:[#allocation10 + $0xa98] sm:$0xff]
    %v2487 = vld [vmem:[#allocation10 + $0xaa0] sm:$0xff]
    %v2488 = vld [vmem:[#allocation10 + $0xaa8] sm:$0xff]
    %v2489 = vld [vmem:[#allocation10 + $0xab0] sm:$0xff]
    %v2490 = vld [vmem:[#allocation10 + $0xab8] sm:$0xff]
    %v2491 = vld [vmem:[#allocation10 + $0xac0] sm:$0xff]
    %v2492 = vld [vmem:[#allocation10 + $0xac8] sm:$0xff]
    %v2493 = vld [vmem:[#allocation10 + $0xad0] sm:$0xff]
    %v2494 = vld [vmem:[#allocation10 + $0xad8] sm:$0xff]
    %v2495 = vld [vmem:[#allocation10 + $0xae0] sm:$0xff]
    %v2496 = vld [vmem:[#allocation10 + $0xae8] sm:$0xff]
    %v2497 = vld [vmem:[#allocation10 + $0xaf0] sm:$0xff]
    %v2498 = vld [vmem:[#allocation10 + $0xaf8] sm:$0xff]
    %v2499 = vld [vmem:[#allocation10 + $0xb00] sm:$0xff]
    %v2500 = vld [vmem:[#allocation10 + $0xb08] sm:$0xff]
    %v2501 = vld [vmem:[#allocation10 + $0xb10] sm:$0xff]
    %v2502 = vld [vmem:[#allocation10 + $0xb18] sm:$0xff]
    %v2503 = vld [vmem:[#allocation10 + $0xb20] sm:$0xff]
    %v2504 = vld [vmem:[#allocation10 + $0xb28] sm:$0xff]
    %v2505 = vld [vmem:[#allocation10 + $0xb30] sm:$0xff]
    %v2506 = vld [vmem:[#allocation10 + $0xb38] sm:$0xff]
    %v2507 = vld [vmem:[#allocation10 + $0xb40] sm:$0xff]
    %v2508 = vld [vmem:[#allocation10 + $0xb48] sm:$0xff]
    %v2509 = vld [vmem:[#allocation10 + $0xb50] sm:$0xff]
    %v2510 = vld [vmem:[#allocation10 + $0xb58] sm:$0xff]
    %v2511 = vld [vmem:[#allocation10 + $0xb60] sm:$0xff]
    %v2512 = vld [vmem:[#allocation10 + $0xb68] sm:$0xff]
    %v2513 = vld [vmem:[#allocation10 + $0xb70] sm:$0xff]
    %v2514 = vld [vmem:[#allocation10 + $0xb78] sm:$0xff]
    %v2515 = vld [vmem:[#allocation10 + $0xb80] sm:$0xff]
    %v2516 = vld [vmem:[#allocation10 + $0xb88] sm:$0xff]
    %v2517 = vld [vmem:[#allocation10 + $0xb90] sm:$0xff]
    %v2518 = vld [vmem:[#allocation10 + $0xb98] sm:$0xff]
    %v2519 = vld [vmem:[#allocation10 + $0xba0] sm:$0xff]
    %v2520 = vld [vmem:[#allocation10 + $0xba8] sm:$0xff]
    %v2521 = vld [vmem:[#allocation10 + $0xbb0] sm:$0xff]
    %v2522 = vld [vmem:[#allocation10 + $0xbb8] sm:$0xff]
    %v2523 = vld [vmem:[#allocation10 + $0xbc0] sm:$0xff]
    %v2524 = vld [vmem:[#allocation10 + $0xbc8] sm:$0xff]
    %v2525 = vld [vmem:[#allocation10 + $0xbd0] sm:$0xff]
    %v2526 = vld [vmem:[#allocation10 + $0xbd8] sm:$0xff]
    %v2527 = vld [vmem:[#allocation10 + $0xbe0] sm:$0xff]
    %v2528 = vld [vmem:[#allocation10 + $0xbe8] sm:$0xff]
    %v2529 = vld [vmem:[#allocation10 + $0xbf0] sm:$0xff]
    %v2530 = vld [vmem:[#allocation10 + $0xbf8] sm:$0xff]
    %v2531 = vld [vmem:[#allocation10 + $0xc00] sm:$0xff]
    %v2532 = vld [vmem:[#allocation10 + $0xc08] sm:$0xff]
    %v2533 = vld [vmem:[#allocation10 + $0xc10] sm:$0xff]
    %v2534 = vld [vmem:[#allocation10 + $0xc18] sm:$0xff]
    %v2535 = vld [vmem:[#allocation10 + $0xc20] sm:$0xff]
    %v2536 = vld [vmem:[#allocation10 + $0xc28] sm:$0xff]
    %v2537 = vld [vmem:[#allocation10 + $0xc30] sm:$0xff]
    %v2538 = vld [vmem:[#allocation10 + $0xc38] sm:$0xff]
    %v2539 = vld [vmem:[#allocation10 + $0xc40] sm:$0xff]
    %v2540 = vld [vmem:[#allocation10 + $0xc48] sm:$0xff]
    %v2541 = vld [vmem:[#allocation10 + $0xc50] sm:$0xff]
    %v2542 = vld [vmem:[#allocation10 + $0xc58] sm:$0xff]
    %v2543 = vld [vmem:[#allocation10 + $0xc60] sm:$0xff]
    %v2544 = vld [vmem:[#allocation10 + $0xc68] sm:$0xff]
    %v2545 = vld [vmem:[#allocation10 + $0xc70] sm:$0xff]
    %v2546 = vld [vmem:[#allocation10 + $0xc78] sm:$0xff]
    %v2547 = vld [vmem:[#allocation10 + $0xc80] sm:$0xff]
    %v2548 = vld [vmem:[#allocation10 + $0xc88] sm:$0xff]
    %v2549 = vld [vmem:[#allocation10 + $0xc90] sm:$0xff]
    %v2550 = vld [vmem:[#allocation10 + $0xc98] sm:$0xff]
    %v2551 = vld [vmem:[#allocation10 + $0xca0] sm:$0xff]
    %v2552 = vld [vmem:[#allocation10 + $0xca8] sm:$0xff]
    %v2553 = vld [vmem:[#allocation10 + $0xcb0] sm:$0xff]
    %v2554 = vld [vmem:[#allocation10 + $0xcb8] sm:$0xff]
    %v2555 = vld [vmem:[#allocation10 + $0xcc0] sm:$0xff]
    %v2556 = vld [vmem:[#allocation10 + $0xcc8] sm:$0xff]
    %v2557 = vld [vmem:[#allocation10 + $0xcd0] sm:$0xff]
    %v2558 = vld [vmem:[#allocation10 + $0xcd8] sm:$0xff]
    %v2559 = vld [vmem:[#allocation10 + $0xce0] sm:$0xff]
    %v2560 = vld [vmem:[#allocation10 + $0xce8] sm:$0xff]
    %v2561 = vld [vmem:[#allocation10 + $0xcf0] sm:$0xff]
    %v2562 = vld [vmem:[#allocation10 + $0xcf8] sm:$0xff]
    %v2563 = vld [vmem:[#allocation10 + $0xd00] sm:$0xff]
    %v2564 = vld [vmem:[#allocation10 + $0xd08] sm:$0xff]
    %v2565 = vld [vmem:[#allocation10 + $0xd10] sm:$0xff]
    %v2566 = vld [vmem:[#allocation10 + $0xd18] sm:$0xff]
    %v2567 = vld [vmem:[#allocation10 + $0xd20] sm:$0xff]
    %v2568 = vld [vmem:[#allocation10 + $0xd28] sm:$0xff]
    %v2569 = vld [vmem:[#allocation10 + $0xd30] sm:$0xff]
    %v2570 = vld [vmem:[#allocation10 + $0xd38] sm:$0xff]
    %v2571 = vld [vmem:[#allocation10 + $0xd40] sm:$0xff]
    %v2572 = vld [vmem:[#allocation10 + $0xd48] sm:$0xff]
    %v2573 = vld [vmem:[#allocation10 + $0xd50] sm:$0xff]
    %v2574 = vld [vmem:[#allocation10 + $0xd58] sm:$0xff]
    %v2575 = vld [vmem:[#allocation10 + $0xd60] sm:$0xff]
    %v2576 = vld [vmem:[#allocation10 + $0xd68] sm:$0xff]
    %v2577 = vld [vmem:[#allocation10 + $0xd70] sm:$0xff]
    %v2578 = vld [vmem:[#allocation10 + $0xd78] sm:$0xff]
    %v2579 = vld [vmem:[#allocation10 + $0xd80] sm:$0xff]
    %v2580 = vld [vmem:[#allocation10 + $0xd88] sm:$0xff]
    %v2581 = vld [vmem:[#allocation10 + $0xd90] sm:$0xff]
    %v2582 = vld [vmem:[#allocation10 + $0xd98] sm:$0xff]
    %v2583 = vld [vmem:[#allocation10 + $0xda0] sm:$0xff]
    %v2584 = vld [vmem:[#allocation10 + $0xda8] sm:$0xff]
    %v2585 = vld [vmem:[#allocation10 + $0xdb0] sm:$0xff]
    %v2586 = vld [vmem:[#allocation10 + $0xdb8] sm:$0xff]
    %v2587 = vld [vmem:[#allocation10 + $0xdc0] sm:$0xff]
    %v2588 = vld [vmem:[#allocation10 + $0xdc8] sm:$0xff]
    %v2589 = vld [vmem:[#allocation10 + $0xdd0] sm:$0xff]
    %v2590 = vld [vmem:[#allocation10 + $0xdd8] sm:$0xff]
    %v2591 = vld [vmem:[#allocation10 + $0xde0] sm:$0xff]
    %v2592 = vld [vmem:[#allocation10 + $0xde8] sm:$0xff]
    %v2593 = vld [vmem:[#allocation10 + $0xdf0] sm:$0xff]
    %v2594 = vld [vmem:[#allocation10 + $0xdf8] sm:$0xff]
    %v2595 = vld [vmem:[#allocation10 + $0xe00] sm:$0xff]
    %v2596 = vld [vmem:[#allocation10 + $0xe08] sm:$0xff]
    %v2597 = vld [vmem:[#allocation10 + $0xe10] sm:$0xff]
    %v2598 = vld [vmem:[#allocation10 + $0xe18] sm:$0xff]
    %v2599 = vld [vmem:[#allocation10 + $0xe20] sm:$0xff]
    %v2600 = vld [vmem:[#allocation10 + $0xe28] sm:$0xff]
    %v2601 = vld [vmem:[#allocation10 + $0xe30] sm:$0xff]
    %v2602 = vld [vmem:[#allocation10 + $0xe38] sm:$0xff]
    %v2603 = vld [vmem:[#allocation10 + $0xe40] sm:$0xff]
    %v2604 = vld [vmem:[#allocation10 + $0xe48] sm:$0xff]
    %v2605 = vld [vmem:[#allocation10 + $0xe50] sm:$0xff]
    %v2606 = vld [vmem:[#allocation10 + $0xe58] sm:$0xff]
    %v2607 = vld [vmem:[#allocation10 + $0xe60] sm:$0xff]
    %v2608 = vld [vmem:[#allocation10 + $0xe68] sm:$0xff]
    %v2609 = vld [vmem:[#allocation10 + $0xe70] sm:$0xff]
    %v2610 = vld [vmem:[#allocation10 + $0xe78] sm:$0xff]
    %v2611 = vld [vmem:[#allocation10 + $0xe80] sm:$0xff]
    %v2612 = vld [vmem:[#allocation10 + $0xe88] sm:$0xff]
    %v2613 = vld [vmem:[#allocation10 + $0xe90] sm:$0xff]
    %v2614 = vld [vmem:[#allocation10 + $0xe98] sm:$0xff]
    %v2615 = vld [vmem:[#allocation10 + $0xea0] sm:$0xff]
    %v2616 = vld [vmem:[#allocation10 + $0xea8] sm:$0xff]
    %v2617 = vld [vmem:[#allocation10 + $0xeb0] sm:$0xff]
    %v2618 = vld [vmem:[#allocation10 + $0xeb8] sm:$0xff]
    %v2619 = vld [vmem:[#allocation10 + $0xec0] sm:$0xff]
    %v2620 = vld [vmem:[#allocation10 + $0xec8] sm:$0xff]
    %v2621 = vld [vmem:[#allocation10 + $0xed0] sm:$0xff]
    %v2622 = vld [vmem:[#allocation10 + $0xed8] sm:$0xff]
    %v2623 = vld [vmem:[#allocation10 + $0xee0] sm:$0xff]
    %v2624 = vld [vmem:[#allocation10 + $0xee8] sm:$0xff]
    %v2625 = vld [vmem:[#allocation10 + $0xef0] sm:$0xff]
    %v2626 = vld [vmem:[#allocation10 + $0xef8] sm:$0xff]
    %v2627 = vld [vmem:[#allocation10 + $0xf00] sm:$0xff]
    %v2628 = vld [vmem:[#allocation10 + $0xf08] sm:$0xff]
    %v2629 = vld [vmem:[#allocation10 + $0xf10] sm:$0xff]
    %v2630 = vld [vmem:[#allocation10 + $0xf18] sm:$0xff]
    %v2631 = vld [vmem:[#allocation10 + $0xf20] sm:$0xff]
    %v2632 = vld [vmem:[#allocation10 + $0xf28] sm:$0xff]
    %v2633 = vld [vmem:[#allocation10 + $0xf30] sm:$0xff]
    %v2634 = vld [vmem:[#allocation10 + $0xf38] sm:$0xff]
    %v2635 = vld [vmem:[#allocation10 + $0xf40] sm:$0xff]
    %v2636 = vld [vmem:[#allocation10 + $0xf48] sm:$0xff]
    %v2637 = vld [vmem:[#allocation10 + $0xf50] sm:$0xff]
    %v2638 = vld [vmem:[#allocation10 + $0xf58] sm:$0xff]
    %v2639 = vld [vmem:[#allocation10 + $0xf60] sm:$0xff]
    %v2640 = vld [vmem:[#allocation10 + $0xf68] sm:$0xff]
    %v2641 = vld [vmem:[#allocation10 + $0xf70] sm:$0xff]
    %v2642 = vld [vmem:[#allocation10 + $0xf78] sm:$0xff]
    %v2643 = vld [vmem:[#allocation10 + $0xf80] sm:$0xff]
    %v2644 = vld [vmem:[#allocation10 + $0xf88] sm:$0xff]
    %v2645 = vld [vmem:[#allocation10 + $0xf90] sm:$0xff]
    %v2646 = vld [vmem:[#allocation10 + $0xf98] sm:$0xff]
    %v2647 = vld [vmem:[#allocation10 + $0xfa0] sm:$0xff]
    %v2648 = vld [vmem:[#allocation10 + $0xfa8] sm:$0xff]
    %v2649 = vld [vmem:[#allocation10 + $0xfb0] sm:$0xff]
    %v2650 = vld [vmem:[#allocation10 + $0xfb8] sm:$0xff]
    %v2651 = vld [vmem:[#allocation10 + $0xfc0] sm:$0xff]
    %v2652 = vld [vmem:[#allocation10 + $0xfc8] sm:$0xff]
    %v2653 = vld [vmem:[#allocation10 + $0xfd0] sm:$0xff]
    %v2654 = vld [vmem:[#allocation10 + $0xfd8] sm:$0xff]
    %v2655 = vld [vmem:[#allocation10 + $0xfe0] sm:$0xff]
    %v2656 = vld [vmem:[#allocation10 + $0xfe8] sm:$0xff]
    %v2657 = vld [vmem:[#allocation10 + $0xff0] sm:$0xff]
    %v2658 = vld [vmem:[#allocation10 + $0xff8] sm:$0xff]
    %v2659 = vld [vmem:[#allocation10 + $0x1000] sm:$0xff]
    %v2660 = vld [vmem:[#allocation10 + $0x1008] sm:$0xff]
    %v2661 = vld [vmem:[#allocation10 + $0x1010] sm:$0xff]
    %v2662 = vld [vmem:[#allocation10 + $0x1018] sm:$0xff]
    %v2663 = vld [vmem:[#allocation10 + $0x1020] sm:$0xff]
    %v2664 = vld [vmem:[#allocation10 + $0x1028] sm:$0xff]
    %v2665 = vld [vmem:[#allocation10 + $0x1030] sm:$0xff]
    %v2666 = vld [vmem:[#allocation10 + $0x1038] sm:$0xff]
    %v2667 = vld [vmem:[#allocation10 + $0x1040] sm:$0xff]
    %v2668 = vld [vmem:[#allocation10 + $0x1048] sm:$0xff]
    %v2669 = vld [vmem:[#allocation10 + $0x1050] sm:$0xff]
    %v2670 = vld [vmem:[#allocation10 + $0x1058] sm:$0xff]
    %v2671 = vld [vmem:[#allocation10 + $0x1060] sm:$0xff]
    %v2672 = vld [vmem:[#allocation10 + $0x1068] sm:$0xff]
    %v2673 = vld [vmem:[#allocation10 + $0x1070] sm:$0xff]
    %v2674 = vld [vmem:[#allocation10 + $0x1078] sm:$0xff]
    %v2675 = vld [vmem:[#allocation10 + $0x1080] sm:$0xff]
    %v2676 = vld [vmem:[#allocation10 + $0x1088] sm:$0xff]
    %v2677 = vld [vmem:[#allocation10 + $0x1090] sm:$0xff]
    %v2678 = vld [vmem:[#allocation10 + $0x1098] sm:$0xff]
    %v2679 = vld [vmem:[#allocation10 + $0x10a0] sm:$0xff]
    %v2680 = vld [vmem:[#allocation10 + $0x10a8] sm:$0xff]
    %v2681 = vld [vmem:[#allocation10 + $0x10b0] sm:$0xff]
    %v2682 = vld [vmem:[#allocation10 + $0x10b8] sm:$0xff]
    %v2683 = vld [vmem:[#allocation10 + $0x10c0] sm:$0xff]
    %v2684 = vld [vmem:[#allocation10 + $0x10c8] sm:$0xff]
    %v2685 = vld [vmem:[#allocation10 + $0x10d0] sm:$0xff]
    %v2686 = vld [vmem:[#allocation10 + $0x10d8] sm:$0xff]
    %v2687 = vld [vmem:[#allocation10 + $0x10e0] sm:$0xff]
    %v2688 = vld [vmem:[#allocation10 + $0x10e8] sm:$0xff]
    %v2689 = vld [vmem:[#allocation10 + $0x10f0] sm:$0xff]
    %v2690 = vld [vmem:[#allocation10 + $0x10f8] sm:$0xff]
    %v2691 = vld [vmem:[#allocation10 + $0x1100] sm:$0xff]
    %v2692 = vld [vmem:[#allocation10 + $0x1108] sm:$0xff]
    %v2693 = vld [vmem:[#allocation10 + $0x1110] sm:$0xff]
    %v2694 = vld [vmem:[#allocation10 + $0x1118] sm:$0xff]
    %v2695 = vld [vmem:[#allocation10 + $0x1120] sm:$0xff]
    %v2696 = vld [vmem:[#allocation10 + $0x1128] sm:$0xff]
    %v2697 = vld [vmem:[#allocation10 + $0x1130] sm:$0xff]
    %v2698 = vld [vmem:[#allocation10 + $0x1138] sm:$0xff]
    %v2699 = vld [vmem:[#allocation10 + $0x1140] sm:$0xff]
    %v2700 = vld [vmem:[#allocation10 + $0x1148] sm:$0xff]
    %v2701 = vld [vmem:[#allocation10 + $0x1150] sm:$0xff]
    %v2702 = vld [vmem:[#allocation10 + $0x1158] sm:$0xff]
    %v2703 = vld [vmem:[#allocation10 + $0x1160] sm:$0xff]
    %v2704 = vld [vmem:[#allocation10 + $0x1168] sm:$0xff]
    %v2705 = vld [vmem:[#allocation10 + $0x1170] sm:$0xff]
    %v2706 = vld [vmem:[#allocation10 + $0x1178] sm:$0xff]
    %v2707 = vld [vmem:[#allocation10 + $0x1180] sm:$0xff]
    %v2708 = vld [vmem:[#allocation10 + $0x1188] sm:$0xff]
    %v2709 = vld [vmem:[#allocation10 + $0x1190] sm:$0xff]
    %v2710 = vld [vmem:[#allocation10 + $0x1198] sm:$0xff]
    %v2711 = vld [vmem:[#allocation10 + $0x11a0] sm:$0xff]
    %v2712 = vld [vmem:[#allocation10 + $0x11a8] sm:$0xff]
    %v2713 = vld [vmem:[#allocation10 + $0x11b0] sm:$0xff]
    %v2714 = vld [vmem:[#allocation10 + $0x11b8] sm:$0xff]
    %v2715 = vld [vmem:[#allocation10 + $0x11c0] sm:$0xff]
    %v2716 = vld [vmem:[#allocation10 + $0x11c8] sm:$0xff]
    %v2717 = vld [vmem:[#allocation10 + $0x11d0] sm:$0xff]
    %v2718 = vld [vmem:[#allocation10 + $0x11d8] sm:$0xff]
    %v2719 = vld [vmem:[#allocation10 + $0x11e0] sm:$0xff]
    %v2720 = vld [vmem:[#allocation10 + $0x11e8] sm:$0xff]
    %v2721 = vld [vmem:[#allocation10 + $0x11f0] sm:$0xff]
    %v2722 = vld [vmem:[#allocation10 + $0x11f8] sm:$0xff]
    %v2723 = vld [vmem:[#allocation10 + $0x1200] sm:$0xff]
    %v2724 = vld [vmem:[#allocation10 + $0x1208] sm:$0xff]
    %v2725 = vld [vmem:[#allocation10 + $0x1210] sm:$0xff]
    %v2726 = vld [vmem:[#allocation10 + $0x1218] sm:$0xff]
    %v2727 = vld [vmem:[#allocation10 + $0x1220] sm:$0xff]
    %v2728 = vld [vmem:[#allocation10 + $0x1228] sm:$0xff]
    %v2729 = vld [vmem:[#allocation10 + $0x1230] sm:$0xff]
    %v2730 = vld [vmem:[#allocation10 + $0x1238] sm:$0xff]
    %v2731 = vld [vmem:[#allocation10 + $0x1240] sm:$0xff]
    %v2732 = vld [vmem:[#allocation10 + $0x1248] sm:$0xff]
    %v2733 = vld [vmem:[#allocation10 + $0x1250] sm:$0xff]
    %v2734 = vld [vmem:[#allocation10 + $0x1258] sm:$0xff]
    %v2735 = vld [vmem:[#allocation10 + $0x1260] sm:$0xff]
    %v2736 = vld [vmem:[#allocation10 + $0x1268] sm:$0xff]
    %v2737 = vld [vmem:[#allocation10 + $0x1270] sm:$0xff]
    %v2738 = vld [vmem:[#allocation10 + $0x1278] sm:$0xff]
    %v2739 = vld [vmem:[#allocation10 + $0x1280] sm:$0xff]
    %v2740 = vld [vmem:[#allocation10 + $0x1288] sm:$0xff]
    %v2741 = vld [vmem:[#allocation10 + $0x1290] sm:$0xff]
    %v2742 = vld [vmem:[#allocation10 + $0x1298] sm:$0xff]
    %v2743 = vld [vmem:[#allocation10 + $0x12a0] sm:$0xff]
    %v2744 = vld [vmem:[#allocation10 + $0x12a8] sm:$0xff]
    %v2745 = vld [vmem:[#allocation10 + $0x12b0] sm:$0xff]
    %v2746 = vld [vmem:[#allocation10 + $0x12b8] sm:$0xff]
    %v2747 = vld [vmem:[#allocation10 + $0x12c0] sm:$0xff]
    %v2748 = vld [vmem:[#allocation10 + $0x12c8] sm:$0xff]
    %v2749 = vld [vmem:[#allocation10 + $0x12d0] sm:$0xff]
    %v2750 = vld [vmem:[#allocation10 + $0x12d8] sm:$0xff]
    %v2751 = vld [vmem:[#allocation10 + $0x12e0] sm:$0xff]
    %v2752 = vld [vmem:[#allocation10 + $0x12e8] sm:$0xff]
    %v2753 = vld [vmem:[#allocation10 + $0x12f0] sm:$0xff]
    %v2754 = vld [vmem:[#allocation10 + $0x12f8] sm:$0xff]
    %v2755 = vld [vmem:[#allocation10 + $0x1300] sm:$0xff]
    %v2756 = vld [vmem:[#allocation10 + $0x1308] sm:$0xff]
    %v2757 = vld [vmem:[#allocation10 + $0x1310] sm:$0xff]
    %v2758 = vld [vmem:[#allocation10 + $0x1318] sm:$0xff]
    %v2759 = vld [vmem:[#allocation10 + $0x1320] sm:$0xff]
    %v2760 = vld [vmem:[#allocation10 + $0x1328] sm:$0xff]
    %v2761 = vld [vmem:[#allocation10 + $0x1330] sm:$0xff]
    %v2762 = vld [vmem:[#allocation10 + $0x1338] sm:$0xff]
    %v2763 = vld [vmem:[#allocation10 + $0x1340] sm:$0xff]
    %v2764 = vld [vmem:[#allocation10 + $0x1348] sm:$0xff]
    %v2765 = vld [vmem:[#allocation10 + $0x1350] sm:$0xff]
    %v2766 = vld [vmem:[#allocation10 + $0x1358] sm:$0xff]
    %v2767 = vld [vmem:[#allocation10 + $0x1360] sm:$0xff]
    %v2768 = vld [vmem:[#allocation10 + $0x1368] sm:$0xff]
    %v2769 = vld [vmem:[#allocation10 + $0x1370] sm:$0xff]
    %v2770 = vld [vmem:[#allocation10 + $0x1378] sm:$0xff]
    %v2771 = vld [vmem:[#allocation10 + $0x1380] sm:$0xff]
    %v2772 = vld [vmem:[#allocation10 + $0x1388] sm:$0xff]
    %v2773 = vld [vmem:[#allocation10 + $0x1390] sm:$0xff]
    %v2774 = vld [vmem:[#allocation10 + $0x1398] sm:$0xff]
    %v2775 = vld [vmem:[#allocation10 + $0x13a0] sm:$0xff]
    %v2776 = vld [vmem:[#allocation10 + $0x13a8] sm:$0xff]
    %v2777 = vld [vmem:[#allocation10 + $0x13b0] sm:$0xff]
    %v2778 = vld [vmem:[#allocation10 + $0x13b8] sm:$0xff]
    %v2779 = vld [vmem:[#allocation10 + $0x13c0] sm:$0xff]
    %v2780 = vld [vmem:[#allocation10 + $0x13c8] sm:$0xff]
    %v2781 = vld [vmem:[#allocation10 + $0x13d0] sm:$0xff]
    %v2782 = vld [vmem:[#allocation10 + $0x13d8] sm:$0xff]
    %v2783 = vld [vmem:[#allocation10 + $0x13e0] sm:$0xff]
    %v2784 = vld [vmem:[#allocation10 + $0x13e8] sm:$0xff]
    %v2785 = vld [vmem:[#allocation10 + $0x13f0] sm:$0xff]
    %v2786 = vld [vmem:[#allocation10 + $0x13f8] sm:$0xff]
    %v2787 = vld [vmem:[#allocation10 + $0x1400] sm:$0xff]
    %v2788 = vld [vmem:[#allocation10 + $0x1408] sm:$0xff]
    %v2789 = vld [vmem:[#allocation10 + $0x1410] sm:$0xff]
    %v2790 = vld [vmem:[#allocation10 + $0x1418] sm:$0xff]
    %v2791 = vld [vmem:[#allocation10 + $0x1420] sm:$0xff]
    %v2792 = vld [vmem:[#allocation10 + $0x1428] sm:$0xff]
    %v2793 = vld [vmem:[#allocation10 + $0x1430] sm:$0xff]
    %v2794 = vld [vmem:[#allocation10 + $0x1438] sm:$0xff]
    %v2795 = vld [vmem:[#allocation10 + $0x1440] sm:$0xff]
    %v2796 = vld [vmem:[#allocation10 + $0x1448] sm:$0xff]
    %v2797 = vld [vmem:[#allocation10 + $0x1450] sm:$0xff]
    %v2798 = vld [vmem:[#allocation10 + $0x1458] sm:$0xff]
    %v2799 = vld [vmem:[#allocation10 + $0x1460] sm:$0xff]
    %v2800 = vld [vmem:[#allocation10 + $0x1468] sm:$0xff]
    %v2801 = vld [vmem:[#allocation10 + $0x1470] sm:$0xff]
    %v2802 = vld [vmem:[#allocation10 + $0x1478] sm:$0xff]
    %v2803 = vld [vmem:[#allocation10 + $0x1480] sm:$0xff]
    %v2804 = vld [vmem:[#allocation10 + $0x1488] sm:$0xff]
    %v2805 = vld [vmem:[#allocation10 + $0x1490] sm:$0xff]
    %v2806 = vld [vmem:[#allocation10 + $0x1498] sm:$0xff]
    %v2807 = vld [vmem:[#allocation10 + $0x14a0] sm:$0xff]
    %v2808 = vld [vmem:[#allocation10 + $0x14a8] sm:$0xff]
    %v2809 = vld [vmem:[#allocation10 + $0x14b0] sm:$0xff]
    %v2810 = vld [vmem:[#allocation10 + $0x14b8] sm:$0xff]
    %v2811 = vld [vmem:[#allocation10 + $0x14c0] sm:$0xff]
    %v2812 = vld [vmem:[#allocation10 + $0x14c8] sm:$0xff]
    %v2813 = vld [vmem:[#allocation10 + $0x14d0] sm:$0xff]
    %v2814 = vld [vmem:[#allocation10 + $0x14d8] sm:$0xff]
    %v2815 = vld [vmem:[#allocation10 + $0x14e0] sm:$0xff]
    %v2816 = vld [vmem:[#allocation10 + $0x14e8] sm:$0xff]
    %v2817 = vld [vmem:[#allocation10 + $0x14f0] sm:$0xff]
    %v2818 = vld [vmem:[#allocation10 + $0x14f8] sm:$0xff]
    %v2819 = vld [vmem:[#allocation10 + $0x1500] sm:$0xff]
    %v2820 = vld [vmem:[#allocation10 + $0x1508] sm:$0xff]
    %v2821 = vld [vmem:[#allocation10 + $0x1510] sm:$0xff]
    %v2822 = vld [vmem:[#allocation10 + $0x1518] sm:$0xff]
    %v2823 = vld [vmem:[#allocation10 + $0x1520] sm:$0xff]
    %v2824 = vld [vmem:[#allocation10 + $0x1528] sm:$0xff]
    %v2825 = vld [vmem:[#allocation10 + $0x1530] sm:$0xff]
    %v2826 = vld [vmem:[#allocation10 + $0x1538] sm:$0xff]
    %v2827 = vld [vmem:[#allocation10 + $0x1540] sm:$0xff]
    %v2828 = vld [vmem:[#allocation10 + $0x1548] sm:$0xff]
    %v2829 = vld [vmem:[#allocation10 + $0x1550] sm:$0xff]
    %v2830 = vld [vmem:[#allocation10 + $0x1558] sm:$0xff]
    %v2831 = vld [vmem:[#allocation10 + $0x1560] sm:$0xff]
    %v2832 = vld [vmem:[#allocation10 + $0x1568] sm:$0xff]
    %v2833 = vld [vmem:[#allocation10 + $0x1570] sm:$0xff]
    %v2834 = vld [vmem:[#allocation10 + $0x1578] sm:$0xff]
    %v2835 = vld [vmem:[#allocation10 + $0x1580] sm:$0xff]
    %v2836 = vld [vmem:[#allocation10 + $0x1588] sm:$0xff]
    %v2837 = vld [vmem:[#allocation10 + $0x1590] sm:$0xff]
    %v2838 = vld [vmem:[#allocation10 + $0x1598] sm:$0xff]
    %v2839 = vld [vmem:[#allocation10 + $0x15a0] sm:$0xff]
    %v2840 = vld [vmem:[#allocation10 + $0x15a8] sm:$0xff]
    %v2841 = vld [vmem:[#allocation10 + $0x15b0] sm:$0xff]
    %v2842 = vld [vmem:[#allocation10 + $0x15b8] sm:$0xff]
    %v2843 = vld [vmem:[#allocation10 + $0x15c0] sm:$0xff]
    %v2844 = vld [vmem:[#allocation10 + $0x15c8] sm:$0xff]
    %v2845 = vld [vmem:[#allocation10 + $0x15d0] sm:$0xff]
    %v2846 = vld [vmem:[#allocation10 + $0x15d8] sm:$0xff]
    %v2847 = vld [vmem:[#allocation10 + $0x15e0] sm:$0xff]
    %v2848 = vld [vmem:[#allocation10 + $0x15e8] sm:$0xff]
    %v2849 = vld [vmem:[#allocation10 + $0x15f0] sm:$0xff]
    %v2850 = vld [vmem:[#allocation10 + $0x15f8] sm:$0xff]
    %v2851 = vld [vmem:[#allocation10 + $0x1600] sm:$0xff]
    %v2852 = vld [vmem:[#allocation10 + $0x1608] sm:$0xff]
    %v2853 = vld [vmem:[#allocation10 + $0x1610] sm:$0xff]
    %v2854 = vld [vmem:[#allocation10 + $0x1618] sm:$0xff]
    %v2855 = vld [vmem:[#allocation10 + $0x1620] sm:$0xff]
    %v2856 = vld [vmem:[#allocation10 + $0x1628] sm:$0xff]
    %v2857 = vld [vmem:[#allocation10 + $0x1630] sm:$0xff]
    %v2858 = vld [vmem:[#allocation10 + $0x1638] sm:$0xff]
    %v2859 = vld [vmem:[#allocation10 + $0x1640] sm:$0xff]
    %v2860 = vld [vmem:[#allocation10 + $0x1648] sm:$0xff]
    %v2861 = vld [vmem:[#allocation10 + $0x1650] sm:$0xff]
    %v2862 = vld [vmem:[#allocation10 + $0x1658] sm:$0xff]
    %v2863 = vld [vmem:[#allocation10 + $0x1660] sm:$0xff]
    %v2864 = vld [vmem:[#allocation10 + $0x1668] sm:$0xff]
    %v2865 = vld [vmem:[#allocation10 + $0x1670] sm:$0xff]
    %v2866 = vld [vmem:[#allocation10 + $0x1678] sm:$0xff]
    %v2867 = vld [vmem:[#allocation10 + $0x1680] sm:$0xff]
    %v2868 = vld [vmem:[#allocation10 + $0x1688] sm:$0xff]
    %v2869 = vld [vmem:[#allocation10 + $0x1690] sm:$0xff]
    %v2870 = vld [vmem:[#allocation10 + $0x1698] sm:$0xff]
    %v2871 = vld [vmem:[#allocation10 + $0x16a0] sm:$0xff]
    %v2872 = vld [vmem:[#allocation10 + $0x16a8] sm:$0xff]
    %v2873 = vld [vmem:[#allocation10 + $0x16b0] sm:$0xff]
    %v2874 = vld [vmem:[#allocation10 + $0x16b8] sm:$0xff]
    %v2875 = vld [vmem:[#allocation10 + $0x16c0] sm:$0xff]
    %v2876 = vld [vmem:[#allocation10 + $0x16c8] sm:$0xff]
    %v2877 = vld [vmem:[#allocation10 + $0x16d0] sm:$0xff]
    %v2878 = vld [vmem:[#allocation10 + $0x16d8] sm:$0xff]
    %v2879 = vld [vmem:[#allocation10 + $0x16e0] sm:$0xff]
    %v2880 = vld [vmem:[#allocation10 + $0x16e8] sm:$0xff]
    %v2881 = vld [vmem:[#allocation10 + $0x16f0] sm:$0xff]
    %v2882 = vld [vmem:[#allocation10 + $0x16f8] sm:$0xff]
    %v2883 = vld [vmem:[#allocation10 + $0x1700] sm:$0xff]
    %v2884 = vld [vmem:[#allocation10 + $0x1708] sm:$0xff]
    %v2885 = vld [vmem:[#allocation10 + $0x1710] sm:$0xff]
    %v2886 = vld [vmem:[#allocation10 + $0x1718] sm:$0xff]
    %v2887 = vld [vmem:[#allocation10 + $0x1720] sm:$0xff]
    %v2888 = vld [vmem:[#allocation10 + $0x1728] sm:$0xff]
    %v2889 = vld [vmem:[#allocation10 + $0x1730] sm:$0xff]
    %v2890 = vld [vmem:[#allocation10 + $0x1738] sm:$0xff]
    %v2891 = vld [vmem:[#allocation10 + $0x1740] sm:$0xff]
    %v2892 = vld [vmem:[#allocation10 + $0x1748] sm:$0xff]
    %v2893 = vld [vmem:[#allocation10 + $0x1750] sm:$0xff]
    %v2894 = vld [vmem:[#allocation10 + $0x1758] sm:$0xff]
    %v2895 = vld [vmem:[#allocation10 + $0x1760] sm:$0xff]
    %v2896 = vld [vmem:[#allocation10 + $0x1768] sm:$0xff]
    %v2897 = vld [vmem:[#allocation10 + $0x1770] sm:$0xff]
    %v2898 = vld [vmem:[#allocation10 + $0x1778] sm:$0xff]
    %v2899 = vld [vmem:[#allocation10 + $0x1780] sm:$0xff]
    %v2900 = vld [vmem:[#allocation10 + $0x1788] sm:$0xff]
    %v2901 = vld [vmem:[#allocation10 + $0x1790] sm:$0xff]
    %v2902 = vld [vmem:[#allocation10 + $0x1798] sm:$0xff]
    %v2903 = vld [vmem:[#allocation10 + $0x17a0] sm:$0xff]
    %v2904 = vld [vmem:[#allocation10 + $0x17a8] sm:$0xff]
    %v2905 = vld [vmem:[#allocation10 + $0x17b0] sm:$0xff]
    %v2906 = vld [vmem:[#allocation10 + $0x17b8] sm:$0xff]
    %v2907 = vld [vmem:[#allocation10 + $0x17c0] sm:$0xff]
    %v2908 = vld [vmem:[#allocation10 + $0x17c8] sm:$0xff]
    %v2909 = vld [vmem:[#allocation10 + $0x17d0] sm:$0xff]
    %v2910 = vld [vmem:[#allocation10 + $0x17d8] sm:$0xff]
    %v2911 = vld [vmem:[#allocation10 + $0x17e0] sm:$0xff]
    %v2912 = vld [vmem:[#allocation10 + $0x17e8] sm:$0xff]
    %v2913 = vld [vmem:[#allocation10 + $0x17f0] sm:$0xff]
    %v2914 = vld [vmem:[#allocation10 + $0x17f8] sm:$0xff]
    %v2915 = vld [vmem:[#allocation10 + $0x1800] sm:$0xff]
    %v2916 = vld [vmem:[#allocation10 + $0x1808] sm:$0xff]
    %v2917 = vld [vmem:[#allocation10 + $0x1810] sm:$0xff]
    %v2918 = vld [vmem:[#allocation10 + $0x1818] sm:$0xff]
    %v2919 = vld [vmem:[#allocation10 + $0x1820] sm:$0xff]
    %v2920 = vld [vmem:[#allocation10 + $0x1828] sm:$0xff]
    %v2921 = vld [vmem:[#allocation10 + $0x1830] sm:$0xff]
    %v2922 = vld [vmem:[#allocation10 + $0x1838] sm:$0xff]
    %v2923 = vld [vmem:[#allocation10 + $0x1840] sm:$0xff]
    %v2924 = vld [vmem:[#allocation10 + $0x1848] sm:$0xff]
    %v2925 = vld [vmem:[#allocation10 + $0x1850] sm:$0xff]
    %v2926 = vld [vmem:[#allocation10 + $0x1858] sm:$0xff]
    %v2927 = vld [vmem:[#allocation10 + $0x1860] sm:$0xff]
    %v2928 = vld [vmem:[#allocation10 + $0x1868] sm:$0xff]
    %v2929 = vld [vmem:[#allocation10 + $0x1870] sm:$0xff]
    %v2930 = vld [vmem:[#allocation10 + $0x1878] sm:$0xff]
    %v2931 = vld [vmem:[#allocation10 + $0x1880] sm:$0xff]
    %v2932 = vld [vmem:[#allocation10 + $0x1888] sm:$0xff]
    %v2933 = vld [vmem:[#allocation10 + $0x1890] sm:$0xff]
    %v2934 = vld [vmem:[#allocation10 + $0x1898] sm:$0xff]
    %v2935 = vld [vmem:[#allocation10 + $0x18a0] sm:$0xff]
    %v2936 = vld [vmem:[#allocation10 + $0x18a8] sm:$0xff]
    %v2937 = vld [vmem:[#allocation10 + $0x18b0] sm:$0xff]
    %v2938 = vld [vmem:[#allocation10 + $0x18b8] sm:$0xff]
    %v2939 = vld [vmem:[#allocation10 + $0x18c0] sm:$0xff]
    %v2940 = vld [vmem:[#allocation10 + $0x18c8] sm:$0xff]
    %v2941 = vld [vmem:[#allocation10 + $0x18d0] sm:$0xff]
    %v2942 = vld [vmem:[#allocation10 + $0x18d8] sm:$0xff]
    %v2943 = vld [vmem:[#allocation10 + $0x18e0] sm:$0xff]
    %v2944 = vld [vmem:[#allocation10 + $0x18e8] sm:$0xff]
    %v2945 = vld [vmem:[#allocation10 + $0x18f0] sm:$0xff]
    %v2946 = vld [vmem:[#allocation10 + $0x18f8] sm:$0xff]
    %v2947 = vld [vmem:[#allocation10 + $0x1900] sm:$0xff]
    %v2948 = vld [vmem:[#allocation10 + $0x1908] sm:$0xff]
    %v2949 = vld [vmem:[#allocation10 + $0x1910] sm:$0xff]
    %v2950 = vld [vmem:[#allocation10 + $0x1918] sm:$0xff]
    %v2951 = vld [vmem:[#allocation10 + $0x1920] sm:$0xff]
    %v2952 = vld [vmem:[#allocation10 + $0x1928] sm:$0xff]
    %v2953 = vld [vmem:[#allocation10 + $0x1930] sm:$0xff]
    %v2954 = vld [vmem:[#allocation10 + $0x1938] sm:$0xff]
    %v2955 = vld [vmem:[#allocation10 + $0x1940] sm:$0xff]
    %v2956 = vld [vmem:[#allocation10 + $0x1948] sm:$0xff]
    %v2957 = vld [vmem:[#allocation10 + $0x1950] sm:$0xff]
    %v2958 = vld [vmem:[#allocation10 + $0x1958] sm:$0xff]
    %v2959 = vld [vmem:[#allocation10 + $0x1960] sm:$0xff]
    %v2960 = vld [vmem:[#allocation10 + $0x1968] sm:$0xff]
    %v2961 = vld [vmem:[#allocation10 + $0x1970] sm:$0xff]
    %v2962 = vld [vmem:[#allocation10 + $0x1978] sm:$0xff]
    %v2963 = vld [vmem:[#allocation10 + $0x1980] sm:$0xff]
    %v2964 = vld [vmem:[#allocation10 + $0x1988] sm:$0xff]
    %v2965 = vld [vmem:[#allocation10 + $0x1990] sm:$0xff]
    %v2966 = vld [vmem:[#allocation10 + $0x1998] sm:$0xff]
    %v2967 = vld [vmem:[#allocation10 + $0x19a0] sm:$0xff]
    %v2968 = vld [vmem:[#allocation10 + $0x19a8] sm:$0xff]
    %v2969 = vld [vmem:[#allocation10 + $0x19b0] sm:$0xff]
    %v2970 = vld [vmem:[#allocation10 + $0x19b8] sm:$0xff]
    %v2971 = vld [vmem:[#allocation10 + $0x19c0] sm:$0xff]
    %v2972 = vld [vmem:[#allocation10 + $0x19c8] sm:$0xff]
    %v2973 = vld [vmem:[#allocation10 + $0x19d0] sm:$0xff]
    %v2974 = vld [vmem:[#allocation10 + $0x19d8] sm:$0xff]
    %v2975 = vld [vmem:[#allocation10 + $0x19e0] sm:$0xff]
    %v2976 = vld [vmem:[#allocation10 + $0x19e8] sm:$0xff]
    %v2977 = vld [vmem:[#allocation10 + $0x19f0] sm:$0xff]
    %v2978 = vld [vmem:[#allocation10 + $0x19f8] sm:$0xff]
    %v2979 = vld [vmem:[#allocation10 + $0x1a00] sm:$0xff]
    %v2980 = vld [vmem:[#allocation10 + $0x1a08] sm:$0xff]
    %v2981 = vld [vmem:[#allocation10 + $0x1a10] sm:$0xff]
    %v2982 = vld [vmem:[#allocation10 + $0x1a18] sm:$0xff]
    %v2983 = vld [vmem:[#allocation10 + $0x1a20] sm:$0xff]
    %v2984 = vld [vmem:[#allocation10 + $0x1a28] sm:$0xff]
    %v2985 = vld [vmem:[#allocation10 + $0x1a30] sm:$0xff]
    %v2986 = vld [vmem:[#allocation10 + $0x1a38] sm:$0xff]
    %v2987 = vld [vmem:[#allocation10 + $0x1a40] sm:$0xff]
    %v2988 = vld [vmem:[#allocation10 + $0x1a48] sm:$0xff]
    %v2989 = vld [vmem:[#allocation10 + $0x1a50] sm:$0xff]
    %v2990 = vld [vmem:[#allocation10 + $0x1a58] sm:$0xff]
    %v2991 = vld [vmem:[#allocation10 + $0x1a60] sm:$0xff]
    %v2992 = vld [vmem:[#allocation10 + $0x1a68] sm:$0xff]
    %v2993 = vld [vmem:[#allocation10 + $0x1a70] sm:$0xff]
    %v2994 = vld [vmem:[#allocation10 + $0x1a78] sm:$0xff]
    %v2995 = vld [vmem:[#allocation10 + $0x1a80] sm:$0xff]
    %v2996 = vld [vmem:[#allocation10 + $0x1a88] sm:$0xff]
    %v2997 = vld [vmem:[#allocation10 + $0x1a90] sm:$0xff]
    %v2998 = vld [vmem:[#allocation10 + $0x1a98] sm:$0xff]
    %v2999 = vld [vmem:[#allocation10 + $0x1aa0] sm:$0xff]
    %v3000 = vld [vmem:[#allocation10 + $0x1aa8] sm:$0xff]
    %v3001 = vld [vmem:[#allocation10 + $0x1ab0] sm:$0xff]
    %v3002 = vld [vmem:[#allocation10 + $0x1ab8] sm:$0xff]
    %v3003 = vld [vmem:[#allocation10 + $0x1ac0] sm:$0xff]
    %v3004 = vld [vmem:[#allocation10 + $0x1ac8] sm:$0xff]
    %v3005 = vld [vmem:[#allocation10 + $0x1ad0] sm:$0xff]
    %v3006 = vld [vmem:[#allocation10 + $0x1ad8] sm:$0xff]
    %v3007 = vld [vmem:[#allocation10 + $0x1ae0] sm:$0xff]
    %v3008 = vld [vmem:[#allocation10 + $0x1ae8] sm:$0xff]
    %v3009 = vld [vmem:[#allocation10 + $0x1af0] sm:$0xff]
    %v3010 = vld [vmem:[#allocation10 + $0x1af8] sm:$0xff]
    %v3011 = vld [vmem:[#allocation10 + $0x1b00] sm:$0xff]
    %v3012 = vld [vmem:[#allocation10 + $0x1b08] sm:$0xff]
    %v3013 = vld [vmem:[#allocation10 + $0x1b10] sm:$0xff]
    %v3014 = vld [vmem:[#allocation10 + $0x1b18] sm:$0xff]
    %v3015 = vld [vmem:[#allocation10 + $0x1b20] sm:$0xff]
    %v3016 = vld [vmem:[#allocation10 + $0x1b28] sm:$0xff]
    %v3017 = vld [vmem:[#allocation10 + $0x1b30] sm:$0xff]
    %v3018 = vld [vmem:[#allocation10 + $0x1b38] sm:$0xff]
    %v3019 = vld [vmem:[#allocation10 + $0x1b40] sm:$0xff]
    %v3020 = vld [vmem:[#allocation10 + $0x1b48] sm:$0xff]
    %v3021 = vld [vmem:[#allocation10 + $0x1b50] sm:$0xff]
    %v3022 = vld [vmem:[#allocation10 + $0x1b58] sm:$0xff]
    %v3023 = vld [vmem:[#allocation10 + $0x1b60] sm:$0xff]
    %v3024 = vld [vmem:[#allocation10 + $0x1b68] sm:$0xff]
    %v3025 = vld [vmem:[#allocation10 + $0x1b70] sm:$0xff]
    %v3026 = vld [vmem:[#allocation10 + $0x1b78] sm:$0xff]
    %v3027 = vld [vmem:[#allocation10 + $0x1b80] sm:$0xff]
    %v3028 = vld [vmem:[#allocation10 + $0x1b88] sm:$0xff]
    %v3029 = vld [vmem:[#allocation10 + $0x1b90] sm:$0xff]
    %v3030 = vld [vmem:[#allocation10 + $0x1b98] sm:$0xff]
    %v3031 = vld [vmem:[#allocation10 + $0x1ba0] sm:$0xff]
    %v3032 = vld [vmem:[#allocation10 + $0x1ba8] sm:$0xff]
    %v3033 = vld [vmem:[#allocation10 + $0x1bb0] sm:$0xff]
    %v3034 = vld [vmem:[#allocation10 + $0x1bb8] sm:$0xff]
    %v3035 = vld [vmem:[#allocation10 + $0x1bc0] sm:$0xff]
    %v3036 = vld [vmem:[#allocation10 + $0x1bc8] sm:$0xff]
    %v3037 = vld [vmem:[#allocation10 + $0x1bd0] sm:$0xff]
    %v3038 = vld [vmem:[#allocation10 + $0x1bd8] sm:$0xff]
    %v3039 = vld [vmem:[#allocation10 + $0x1be0] sm:$0xff]
    %v3040 = vld [vmem:[#allocation10 + $0x1be8] sm:$0xff]
    %v3041 = vld [vmem:[#allocation10 + $0x1bf0] sm:$0xff]
    %v3042 = vld [vmem:[#allocation10 + $0x1bf8] sm:$0xff]
    %v3043 = vld [vmem:[#allocation10 + $0x1c00] sm:$0xff]
    %v3044 = vld [vmem:[#allocation10 + $0x1c08] sm:$0xff]
    %v3045 = vld [vmem:[#allocation10 + $0x1c10] sm:$0xff]
    %v3046 = vld [vmem:[#allocation10 + $0x1c18] sm:$0xff]
    %v3047 = vld [vmem:[#allocation10 + $0x1c20] sm:$0xff]
    %v3048 = vld [vmem:[#allocation10 + $0x1c28] sm:$0xff]
    %v3049 = vld [vmem:[#allocation10 + $0x1c30] sm:$0xff]
    %v3050 = vld [vmem:[#allocation10 + $0x1c38] sm:$0xff]
    %v3051 = vld [vmem:[#allocation10 + $0x1c40] sm:$0xff]
    %v3052 = vld [vmem:[#allocation10 + $0x1c48] sm:$0xff]
    %v3053 = vld [vmem:[#allocation10 + $0x1c50] sm:$0xff]
    %v3054 = vld [vmem:[#allocation10 + $0x1c58] sm:$0xff]
    %v3055 = vld [vmem:[#allocation10 + $0x1c60] sm:$0xff]
    %v3056 = vld [vmem:[#allocation10 + $0x1c68] sm:$0xff]
    %v3057 = vld [vmem:[#allocation10 + $0x1c70] sm:$0xff]
    %v3058 = vld [vmem:[#allocation10 + $0x1c78] sm:$0xff]
    %v3059 = vld [vmem:[#allocation10 + $0x1c80] sm:$0xff]
    %v3060 = vld [vmem:[#allocation10 + $0x1c88] sm:$0xff]
    %v3061 = vld [vmem:[#allocation10 + $0x1c90] sm:$0xff]
    %v3062 = vld [vmem:[#allocation10 + $0x1c98] sm:$0xff]
    %v3063 = vld [vmem:[#allocation10 + $0x1ca0] sm:$0xff]
    %v3064 = vld [vmem:[#allocation10 + $0x1ca8] sm:$0xff]
    %v3065 = vld [vmem:[#allocation10 + $0x1cb0] sm:$0xff]
    %v3066 = vld [vmem:[#allocation10 + $0x1cb8] sm:$0xff]
    %v3067 = vld [vmem:[#allocation10 + $0x1cc0] sm:$0xff]
    %v3068 = vld [vmem:[#allocation10 + $0x1cc8] sm:$0xff]
    %v3069 = vld [vmem:[#allocation10 + $0x1cd0] sm:$0xff]
    %v3070 = vld [vmem:[#allocation10 + $0x1cd8] sm:$0xff]
    %v3071 = vld [vmem:[#allocation10 + $0x1ce0] sm:$0xff]
    %v3072 = vld [vmem:[#allocation10 + $0x1ce8] sm:$0xff]
    %v3073 = vld [vmem:[#allocation10 + $0x1cf0] sm:$0xff]
    %v3074 = vld [vmem:[#allocation10 + $0x1cf8] sm:$0xff]
    %v3075 = vld [vmem:[#allocation10 + $0x1d00] sm:$0xff]
    %v3076 = vld [vmem:[#allocation10 + $0x1d08] sm:$0xff]
    %v3077 = vld [vmem:[#allocation10 + $0x1d10] sm:$0xff]
    %v3078 = vld [vmem:[#allocation10 + $0x1d18] sm:$0xff]
    %v3079 = vld [vmem:[#allocation10 + $0x1d20] sm:$0xff]
    %v3080 = vld [vmem:[#allocation10 + $0x1d28] sm:$0xff]
    %v3081 = vld [vmem:[#allocation10 + $0x1d30] sm:$0xff]
    %v3082 = vld [vmem:[#allocation10 + $0x1d38] sm:$0xff]
    %v3083 = vld [vmem:[#allocation10 + $0x1d40] sm:$0xff]
    %v3084 = vld [vmem:[#allocation10 + $0x1d48] sm:$0xff]
    %v3085 = vld [vmem:[#allocation10 + $0x1d50] sm:$0xff]
    %v3086 = vld [vmem:[#allocation10 + $0x1d58] sm:$0xff]
    %v3087 = vld [vmem:[#allocation10 + $0x1d60] sm:$0xff]
    %v3088 = vld [vmem:[#allocation10 + $0x1d68] sm:$0xff]
    %v3089 = vld [vmem:[#allocation10 + $0x1d70] sm:$0xff]
    %v3090 = vld [vmem:[#allocation10 + $0x1d78] sm:$0xff]
    %v3091 = vld [vmem:[#allocation10 + $0x1d80] sm:$0xff]
    %v3092 = vld [vmem:[#allocation10 + $0x1d88] sm:$0xff]
    %v3093 = vld [vmem:[#allocation10 + $0x1d90] sm:$0xff]
    %v3094 = vld [vmem:[#allocation10 + $0x1d98] sm:$0xff]
    %v3095 = vld [vmem:[#allocation10 + $0x1da0] sm:$0xff]
    %v3096 = vld [vmem:[#allocation10 + $0x1da8] sm:$0xff]
    %v3097 = vld [vmem:[#allocation10 + $0x1db0] sm:$0xff]
    %v3098 = vld [vmem:[#allocation10 + $0x1db8] sm:$0xff]
    %v3099 = vld [vmem:[#allocation10 + $0x1dc0] sm:$0xff]
    %v3100 = vld [vmem:[#allocation10 + $0x1dc8] sm:$0xff]
    %v3101 = vld [vmem:[#allocation10 + $0x1dd0] sm:$0xff]
    %v3102 = vld [vmem:[#allocation10 + $0x1dd8] sm:$0xff]
    %v3103 = vld [vmem:[#allocation10 + $0x1de0] sm:$0xff]
    %v3104 = vld [vmem:[#allocation10 + $0x1de8] sm:$0xff]
    %v3105 = vld [vmem:[#allocation10 + $0x1df0] sm:$0xff]
    %v3106 = vld [vmem:[#allocation10 + $0x1df8] sm:$0xff]
    %v3107 = vld [vmem:[#allocation10 + $0x1e00] sm:$0xff]
    %v3108 = vld [vmem:[#allocation10 + $0x1e08] sm:$0xff]
    %v3109 = vld [vmem:[#allocation10 + $0x1e10] sm:$0xff]
    %v3110 = vld [vmem:[#allocation10 + $0x1e18] sm:$0xff]
    %v3111 = vld [vmem:[#allocation10 + $0x1e20] sm:$0xff]
    %v3112 = vld [vmem:[#allocation10 + $0x1e28] sm:$0xff]
    %v3113 = vld [vmem:[#allocation10 + $0x1e30] sm:$0xff]
    %v3114 = vld [vmem:[#allocation10 + $0x1e38] sm:$0xff]
    %v3115 = vld [vmem:[#allocation10 + $0x1e40] sm:$0xff]
    %v3116 = vld [vmem:[#allocation10 + $0x1e48] sm:$0xff]
    %v3117 = vld [vmem:[#allocation10 + $0x1e50] sm:$0xff]
    %v3118 = vld [vmem:[#allocation10 + $0x1e58] sm:$0xff]
    %v3119 = vld [vmem:[#allocation10 + $0x1e60] sm:$0xff]
    %v3120 = vld [vmem:[#allocation10 + $0x1e68] sm:$0xff]
    %v3121 = vld [vmem:[#allocation10 + $0x1e70] sm:$0xff]
    %v3122 = vld [vmem:[#allocation10 + $0x1e78] sm:$0xff]
    %v3123 = vld [vmem:[#allocation10 + $0x1e80] sm:$0xff]
    %v3124 = vld [vmem:[#allocation10 + $0x1e88] sm:$0xff]
    %v3125 = vld [vmem:[#allocation10 + $0x1e90] sm:$0xff]
    %v3126 = vld [vmem:[#allocation10 + $0x1e98] sm:$0xff]
    %v3127 = vld [vmem:[#allocation10 + $0x1ea0] sm:$0xff]
    %v3128 = vld [vmem:[#allocation10 + $0x1ea8] sm:$0xff]
    %v3129 = vld [vmem:[#allocation10 + $0x1eb0] sm:$0xff]
    %v3130 = vld [vmem:[#allocation10 + $0x1eb8] sm:$0xff]
    %v3131 = vld [vmem:[#allocation10 + $0x1ec0] sm:$0xff]
    %v3132 = vld [vmem:[#allocation10 + $0x1ec8] sm:$0xff]
    %v3133 = vld [vmem:[#allocation10 + $0x1ed0] sm:$0xff]
    %v3134 = vld [vmem:[#allocation10 + $0x1ed8] sm:$0xff]
    %v3135 = vld [vmem:[#allocation10 + $0x1ee0] sm:$0xff]
    %v3136 = vld [vmem:[#allocation10 + $0x1ee8] sm:$0xff]
    %v3137 = vld [vmem:[#allocation10 + $0x1ef0] sm:$0xff]
    %v3138 = vld [vmem:[#allocation10 + $0x1ef8] sm:$0xff]
    %v3139 = vld [vmem:[#allocation10 + $0x1f00] sm:$0xff]
    %v3140 = vld [vmem:[#allocation10 + $0x1f08] sm:$0xff]
    %v3141 = vld [vmem:[#allocation10 + $0x1f10] sm:$0xff]
    %v3142 = vld [vmem:[#allocation10 + $0x1f18] sm:$0xff]
    %v3143 = vld [vmem:[#allocation10 + $0x1f20] sm:$0xff]
    %v3144 = vld [vmem:[#allocation10 + $0x1f28] sm:$0xff]
    %v3145 = vld [vmem:[#allocation10 + $0x1f30] sm:$0xff]
    %v3146 = vld [vmem:[#allocation10 + $0x1f38] sm:$0xff]
    %v3147 = vld [vmem:[#allocation10 + $0x1f40] sm:$0xff]
    %v3148 = vld [vmem:[#allocation10 + $0x1f48] sm:$0xff]
    %v3149 = vld [vmem:[#allocation10 + $0x1f50] sm:$0xff]
    %v3150 = vld [vmem:[#allocation10 + $0x1f58] sm:$0xff]
    %v3151 = vld [vmem:[#allocation10 + $0x1f60] sm:$0xff]
    %v3152 = vld [vmem:[#allocation10 + $0x1f68] sm:$0xff]
    %v3153 = vld [vmem:[#allocation10 + $0x1f70] sm:$0xff]
    %v3154 = vld [vmem:[#allocation10 + $0x1f78] sm:$0xff]
    %v3155 = vld [vmem:[#allocation10 + $0x1f80] sm:$0xff]
    %v3156 = vld [vmem:[#allocation10 + $0x1f88] sm:$0xff]
    %v3157 = vld [vmem:[#allocation10 + $0x1f90] sm:$0xff]
    %v3158 = vld [vmem:[#allocation10 + $0x1f98] sm:$0xff]
    %v3159 = vld [vmem:[#allocation10 + $0x1fa0] sm:$0xff]
    %v3160 = vld [vmem:[#allocation10 + $0x1fa8] sm:$0xff]
    %v3161 = vld [vmem:[#allocation10 + $0x1fb0] sm:$0xff]
    %v3162 = vld [vmem:[#allocation10 + $0x1fb8] sm:$0xff]
    %v3163 = vld [vmem:[#allocation10 + $0x1fc0] sm:$0xff]
    %v3164 = vld [vmem:[#allocation10 + $0x1fc8] sm:$0xff]
    %v3165 = vld [vmem:[#allocation10 + $0x1fd0] sm:$0xff]
    %v3166 = vld [vmem:[#allocation10 + $0x1fd8] sm:$0xff]
    %v3167 = vld [vmem:[#allocation10 + $0x1fe0] sm:$0xff]
    %v3168 = vld [vmem:[#allocation10 + $0x1fe8] sm:$0xff]
    %v3169 = vld [vmem:[#allocation10 + $0x1ff0] sm:$0xff]
    %v3170 = vld [vmem:[#allocation10 + $0x1ff8] sm:$0xff]
    %s3171 = scalar_lea.vmem [#allocation10], 8192
    %v3172 = vld [vmem:[%s3171] sm:$0xff]
    %v3173 = vld [vmem:[%s3171 + $0x8] sm:$0xff]
    %v3174 = vld [vmem:[%s3171 + $0x10] sm:$0xff]
    %v3175 = vld [vmem:[%s3171 + $0x18] sm:$0xff]
    %v3176 = vld [vmem:[%s3171 + $0x20] sm:$0xff]
    %v3177 = vld [vmem:[%s3171 + $0x28] sm:$0xff]
    %v3178 = vld [vmem:[%s3171 + $0x30] sm:$0xff]
    %v3179 = vld [vmem:[%s3171 + $0x38] sm:$0xff]
    %v3180 = vld [vmem:[%s3171 + $0x40] sm:$0xff]
    %v3181 = vld [vmem:[%s3171 + $0x48] sm:$0xff]
    %v3182 = vld [vmem:[%s3171 + $0x50] sm:$0xff]
    %v3183 = vld [vmem:[%s3171 + $0x58] sm:$0xff]
    %v3184 = vld [vmem:[%s3171 + $0x60] sm:$0xff]
    %v3185 = vld [vmem:[%s3171 + $0x68] sm:$0xff]
    %v3186 = vld [vmem:[%s3171 + $0x70] sm:$0xff]
    %v3187 = vld [vmem:[%s3171 + $0x78] sm:$0xff]
    %v3188 = vld [vmem:[%s3171 + $0x80] sm:$0xff]
    %v3189 = vld [vmem:[%s3171 + $0x88] sm:$0xff]
    %v3190 = vld [vmem:[%s3171 + $0x90] sm:$0xff]
    %v3191 = vld [vmem:[%s3171 + $0x98] sm:$0xff]
    %v3192 = vld [vmem:[%s3171 + $0xa0] sm:$0xff]
    %v3193 = vld [vmem:[%s3171 + $0xa8] sm:$0xff]
    %v3194 = vld [vmem:[%s3171 + $0xb0] sm:$0xff]
    %v3195 = vld [vmem:[%s3171 + $0xb8] sm:$0xff]
    %v3196 = vld [vmem:[%s3171 + $0xc0] sm:$0xff]
    %v3197 = vld [vmem:[%s3171 + $0xc8] sm:$0xff]
    %v3198 = vld [vmem:[%s3171 + $0xd0] sm:$0xff]
    %v3199 = vld [vmem:[%s3171 + $0xd8] sm:$0xff]
    %v3200 = vld [vmem:[%s3171 + $0xe0] sm:$0xff]
    %v3201 = vld [vmem:[%s3171 + $0xe8] sm:$0xff]
    %v3202 = vld [vmem:[%s3171 + $0xf0] sm:$0xff]
    %v3203 = vld [vmem:[%s3171 + $0xf8] sm:$0xff]
    %v3204 = vld [vmem:[%s3171 + $0x100] sm:$0xff]
    %v3205 = vld [vmem:[%s3171 + $0x108] sm:$0xff]
    %v3206 = vld [vmem:[%s3171 + $0x110] sm:$0xff]
    %v3207 = vld [vmem:[%s3171 + $0x118] sm:$0xff]
    %v3208 = vld [vmem:[%s3171 + $0x120] sm:$0xff]
    %v3209 = vld [vmem:[%s3171 + $0x128] sm:$0xff]
    %v3210 = vld [vmem:[%s3171 + $0x130] sm:$0xff]
    %v3211 = vld [vmem:[%s3171 + $0x138] sm:$0xff]
    %v3212 = vld [vmem:[%s3171 + $0x140] sm:$0xff]
    %v3213 = vld [vmem:[%s3171 + $0x148] sm:$0xff]
    %v3214 = vld [vmem:[%s3171 + $0x150] sm:$0xff]
    %v3215 = vld [vmem:[%s3171 + $0x158] sm:$0xff]
    %v3216 = vld [vmem:[%s3171 + $0x160] sm:$0xff]
    %v3217 = vld [vmem:[%s3171 + $0x168] sm:$0xff]
    %v3218 = vld [vmem:[%s3171 + $0x170] sm:$0xff]
    %v3219 = vld [vmem:[%s3171 + $0x178] sm:$0xff]
    %v3220 = vld [vmem:[%s3171 + $0x180] sm:$0xff]
    %v3221 = vld [vmem:[%s3171 + $0x188] sm:$0xff]
    %v3222 = vld [vmem:[%s3171 + $0x190] sm:$0xff]
    %v3223 = vld [vmem:[%s3171 + $0x198] sm:$0xff]
    %v3224 = vld [vmem:[%s3171 + $0x1a0] sm:$0xff]
    %v3225 = vld [vmem:[%s3171 + $0x1a8] sm:$0xff]
    %v3226 = vld [vmem:[%s3171 + $0x1b0] sm:$0xff]
    %v3227 = vld [vmem:[%s3171 + $0x1b8] sm:$0xff]
    %v3228 = vld [vmem:[%s3171 + $0x1c0] sm:$0xff]
    %v3229 = vld [vmem:[%s3171 + $0x1c8] sm:$0xff]
    %v3230 = vld [vmem:[%s3171 + $0x1d0] sm:$0xff]
    %v3231 = vld [vmem:[%s3171 + $0x1d8] sm:$0xff]
    %v3232 = vld [vmem:[%s3171 + $0x1e0] sm:$0xff]
    %v3233 = vld [vmem:[%s3171 + $0x1e8] sm:$0xff]
    %v3234 = vld [vmem:[%s3171 + $0x1f0] sm:$0xff]
    %v3235 = vld [vmem:[%s3171 + $0x1f8] sm:$0xff]
    %v3236 = vld [vmem:[%s3171 + $0x200] sm:$0xff]
    %v3237 = vld [vmem:[%s3171 + $0x208] sm:$0xff]
    %v3238 = vld [vmem:[%s3171 + $0x210] sm:$0xff]
    %v3239 = vld [vmem:[%s3171 + $0x218] sm:$0xff]
    %v3240 = vld [vmem:[%s3171 + $0x220] sm:$0xff]
    %v3241 = vld [vmem:[%s3171 + $0x228] sm:$0xff]
    %v3242 = vld [vmem:[%s3171 + $0x230] sm:$0xff]
    %v3243 = vld [vmem:[%s3171 + $0x238] sm:$0xff]
    %v3244 = vld [vmem:[%s3171 + $0x240] sm:$0xff]
    %v3245 = vld [vmem:[%s3171 + $0x248] sm:$0xff]
    %v3246 = vld [vmem:[%s3171 + $0x250] sm:$0xff]
    %v3247 = vld [vmem:[%s3171 + $0x258] sm:$0xff]
    %v3248 = vld [vmem:[%s3171 + $0x260] sm:$0xff]
    %v3249 = vld [vmem:[%s3171 + $0x268] sm:$0xff]
    %v3250 = vld [vmem:[%s3171 + $0x270] sm:$0xff]
    %v3251 = vld [vmem:[%s3171 + $0x278] sm:$0xff]
    %v3252 = vld [vmem:[%s3171 + $0x280] sm:$0xff]
    %v3253 = vld [vmem:[%s3171 + $0x288] sm:$0xff]
    %v3254 = vld [vmem:[%s3171 + $0x290] sm:$0xff]
    %v3255 = vld [vmem:[%s3171 + $0x298] sm:$0xff]
    %v3256 = vld [vmem:[%s3171 + $0x2a0] sm:$0xff]
    %v3257 = vld [vmem:[%s3171 + $0x2a8] sm:$0xff]
    %v3258 = vld [vmem:[%s3171 + $0x2b0] sm:$0xff]
    %v3259 = vld [vmem:[%s3171 + $0x2b8] sm:$0xff]
    %v3260 = vld [vmem:[%s3171 + $0x2c0] sm:$0xff]
    %v3261 = vld [vmem:[%s3171 + $0x2c8] sm:$0xff]
    %v3262 = vld [vmem:[%s3171 + $0x2d0] sm:$0xff]
    %v3263 = vld [vmem:[%s3171 + $0x2d8] sm:$0xff]
    %v3264 = vld [vmem:[%s3171 + $0x2e0] sm:$0xff]
    %v3265 = vld [vmem:[%s3171 + $0x2e8] sm:$0xff]
    %v3266 = vld [vmem:[%s3171 + $0x2f0] sm:$0xff]
    %v3267 = vld [vmem:[%s3171 + $0x2f8] sm:$0xff]
    %v3268 = vld [vmem:[%s3171 + $0x300] sm:$0xff]
    %v3269 = vld [vmem:[%s3171 + $0x308] sm:$0xff]
    %v3270 = vld [vmem:[%s3171 + $0x310] sm:$0xff]
    %v3271 = vld [vmem:[%s3171 + $0x318] sm:$0xff]
    %v3272 = vld [vmem:[%s3171 + $0x320] sm:$0xff]
    %v3273 = vld [vmem:[%s3171 + $0x328] sm:$0xff]
    %v3274 = vld [vmem:[%s3171 + $0x330] sm:$0xff]
    %v3275 = vld [vmem:[%s3171 + $0x338] sm:$0xff]
    %v3276 = vld [vmem:[%s3171 + $0x340] sm:$0xff]
    %v3277 = vld [vmem:[%s3171 + $0x348] sm:$0xff]
    %v3278 = vld [vmem:[%s3171 + $0x350] sm:$0xff]
    %v3279 = vld [vmem:[%s3171 + $0x358] sm:$0xff]
    %v3280 = vld [vmem:[%s3171 + $0x360] sm:$0xff]
    %v3281 = vld [vmem:[%s3171 + $0x368] sm:$0xff]
    %v3282 = vld [vmem:[%s3171 + $0x370] sm:$0xff]
    %v3283 = vld [vmem:[%s3171 + $0x378] sm:$0xff]
    %v3284 = vld [vmem:[%s3171 + $0x380] sm:$0xff]
    %v3285 = vld [vmem:[%s3171 + $0x388] sm:$0xff]
    %v3286 = vld [vmem:[%s3171 + $0x390] sm:$0xff]
    %v3287 = vld [vmem:[%s3171 + $0x398] sm:$0xff]
    %v3288 = vld [vmem:[%s3171 + $0x3a0] sm:$0xff]
    %v3289 = vld [vmem:[%s3171 + $0x3a8] sm:$0xff]
    %v3290 = vld [vmem:[%s3171 + $0x3b0] sm:$0xff]
    %v3291 = vld [vmem:[%s3171 + $0x3b8] sm:$0xff]
    %v3292 = vld [vmem:[%s3171 + $0x3c0] sm:$0xff]
    %v3293 = vld [vmem:[%s3171 + $0x3c8] sm:$0xff]
    %v3294 = vld [vmem:[%s3171 + $0x3d0] sm:$0xff]
    %v3295 = vld [vmem:[%s3171 + $0x3d8] sm:$0xff]
    %v3296 = vld [vmem:[%s3171 + $0x3e0] sm:$0xff]
    %v3297 = vld [vmem:[%s3171 + $0x3e8] sm:$0xff]
    %v3298 = vld [vmem:[%s3171 + $0x3f0] sm:$0xff]
    %v3299 = vld [vmem:[%s3171 + $0x3f8] sm:$0xff]
    %v3300 = vld [vmem:[%s3171 + $0x400] sm:$0xff]
    %v3301 = vld [vmem:[%s3171 + $0x408] sm:$0xff]
    %v3302 = vld [vmem:[%s3171 + $0x410] sm:$0xff]
    %v3303 = vld [vmem:[%s3171 + $0x418] sm:$0xff]
    %v3304 = vld [vmem:[%s3171 + $0x420] sm:$0xff]
    %v3305 = vld [vmem:[%s3171 + $0x428] sm:$0xff]
    %v3306 = vld [vmem:[%s3171 + $0x430] sm:$0xff]
    %v3307 = vld [vmem:[%s3171 + $0x438] sm:$0xff]
    %v3308 = vld [vmem:[%s3171 + $0x440] sm:$0xff]
    %v3309 = vld [vmem:[%s3171 + $0x448] sm:$0xff]
    %v3310 = vld [vmem:[%s3171 + $0x450] sm:$0xff]
    %v3311 = vld [vmem:[%s3171 + $0x458] sm:$0xff]
    %v3312 = vld [vmem:[%s3171 + $0x460] sm:$0xff]
    %v3313 = vld [vmem:[%s3171 + $0x468] sm:$0xff]
    %v3314 = vld [vmem:[%s3171 + $0x470] sm:$0xff]
    %v3315 = vld [vmem:[%s3171 + $0x478] sm:$0xff]
    %v3316 = vld [vmem:[%s3171 + $0x480] sm:$0xff]
    %v3317 = vld [vmem:[%s3171 + $0x488] sm:$0xff]
    %v3318 = vld [vmem:[%s3171 + $0x490] sm:$0xff]
    %v3319 = vld [vmem:[%s3171 + $0x498] sm:$0xff]
    %v3320 = vld [vmem:[%s3171 + $0x4a0] sm:$0xff]
    %v3321 = vld [vmem:[%s3171 + $0x4a8] sm:$0xff]
    %v3322 = vld [vmem:[%s3171 + $0x4b0] sm:$0xff]
    %v3323 = vld [vmem:[%s3171 + $0x4b8] sm:$0xff]
    %v3324 = vld [vmem:[%s3171 + $0x4c0] sm:$0xff]
    %v3325 = vld [vmem:[%s3171 + $0x4c8] sm:$0xff]
    %v3326 = vld [vmem:[%s3171 + $0x4d0] sm:$0xff]
    %v3327 = vld [vmem:[%s3171 + $0x4d8] sm:$0xff]
    %v3328 = vld [vmem:[%s3171 + $0x4e0] sm:$0xff]
    %v3329 = vld [vmem:[%s3171 + $0x4e8] sm:$0xff]
    %v3330 = vld [vmem:[%s3171 + $0x4f0] sm:$0xff]
    %v3331 = vld [vmem:[%s3171 + $0x4f8] sm:$0xff]
    %v3332 = vld [vmem:[%s3171 + $0x500] sm:$0xff]
    %v3333 = vld [vmem:[%s3171 + $0x508] sm:$0xff]
    %v3334 = vld [vmem:[%s3171 + $0x510] sm:$0xff]
    %v3335 = vld [vmem:[%s3171 + $0x518] sm:$0xff]
    %v3336 = vld [vmem:[%s3171 + $0x520] sm:$0xff]
    %v3337 = vld [vmem:[%s3171 + $0x528] sm:$0xff]
    %v3338 = vld [vmem:[%s3171 + $0x530] sm:$0xff]
    %v3339 = vld [vmem:[%s3171 + $0x538] sm:$0xff]
    %v3340 = vld [vmem:[%s3171 + $0x540] sm:$0xff]
    %v3341 = vld [vmem:[%s3171 + $0x548] sm:$0xff]
    %v3342 = vld [vmem:[%s3171 + $0x550] sm:$0xff]
    %v3343 = vld [vmem:[%s3171 + $0x558] sm:$0xff]
    %v3344 = vld [vmem:[%s3171 + $0x560] sm:$0xff]
    %v3345 = vld [vmem:[%s3171 + $0x568] sm:$0xff]
    %v3346 = vld [vmem:[%s3171 + $0x570] sm:$0xff]
    %v3347 = vld [vmem:[%s3171 + $0x578] sm:$0xff]
    %v3348 = vld [vmem:[%s3171 + $0x580] sm:$0xff]
    %v3349 = vld [vmem:[%s3171 + $0x588] sm:$0xff]
    %v3350 = vld [vmem:[%s3171 + $0x590] sm:$0xff]
    %v3351 = vld [vmem:[%s3171 + $0x598] sm:$0xff]
    %v3352 = vld [vmem:[%s3171 + $0x5a0] sm:$0xff]
    %v3353 = vld [vmem:[%s3171 + $0x5a8] sm:$0xff]
    %v3354 = vld [vmem:[%s3171 + $0x5b0] sm:$0xff]
    %v3355 = vld [vmem:[%s3171 + $0x5b8] sm:$0xff]
    %v3356 = vld [vmem:[%s3171 + $0x5c0] sm:$0xff]
    %v3357 = vld [vmem:[%s3171 + $0x5c8] sm:$0xff]
    %v3358 = vld [vmem:[%s3171 + $0x5d0] sm:$0xff]
    %v3359 = vld [vmem:[%s3171 + $0x5d8] sm:$0xff]
    %v3360 = vld [vmem:[%s3171 + $0x5e0] sm:$0xff]
    %v3361 = vld [vmem:[%s3171 + $0x5e8] sm:$0xff]
    %v3362 = vld [vmem:[%s3171 + $0x5f0] sm:$0xff]
    %v3363 = vld [vmem:[%s3171 + $0x5f8] sm:$0xff]
    %v3364 = vld [vmem:[%s3171 + $0x600] sm:$0xff]
    %v3365 = vld [vmem:[%s3171 + $0x608] sm:$0xff]
    %v3366 = vld [vmem:[%s3171 + $0x610] sm:$0xff]
    %v3367 = vld [vmem:[%s3171 + $0x618] sm:$0xff]
    %v3368 = vld [vmem:[%s3171 + $0x620] sm:$0xff]
    %v3369 = vld [vmem:[%s3171 + $0x628] sm:$0xff]
    %v3370 = vld [vmem:[%s3171 + $0x630] sm:$0xff]
    %v3371 = vld [vmem:[%s3171 + $0x638] sm:$0xff]
    %v3372 = vld [vmem:[%s3171 + $0x640] sm:$0xff]
    %v3373 = vld [vmem:[%s3171 + $0x648] sm:$0xff]
    %v3374 = vld [vmem:[%s3171 + $0x650] sm:$0xff]
    %v3375 = vld [vmem:[%s3171 + $0x658] sm:$0xff]
    %v3376 = vld [vmem:[%s3171 + $0x660] sm:$0xff]
    %v3377 = vld [vmem:[%s3171 + $0x668] sm:$0xff]
    %v3378 = vld [vmem:[%s3171 + $0x670] sm:$0xff]
    %v3379 = vld [vmem:[%s3171 + $0x678] sm:$0xff]
    %v3380 = vld [vmem:[%s3171 + $0x680] sm:$0xff]
    %v3381 = vld [vmem:[%s3171 + $0x688] sm:$0xff]
    %v3382 = vld [vmem:[%s3171 + $0x690] sm:$0xff]
    %v3383 = vld [vmem:[%s3171 + $0x698] sm:$0xff]
    %v3384 = vld [vmem:[%s3171 + $0x6a0] sm:$0xff]
    %v3385 = vld [vmem:[%s3171 + $0x6a8] sm:$0xff]
    %v3386 = vld [vmem:[%s3171 + $0x6b0] sm:$0xff]
    %v3387 = vld [vmem:[%s3171 + $0x6b8] sm:$0xff]
    %v3388 = vld [vmem:[%s3171 + $0x6c0] sm:$0xff]
    %v3389 = vld [vmem:[%s3171 + $0x6c8] sm:$0xff]
    %v3390 = vld [vmem:[%s3171 + $0x6d0] sm:$0xff]
    %v3391 = vld [vmem:[%s3171 + $0x6d8] sm:$0xff]
    %v3392 = vld [vmem:[%s3171 + $0x6e0] sm:$0xff]
    %v3393 = vld [vmem:[%s3171 + $0x6e8] sm:$0xff]
    %v3394 = vld [vmem:[%s3171 + $0x6f0] sm:$0xff]
    %v3395 = vld [vmem:[%s3171 + $0x6f8] sm:$0xff]
    %v3396 = vld [vmem:[%s3171 + $0x700] sm:$0xff]
    %v3397 = vld [vmem:[%s3171 + $0x708] sm:$0xff]
    %v3398 = vld [vmem:[%s3171 + $0x710] sm:$0xff]
    %v3399 = vld [vmem:[%s3171 + $0x718] sm:$0xff]
    %v3400 = vld [vmem:[%s3171 + $0x720] sm:$0xff]
    %v3401 = vld [vmem:[%s3171 + $0x728] sm:$0xff]
    %v3402 = vld [vmem:[%s3171 + $0x730] sm:$0xff]
    %v3403 = vld [vmem:[%s3171 + $0x738] sm:$0xff]
    %v3404 = vld [vmem:[%s3171 + $0x740] sm:$0xff]
    %v3405 = vld [vmem:[%s3171 + $0x748] sm:$0xff]
    %v3406 = vld [vmem:[%s3171 + $0x750] sm:$0xff]
    %v3407 = vld [vmem:[%s3171 + $0x758] sm:$0xff]
    %v3408 = vld [vmem:[%s3171 + $0x760] sm:$0xff]
    %v3409 = vld [vmem:[%s3171 + $0x768] sm:$0xff]
    %v3410 = vld [vmem:[%s3171 + $0x770] sm:$0xff]
    %v3411 = vld [vmem:[%s3171 + $0x778] sm:$0xff]
    %v3412 = vld [vmem:[%s3171 + $0x780] sm:$0xff]
    %v3413 = vld [vmem:[%s3171 + $0x788] sm:$0xff]
    %v3414 = vld [vmem:[%s3171 + $0x790] sm:$0xff]
    %v3415 = vld [vmem:[%s3171 + $0x798] sm:$0xff]
    %v3416 = vld [vmem:[%s3171 + $0x7a0] sm:$0xff]
    %v3417 = vld [vmem:[%s3171 + $0x7a8] sm:$0xff]
    %v3418 = vld [vmem:[%s3171 + $0x7b0] sm:$0xff]
    %v3419 = vld [vmem:[%s3171 + $0x7b8] sm:$0xff]
    %v3420 = vld [vmem:[%s3171 + $0x7c0] sm:$0xff]
    %v3421 = vld [vmem:[%s3171 + $0x7c8] sm:$0xff]
    %v3422 = vld [vmem:[%s3171 + $0x7d0] sm:$0xff]
    %v3423 = vld [vmem:[%s3171 + $0x7d8] sm:$0xff]
    %v3424 = vld [vmem:[%s3171 + $0x7e0] sm:$0xff]
    %v3425 = vld [vmem:[%s3171 + $0x7e8] sm:$0xff]
    %v3426 = vld [vmem:[%s3171 + $0x7f0] sm:$0xff]
    %v3427 = vld [vmem:[%s3171 + $0x7f8] sm:$0xff]
    %v3428 = vld [vmem:[%s3171 + $0x800] sm:$0xff]
    %v3429 = vld [vmem:[%s3171 + $0x808] sm:$0xff]
    %v3430 = vld [vmem:[%s3171 + $0x810] sm:$0xff]
    %v3431 = vld [vmem:[%s3171 + $0x818] sm:$0xff]
    %v3432 = vld [vmem:[%s3171 + $0x820] sm:$0xff]
    %v3433 = vld [vmem:[%s3171 + $0x828] sm:$0xff]
    %v3434 = vld [vmem:[%s3171 + $0x830] sm:$0xff]
    %v3435 = vld [vmem:[%s3171 + $0x838] sm:$0xff]
    %v3436 = vld [vmem:[%s3171 + $0x840] sm:$0xff]
    %v3437 = vld [vmem:[%s3171 + $0x848] sm:$0xff]
    %v3438 = vld [vmem:[%s3171 + $0x850] sm:$0xff]
    %v3439 = vld [vmem:[%s3171 + $0x858] sm:$0xff]
    %v3440 = vld [vmem:[%s3171 + $0x860] sm:$0xff]
    %v3441 = vld [vmem:[%s3171 + $0x868] sm:$0xff]
    %v3442 = vld [vmem:[%s3171 + $0x870] sm:$0xff]
    %v3443 = vld [vmem:[%s3171 + $0x878] sm:$0xff]
    %v3444 = vld [vmem:[%s3171 + $0x880] sm:$0xff]
    %v3445 = vld [vmem:[%s3171 + $0x888] sm:$0xff]
    %v3446 = vld [vmem:[%s3171 + $0x890] sm:$0xff]
    %v3447 = vld [vmem:[%s3171 + $0x898] sm:$0xff]
    %v3448 = vld [vmem:[%s3171 + $0x8a0] sm:$0xff]
    %v3449 = vld [vmem:[%s3171 + $0x8a8] sm:$0xff]
    %v3450 = vld [vmem:[%s3171 + $0x8b0] sm:$0xff]
    %v3451 = vld [vmem:[%s3171 + $0x8b8] sm:$0xff]
    %v3452 = vld [vmem:[%s3171 + $0x8c0] sm:$0xff]
    %v3453 = vld [vmem:[%s3171 + $0x8c8] sm:$0xff]
    %v3454 = vld [vmem:[%s3171 + $0x8d0] sm:$0xff]
    %v3455 = vld [vmem:[%s3171 + $0x8d8] sm:$0xff]
    %v3456 = vld [vmem:[%s3171 + $0x8e0] sm:$0xff]
    %v3457 = vld [vmem:[%s3171 + $0x8e8] sm:$0xff]
    %v3458 = vld [vmem:[%s3171 + $0x8f0] sm:$0xff]
    %v3459 = vld [vmem:[%s3171 + $0x8f8] sm:$0xff]
    %v3460 = vld [vmem:[%s3171 + $0x900] sm:$0xff]
    %v3461 = vld [vmem:[%s3171 + $0x908] sm:$0xff]
    %v3462 = vld [vmem:[%s3171 + $0x910] sm:$0xff]
    %v3463 = vld [vmem:[%s3171 + $0x918] sm:$0xff]
    %v3464 = vld [vmem:[%s3171 + $0x920] sm:$0xff]
    %v3465 = vld [vmem:[%s3171 + $0x928] sm:$0xff]
    %v3466 = vld [vmem:[%s3171 + $0x930] sm:$0xff]
    %v3467 = vld [vmem:[%s3171 + $0x938] sm:$0xff]
    %v3468 = vld [vmem:[%s3171 + $0x940] sm:$0xff]
    %v3469 = vld [vmem:[%s3171 + $0x948] sm:$0xff]
    %v3470 = vld [vmem:[%s3171 + $0x950] sm:$0xff]
    %v3471 = vld [vmem:[%s3171 + $0x958] sm:$0xff]
    %v3472 = vld [vmem:[%s3171 + $0x960] sm:$0xff]
    %v3473 = vld [vmem:[%s3171 + $0x968] sm:$0xff]
    %v3474 = vld [vmem:[%s3171 + $0x970] sm:$0xff]
    %v3475 = vld [vmem:[%s3171 + $0x978] sm:$0xff]
    %v3476 = vld [vmem:[%s3171 + $0x980] sm:$0xff]
    %v3477 = vld [vmem:[%s3171 + $0x988] sm:$0xff]
    %v3478 = vld [vmem:[%s3171 + $0x990] sm:$0xff]
    %v3479 = vld [vmem:[%s3171 + $0x998] sm:$0xff]
    %v3480 = vld [vmem:[%s3171 + $0x9a0] sm:$0xff]
    %v3481 = vld [vmem:[%s3171 + $0x9a8] sm:$0xff]
    %v3482 = vld [vmem:[%s3171 + $0x9b0] sm:$0xff]
    %v3483 = vld [vmem:[%s3171 + $0x9b8] sm:$0xff]
    %v3484 = vld [vmem:[%s3171 + $0x9c0] sm:$0xff]
    %v3485 = vld [vmem:[%s3171 + $0x9c8] sm:$0xff]
    %v3486 = vld [vmem:[%s3171 + $0x9d0] sm:$0xff]
    %v3487 = vld [vmem:[%s3171 + $0x9d8] sm:$0xff]
    %v3488 = vld [vmem:[%s3171 + $0x9e0] sm:$0xff]
    %v3489 = vld [vmem:[%s3171 + $0x9e8] sm:$0xff]
    %v3490 = vld [vmem:[%s3171 + $0x9f0] sm:$0xff]
    %v3491 = vld [vmem:[%s3171 + $0x9f8] sm:$0xff]
    %v3492 = vld [vmem:[%s3171 + $0xa00] sm:$0xff]
    %v3493 = vld [vmem:[%s3171 + $0xa08] sm:$0xff]
    %v3494 = vld [vmem:[%s3171 + $0xa10] sm:$0xff]
    %v3495 = vld [vmem:[%s3171 + $0xa18] sm:$0xff]
    %v3496 = vld [vmem:[%s3171 + $0xa20] sm:$0xff]
    %v3497 = vld [vmem:[%s3171 + $0xa28] sm:$0xff]
    %v3498 = vld [vmem:[%s3171 + $0xa30] sm:$0xff]
    %v3499 = vld [vmem:[%s3171 + $0xa38] sm:$0xff]
    %v3500 = vld [vmem:[%s3171 + $0xa40] sm:$0xff]
    %v3501 = vld [vmem:[%s3171 + $0xa48] sm:$0xff]
    %v3502 = vld [vmem:[%s3171 + $0xa50] sm:$0xff]
    %v3503 = vld [vmem:[%s3171 + $0xa58] sm:$0xff]
    %v3504 = vld [vmem:[%s3171 + $0xa60] sm:$0xff]
    %v3505 = vld [vmem:[%s3171 + $0xa68] sm:$0xff]
    %v3506 = vld [vmem:[%s3171 + $0xa70] sm:$0xff]
    %v3507 = vld [vmem:[%s3171 + $0xa78] sm:$0xff]
    %v3508 = vld [vmem:[%s3171 + $0xa80] sm:$0xff]
    %v3509 = vld [vmem:[%s3171 + $0xa88] sm:$0xff]
    %v3510 = vld [vmem:[%s3171 + $0xa90] sm:$0xff]
    %v3511 = vld [vmem:[%s3171 + $0xa98] sm:$0xff]
    %v3512 = vld [vmem:[%s3171 + $0xaa0] sm:$0xff]
    %v3513 = vld [vmem:[%s3171 + $0xaa8] sm:$0xff]
    %v3514 = vld [vmem:[%s3171 + $0xab0] sm:$0xff]
    %v3515 = vld [vmem:[%s3171 + $0xab8] sm:$0xff]
    %v3516 = vld [vmem:[%s3171 + $0xac0] sm:$0xff]
    %v3517 = vld [vmem:[%s3171 + $0xac8] sm:$0xff]
    %v3518 = vld [vmem:[%s3171 + $0xad0] sm:$0xff]
    %v3519 = vld [vmem:[%s3171 + $0xad8] sm:$0xff]
    %v3520 = vld [vmem:[%s3171 + $0xae0] sm:$0xff]
    %v3521 = vld [vmem:[%s3171 + $0xae8] sm:$0xff]
    %v3522 = vld [vmem:[%s3171 + $0xaf0] sm:$0xff]
    %v3523 = vld [vmem:[%s3171 + $0xaf8] sm:$0xff]
    %v3524 = vld [vmem:[%s3171 + $0xb00] sm:$0xff]
    %v3525 = vld [vmem:[%s3171 + $0xb08] sm:$0xff]
    %v3526 = vld [vmem:[%s3171 + $0xb10] sm:$0xff]
    %v3527 = vld [vmem:[%s3171 + $0xb18] sm:$0xff]
    %v3528 = vld [vmem:[%s3171 + $0xb20] sm:$0xff]
    %v3529 = vld [vmem:[%s3171 + $0xb28] sm:$0xff]
    %v3530 = vld [vmem:[%s3171 + $0xb30] sm:$0xff]
    %v3531 = vld [vmem:[%s3171 + $0xb38] sm:$0xff]
    %v3532 = vld [vmem:[%s3171 + $0xb40] sm:$0xff]
    %v3533 = vld [vmem:[%s3171 + $0xb48] sm:$0xff]
    %v3534 = vld [vmem:[%s3171 + $0xb50] sm:$0xff]
    %v3535 = vld [vmem:[%s3171 + $0xb58] sm:$0xff]
    %v3536 = vld [vmem:[%s3171 + $0xb60] sm:$0xff]
    %v3537 = vld [vmem:[%s3171 + $0xb68] sm:$0xff]
    %v3538 = vld [vmem:[%s3171 + $0xb70] sm:$0xff]
    %v3539 = vld [vmem:[%s3171 + $0xb78] sm:$0xff]
    %v3540 = vld [vmem:[%s3171 + $0xb80] sm:$0xff]
    %v3541 = vld [vmem:[%s3171 + $0xb88] sm:$0xff]
    %v3542 = vld [vmem:[%s3171 + $0xb90] sm:$0xff]
    %v3543 = vld [vmem:[%s3171 + $0xb98] sm:$0xff]
    %v3544 = vld [vmem:[%s3171 + $0xba0] sm:$0xff]
    %v3545 = vld [vmem:[%s3171 + $0xba8] sm:$0xff]
    %v3546 = vld [vmem:[%s3171 + $0xbb0] sm:$0xff]
    %v3547 = vld [vmem:[%s3171 + $0xbb8] sm:$0xff]
    %v3548 = vld [vmem:[%s3171 + $0xbc0] sm:$0xff]
    %v3549 = vld [vmem:[%s3171 + $0xbc8] sm:$0xff]
    %v3550 = vld [vmem:[%s3171 + $0xbd0] sm:$0xff]
    %v3551 = vld [vmem:[%s3171 + $0xbd8] sm:$0xff]
    %v3552 = vld [vmem:[%s3171 + $0xbe0] sm:$0xff]
    %v3553 = vld [vmem:[%s3171 + $0xbe8] sm:$0xff]
    %v3554 = vld [vmem:[%s3171 + $0xbf0] sm:$0xff]
    %v3555 = vld [vmem:[%s3171 + $0xbf8] sm:$0xff]
    %v3556 = vld [vmem:[%s3171 + $0xc00] sm:$0xff]
    %v3557 = vld [vmem:[%s3171 + $0xc08] sm:$0xff]
    %v3558 = vld [vmem:[%s3171 + $0xc10] sm:$0xff]
    %v3559 = vld [vmem:[%s3171 + $0xc18] sm:$0xff]
    %v3560 = vld [vmem:[%s3171 + $0xc20] sm:$0xff]
    %v3561 = vld [vmem:[%s3171 + $0xc28] sm:$0xff]
    %v3562 = vld [vmem:[%s3171 + $0xc30] sm:$0xff]
    %v3563 = vld [vmem:[%s3171 + $0xc38] sm:$0xff]
    %v3564 = vld [vmem:[%s3171 + $0xc40] sm:$0xff]
    %v3565 = vld [vmem:[%s3171 + $0xc48] sm:$0xff]
    %v3566 = vld [vmem:[%s3171 + $0xc50] sm:$0xff]
    %v3567 = vld [vmem:[%s3171 + $0xc58] sm:$0xff]
    %v3568 = vld [vmem:[%s3171 + $0xc60] sm:$0xff]
    %v3569 = vld [vmem:[%s3171 + $0xc68] sm:$0xff]
    %v3570 = vld [vmem:[%s3171 + $0xc70] sm:$0xff]
    %v3571 = vld [vmem:[%s3171 + $0xc78] sm:$0xff]
    %v3572 = vld [vmem:[%s3171 + $0xc80] sm:$0xff]
    %v3573 = vld [vmem:[%s3171 + $0xc88] sm:$0xff]
    %v3574 = vld [vmem:[%s3171 + $0xc90] sm:$0xff]
    %v3575 = vld [vmem:[%s3171 + $0xc98] sm:$0xff]
    %v3576 = vld [vmem:[%s3171 + $0xca0] sm:$0xff]
    %v3577 = vld [vmem:[%s3171 + $0xca8] sm:$0xff]
    %v3578 = vld [vmem:[%s3171 + $0xcb0] sm:$0xff]
    %v3579 = vld [vmem:[%s3171 + $0xcb8] sm:$0xff]
    %v3580 = vld [vmem:[%s3171 + $0xcc0] sm:$0xff]
    %v3581 = vld [vmem:[%s3171 + $0xcc8] sm:$0xff]
    %v3582 = vld [vmem:[%s3171 + $0xcd0] sm:$0xff]
    %v3583 = vld [vmem:[%s3171 + $0xcd8] sm:$0xff]
    %v3584 = vld [vmem:[%s3171 + $0xce0] sm:$0xff]
    %v3585 = vld [vmem:[%s3171 + $0xce8] sm:$0xff]
    %v3586 = vld [vmem:[%s3171 + $0xcf0] sm:$0xff]
    %v3587 = vld [vmem:[%s3171 + $0xcf8] sm:$0xff]
    %v3588 = vld [vmem:[%s3171 + $0xd00] sm:$0xff]
    %v3589 = vld [vmem:[%s3171 + $0xd08] sm:$0xff]
    %v3590 = vld [vmem:[%s3171 + $0xd10] sm:$0xff]
    %v3591 = vld [vmem:[%s3171 + $0xd18] sm:$0xff]
    %v3592 = vld [vmem:[%s3171 + $0xd20] sm:$0xff]
    %v3593 = vld [vmem:[%s3171 + $0xd28] sm:$0xff]
    %v3594 = vld [vmem:[%s3171 + $0xd30] sm:$0xff]
    %v3595 = vld [vmem:[%s3171 + $0xd38] sm:$0xff]
    %v3596 = vld [vmem:[%s3171 + $0xd40] sm:$0xff]
    %v3597 = vld [vmem:[%s3171 + $0xd48] sm:$0xff]
    %v3598 = vld [vmem:[%s3171 + $0xd50] sm:$0xff]
    %v3599 = vld [vmem:[%s3171 + $0xd58] sm:$0xff]
    %v3600 = vld [vmem:[%s3171 + $0xd60] sm:$0xff]
    %v3601 = vld [vmem:[%s3171 + $0xd68] sm:$0xff]
    %v3602 = vld [vmem:[%s3171 + $0xd70] sm:$0xff]
    %v3603 = vld [vmem:[%s3171 + $0xd78] sm:$0xff]
    %v3604 = vld [vmem:[%s3171 + $0xd80] sm:$0xff]
    %v3605 = vld [vmem:[%s3171 + $0xd88] sm:$0xff]
    %v3606 = vld [vmem:[%s3171 + $0xd90] sm:$0xff]
    %v3607 = vld [vmem:[%s3171 + $0xd98] sm:$0xff]
    %v3608 = vld [vmem:[%s3171 + $0xda0] sm:$0xff]
    %v3609 = vld [vmem:[%s3171 + $0xda8] sm:$0xff]
    %v3610 = vld [vmem:[%s3171 + $0xdb0] sm:$0xff]
    %v3611 = vld [vmem:[%s3171 + $0xdb8] sm:$0xff]
    %v3612 = vld [vmem:[%s3171 + $0xdc0] sm:$0xff]
    %v3613 = vld [vmem:[%s3171 + $0xdc8] sm:$0xff]
    %v3614 = vld [vmem:[%s3171 + $0xdd0] sm:$0xff]
    %v3615 = vld [vmem:[%s3171 + $0xdd8] sm:$0xff]
    %v3616 = vld [vmem:[%s3171 + $0xde0] sm:$0xff]
    %v3617 = vld [vmem:[%s3171 + $0xde8] sm:$0xff]
    %v3618 = vld [vmem:[%s3171 + $0xdf0] sm:$0xff]
    %v3619 = vld [vmem:[%s3171 + $0xdf8] sm:$0xff]
    %v3620 = vld [vmem:[%s3171 + $0xe00] sm:$0xff]
    %v3621 = vld [vmem:[%s3171 + $0xe08] sm:$0xff]
    %v3622 = vld [vmem:[%s3171 + $0xe10] sm:$0xff]
    %v3623 = vld [vmem:[%s3171 + $0xe18] sm:$0xff]
    %v3624 = vld [vmem:[%s3171 + $0xe20] sm:$0xff]
    %v3625 = vld [vmem:[%s3171 + $0xe28] sm:$0xff]
    %v3626 = vld [vmem:[%s3171 + $0xe30] sm:$0xff]
    %v3627 = vld [vmem:[%s3171 + $0xe38] sm:$0xff]
    %v3628 = vld [vmem:[%s3171 + $0xe40] sm:$0xff]
    %v3629 = vld [vmem:[%s3171 + $0xe48] sm:$0xff]
    %v3630 = vld [vmem:[%s3171 + $0xe50] sm:$0xff]
    %v3631 = vld [vmem:[%s3171 + $0xe58] sm:$0xff]
    %v3632 = vld [vmem:[%s3171 + $0xe60] sm:$0xff]
    %v3633 = vld [vmem:[%s3171 + $0xe68] sm:$0xff]
    %v3634 = vld [vmem:[%s3171 + $0xe70] sm:$0xff]
    %v3635 = vld [vmem:[%s3171 + $0xe78] sm:$0xff]
    %v3636 = vld [vmem:[%s3171 + $0xe80] sm:$0xff]
    %v3637 = vld [vmem:[%s3171 + $0xe88] sm:$0xff]
    %v3638 = vld [vmem:[%s3171 + $0xe90] sm:$0xff]
    %v3639 = vld [vmem:[%s3171 + $0xe98] sm:$0xff]
    %v3640 = vld [vmem:[%s3171 + $0xea0] sm:$0xff]
    %v3641 = vld [vmem:[%s3171 + $0xea8] sm:$0xff]
    %v3642 = vld [vmem:[%s3171 + $0xeb0] sm:$0xff]
    %v3643 = vld [vmem:[%s3171 + $0xeb8] sm:$0xff]
    %v3644 = vld [vmem:[%s3171 + $0xec0] sm:$0xff]
    %v3645 = vld [vmem:[%s3171 + $0xec8] sm:$0xff]
    %v3646 = vld [vmem:[%s3171 + $0xed0] sm:$0xff]
    %v3647 = vld [vmem:[%s3171 + $0xed8] sm:$0xff]
    %v3648 = vld [vmem:[%s3171 + $0xee0] sm:$0xff]
    %v3649 = vld [vmem:[%s3171 + $0xee8] sm:$0xff]
    %v3650 = vld [vmem:[%s3171 + $0xef0] sm:$0xff]
    %v3651 = vld [vmem:[%s3171 + $0xef8] sm:$0xff]
    %v3652 = vld [vmem:[%s3171 + $0xf00] sm:$0xff]
    %v3653 = vld [vmem:[%s3171 + $0xf08] sm:$0xff]
    %v3654 = vld [vmem:[%s3171 + $0xf10] sm:$0xff]
    %v3655 = vld [vmem:[%s3171 + $0xf18] sm:$0xff]
    %v3656 = vld [vmem:[%s3171 + $0xf20] sm:$0xff]
    %v3657 = vld [vmem:[%s3171 + $0xf28] sm:$0xff]
    %v3658 = vld [vmem:[%s3171 + $0xf30] sm:$0xff]
    %v3659 = vld [vmem:[%s3171 + $0xf38] sm:$0xff]
    %v3660 = vld [vmem:[%s3171 + $0xf40] sm:$0xff]
    %v3661 = vld [vmem:[%s3171 + $0xf48] sm:$0xff]
    %v3662 = vld [vmem:[%s3171 + $0xf50] sm:$0xff]
    %v3663 = vld [vmem:[%s3171 + $0xf58] sm:$0xff]
    %v3664 = vld [vmem:[%s3171 + $0xf60] sm:$0xff]
    %v3665 = vld [vmem:[%s3171 + $0xf68] sm:$0xff]
    %v3666 = vld [vmem:[%s3171 + $0xf70] sm:$0xff]
    %v3667 = vld [vmem:[%s3171 + $0xf78] sm:$0xff]
    %v3668 = vld [vmem:[%s3171 + $0xf80] sm:$0xff]
    %v3669 = vld [vmem:[%s3171 + $0xf88] sm:$0xff]
    %v3670 = vld [vmem:[%s3171 + $0xf90] sm:$0xff]
    %v3671 = vld [vmem:[%s3171 + $0xf98] sm:$0xff]
    %v3672 = vld [vmem:[%s3171 + $0xfa0] sm:$0xff]
    %v3673 = vld [vmem:[%s3171 + $0xfa8] sm:$0xff]
    %v3674 = vld [vmem:[%s3171 + $0xfb0] sm:$0xff]
    %v3675 = vld [vmem:[%s3171 + $0xfb8] sm:$0xff]
    %v3676 = vld [vmem:[%s3171 + $0xfc0] sm:$0xff]
    %v3677 = vld [vmem:[%s3171 + $0xfc8] sm:$0xff]
    %v3678 = vld [vmem:[%s3171 + $0xfd0] sm:$0xff]
    %v3679 = vld [vmem:[%s3171 + $0xfd8] sm:$0xff]
    %v3680 = vld [vmem:[%s3171 + $0xfe0] sm:$0xff]
    %v3681 = vld [vmem:[%s3171 + $0xfe8] sm:$0xff]
    %v3682 = vld [vmem:[%s3171 + $0xff0] sm:$0xff]
    %v3683 = vld [vmem:[%s3171 + $0xff8] sm:$0xff]
    %v3684 = vld [vmem:[%s3171 + $0x1000] sm:$0xff]
    %v3685 = vld [vmem:[%s3171 + $0x1008] sm:$0xff]
    %v3686 = vld [vmem:[%s3171 + $0x1010] sm:$0xff]
    %v3687 = vld [vmem:[%s3171 + $0x1018] sm:$0xff]
    %v3688 = vld [vmem:[%s3171 + $0x1020] sm:$0xff]
    %v3689 = vld [vmem:[%s3171 + $0x1028] sm:$0xff]
    %v3690 = vld [vmem:[%s3171 + $0x1030] sm:$0xff]
    %v3691 = vld [vmem:[%s3171 + $0x1038] sm:$0xff]
    %v3692 = vld [vmem:[%s3171 + $0x1040] sm:$0xff]
    %v3693 = vld [vmem:[%s3171 + $0x1048] sm:$0xff]
    %v3694 = vld [vmem:[%s3171 + $0x1050] sm:$0xff]
    %v3695 = vld [vmem:[%s3171 + $0x1058] sm:$0xff]
    %v3696 = vld [vmem:[%s3171 + $0x1060] sm:$0xff]
    %v3697 = vld [vmem:[%s3171 + $0x1068] sm:$0xff]
    %v3698 = vld [vmem:[%s3171 + $0x1070] sm:$0xff]
    %v3699 = vld [vmem:[%s3171 + $0x1078] sm:$0xff]
    %v3700 = vld [vmem:[%s3171 + $0x1080] sm:$0xff]
    %v3701 = vld [vmem:[%s3171 + $0x1088] sm:$0xff]
    %v3702 = vld [vmem:[%s3171 + $0x1090] sm:$0xff]
    %v3703 = vld [vmem:[%s3171 + $0x1098] sm:$0xff]
    %v3704 = vld [vmem:[%s3171 + $0x10a0] sm:$0xff]
    %v3705 = vld [vmem:[%s3171 + $0x10a8] sm:$0xff]
    %v3706 = vld [vmem:[%s3171 + $0x10b0] sm:$0xff]
    %v3707 = vld [vmem:[%s3171 + $0x10b8] sm:$0xff]
    %v3708 = vld [vmem:[%s3171 + $0x10c0] sm:$0xff]
    %v3709 = vld [vmem:[%s3171 + $0x10c8] sm:$0xff]
    %v3710 = vld [vmem:[%s3171 + $0x10d0] sm:$0xff]
    %v3711 = vld [vmem:[%s3171 + $0x10d8] sm:$0xff]
    %v3712 = vld [vmem:[%s3171 + $0x10e0] sm:$0xff]
    %v3713 = vld [vmem:[%s3171 + $0x10e8] sm:$0xff]
    %v3714 = vld [vmem:[%s3171 + $0x10f0] sm:$0xff]
    %v3715 = vld [vmem:[%s3171 + $0x10f8] sm:$0xff]
    %v3716 = vld [vmem:[%s3171 + $0x1100] sm:$0xff]
    %v3717 = vld [vmem:[%s3171 + $0x1108] sm:$0xff]
    %v3718 = vld [vmem:[%s3171 + $0x1110] sm:$0xff]
    %v3719 = vld [vmem:[%s3171 + $0x1118] sm:$0xff]
    %v3720 = vld [vmem:[%s3171 + $0x1120] sm:$0xff]
    %v3721 = vld [vmem:[%s3171 + $0x1128] sm:$0xff]
    %v3722 = vld [vmem:[%s3171 + $0x1130] sm:$0xff]
    %v3723 = vld [vmem:[%s3171 + $0x1138] sm:$0xff]
    %v3724 = vld [vmem:[%s3171 + $0x1140] sm:$0xff]
    %v3725 = vld [vmem:[%s3171 + $0x1148] sm:$0xff]
    %v3726 = vld [vmem:[%s3171 + $0x1150] sm:$0xff]
    %v3727 = vld [vmem:[%s3171 + $0x1158] sm:$0xff]
    %v3728 = vld [vmem:[%s3171 + $0x1160] sm:$0xff]
    %v3729 = vld [vmem:[%s3171 + $0x1168] sm:$0xff]
    %v3730 = vld [vmem:[%s3171 + $0x1170] sm:$0xff]
    %v3731 = vld [vmem:[%s3171 + $0x1178] sm:$0xff]
    %v3732 = vld [vmem:[%s3171 + $0x1180] sm:$0xff]
    %v3733 = vld [vmem:[%s3171 + $0x1188] sm:$0xff]
    %v3734 = vld [vmem:[%s3171 + $0x1190] sm:$0xff]
    %v3735 = vld [vmem:[%s3171 + $0x1198] sm:$0xff]
    %v3736 = vld [vmem:[%s3171 + $0x11a0] sm:$0xff]
    %v3737 = vld [vmem:[%s3171 + $0x11a8] sm:$0xff]
    %v3738 = vld [vmem:[%s3171 + $0x11b0] sm:$0xff]
    %v3739 = vld [vmem:[%s3171 + $0x11b8] sm:$0xff]
    %v3740 = vld [vmem:[%s3171 + $0x11c0] sm:$0xff]
    %v3741 = vld [vmem:[%s3171 + $0x11c8] sm:$0xff]
    %v3742 = vld [vmem:[%s3171 + $0x11d0] sm:$0xff]
    %v3743 = vld [vmem:[%s3171 + $0x11d8] sm:$0xff]
    %v3744 = vld [vmem:[%s3171 + $0x11e0] sm:$0xff]
    %v3745 = vld [vmem:[%s3171 + $0x11e8] sm:$0xff]
    %v3746 = vld [vmem:[%s3171 + $0x11f0] sm:$0xff]
    %v3747 = vld [vmem:[%s3171 + $0x11f8] sm:$0xff]
    %v3748 = vld [vmem:[%s3171 + $0x1200] sm:$0xff]
    %v3749 = vld [vmem:[%s3171 + $0x1208] sm:$0xff]
    %v3750 = vld [vmem:[%s3171 + $0x1210] sm:$0xff]
    %v3751 = vld [vmem:[%s3171 + $0x1218] sm:$0xff]
    %v3752 = vld [vmem:[%s3171 + $0x1220] sm:$0xff]
    %v3753 = vld [vmem:[%s3171 + $0x1228] sm:$0xff]
    %v3754 = vld [vmem:[%s3171 + $0x1230] sm:$0xff]
    %v3755 = vld [vmem:[%s3171 + $0x1238] sm:$0xff]
    %v3756 = vld [vmem:[%s3171 + $0x1240] sm:$0xff]
    %v3757 = vld [vmem:[%s3171 + $0x1248] sm:$0xff]
    %v3758 = vld [vmem:[%s3171 + $0x1250] sm:$0xff]
    %v3759 = vld [vmem:[%s3171 + $0x1258] sm:$0xff]
    %v3760 = vld [vmem:[%s3171 + $0x1260] sm:$0xff]
    %v3761 = vld [vmem:[%s3171 + $0x1268] sm:$0xff]
    %v3762 = vld [vmem:[%s3171 + $0x1270] sm:$0xff]
    %v3763 = vld [vmem:[%s3171 + $0x1278] sm:$0xff]
    %v3764 = vld [vmem:[%s3171 + $0x1280] sm:$0xff]
    %v3765 = vld [vmem:[%s3171 + $0x1288] sm:$0xff]
    %v3766 = vld [vmem:[%s3171 + $0x1290] sm:$0xff]
    %v3767 = vld [vmem:[%s3171 + $0x1298] sm:$0xff]
    %v3768 = vld [vmem:[%s3171 + $0x12a0] sm:$0xff]
    %v3769 = vld [vmem:[%s3171 + $0x12a8] sm:$0xff]
    %v3770 = vld [vmem:[%s3171 + $0x12b0] sm:$0xff]
    %v3771 = vld [vmem:[%s3171 + $0x12b8] sm:$0xff]
    %v3772 = vld [vmem:[%s3171 + $0x12c0] sm:$0xff]
    %v3773 = vld [vmem:[%s3171 + $0x12c8] sm:$0xff]
    %v3774 = vld [vmem:[%s3171 + $0x12d0] sm:$0xff]
    %v3775 = vld [vmem:[%s3171 + $0x12d8] sm:$0xff]
    %v3776 = vld [vmem:[%s3171 + $0x12e0] sm:$0xff]
    %v3777 = vld [vmem:[%s3171 + $0x12e8] sm:$0xff]
    %v3778 = vld [vmem:[%s3171 + $0x12f0] sm:$0xff]
    %v3779 = vld [vmem:[%s3171 + $0x12f8] sm:$0xff]
    %v3780 = vld [vmem:[%s3171 + $0x1300] sm:$0xff]
    %v3781 = vld [vmem:[%s3171 + $0x1308] sm:$0xff]
    %v3782 = vld [vmem:[%s3171 + $0x1310] sm:$0xff]
    %v3783 = vld [vmem:[%s3171 + $0x1318] sm:$0xff]
    %v3784 = vld [vmem:[%s3171 + $0x1320] sm:$0xff]
    %v3785 = vld [vmem:[%s3171 + $0x1328] sm:$0xff]
    %v3786 = vld [vmem:[%s3171 + $0x1330] sm:$0xff]
    %v3787 = vld [vmem:[%s3171 + $0x1338] sm:$0xff]
    %v3788 = vld [vmem:[%s3171 + $0x1340] sm:$0xff]
    %v3789 = vld [vmem:[%s3171 + $0x1348] sm:$0xff]
    %v3790 = vld [vmem:[%s3171 + $0x1350] sm:$0xff]
    %v3791 = vld [vmem:[%s3171 + $0x1358] sm:$0xff]
    %v3792 = vld [vmem:[%s3171 + $0x1360] sm:$0xff]
    %v3793 = vld [vmem:[%s3171 + $0x1368] sm:$0xff]
    %v3794 = vld [vmem:[%s3171 + $0x1370] sm:$0xff]
    %v3795 = vld [vmem:[%s3171 + $0x1378] sm:$0xff]
    %v3796 = vld [vmem:[%s3171 + $0x1380] sm:$0xff]
    %v3797 = vld [vmem:[%s3171 + $0x1388] sm:$0xff]
    %v3798 = vld [vmem:[%s3171 + $0x1390] sm:$0xff]
    %v3799 = vld [vmem:[%s3171 + $0x1398] sm:$0xff]
    %v3800 = vld [vmem:[%s3171 + $0x13a0] sm:$0xff]
    %v3801 = vld [vmem:[%s3171 + $0x13a8] sm:$0xff]
    %v3802 = vld [vmem:[%s3171 + $0x13b0] sm:$0xff]
    %v3803 = vld [vmem:[%s3171 + $0x13b8] sm:$0xff]
    %v3804 = vld [vmem:[%s3171 + $0x13c0] sm:$0xff]
    %v3805 = vld [vmem:[%s3171 + $0x13c8] sm:$0xff]
    %v3806 = vld [vmem:[%s3171 + $0x13d0] sm:$0xff]
    %v3807 = vld [vmem:[%s3171 + $0x13d8] sm:$0xff]
    %v3808 = vld [vmem:[%s3171 + $0x13e0] sm:$0xff]
    %v3809 = vld [vmem:[%s3171 + $0x13e8] sm:$0xff]
    %v3810 = vld [vmem:[%s3171 + $0x13f0] sm:$0xff]
    %v3811 = vld [vmem:[%s3171 + $0x13f8] sm:$0xff]
    %v3812 = vld [vmem:[%s3171 + $0x1400] sm:$0xff]
    %v3813 = vld [vmem:[%s3171 + $0x1408] sm:$0xff]
    %v3814 = vld [vmem:[%s3171 + $0x1410] sm:$0xff]
    %v3815 = vld [vmem:[%s3171 + $0x1418] sm:$0xff]
    %v3816 = vld [vmem:[%s3171 + $0x1420] sm:$0xff]
    %v3817 = vld [vmem:[%s3171 + $0x1428] sm:$0xff]
    %v3818 = vld [vmem:[%s3171 + $0x1430] sm:$0xff]
    %v3819 = vld [vmem:[%s3171 + $0x1438] sm:$0xff]
    %v3820 = vld [vmem:[%s3171 + $0x1440] sm:$0xff]
    %v3821 = vld [vmem:[%s3171 + $0x1448] sm:$0xff]
    %v3822 = vld [vmem:[%s3171 + $0x1450] sm:$0xff]
    %v3823 = vld [vmem:[%s3171 + $0x1458] sm:$0xff]
    %v3824 = vld [vmem:[%s3171 + $0x1460] sm:$0xff]
    %v3825 = vld [vmem:[%s3171 + $0x1468] sm:$0xff]
    %v3826 = vld [vmem:[%s3171 + $0x1470] sm:$0xff]
    %v3827 = vld [vmem:[%s3171 + $0x1478] sm:$0xff]
    %v3828 = vld [vmem:[%s3171 + $0x1480] sm:$0xff]
    %v3829 = vld [vmem:[%s3171 + $0x1488] sm:$0xff]
    %v3830 = vld [vmem:[%s3171 + $0x1490] sm:$0xff]
    %v3831 = vld [vmem:[%s3171 + $0x1498] sm:$0xff]
    %v3832 = vld [vmem:[%s3171 + $0x14a0] sm:$0xff]
    %v3833 = vld [vmem:[%s3171 + $0x14a8] sm:$0xff]
    %v3834 = vld [vmem:[%s3171 + $0x14b0] sm:$0xff]
    %v3835 = vld [vmem:[%s3171 + $0x14b8] sm:$0xff]
    %v3836 = vld [vmem:[%s3171 + $0x14c0] sm:$0xff]
    %v3837 = vld [vmem:[%s3171 + $0x14c8] sm:$0xff]
    %v3838 = vld [vmem:[%s3171 + $0x14d0] sm:$0xff]
    %v3839 = vld [vmem:[%s3171 + $0x14d8] sm:$0xff]
    %v3840 = vld [vmem:[%s3171 + $0x14e0] sm:$0xff]
    %v3841 = vld [vmem:[%s3171 + $0x14e8] sm:$0xff]
    %v3842 = vld [vmem:[%s3171 + $0x14f0] sm:$0xff]
    %v3843 = vld [vmem:[%s3171 + $0x14f8] sm:$0xff]
    %v3844 = vld [vmem:[%s3171 + $0x1500] sm:$0xff]
    %v3845 = vld [vmem:[%s3171 + $0x1508] sm:$0xff]
    %v3846 = vld [vmem:[%s3171 + $0x1510] sm:$0xff]
    %v3847 = vld [vmem:[%s3171 + $0x1518] sm:$0xff]
    %v3848 = vld [vmem:[%s3171 + $0x1520] sm:$0xff]
    %v3849 = vld [vmem:[%s3171 + $0x1528] sm:$0xff]
    %v3850 = vld [vmem:[%s3171 + $0x1530] sm:$0xff]
    %v3851 = vld [vmem:[%s3171 + $0x1538] sm:$0xff]
    %v3852 = vld [vmem:[%s3171 + $0x1540] sm:$0xff]
    %v3853 = vld [vmem:[%s3171 + $0x1548] sm:$0xff]
    %v3854 = vld [vmem:[%s3171 + $0x1550] sm:$0xff]
    %v3855 = vld [vmem:[%s3171 + $0x1558] sm:$0xff]
    %v3856 = vld [vmem:[%s3171 + $0x1560] sm:$0xff]
    %v3857 = vld [vmem:[%s3171 + $0x1568] sm:$0xff]
    %v3858 = vld [vmem:[%s3171 + $0x1570] sm:$0xff]
    %v3859 = vld [vmem:[%s3171 + $0x1578] sm:$0xff]
    %v3860 = vld [vmem:[%s3171 + $0x1580] sm:$0xff]
    %v3861 = vld [vmem:[%s3171 + $0x1588] sm:$0xff]
    %v3862 = vld [vmem:[%s3171 + $0x1590] sm:$0xff]
    %v3863 = vld [vmem:[%s3171 + $0x1598] sm:$0xff]
    %v3864 = vld [vmem:[%s3171 + $0x15a0] sm:$0xff]
    %v3865 = vld [vmem:[%s3171 + $0x15a8] sm:$0xff]
    %v3866 = vld [vmem:[%s3171 + $0x15b0] sm:$0xff]
    %v3867 = vld [vmem:[%s3171 + $0x15b8] sm:$0xff]
    %v3868 = vld [vmem:[%s3171 + $0x15c0] sm:$0xff]
    %v3869 = vld [vmem:[%s3171 + $0x15c8] sm:$0xff]
    %v3870 = vld [vmem:[%s3171 + $0x15d0] sm:$0xff]
    %v3871 = vld [vmem:[%s3171 + $0x15d8] sm:$0xff]
    %v3872 = vld [vmem:[%s3171 + $0x15e0] sm:$0xff]
    %v3873 = vld [vmem:[%s3171 + $0x15e8] sm:$0xff]
    %v3874 = vld [vmem:[%s3171 + $0x15f0] sm:$0xff]
    %v3875 = vld [vmem:[%s3171 + $0x15f8] sm:$0xff]
    %v3876 = vld [vmem:[%s3171 + $0x1600] sm:$0xff]
    %v3877 = vld [vmem:[%s3171 + $0x1608] sm:$0xff]
    %v3878 = vld [vmem:[%s3171 + $0x1610] sm:$0xff]
    %v3879 = vld [vmem:[%s3171 + $0x1618] sm:$0xff]
    %v3880 = vld [vmem:[%s3171 + $0x1620] sm:$0xff]
    %v3881 = vld [vmem:[%s3171 + $0x1628] sm:$0xff]
    %v3882 = vld [vmem:[%s3171 + $0x1630] sm:$0xff]
    %v3883 = vld [vmem:[%s3171 + $0x1638] sm:$0xff]
    %v3884 = vld [vmem:[%s3171 + $0x1640] sm:$0xff]
    %v3885 = vld [vmem:[%s3171 + $0x1648] sm:$0xff]
    %v3886 = vld [vmem:[%s3171 + $0x1650] sm:$0xff]
    %v3887 = vld [vmem:[%s3171 + $0x1658] sm:$0xff]
    %v3888 = vld [vmem:[%s3171 + $0x1660] sm:$0xff]
    %v3889 = vld [vmem:[%s3171 + $0x1668] sm:$0xff]
    %v3890 = vld [vmem:[%s3171 + $0x1670] sm:$0xff]
    %v3891 = vld [vmem:[%s3171 + $0x1678] sm:$0xff]
    %v3892 = vld [vmem:[%s3171 + $0x1680] sm:$0xff]
    %v3893 = vld [vmem:[%s3171 + $0x1688] sm:$0xff]
    %v3894 = vld [vmem:[%s3171 + $0x1690] sm:$0xff]
    %v3895 = vld [vmem:[%s3171 + $0x1698] sm:$0xff]
    %v3896 = vld [vmem:[%s3171 + $0x16a0] sm:$0xff]
    %v3897 = vld [vmem:[%s3171 + $0x16a8] sm:$0xff]
    %v3898 = vld [vmem:[%s3171 + $0x16b0] sm:$0xff]
    %v3899 = vld [vmem:[%s3171 + $0x16b8] sm:$0xff]
    %v3900 = vld [vmem:[%s3171 + $0x16c0] sm:$0xff]
    %v3901 = vld [vmem:[%s3171 + $0x16c8] sm:$0xff]
    %v3902 = vld [vmem:[%s3171 + $0x16d0] sm:$0xff]
    %v3903 = vld [vmem:[%s3171 + $0x16d8] sm:$0xff]
    %v3904 = vld [vmem:[%s3171 + $0x16e0] sm:$0xff]
    %v3905 = vld [vmem:[%s3171 + $0x16e8] sm:$0xff]
    %v3906 = vld [vmem:[%s3171 + $0x16f0] sm:$0xff]
    %v3907 = vld [vmem:[%s3171 + $0x16f8] sm:$0xff]
    %v3908 = vld [vmem:[%s3171 + $0x1700] sm:$0xff]
    %v3909 = vld [vmem:[%s3171 + $0x1708] sm:$0xff]
    %v3910 = vld [vmem:[%s3171 + $0x1710] sm:$0xff]
    %v3911 = vld [vmem:[%s3171 + $0x1718] sm:$0xff]
    %v3912 = vld [vmem:[%s3171 + $0x1720] sm:$0xff]
    %v3913 = vld [vmem:[%s3171 + $0x1728] sm:$0xff]
    %v3914 = vld [vmem:[%s3171 + $0x1730] sm:$0xff]
    %v3915 = vld [vmem:[%s3171 + $0x1738] sm:$0xff]
    %v3916 = vld [vmem:[%s3171 + $0x1740] sm:$0xff]
    %v3917 = vld [vmem:[%s3171 + $0x1748] sm:$0xff]
    %v3918 = vld [vmem:[%s3171 + $0x1750] sm:$0xff]
    %v3919 = vld [vmem:[%s3171 + $0x1758] sm:$0xff]
    %v3920 = vld [vmem:[%s3171 + $0x1760] sm:$0xff]
    %v3921 = vld [vmem:[%s3171 + $0x1768] sm:$0xff]
    %v3922 = vld [vmem:[%s3171 + $0x1770] sm:$0xff]
    %v3923 = vld [vmem:[%s3171 + $0x1778] sm:$0xff]
    %v3924 = vld [vmem:[%s3171 + $0x1780] sm:$0xff]
    %v3925 = vld [vmem:[%s3171 + $0x1788] sm:$0xff]
    %v3926 = vld [vmem:[%s3171 + $0x1790] sm:$0xff]
    %v3927 = vld [vmem:[%s3171 + $0x1798] sm:$0xff]
    %v3928 = vld [vmem:[%s3171 + $0x17a0] sm:$0xff]
    %v3929 = vld [vmem:[%s3171 + $0x17a8] sm:$0xff]
    %v3930 = vld [vmem:[%s3171 + $0x17b0] sm:$0xff]
    %v3931 = vld [vmem:[%s3171 + $0x17b8] sm:$0xff]
    %v3932 = vld [vmem:[%s3171 + $0x17c0] sm:$0xff]
    %v3933 = vld [vmem:[%s3171 + $0x17c8] sm:$0xff]
    %v3934 = vld [vmem:[%s3171 + $0x17d0] sm:$0xff]
    %v3935 = vld [vmem:[%s3171 + $0x17d8] sm:$0xff]
    %v3936 = vld [vmem:[%s3171 + $0x17e0] sm:$0xff]
    %v3937 = vld [vmem:[%s3171 + $0x17e8] sm:$0xff]
    %v3938 = vld [vmem:[%s3171 + $0x17f0] sm:$0xff]
    %v3939 = vld [vmem:[%s3171 + $0x17f8] sm:$0xff]
    %v3940 = vld [vmem:[%s3171 + $0x1800] sm:$0xff]
    %v3941 = vld [vmem:[%s3171 + $0x1808] sm:$0xff]
    %v3942 = vld [vmem:[%s3171 + $0x1810] sm:$0xff]
    %v3943 = vld [vmem:[%s3171 + $0x1818] sm:$0xff]
    %v3944 = vld [vmem:[%s3171 + $0x1820] sm:$0xff]
    %v3945 = vld [vmem:[%s3171 + $0x1828] sm:$0xff]
    %v3946 = vld [vmem:[%s3171 + $0x1830] sm:$0xff]
    %v3947 = vld [vmem:[%s3171 + $0x1838] sm:$0xff]
    %v3948 = vld [vmem:[%s3171 + $0x1840] sm:$0xff]
    %v3949 = vld [vmem:[%s3171 + $0x1848] sm:$0xff]
    %v3950 = vld [vmem:[%s3171 + $0x1850] sm:$0xff]
    %v3951 = vld [vmem:[%s3171 + $0x1858] sm:$0xff]
    %v3952 = vld [vmem:[%s3171 + $0x1860] sm:$0xff]
    %v3953 = vld [vmem:[%s3171 + $0x1868] sm:$0xff]
    %v3954 = vld [vmem:[%s3171 + $0x1870] sm:$0xff]
    %v3955 = vld [vmem:[%s3171 + $0x1878] sm:$0xff]
    %v3956 = vld [vmem:[%s3171 + $0x1880] sm:$0xff]
    %v3957 = vld [vmem:[%s3171 + $0x1888] sm:$0xff]
    %v3958 = vld [vmem:[%s3171 + $0x1890] sm:$0xff]
    %v3959 = vld [vmem:[%s3171 + $0x1898] sm:$0xff]
    %v3960 = vld [vmem:[%s3171 + $0x18a0] sm:$0xff]
    %v3961 = vld [vmem:[%s3171 + $0x18a8] sm:$0xff]
    %v3962 = vld [vmem:[%s3171 + $0x18b0] sm:$0xff]
    %v3963 = vld [vmem:[%s3171 + $0x18b8] sm:$0xff]
    %v3964 = vld [vmem:[%s3171 + $0x18c0] sm:$0xff]
    %v3965 = vld [vmem:[%s3171 + $0x18c8] sm:$0xff]
    %v3966 = vld [vmem:[%s3171 + $0x18d0] sm:$0xff]
    %v3967 = vld [vmem:[%s3171 + $0x18d8] sm:$0xff]
    %v3968 = vld [vmem:[%s3171 + $0x18e0] sm:$0xff]
    %v3969 = vld [vmem:[%s3171 + $0x18e8] sm:$0xff]
    %v3970 = vld [vmem:[%s3171 + $0x18f0] sm:$0xff]
    %v3971 = vld [vmem:[%s3171 + $0x18f8] sm:$0xff]
    %v3972 = vld [vmem:[%s3171 + $0x1900] sm:$0xff]
    %v3973 = vld [vmem:[%s3171 + $0x1908] sm:$0xff]
    %v3974 = vld [vmem:[%s3171 + $0x1910] sm:$0xff]
    %v3975 = vld [vmem:[%s3171 + $0x1918] sm:$0xff]
    %v3976 = vld [vmem:[%s3171 + $0x1920] sm:$0xff]
    %v3977 = vld [vmem:[%s3171 + $0x1928] sm:$0xff]
    %v3978 = vld [vmem:[%s3171 + $0x1930] sm:$0xff]
    %v3979 = vld [vmem:[%s3171 + $0x1938] sm:$0xff]
    %v3980 = vld [vmem:[%s3171 + $0x1940] sm:$0xff]
    %v3981 = vld [vmem:[%s3171 + $0x1948] sm:$0xff]
    %v3982 = vld [vmem:[%s3171 + $0x1950] sm:$0xff]
    %v3983 = vld [vmem:[%s3171 + $0x1958] sm:$0xff]
    %v3984 = vld [vmem:[%s3171 + $0x1960] sm:$0xff]
    %v3985 = vld [vmem:[%s3171 + $0x1968] sm:$0xff]
    %v3986 = vld [vmem:[%s3171 + $0x1970] sm:$0xff]
    %v3987 = vld [vmem:[%s3171 + $0x1978] sm:$0xff]
    %v3988 = vld [vmem:[%s3171 + $0x1980] sm:$0xff]
    %v3989 = vld [vmem:[%s3171 + $0x1988] sm:$0xff]
    %v3990 = vld [vmem:[%s3171 + $0x1990] sm:$0xff]
    %v3991 = vld [vmem:[%s3171 + $0x1998] sm:$0xff]
    %v3992 = vld [vmem:[%s3171 + $0x19a0] sm:$0xff]
    %v3993 = vld [vmem:[%s3171 + $0x19a8] sm:$0xff]
    %v3994 = vld [vmem:[%s3171 + $0x19b0] sm:$0xff]
    %v3995 = vld [vmem:[%s3171 + $0x19b8] sm:$0xff]
    %v3996 = vld [vmem:[%s3171 + $0x19c0] sm:$0xff]
    %v3997 = vld [vmem:[%s3171 + $0x19c8] sm:$0xff]
    %v3998 = vld [vmem:[%s3171 + $0x19d0] sm:$0xff]
    %v3999 = vld [vmem:[%s3171 + $0x19d8] sm:$0xff]
    %v4000 = vld [vmem:[%s3171 + $0x19e0] sm:$0xff]
    %v4001 = vld [vmem:[%s3171 + $0x19e8] sm:$0xff]
    %v4002 = vld [vmem:[%s3171 + $0x19f0] sm:$0xff]
    %v4003 = vld [vmem:[%s3171 + $0x19f8] sm:$0xff]
    %v4004 = vld [vmem:[%s3171 + $0x1a00] sm:$0xff]
    %v4005 = vld [vmem:[%s3171 + $0x1a08] sm:$0xff]
    %v4006 = vld [vmem:[%s3171 + $0x1a10] sm:$0xff]
    %v4007 = vld [vmem:[%s3171 + $0x1a18] sm:$0xff]
    %v4008 = vld [vmem:[%s3171 + $0x1a20] sm:$0xff]
    %v4009 = vld [vmem:[%s3171 + $0x1a28] sm:$0xff]
    %v4010 = vld [vmem:[%s3171 + $0x1a30] sm:$0xff]
    %v4011 = vld [vmem:[%s3171 + $0x1a38] sm:$0xff]
    %v4012 = vld [vmem:[%s3171 + $0x1a40] sm:$0xff]
    %v4013 = vld [vmem:[%s3171 + $0x1a48] sm:$0xff]
    %v4014 = vld [vmem:[%s3171 + $0x1a50] sm:$0xff]
    %v4015 = vld [vmem:[%s3171 + $0x1a58] sm:$0xff]
    %v4016 = vld [vmem:[%s3171 + $0x1a60] sm:$0xff]
    %v4017 = vld [vmem:[%s3171 + $0x1a68] sm:$0xff]
    %v4018 = vld [vmem:[%s3171 + $0x1a70] sm:$0xff]
    %v4019 = vld [vmem:[%s3171 + $0x1a78] sm:$0xff]
    %v4020 = vld [vmem:[%s3171 + $0x1a80] sm:$0xff]
    %v4021 = vld [vmem:[%s3171 + $0x1a88] sm:$0xff]
    %v4022 = vld [vmem:[%s3171 + $0x1a90] sm:$0xff]
    %v4023 = vld [vmem:[%s3171 + $0x1a98] sm:$0xff]
    %v4024 = vld [vmem:[%s3171 + $0x1aa0] sm:$0xff]
    %v4025 = vld [vmem:[%s3171 + $0x1aa8] sm:$0xff]
    %v4026 = vld [vmem:[%s3171 + $0x1ab0] sm:$0xff]
    %v4027 = vld [vmem:[%s3171 + $0x1ab8] sm:$0xff]
    %v4028 = vld [vmem:[%s3171 + $0x1ac0] sm:$0xff]
    %v4029 = vld [vmem:[%s3171 + $0x1ac8] sm:$0xff]
    %v4030 = vld [vmem:[%s3171 + $0x1ad0] sm:$0xff]
    %v4031 = vld [vmem:[%s3171 + $0x1ad8] sm:$0xff]
    %v4032 = vld [vmem:[%s3171 + $0x1ae0] sm:$0xff]
    %v4033 = vld [vmem:[%s3171 + $0x1ae8] sm:$0xff]
    %v4034 = vld [vmem:[%s3171 + $0x1af0] sm:$0xff]
    %v4035 = vld [vmem:[%s3171 + $0x1af8] sm:$0xff]
    %v4036 = vld [vmem:[%s3171 + $0x1b00] sm:$0xff]
    %v4037 = vld [vmem:[%s3171 + $0x1b08] sm:$0xff]
    %v4038 = vld [vmem:[%s3171 + $0x1b10] sm:$0xff]
    %v4039 = vld [vmem:[%s3171 + $0x1b18] sm:$0xff]
    %v4040 = vld [vmem:[%s3171 + $0x1b20] sm:$0xff]
    %v4041 = vld [vmem:[%s3171 + $0x1b28] sm:$0xff]
    %v4042 = vld [vmem:[%s3171 + $0x1b30] sm:$0xff]
    %v4043 = vld [vmem:[%s3171 + $0x1b38] sm:$0xff]
    %v4044 = vld [vmem:[%s3171 + $0x1b40] sm:$0xff]
    %v4045 = vld [vmem:[%s3171 + $0x1b48] sm:$0xff]
    %v4046 = vld [vmem:[%s3171 + $0x1b50] sm:$0xff]
    %v4047 = vld [vmem:[%s3171 + $0x1b58] sm:$0xff]
    %v4048 = vld [vmem:[%s3171 + $0x1b60] sm:$0xff]
    %v4049 = vld [vmem:[%s3171 + $0x1b68] sm:$0xff]
    %v4050 = vld [vmem:[%s3171 + $0x1b70] sm:$0xff]
    %v4051 = vld [vmem:[%s3171 + $0x1b78] sm:$0xff]
    %v4052 = vld [vmem:[%s3171 + $0x1b80] sm:$0xff]
    %v4053 = vld [vmem:[%s3171 + $0x1b88] sm:$0xff]
    %v4054 = vld [vmem:[%s3171 + $0x1b90] sm:$0xff]
    %v4055 = vld [vmem:[%s3171 + $0x1b98] sm:$0xff]
    %v4056 = vld [vmem:[%s3171 + $0x1ba0] sm:$0xff]
    %v4057 = vld [vmem:[%s3171 + $0x1ba8] sm:$0xff]
    %v4058 = vld [vmem:[%s3171 + $0x1bb0] sm:$0xff]
    %v4059 = vld [vmem:[%s3171 + $0x1bb8] sm:$0xff]
    %v4060 = vld [vmem:[%s3171 + $0x1bc0] sm:$0xff]
    %v4061 = vld [vmem:[%s3171 + $0x1bc8] sm:$0xff]
    %v4062 = vld [vmem:[%s3171 + $0x1bd0] sm:$0xff]
    %v4063 = vld [vmem:[%s3171 + $0x1bd8] sm:$0xff]
    %v4064 = vld [vmem:[%s3171 + $0x1be0] sm:$0xff]
    %v4065 = vld [vmem:[%s3171 + $0x1be8] sm:$0xff]
    %v4066 = vld [vmem:[%s3171 + $0x1bf0] sm:$0xff]
    %v4067 = vld [vmem:[%s3171 + $0x1bf8] sm:$0xff]
    %v4068 = vld [vmem:[%s3171 + $0x1c00] sm:$0xff]
    %v4069 = vld [vmem:[%s3171 + $0x1c08] sm:$0xff]
    %v4070 = vld [vmem:[%s3171 + $0x1c10] sm:$0xff]
    %v4071 = vld [vmem:[%s3171 + $0x1c18] sm:$0xff]
    %v4072 = vld [vmem:[%s3171 + $0x1c20] sm:$0xff]
    %v4073 = vld [vmem:[%s3171 + $0x1c28] sm:$0xff]
    %v4074 = vld [vmem:[%s3171 + $0x1c30] sm:$0xff]
    %v4075 = vld [vmem:[%s3171 + $0x1c38] sm:$0xff]
    %v4076 = vld [vmem:[%s3171 + $0x1c40] sm:$0xff]
    %v4077 = vld [vmem:[%s3171 + $0x1c48] sm:$0xff]
    %v4078 = vld [vmem:[%s3171 + $0x1c50] sm:$0xff]
    %v4079 = vld [vmem:[%s3171 + $0x1c58] sm:$0xff]
    %v4080 = vld [vmem:[%s3171 + $0x1c60] sm:$0xff]
    %v4081 = vld [vmem:[%s3171 + $0x1c68] sm:$0xff]
    %v4082 = vld [vmem:[%s3171 + $0x1c70] sm:$0xff]
    %v4083 = vld [vmem:[%s3171 + $0x1c78] sm:$0xff]
    %v4084 = vld [vmem:[%s3171 + $0x1c80] sm:$0xff]
    %v4085 = vld [vmem:[%s3171 + $0x1c88] sm:$0xff]
    %v4086 = vld [vmem:[%s3171 + $0x1c90] sm:$0xff]
    %v4087 = vld [vmem:[%s3171 + $0x1c98] sm:$0xff]
    %v4088 = vld [vmem:[%s3171 + $0x1ca0] sm:$0xff]
    %v4089 = vld [vmem:[%s3171 + $0x1ca8] sm:$0xff]
    %v4090 = vld [vmem:[%s3171 + $0x1cb0] sm:$0xff]
    %v4091 = vld [vmem:[%s3171 + $0x1cb8] sm:$0xff]
    %v4092 = vld [vmem:[%s3171 + $0x1cc0] sm:$0xff]
    %v4093 = vld [vmem:[%s3171 + $0x1cc8] sm:$0xff]
    %v4094 = vld [vmem:[%s3171 + $0x1cd0] sm:$0xff]
    %v4095 = vld [vmem:[%s3171 + $0x1cd8] sm:$0xff]
    %v4096 = vld [vmem:[%s3171 + $0x1ce0] sm:$0xff]
    %v4097 = vld [vmem:[%s3171 + $0x1ce8] sm:$0xff]
    %v4098 = vld [vmem:[%s3171 + $0x1cf0] sm:$0xff]
    %v4099 = vld [vmem:[%s3171 + $0x1cf8] sm:$0xff]
    %v4100 = vld [vmem:[%s3171 + $0x1d00] sm:$0xff]
    %v4101 = vld [vmem:[%s3171 + $0x1d08] sm:$0xff]
    %v4102 = vld [vmem:[%s3171 + $0x1d10] sm:$0xff]
    %v4103 = vld [vmem:[%s3171 + $0x1d18] sm:$0xff]
    %v4104 = vld [vmem:[%s3171 + $0x1d20] sm:$0xff]
    %v4105 = vld [vmem:[%s3171 + $0x1d28] sm:$0xff]
    %v4106 = vld [vmem:[%s3171 + $0x1d30] sm:$0xff]
    %v4107 = vld [vmem:[%s3171 + $0x1d38] sm:$0xff]
    %v4108 = vld [vmem:[%s3171 + $0x1d40] sm:$0xff]
    %v4109 = vld [vmem:[%s3171 + $0x1d48] sm:$0xff]
    %v4110 = vld [vmem:[%s3171 + $0x1d50] sm:$0xff]
    %v4111 = vld [vmem:[%s3171 + $0x1d58] sm:$0xff]
    %v4112 = vld [vmem:[%s3171 + $0x1d60] sm:$0xff]
    %v4113 = vld [vmem:[%s3171 + $0x1d68] sm:$0xff]
    %v4114 = vld [vmem:[%s3171 + $0x1d70] sm:$0xff]
    %v4115 = vld [vmem:[%s3171 + $0x1d78] sm:$0xff]
    %v4116 = vld [vmem:[%s3171 + $0x1d80] sm:$0xff]
    %v4117 = vld [vmem:[%s3171 + $0x1d88] sm:$0xff]
    %v4118 = vld [vmem:[%s3171 + $0x1d90] sm:$0xff]
    %v4119 = vld [vmem:[%s3171 + $0x1d98] sm:$0xff]
    %v4120 = vld [vmem:[%s3171 + $0x1da0] sm:$0xff]
    %v4121 = vld [vmem:[%s3171 + $0x1da8] sm:$0xff]
    %v4122 = vld [vmem:[%s3171 + $0x1db0] sm:$0xff]
    %v4123 = vld [vmem:[%s3171 + $0x1db8] sm:$0xff]
    %v4124 = vld [vmem:[%s3171 + $0x1dc0] sm:$0xff]
    %v4125 = vld [vmem:[%s3171 + $0x1dc8] sm:$0xff]
    %v4126 = vld [vmem:[%s3171 + $0x1dd0] sm:$0xff]
    %v4127 = vld [vmem:[%s3171 + $0x1dd8] sm:$0xff]
    %v4128 = vld [vmem:[%s3171 + $0x1de0] sm:$0xff]
    %v4129 = vld [vmem:[%s3171 + $0x1de8] sm:$0xff]
    %v4130 = vld [vmem:[%s3171 + $0x1df0] sm:$0xff]
    %v4131 = vld [vmem:[%s3171 + $0x1df8] sm:$0xff]
    %v4132 = vld [vmem:[%s3171 + $0x1e00] sm:$0xff]
    %v4133 = vld [vmem:[%s3171 + $0x1e08] sm:$0xff]
    %v4134 = vld [vmem:[%s3171 + $0x1e10] sm:$0xff]
    %v4135 = vld [vmem:[%s3171 + $0x1e18] sm:$0xff]
    %v4136 = vld [vmem:[%s3171 + $0x1e20] sm:$0xff]
    %v4137 = vld [vmem:[%s3171 + $0x1e28] sm:$0xff]
    %v4138 = vld [vmem:[%s3171 + $0x1e30] sm:$0xff]
    %v4139 = vld [vmem:[%s3171 + $0x1e38] sm:$0xff]
    %v4140 = vld [vmem:[%s3171 + $0x1e40] sm:$0xff]
    %v4141 = vld [vmem:[%s3171 + $0x1e48] sm:$0xff]
    %v4142 = vld [vmem:[%s3171 + $0x1e50] sm:$0xff]
    %v4143 = vld [vmem:[%s3171 + $0x1e58] sm:$0xff]
    %v4144 = vld [vmem:[%s3171 + $0x1e60] sm:$0xff]
    %v4145 = vld [vmem:[%s3171 + $0x1e68] sm:$0xff]
    %v4146 = vld [vmem:[%s3171 + $0x1e70] sm:$0xff]
    %v4147 = vld [vmem:[%s3171 + $0x1e78] sm:$0xff]
    %v4148 = vld [vmem:[%s3171 + $0x1e80] sm:$0xff]
    %v4149 = vld [vmem:[%s3171 + $0x1e88] sm:$0xff]
    %v4150 = vld [vmem:[%s3171 + $0x1e90] sm:$0xff]
    %v4151 = vld [vmem:[%s3171 + $0x1e98] sm:$0xff]
    %v4152 = vld [vmem:[%s3171 + $0x1ea0] sm:$0xff]
    %v4153 = vld [vmem:[%s3171 + $0x1ea8] sm:$0xff]
    %v4154 = vld [vmem:[%s3171 + $0x1eb0] sm:$0xff]
    %v4155 = vld [vmem:[%s3171 + $0x1eb8] sm:$0xff]
    %v4156 = vld [vmem:[%s3171 + $0x1ec0] sm:$0xff]
    %v4157 = vld [vmem:[%s3171 + $0x1ec8] sm:$0xff]
    %v4158 = vld [vmem:[%s3171 + $0x1ed0] sm:$0xff]
    %v4159 = vld [vmem:[%s3171 + $0x1ed8] sm:$0xff]
    %v4160 = vld [vmem:[%s3171 + $0x1ee0] sm:$0xff]
    %v4161 = vld [vmem:[%s3171 + $0x1ee8] sm:$0xff]
    %v4162 = vld [vmem:[%s3171 + $0x1ef0] sm:$0xff]
    %v4163 = vld [vmem:[%s3171 + $0x1ef8] sm:$0xff]
    %v4164 = vld [vmem:[%s3171 + $0x1f00] sm:$0xff]
    %v4165 = vld [vmem:[%s3171 + $0x1f08] sm:$0xff]
    %v4166 = vld [vmem:[%s3171 + $0x1f10] sm:$0xff]
    %v4167 = vld [vmem:[%s3171 + $0x1f18] sm:$0xff]
    %v4168 = vld [vmem:[%s3171 + $0x1f20] sm:$0xff]
    %v4169 = vld [vmem:[%s3171 + $0x1f28] sm:$0xff]
    %v4170 = vld [vmem:[%s3171 + $0x1f30] sm:$0xff]
    %v4171 = vld [vmem:[%s3171 + $0x1f38] sm:$0xff]
    %v4172 = vld [vmem:[%s3171 + $0x1f40] sm:$0xff]
    %v4173 = vld [vmem:[%s3171 + $0x1f48] sm:$0xff]
    %v4174 = vld [vmem:[%s3171 + $0x1f50] sm:$0xff]
    %v4175 = vld [vmem:[%s3171 + $0x1f58] sm:$0xff]
    %v4176 = vld [vmem:[%s3171 + $0x1f60] sm:$0xff]
    %v4177 = vld [vmem:[%s3171 + $0x1f68] sm:$0xff]
    %v4178 = vld [vmem:[%s3171 + $0x1f70] sm:$0xff]
    %v4179 = vld [vmem:[%s3171 + $0x1f78] sm:$0xff]
    %v4180 = vld [vmem:[%s3171 + $0x1f80] sm:$0xff]
    %v4181 = vld [vmem:[%s3171 + $0x1f88] sm:$0xff]
    %v4182 = vld [vmem:[%s3171 + $0x1f90] sm:$0xff]
    %v4183 = vld [vmem:[%s3171 + $0x1f98] sm:$0xff]
    %v4184 = vld [vmem:[%s3171 + $0x1fa0] sm:$0xff]
    %v4185 = vld [vmem:[%s3171 + $0x1fa8] sm:$0xff]
    %v4186 = vld [vmem:[%s3171 + $0x1fb0] sm:$0xff]
    %v4187 = vld [vmem:[%s3171 + $0x1fb8] sm:$0xff]
    %v4188 = vld [vmem:[%s3171 + $0x1fc0] sm:$0xff]
    %v4189 = vld [vmem:[%s3171 + $0x1fc8] sm:$0xff]
    %v4190 = vld [vmem:[%s3171 + $0x1fd0] sm:$0xff]
    %v4191 = vld [vmem:[%s3171 + $0x1fd8] sm:$0xff]
    %v4192 = vld [vmem:[%s3171 + $0x1fe0] sm:$0xff]
    %v4193 = vld [vmem:[%s3171 + $0x1fe8] sm:$0xff]
    %v4194 = vld [vmem:[%s3171 + $0x1ff0] sm:$0xff]
    %v4195 = vld [vmem:[%s3171 + $0x1ff8] sm:$0xff]
    %4196 = vmatprep.subr.mxu0 %v3173
    %4197 = vmatpush1.msra.mxu0 %v3172
    %4198 = vmatprep.subr.mxu0 %v3181
    %4199 = vmatpush1.msra.mxu0 %v3180
    %4200 = vmatprep.subr.mxu0 %v3189
    %4201 = vmatpush1.msra.mxu0 %v3188
    %4202 = vmatprep.subr.mxu0 %v3197
    %4203 = vmatpush1.msra.mxu0 %v3196
    %4204 = vmatprep.subr.mxu0 %v3205
    %4205 = vmatpush1.msra.mxu0 %v3204
    %4206 = vmatprep.subr.mxu0 %v3213
    %4207 = vmatpush1.msra.mxu0 %v3212
    %4208 = vmatprep.subr.mxu0 %v3221
    %4209 = vmatpush1.msra.mxu0 %v3220
    %4210 = vmatprep.subr.mxu0 %v3229
    %4211 = vmatpush1.msra.mxu0 %v3228
    %4212 = vmatprep.subr.mxu0 %v3237
    %4213 = vmatpush1.msra.mxu0 %v3236
    %4214 = vmatprep.subr.mxu0 %v3245
    %4215 = vmatpush1.msra.mxu0 %v3244
    %4216 = vmatprep.subr.mxu0 %v3253
    %4217 = vmatpush1.msra.mxu0 %v3252
    %4218 = vmatprep.subr.mxu0 %v3261
    %4219 = vmatpush1.msra.mxu0 %v3260
    %4220 = vmatprep.subr.mxu0 %v3269
    %4221 = vmatpush1.msra.mxu0 %v3268
    %4222 = vmatprep.subr.mxu0 %v3277
    %4223 = vmatpush1.msra.mxu0 %v3276
    %4224 = vmatprep.subr.mxu0 %v3285
    %4225 = vmatpush1.msra.mxu0 %v3284
    %4226 = vmatprep.subr.mxu0 %v3293
    %4227 = vmatpush1.msra.mxu0 %v3292
    %4228 = vmatprep.subr.mxu0 %v3301
    %4229 = vmatpush1.msra.mxu0 %v3300
    %4230 = vmatprep.subr.mxu0 %v3309
    %4231 = vmatpush1.msra.mxu0 %v3308
    %4232 = vmatprep.subr.mxu0 %v3317
    %4233 = vmatpush1.msra.mxu0 %v3316
    %4234 = vmatprep.subr.mxu0 %v3325
    %4235 = vmatpush1.msra.mxu0 %v3324
    %4236 = vmatprep.subr.mxu0 %v3333
    %4237 = vmatpush1.msra.mxu0 %v3332
    %4238 = vmatprep.subr.mxu0 %v3341
    %4239 = vmatpush1.msra.mxu0 %v3340
    %4240 = vmatprep.subr.mxu0 %v3349
    %4241 = vmatpush1.msra.mxu0 %v3348
    %4242 = vmatprep.subr.mxu0 %v3357
    %4243 = vmatpush1.msra.mxu0 %v3356
    %4244 = vmatprep.subr.mxu0 %v3365
    %4245 = vmatpush1.msra.mxu0 %v3364
    %4246 = vmatprep.subr.mxu0 %v3373
    %4247 = vmatpush1.msra.mxu0 %v3372
    %4248 = vmatprep.subr.mxu0 %v3381
    %4249 = vmatpush1.msra.mxu0 %v3380
    %4250 = vmatprep.subr.mxu0 %v3389
    %4251 = vmatpush1.msra.mxu0 %v3388
    %4252 = vmatprep.subr.mxu0 %v3397
    %4253 = vmatpush1.msra.mxu0 %v3396
    %4254 = vmatprep.subr.mxu0 %v3405
    %4255 = vmatpush1.msra.mxu0 %v3404
    %4256 = vmatprep.subr.mxu0 %v3413
    %4257 = vmatpush1.msra.mxu0 %v3412
    %4258 = vmatprep.subr.mxu0 %v3421
    %4259 = vmatpush1.msra.mxu0 %v3420
    %4260 = vmatprep.mubr.f32.mxu0 %v1924
    %4261 = vmatmul.mubr.f32.gmra.mrb[0].mxu0 %v1923
    %v4262 = vpop.f32.mrb[0].mxu0
    %v4263 = vadd.f32 0.0, %v4262
    %v4264 = vpop.f32.mrb[0].mxu0
    %v4265 = vadd.f32 0.0, %v4264
    %4266 = vmatprep.mubr.f32.mxu0 %v1932
    %4267 = vmatmul.mubr.f32.gmra.mrb[0].mxu0 %v1931
    %v4268 = vpop.f32.mrb[0].mxu0
    %v4269 = vadd.f32 0.0, %v4268
    %v4270 = vpop.f32.mrb[0].mxu0
    %v4271 = vadd.f32 0.0, %v4270
    %4272 = vmatprep.mubr.f32.mxu0 %v1940
    %4273 = vmatmul.mubr.f32.gmra.mrb[0].mxu0 %v1939
    %v4274 = vpop.f32.mrb[0].mxu0
    %v4275 = vadd.f32 0.0, %v4274
    %v4276 = vpop.f32.mrb[0].mxu0
    %v4277 = vadd.f32 0.0, %v4276
    %4278 = vmatprep.mubr.f32.mxu0 %v1948
    %4279 = vmatmul.mubr.f32.gmra.mrb[0].mxu0 %v1947
    %v4280 = vpop.f32.mrb[0].mxu0
    %v4281 = vadd.f32 0.0, %v4280
    %v4282 = vpop.f32.mrb[0].mxu0
    %v4283 = vadd.f32 0.0, %v4282
    %4284 = vdwg.mxu0
    %4285 = vmatprep.subr.mxu0 %v3429
    %4286 = vmatpush1.msra.mxu0 %v3428
    %4287 = vmatprep.subr.mxu0 %v3437
    %4288 = vmatpush1.msra.mxu0 %v3436
    %4289 = vmatprep.subr.mxu0 %v3445
    %4290 = vmatpush1.msra.mxu0 %v3444
    %4291 = vmatprep.subr.mxu0 %v3453
    %4292 = vmatpush1.msra.mxu0 %v3452
    %4293 = vmatprep.subr.mxu0 %v3461
    %4294 = vmatpush1.msra.mxu0 %v3460
    %4295 = vmatprep.subr.mxu0 %v3469
    %4296 = vmatpush1.msra.mxu0 %v3468
    %4297 = vmatprep.subr.mxu0 %v3477
    %4298 = vmatpush1.msra.mxu0 %v3476
    %4299 = vmatprep.subr.mxu0 %v3485
    %4300 = vmatpush1.msra.mxu0 %v3484
    %4301 = vmatprep.subr.mxu0 %v3493
    %4302 = vmatpush1.msra.mxu0 %v3492
    %4303 = vmatprep.subr.mxu0 %v3501
    %4304 = vmatpush1.msra.mxu0 %v3500
    %4305 = vmatprep.subr.mxu0 %v3509
    %4306 = vmatpush1.msra.mxu0 %v3508
    %4307 = vmatprep.subr.mxu0 %v3517
    %4308 = vmatpush1.msra.mxu0 %v3516
    %4309 = vmatprep.subr.mxu0 %v3525
    %4310 = vmatpush1.msra.mxu0 %v3524
    %4311 = vmatprep.subr.mxu0 %v3533
    %4312 = vmatpush1.msra.mxu0 %v3532
    %4313 = vmatprep.subr.mxu0 %v3541
    %4314 = vmatpush1.msra.mxu0 %v3540
    %4315 = vmatprep.subr.mxu0 %v3549
    %4316 = vmatpush1.msra.mxu0 %v3548
    %4317 = vmatprep.subr.mxu0 %v3557
    %4318 = vmatpush1.msra.mxu0 %v3556
    %4319 = vmatprep.subr.mxu0 %v3565
    %4320 = vmatpush1.msra.mxu0 %v3564
    %4321 = vmatprep.subr.mxu0 %v3573
    %4322 = vmatpush1.msra.mxu0 %v3572
    %4323 = vmatprep.subr.mxu0 %v3581
    %4324 = vmatpush1.msra.mxu0 %v3580
    %4325 = vmatprep.subr.mxu0 %v3589
    %4326 = vmatpush1.msra.mxu0 %v3588
    %4327 = vmatprep.subr.mxu0 %v3597
    %4328 = vmatpush1.msra.mxu0 %v3596
    %4329 = vmatprep.subr.mxu0 %v3605
    %4330 = vmatpush1.msra.mxu0 %v3604
    %4331 = vmatprep.subr.mxu0 %v3613
    %4332 = vmatpush1.msra.mxu0 %v3612
    %4333 = vmatprep.subr.mxu0 %v3621
    %4334 = vmatpush1.msra.mxu0 %v3620
    %4335 = vmatprep.subr.mxu0 %v3629
    %4336 = vmatpush1.msra.mxu0 %v3628
    %4337 = vmatprep.subr.mxu0 %v3637
    %4338 = vmatpush1.msra.mxu0 %v3636
    %4339 = vmatprep.subr.mxu0 %v3645
    %4340 = vmatpush1.msra.mxu0 %v3644
    %4341 = vmatprep.subr.mxu0 %v3653
    %4342 = vmatpush1.msra.mxu0 %v3652
    %4343 = vmatprep.subr.mxu0 %v3661
    %4344 = vmatpush1.msra.mxu0 %v3660
    %4345 = vmatprep.subr.mxu0 %v3669
    %4346 = vmatpush1.msra.mxu0 %v3668
    %4347 = vmatprep.subr.mxu0 %v3677
    %4348 = vmatpush1.msra.mxu0 %v3676
    %4349 = vmatprep.mubr.f32.mxu0 %v1926
    %4350 = vmatmul.mubr.f32.gmra.mrb[0].mxu0 %v1925
    %v4351 = vpop.f32.mrb[0].mxu0
    %v4352 = vadd.f32 %v4263, %v4351
    %v4353 = vpop.f32.mrb[0].mxu0
    %v4354 = vadd.f32 %v4265, %v4353
    %4355 = vmatprep.mubr.f32.mxu0 %v1934
    %4356 = vmatmul.mubr.f32.gmra.mrb[0].mxu0 %v1933
    %v4357 = vpop.f32.mrb[0].mxu0
    %v4358 = vadd.f32 %v4269, %v4357
    %v4359 = vpop.f32.mrb[0].mxu0
    %v4360 = vadd.f32 %v4271, %v4359
    %4361 = vmatprep.mubr.f32.mxu0 %v1942
    %4362 = vmatmul.mubr.f32.gmra.mrb[0].mxu0 %v1941
    %v4363 = vpop.f32.mrb[0].mxu0
    %v4364 = vadd.f32 %v4275, %v4363
    %v4365 = vpop.f32.mrb[0].mxu0
    %v4366 = vadd.f32 %v4277, %v4365
    %4367 = vmatprep.mubr.f32.mxu0 %v1950
    %4368 = vmatmul.mubr.f32.gmra.mrb[0].mxu0 %v1949
    %v4369 = vpop.f32.mrb[0].mxu0
    %v4370 = vadd.f32 %v4281, %v4369
    %v4371 = vpop.f32.mrb[0].mxu0
    %v4372 = vadd.f32 %v4283, %v4371
    %4373 = vdwg.mxu0
    %4374 = vmatprep.subr.mxu0 %v3685
    %4375 = vmatpush1.msra.mxu0 %v3684
    %4376 = vmatprep.subr.mxu0 %v3693
    %4377 = vmatpush1.msra.mxu0 %v3692
    %4378 = vmatprep.subr.mxu0 %v3701
    %4379 = vmatpush1.msra.mxu0 %v3700
    %4380 = vmatprep.subr.mxu0 %v3709
    %4381 = vmatpush1.msra.mxu0 %v3708
    %4382 = vmatprep.subr.mxu0 %v3717
    %4383 = vmatpush1.msra.mxu0 %v3716
    %4384 = vmatprep.subr.mxu0 %v3725
    %4385 = vmatpush1.msra.mxu0 %v3724
    %4386 = vmatprep.subr.mxu0 %v3733
    %4387 = vmatpush1.msra.mxu0 %v3732
    %4388 = vmatprep.subr.mxu0 %v3741
    %4389 = vmatpush1.msra.mxu0 %v3740
    %4390 = vmatprep.subr.mxu0 %v3749
    %4391 = vmatpush1.msra.mxu0 %v3748
    %4392 = vmatprep.subr.mxu0 %v3757
    %4393 = vmatpush1.msra.mxu0 %v3756
    %4394 = vmatprep.subr.mxu0 %v3765
    %4395 = vmatpush1.msra.mxu0 %v3764
    %4396 = vmatprep.subr.mxu0 %v3773
    %4397 = vmatpush1.msra.mxu0 %v3772
    %4398 = vmatprep.subr.mxu0 %v3781
    %4399 = vmatpush1.msra.mxu0 %v3780
    %4400 = vmatprep.subr.mxu0 %v3789
    %4401 = vmatpush1.msra.mxu0 %v3788
    %4402 = vmatprep.subr.mxu0 %v3797
    %4403 = vmatpush1.msra.mxu0 %v3796
    %4404 = vmatprep.subr.mxu0 %v3805
    %4405 = vmatpush1.msra.mxu0 %v3804
    %4406 = vmatprep.subr.mxu0 %v3813
    %4407 = vmatpush1.msra.mxu0 %v3812
    %4408 = vmatprep.subr.mxu0 %v3821
    %4409 = vmatpush1.msra.mxu0 %v3820
    %4410 = vmatprep.subr.mxu0 %v3829
    %4411 = vmatpush1.msra.mxu0 %v3828
    %4412 = vmatprep.subr.mxu0 %v3837
    %4413 = vmatpush1.msra.mxu0 %v3836
    %4414 = vmatprep.subr.mxu0 %v3845
    %4415 = vmatpush1.msra.mxu0 %v3844
    %4416 = vmatprep.subr.mxu0 %v3853
    %4417 = vmatpush1.msra.mxu0 %v3852
    %4418 = vmatprep.subr.mxu0 %v3861
    %4419 = vmatpush1.msra.mxu0 %v3860
    %4420 = vmatprep.subr.mxu0 %v3869
    %4421 = vmatpush1.msra.mxu0 %v3868
    %4422 = vmatprep.subr.mxu0 %v3877
    %4423 = vmatpush1.msra.mxu0 %v3876
    %4424 = vmatprep.subr.mxu0 %v3885
    %4425 = vmatpush1.msra.mxu0 %v3884
    %4426 = vmatprep.subr.mxu0 %v3893
    %4427 = vmatpush1.msra.mxu0 %v3892
    %4428 = vmatprep.subr.mxu0 %v3901
    %4429 = vmatpush1.msra.mxu0 %v3900
    %4430 = vmatprep.subr.mxu0 %v3909
    %4431 = vmatpush1.msra.mxu0 %v3908
    %4432 = vmatprep.subr.mxu0 %v3917
    %4433 = vmatpush1.msra.mxu0 %v3916
    %4434 = vmatprep.subr.mxu0 %v3925
    %4435 = vmatpush1.msra.mxu0 %v3924
    %4436 = vmatprep.subr.mxu0 %v3933
    %4437 = vmatpush1.msra.mxu0 %v3932
    %4438 = vmatprep.mubr.f32.mxu0 %v1928
    %4439 = vmatmul.mubr.f32.gmra.mrb[0].mxu0 %v1927
    %v4440 = vpop.f32.mrb[0].mxu0
    %v4441 = vadd.f32 %v4352, %v4440
    %v4442 = vpop.f32.mrb[0].mxu0
    %v4443 = vadd.f32 %v4354, %v4442
    %4444 = vmatprep.mubr.f32.mxu0 %v1936
    %4445 = vmatmul.mubr.f32.gmra.mrb[0].mxu0 %v1935
    %v4446 = vpop.f32.mrb[0].mxu0
    %v4447 = vadd.f32 %v4358, %v4446
    %v4448 = vpop.f32.mrb[0].mxu0
    %v4449 = vadd.f32 %v4360, %v4448
    %4450 = vmatprep.mubr.f32.mxu0 %v1944
    %4451 = vmatmul.mubr.f32.gmra.mrb[0].mxu0 %v1943
    %v4452 = vpop.f32.mrb[0].mxu0
    %v4453 = vadd.f32 %v4364, %v4452
    %v4454 = vpop.f32.mrb[0].mxu0
    %v4455 = vadd.f32 %v4366, %v4454
    %4456 = vmatprep.mubr.f32.mxu0 %v1952
    %4457 = vmatmul.mubr.f32.gmra.mrb[0].mxu0 %v1951
    %v4458 = vpop.f32.mrb[0].mxu0
    %v4459 = vadd.f32 %v4370, %v4458
    %v4460 = vpop.f32.mrb[0].mxu0
    %v4461 = vadd.f32 %v4372, %v4460
    %4462 = vdwg.mxu0
    %4463 = vmatprep.subr.mxu0 %v3941
    %4464 = vmatpush1.msra.mxu0 %v3940
    %4465 = vmatprep.subr.mxu0 %v3949
    %4466 = vmatpush1.msra.mxu0 %v3948
    %4467 = vmatprep.subr.mxu0 %v3957
    %4468 = vmatpush1.msra.mxu0 %v3956
    %4469 = vmatprep.subr.mxu0 %v3965
    %4470 = vmatpush1.msra.mxu0 %v3964
    %4471 = vmatprep.subr.mxu0 %v3973
    %4472 = vmatpush1.msra.mxu0 %v3972
    %4473 = vmatprep.subr.mxu0 %v3981
    %4474 = vmatpush1.msra.mxu0 %v3980
    %4475 = vmatprep.subr.mxu0 %v3989
    %4476 = vmatpush1.msra.mxu0 %v3988
    %4477 = vmatprep.subr.mxu0 %v3997
    %4478 = vmatpush1.msra.mxu0 %v3996
    %4479 = vmatprep.subr.mxu0 %v4005
    %4480 = vmatpush1.msra.mxu0 %v4004
    %4481 = vmatprep.subr.mxu0 %v4013
    %4482 = vmatpush1.msra.mxu0 %v4012
    %4483 = vmatprep.subr.mxu0 %v4021
    %4484 = vmatpush1.msra.mxu0 %v4020
    %4485 = vmatprep.subr.mxu0 %v4029
    %4486 = vmatpush1.msra.mxu0 %v4028
    %4487 = vmatprep.subr.mxu0 %v4037
    %4488 = vmatpush1.msra.mxu0 %v4036
    %4489 = vmatprep.subr.mxu0 %v4045
    %4490 = vmatpush1.msra.mxu0 %v4044
    %4491 = vmatprep.subr.mxu0 %v4053
    %4492 = vmatpush1.msra.mxu0 %v4052
    %4493 = vmatprep.subr.mxu0 %v4061
    %4494 = vmatpush1.msra.mxu0 %v4060
    %4495 = vmatprep.subr.mxu0 %v4069
    %4496 = vmatpush1.msra.mxu0 %v4068
    %4497 = vmatprep.subr.mxu0 %v4077
    %4498 = vmatpush1.msra.mxu0 %v4076
    %4499 = vmatprep.subr.mxu0 %v4085
    %4500 = vmatpush1.msra.mxu0 %v4084
    %4501 = vmatprep.subr.mxu0 %v4093
    %4502 = vmatpush1.msra.mxu0 %v4092
    %4503 = vmatprep.subr.mxu0 %v4101
    %4504 = vmatpush1.msra.mxu0 %v4100
    %4505 = vmatprep.subr.mxu0 %v4109
    %4506 = vmatpush1.msra.mxu0 %v4108
    %4507 = vmatprep.subr.mxu0 %v4117
    %4508 = vmatpush1.msra.mxu0 %v4116
    %4509 = vmatprep.subr.mxu0 %v4125
    %4510 = vmatpush1.msra.mxu0 %v4124
    %4511 = vmatprep.subr.mxu0 %v4133
    %4512 = vmatpush1.msra.mxu0 %v4132
    %4513 = vmatprep.subr.mxu0 %v4141
    %4514 = vmatpush1.msra.mxu0 %v4140
    %4515 = vmatprep.subr.mxu0 %v4149
    %4516 = vmatpush1.msra.mxu0 %v4148
    %4517 = vmatprep.subr.mxu0 %v4157
    %4518 = vmatpush1.msra.mxu0 %v4156
    %4519 = vmatprep.subr.mxu0 %v4165
    %4520 = vmatpush1.msra.mxu0 %v4164
    %4521 = vmatprep.subr.mxu0 %v4173
    %4522 = vmatpush1.msra.mxu0 %v4172
    %4523 = vmatprep.subr.mxu0 %v4181
    %4524 = vmatpush1.msra.mxu0 %v4180
    %4525 = vmatprep.subr.mxu0 %v4189
    %4526 = vmatpush1.msra.mxu0 %v4188
    %4527 = vmatprep.mubr.f32.mxu0 %v1930
    %4528 = vmatmul.mubr.f32.gmra.mrb[0].mxu0 %v1929
    %v4529 = vpop.f32.mrb[0].mxu0
    %v4530 = vadd.f32 %v4441, %v4529
    %v4531 = vpop.f32.mrb[0].mxu0
    %v4532 = vadd.f32 %v4443, %v4531
    %4533 = vmatprep.mubr.f32.mxu0 %v1938
    %4534 = vmatmul.mubr.f32.gmra.mrb[0].mxu0 %v1937
    %v4535 = vpop.f32.mrb[0].mxu0
    %v4536 = vadd.f32 %v4447, %v4535
    %v4537 = vpop.f32.mrb[0].mxu0
    %v4538 = vadd.f32 %v4449, %v4537
    %4539 = vmatprep.mubr.f32.mxu0 %v1946
    %4540 = vmatmul.mubr.f32.gmra.mrb[0].mxu0 %v1945
    %v4541 = vpop.f32.mrb[0].mxu0
    %v4542 = vadd.f32 %v4453, %v4541
    %v4543 = vpop.f32.mrb[0].mxu0
    %v4544 = vadd.f32 %v4455, %v4543
    %4545 = vmatprep.mubr.f32.mxu0 %v1954
    %4546 = vmatmul.mubr.f32.gmra.mrb[0].mxu0 %v1953
    %v4547 = vpop.f32.mrb[0].mxu0
    %v4548 = vadd.f32 %v4459, %v4547
    %v4549 = vpop.f32.mrb[0].mxu0
    %v4550 = vadd.f32 %v4461, %v4549
    %4551 = vdwg.mxu0
    %4552 = vmatprep.subr.mxu0 %v3175
    %4553 = vmatpush1.msra.mxu0 %v3174
    %4554 = vmatprep.subr.mxu0 %v3183
    %4555 = vmatpush1.msra.mxu0 %v3182
    %4556 = vmatprep.subr.mxu0 %v3191
    %4557 = vmatpush1.msra.mxu0 %v3190
    %4558 = vmatprep.subr.mxu0 %v3199
    %4559 = vmatpush1.msra.mxu0 %v3198
    %4560 = vmatprep.subr.mxu0 %v3207
    %4561 = vmatpush1.msra.mxu0 %v3206
    %4562 = vmatprep.subr.mxu0 %v3215
    %4563 = vmatpush1.msra.mxu0 %v3214
    %4564 = vmatprep.subr.mxu0 %v3223
    %4565 = vmatpush1.msra.mxu0 %v3222
    %4566 = vmatprep.subr.mxu0 %v3231
    %4567 = vmatpush1.msra.mxu0 %v3230
    %4568 = vmatprep.subr.mxu0 %v3239
    %4569 = vmatpush1.msra.mxu0 %v3238
    %4570 = vmatprep.subr.mxu0 %v3247
    %4571 = vmatpush1.msra.mxu0 %v3246
    %4572 = vmatprep.subr.mxu0 %v3255
    %4573 = vmatpush1.msra.mxu0 %v3254
    %4574 = vmatprep.subr.mxu0 %v3263
    %4575 = vmatpush1.msra.mxu0 %v3262
    %4576 = vmatprep.subr.mxu0 %v3271
    %4577 = vmatpush1.msra.mxu0 %v3270
    %4578 = vmatprep.subr.mxu0 %v3279
    %4579 = vmatpush1.msra.mxu0 %v3278
    %4580 = vmatprep.subr.mxu0 %v3287
    %4581 = vmatpush1.msra.mxu0 %v3286
    %4582 = vmatprep.subr.mxu0 %v3295
    %4583 = vmatpush1.msra.mxu0 %v3294
    %4584 = vmatprep.subr.mxu0 %v3303
    %4585 = vmatpush1.msra.mxu0 %v3302
    %4586 = vmatprep.subr.mxu0 %v3311
    %4587 = vmatpush1.msra.mxu0 %v3310
    %4588 = vmatprep.subr.mxu0 %v3319
    %4589 = vmatpush1.msra.mxu0 %v3318
    %4590 = vmatprep.subr.mxu0 %v3327
    %4591 = vmatpush1.msra.mxu0 %v3326
    %4592 = vmatprep.subr.mxu0 %v3335
    %4593 = vmatpush1.msra.mxu0 %v3334
    %4594 = vmatprep.subr.mxu0 %v3343
    %4595 = vmatpush1.msra.mxu0 %v3342
    %4596 = vmatprep.subr.mxu0 %v3351
    %4597 = vmatpush1.msra.mxu0 %v3350
    %4598 = vmatprep.subr.mxu0 %v3359
    %4599 = vmatpush1.msra.mxu0 %v3358
    %4600 = vmatprep.subr.mxu0 %v3367
    %4601 = vmatpush1.msra.mxu0 %v3366
    %4602 = vmatprep.subr.mxu0 %v3375
    %4603 = vmatpush1.msra.mxu0 %v3374
    %4604 = vmatprep.subr.mxu0 %v3383
    %4605 = vmatpush1.msra.mxu0 %v3382
    %4606 = vmatprep.subr.mxu0 %v3391
    %4607 = vmatpush1.msra.mxu0 %v3390
    %4608 = vmatprep.subr.mxu0 %v3399
    %4609 = vmatpush1.msra.mxu0 %v3398
    %4610 = vmatprep.subr.mxu0 %v3407
    %4611 = vmatpush1.msra.mxu0 %v3406
    %4612 = vmatprep.subr.mxu0 %v3415
    %4613 = vmatpush1.msra.mxu0 %v3414
    %4614 = vmatprep.subr.mxu0 %v3423
    %4615 = vmatpush1.msra.mxu0 %v3422
    %4616 = vmatprep.mubr.f32.mxu0 %v1924
    %4617 = vmatmul.mubr.f32.gmra.mrb[0].mxu0 %v1923
    %v4618 = vpop.f32.mrb[0].mxu0
    %v4619 = vadd.f32 0.0, %v4618
    %v4620 = vpop.f32.mrb[0].mxu0
    %v4621 = vadd.f32 0.0, %v4620
    %4622 = vmatprep.mubr.f32.mxu0 %v1932
    %4623 = vmatmul.mubr.f32.gmra.mrb[0].mxu0 %v1931
    %v4624 = vpop.f32.mrb[0].mxu0
    %v4625 = vadd.f32 0.0, %v4624
    %v4626 = vpop.f32.mrb[0].mxu0
    %v4627 = vadd.f32 0.0, %v4626
    %4628 = vmatprep.mubr.f32.mxu0 %v1940
    %4629 = vmatmul.mubr.f32.gmra.mrb[0].mxu0 %v1939
    %v4630 = vpop.f32.mrb[0].mxu0
    %v4631 = vadd.f32 0.0, %v4630
    %v4632 = vpop.f32.mrb[0].mxu0
    %v4633 = vadd.f32 0.0, %v4632
    %4634 = vmatprep.mubr.f32.mxu0 %v1948
    %4635 = vmatmul.mubr.f32.gmra.mrb[0].mxu0 %v1947
    %v4636 = vpop.f32.mrb[0].mxu0
    %v4637 = vadd.f32 0.0, %v4636
    %v4638 = vpop.f32.mrb[0].mxu0
    %v4639 = vadd.f32 0.0, %v4638
    %4640 = vdwg.mxu0
    %4641 = vmatprep.subr.mxu0 %v3431
    %4642 = vmatpush1.msra.mxu0 %v3430
    %4643 = vmatprep.subr.mxu0 %v3439
    %4644 = vmatpush1.msra.mxu0 %v3438
    %4645 = vmatprep.subr.mxu0 %v3447
    %4646 = vmatpush1.msra.mxu0 %v3446
    %4647 = vmatprep.subr.mxu0 %v3455
    %4648 = vmatpush1.msra.mxu0 %v3454
    %4649 = vmatprep.subr.mxu0 %v3463
    %4650 = vmatpush1.msra.mxu0 %v3462
    %4651 = vmatprep.subr.mxu0 %v3471
    %4652 = vmatpush1.msra.mxu0 %v3470
    %4653 = vmatprep.subr.mxu0 %v3479
    %4654 = vmatpush1.msra.mxu0 %v3478
    %4655 = vmatprep.subr.mxu0 %v3487
    %4656 = vmatpush1.msra.mxu0 %v3486
    %4657 = vmatprep.subr.mxu0 %v3495
    %4658 = vmatpush1.msra.mxu0 %v3494
    %4659 = vmatprep.subr.mxu0 %v3503
    %4660 = vmatpush1.msra.mxu0 %v3502
    %4661 = vmatprep.subr.mxu0 %v3511
    %4662 = vmatpush1.msra.mxu0 %v3510
    %4663 = vmatprep.subr.mxu0 %v3519
    %4664 = vmatpush1.msra.mxu0 %v3518
    %4665 = vmatprep.subr.mxu0 %v3527
    %4666 = vmatpush1.msra.mxu0 %v3526
    %4667 = vmatprep.subr.mxu0 %v3535
    %4668 = vmatpush1.msra.mxu0 %v3534
    %4669 = vmatprep.subr.mxu0 %v3543
    %4670 = vmatpush1.msra.mxu0 %v3542
    %4671 = vmatprep.subr.mxu0 %v3551
    %4672 = vmatpush1.msra.mxu0 %v3550
    %4673 = vmatprep.subr.mxu0 %v3559
    %4674 = vmatpush1.msra.mxu0 %v3558
    %4675 = vmatprep.subr.mxu0 %v3567
    %4676 = vmatpush1.msra.mxu0 %v3566
    %4677 = vmatprep.subr.mxu0 %v3575
    %4678 = vmatpush1.msra.mxu0 %v3574
    %4679 = vmatprep.subr.mxu0 %v3583
    %4680 = vmatpush1.msra.mxu0 %v3582
    %4681 = vmatprep.subr.mxu0 %v3591
    %4682 = vmatpush1.msra.mxu0 %v3590
    %4683 = vmatprep.subr.mxu0 %v3599
    %4684 = vmatpush1.msra.mxu0 %v3598
    %4685 = vmatprep.subr.mxu0 %v3607
    %4686 = vmatpush1.msra.mxu0 %v3606
    %4687 = vmatprep.subr.mxu0 %v3615
    %4688 = vmatpush1.msra.mxu0 %v3614
    %4689 = vmatprep.subr.mxu0 %v3623
    %4690 = vmatpush1.msra.mxu0 %v3622
    %4691 = vmatprep.subr.mxu0 %v3631
    %4692 = vmatpush1.msra.mxu0 %v3630
    %4693 = vmatprep.subr.mxu0 %v3639
    %4694 = vmatpush1.msra.mxu0 %v3638
    %4695 = vmatprep.subr.mxu0 %v3647
    %4696 = vmatpush1.msra.mxu0 %v3646
    %4697 = vmatprep.subr.mxu0 %v3655
    %4698 = vmatpush1.msra.mxu0 %v3654
    %4699 = vmatprep.subr.mxu0 %v3663
    %4700 = vmatpush1.msra.mxu0 %v3662
    %4701 = vmatprep.subr.mxu0 %v3671
    %4702 = vmatpush1.msra.mxu0 %v3670
    %4703 = vmatprep.subr.mxu0 %v3679
    %4704 = vmatpush1.msra.mxu0 %v3678
    %4705 = vmatprep.mubr.f32.mxu0 %v1926
    %4706 = vmatmul.mubr.f32.gmra.mrb[0].mxu0 %v1925
    %v4707 = vpop.f32.mrb[0].mxu0
    %v4708 = vadd.f32 %v4619, %v4707
    %v4709 = vpop.f32.mrb[0].mxu0
    %v4710 = vadd.f32 %v4621, %v4709
    %4711 = vmatprep.mubr.f32.mxu0 %v1934
    %4712 = vmatmul.mubr.f32.gmra.mrb[0].mxu0 %v1933
    %v4713 = vpop.f32.mrb[0].mxu0
    %v4714 = vadd.f32 %v4625, %v4713
    %v4715 = vpop.f32.mrb[0].mxu0
    %v4716 = vadd.f32 %v4627, %v4715
    %4717 = vmatprep.mubr.f32.mxu0 %v1942
    %4718 = vmatmul.mubr.f32.gmra.mrb[0].mxu0 %v1941
    %v4719 = vpop.f32.mrb[0].mxu0
    %v4720 = vadd.f32 %v4631, %v4719
    %v4721 = vpop.f32.mrb[0].mxu0
    %v4722 = vadd.f32 %v4633, %v4721
    %4723 = vmatprep.mubr.f32.mxu0 %v1950
    %4724 = vmatmul.mubr.f32.gmra.mrb[0].mxu0 %v1949
    %v4725 = vpop.f32.mrb[0].mxu0
    %v4726 = vadd.f32 %v4637, %v4725
    %v4727 = vpop.f32.mrb[0].mxu0
    %v4728 = vadd.f32 %v4639, %v4727
    %4729 = vdwg.mxu0
    %4730 = vmatprep.subr.mxu0 %v3687
    %4731 = vmatpush1.msra.mxu0 %v3686
    %4732 = vmatprep.subr.mxu0 %v3695
    %4733 = vmatpush1.msra.mxu0 %v3694
    %4734 = vmatprep.subr.mxu0 %v3703
    %4735 = vmatpush1.msra.mxu0 %v3702
    %4736 = vmatprep.subr.mxu0 %v3711
    %4737 = vmatpush1.msra.mxu0 %v3710
    %4738 = vmatprep.subr.mxu0 %v3719
    %4739 = vmatpush1.msra.mxu0 %v3718
    %4740 = vmatprep.subr.mxu0 %v3727
    %4741 = vmatpush1.msra.mxu0 %v3726
    %4742 = vmatprep.subr.mxu0 %v3735
    %4743 = vmatpush1.msra.mxu0 %v3734
    %4744 = vmatprep.subr.mxu0 %v3743
    %4745 = vmatpush1.msra.mxu0 %v3742
    %4746 = vmatprep.subr.mxu0 %v3751
    %4747 = vmatpush1.msra.mxu0 %v3750
    %4748 = vmatprep.subr.mxu0 %v3759
    %4749 = vmatpush1.msra.mxu0 %v3758
    %4750 = vmatprep.subr.mxu0 %v3767
    %4751 = vmatpush1.msra.mxu0 %v3766
    %4752 = vmatprep.subr.mxu0 %v3775
    %4753 = vmatpush1.msra.mxu0 %v3774
    %4754 = vmatprep.subr.mxu0 %v3783
    %4755 = vmatpush1.msra.mxu0 %v3782
    %4756 = vmatprep.subr.mxu0 %v3791
    %4757 = vmatpush1.msra.mxu0 %v3790
    %4758 = vmatprep.subr.mxu0 %v3799
    %4759 = vmatpush1.msra.mxu0 %v3798
    %4760 = vmatprep.subr.mxu0 %v3807
    %4761 = vmatpush1.msra.mxu0 %v3806
    %4762 = vmatprep.subr.mxu0 %v3815
    %4763 = vmatpush1.msra.mxu0 %v3814
    %4764 = vmatprep.subr.mxu0 %v3823
    %4765 = vmatpush1.msra.mxu0 %v3822
    %4766 = vmatprep.subr.mxu0 %v3831
    %4767 = vmatpush1.msra.mxu0 %v3830
    %4768 = vmatprep.subr.mxu0 %v3839
    %4769 = vmatpush1.msra.mxu0 %v3838
    %4770 = vmatprep.subr.mxu0 %v3847
    %4771 = vmatpush1.msra.mxu0 %v3846
    %4772 = vmatprep.subr.mxu0 %v3855
    %4773 = vmatpush1.msra.mxu0 %v3854
    %4774 = vmatprep.subr.mxu0 %v3863
    %4775 = vmatpush1.msra.mxu0 %v3862
    %4776 = vmatprep.subr.mxu0 %v3871
    %4777 = vmatpush1.msra.mxu0 %v3870
    %4778 = vmatprep.subr.mxu0 %v3879
    %4779 = vmatpush1.msra.mxu0 %v3878
    %4780 = vmatprep.subr.mxu0 %v3887
    %4781 = vmatpush1.msra.mxu0 %v3886
    %4782 = vmatprep.subr.mxu0 %v3895
    %4783 = vmatpush1.msra.mxu0 %v3894
    %4784 = vmatprep.subr.mxu0 %v3903
    %4785 = vmatpush1.msra.mxu0 %v3902
    %4786 = vmatprep.subr.mxu0 %v3911
    %4787 = vmatpush1.msra.mxu0 %v3910
    %4788 = vmatprep.subr.mxu0 %v3919
    %4789 = vmatpush1.msra.mxu0 %v3918
    %4790 = vmatprep.subr.mxu0 %v3927
    %4791 = vmatpush1.msra.mxu0 %v3926
    %4792 = vmatprep.subr.mxu0 %v3935
    %4793 = vmatpush1.msra.mxu0 %v3934
    %4794 = vmatprep.mubr.f32.mxu0 %v1928
    %4795 = vmatmul.mubr.f32.gmra.mrb[0].mxu0 %v1927
    %v4796 = vpop.f32.mrb[0].mxu0
    %v4797 = vadd.f32 %v4708, %v4796
    %v4798 = vpop.f32.mrb[0].mxu0
    %v4799 = vadd.f32 %v4710, %v4798
    %4800 = vmatprep.mubr.f32.mxu0 %v1936
    %4801 = vmatmul.mubr.f32.gmra.mrb[0].mxu0 %v1935
    %v4802 = vpop.f32.mrb[0].mxu0
    %v4803 = vadd.f32 %v4714, %v4802
    %v4804 = vpop.f32.mrb[0].mxu0
    %v4805 = vadd.f32 %v4716, %v4804
    %4806 = vmatprep.mubr.f32.mxu0 %v1944
    %4807 = vmatmul.mubr.f32.gmra.mrb[0].mxu0 %v1943
    %v4808 = vpop.f32.mrb[0].mxu0
    %v4809 = vadd.f32 %v4720, %v4808
    %v4810 = vpop.f32.mrb[0].mxu0
    %v4811 = vadd.f32 %v4722, %v4810
    %4812 = vmatprep.mubr.f32.mxu0 %v1952
    %4813 = vmatmul.mubr.f32.gmra.mrb[0].mxu0 %v1951
    %v4814 = vpop.f32.mrb[0].mxu0
    %v4815 = vadd.f32 %v4726, %v4814
    %v4816 = vpop.f32.mrb[0].mxu0
    %v4817 = vadd.f32 %v4728, %v4816
    %4818 = vdwg.mxu0
    %4819 = vmatprep.subr.mxu0 %v3943
    %4820 = vmatpush1.msra.mxu0 %v3942
    %4821 = vmatprep.subr.mxu0 %v3951
    %4822 = vmatpush1.msra.mxu0 %v3950
    %4823 = vmatprep.subr.mxu0 %v3959
    %4824 = vmatpush1.msra.mxu0 %v3958
    %4825 = vmatprep.subr.mxu0 %v3967
    %4826 = vmatpush1.msra.mxu0 %v3966
    %4827 = vmatprep.subr.mxu0 %v3975
    %4828 = vmatpush1.msra.mxu0 %v3974
    %4829 = vmatprep.subr.mxu0 %v3983
    %4830 = vmatpush1.msra.mxu0 %v3982
    %4831 = vmatprep.subr.mxu0 %v3991
    %4832 = vmatpush1.msra.mxu0 %v3990
    %4833 = vmatprep.subr.mxu0 %v3999
    %4834 = vmatpush1.msra.mxu0 %v3998
    %4835 = vmatprep.subr.mxu0 %v4007
    %4836 = vmatpush1.msra.mxu0 %v4006
    %4837 = vmatprep.subr.mxu0 %v4015
    %4838 = vmatpush1.msra.mxu0 %v4014
    %4839 = vmatprep.subr.mxu0 %v4023
    %4840 = vmatpush1.msra.mxu0 %v4022
    %4841 = vmatprep.subr.mxu0 %v4031
    %4842 = vmatpush1.msra.mxu0 %v4030
    %4843 = vmatprep.subr.mxu0 %v4039
    %4844 = vmatpush1.msra.mxu0 %v4038
    %4845 = vmatprep.subr.mxu0 %v4047
    %4846 = vmatpush1.msra.mxu0 %v4046
    %4847 = vmatprep.subr.mxu0 %v4055
    %4848 = vmatpush1.msra.mxu0 %v4054
    %4849 = vmatprep.subr.mxu0 %v4063
    %4850 = vmatpush1.msra.mxu0 %v4062
    %4851 = vmatprep.subr.mxu0 %v4071
    %4852 = vmatpush1.msra.mxu0 %v4070
    %4853 = vmatprep.subr.mxu0 %v4079
    %4854 = vmatpush1.msra.mxu0 %v4078
    %4855 = vmatprep.subr.mxu0 %v4087
    %4856 = vmatpush1.msra.mxu0 %v4086
    %4857 = vmatprep.subr.mxu0 %v4095
    %4858 = vmatpush1.msra.mxu0 %v4094
    %4859 = vmatprep.subr.mxu0 %v4103
    %4860 = vmatpush1.msra.mxu0 %v4102
    %4861 = vmatprep.subr.mxu0 %v4111
    %4862 = vmatpush1.msra.mxu0 %v4110
    %4863 = vmatprep.subr.mxu0 %v4119
    %4864 = vmatpush1.msra.mxu0 %v4118
    %4865 = vmatprep.subr.mxu0 %v4127
    %4866 = vmatpush1.msra.mxu0 %v4126
    %4867 = vmatprep.subr.mxu0 %v4135
    %4868 = vmatpush1.msra.mxu0 %v4134
    %4869 = vmatprep.subr.mxu0 %v4143
    %4870 = vmatpush1.msra.mxu0 %v4142
    %4871 = vmatprep.subr.mxu0 %v4151
    %4872 = vmatpush1.msra.mxu0 %v4150
    %4873 = vmatprep.subr.mxu0 %v4159
    %4874 = vmatpush1.msra.mxu0 %v4158
    %4875 = vmatprep.subr.mxu0 %v4167
    %4876 = vmatpush1.msra.mxu0 %v4166
    %4877 = vmatprep.subr.mxu0 %v4175
    %4878 = vmatpush1.msra.mxu0 %v4174
    %4879 = vmatprep.subr.mxu0 %v4183
    %4880 = vmatpush1.msra.mxu0 %v4182
    %4881 = vmatprep.subr.mxu0 %v4191
    %4882 = vmatpush1.msra.mxu0 %v4190
    %4883 = vmatprep.mubr.f32.mxu0 %v1930
    %4884 = vmatmul.mubr.f32.gmra.mrb[0].mxu0 %v1929
    %v4885 = vpop.f32.mrb[0].mxu0
    %v4886 = vadd.f32 %v4797, %v4885
    %v4887 = vpop.f32.mrb[0].mxu0
    %v4888 = vadd.f32 %v4799, %v4887
    %4889 = vmatprep.mubr.f32.mxu0 %v1938
    %4890 = vmatmul.mubr.f32.gmra.mrb[0].mxu0 %v1937
    %v4891 = vpop.f32.mrb[0].mxu0
    %v4892 = vadd.f32 %v4803, %v4891
    %v4893 = vpop.f32.mrb[0].mxu0
    %v4894 = vadd.f32 %v4805, %v4893
    %4895 = vmatprep.mubr.f32.mxu0 %v1946
    %4896 = vmatmul.mubr.f32.gmra.mrb[0].mxu0 %v1945
    %v4897 = vpop.f32.mrb[0].mxu0
    %v4898 = vadd.f32 %v4809, %v4897
    %v4899 = vpop.f32.mrb[0].mxu0
    %v4900 = vadd.f32 %v4811, %v4899
    %4901 = vmatprep.mubr.f32.mxu0 %v1954
    %4902 = vmatmul.mubr.f32.gmra.mrb[0].mxu0 %v1953
    %v4903 = vpop.f32.mrb[0].mxu0
    %v4904 = vadd.f32 %v4815, %v4903
    %v4905 = vpop.f32.mrb[0].mxu0
    %v4906 = vadd.f32 %v4817, %v4905
    %4907 = vdwg.mxu0
    %4908 = vmatprep.subr.mxu0 %v3177
    %4909 = vmatpush1.msra.mxu0 %v3176
    %4910 = vmatprep.subr.mxu0 %v3185
    %4911 = vmatpush1.msra.mxu0 %v3184
    %4912 = vmatprep.subr.mxu0 %v3193
    %4913 = vmatpush1.msra.mxu0 %v3192
    %4914 = vmatprep.subr.mxu0 %v3201
    %4915 = vmatpush1.msra.mxu0 %v3200
    %4916 = vmatprep.subr.mxu0 %v3209
    %4917 = vmatpush1.msra.mxu0 %v3208
    %4918 = vmatprep.subr.mxu0 %v3217
    %4919 = vmatpush1.msra.mxu0 %v3216
    %4920 = vmatprep.subr.mxu0 %v3225
    %4921 = vmatpush1.msra.mxu0 %v3224
    %4922 = vmatprep.subr.mxu0 %v3233
    %4923 = vmatpush1.msra.mxu0 %v3232
    %4924 = vmatprep.subr.mxu0 %v3241
    %4925 = vmatpush1.msra.mxu0 %v3240
    %4926 = vmatprep.subr.mxu0 %v3249
    %4927 = vmatpush1.msra.mxu0 %v3248
    %4928 = vmatprep.subr.mxu0 %v3257
    %4929 = vmatpush1.msra.mxu0 %v3256
    %4930 = vmatprep.subr.mxu0 %v3265
    %4931 = vmatpush1.msra.mxu0 %v3264
    %4932 = vmatprep.subr.mxu0 %v3273
    %4933 = vmatpush1.msra.mxu0 %v3272
    %4934 = vmatprep.subr.mxu0 %v3281
    %4935 = vmatpush1.msra.mxu0 %v3280
    %4936 = vmatprep.subr.mxu0 %v3289
    %4937 = vmatpush1.msra.mxu0 %v3288
    %4938 = vmatprep.subr.mxu0 %v3297
    %4939 = vmatpush1.msra.mxu0 %v3296
    %4940 = vmatprep.subr.mxu0 %v3305
    %4941 = vmatpush1.msra.mxu0 %v3304
    %4942 = vmatprep.subr.mxu0 %v3313
    %4943 = vmatpush1.msra.mxu0 %v3312
    %4944 = vmatprep.subr.mxu0 %v3321
    %4945 = vmatpush1.msra.mxu0 %v3320
    %4946 = vmatprep.subr.mxu0 %v3329
    %4947 = vmatpush1.msra.mxu0 %v3328
    %4948 = vmatprep.subr.mxu0 %v3337
    %4949 = vmatpush1.msra.mxu0 %v3336
    %4950 = vmatprep.subr.mxu0 %v3345
    %4951 = vmatpush1.msra.mxu0 %v3344
    %4952 = vmatprep.subr.mxu0 %v3353
    %4953 = vmatpush1.msra.mxu0 %v3352
    %4954 = vmatprep.subr.mxu0 %v3361
    %4955 = vmatpush1.msra.mxu0 %v3360
    %4956 = vmatprep.subr.mxu0 %v3369
    %4957 = vmatpush1.msra.mxu0 %v3368
    %4958 = vmatprep.subr.mxu0 %v3377
    %4959 = vmatpush1.msra.mxu0 %v3376
    %4960 = vmatprep.subr.mxu0 %v3385
    %4961 = vmatpush1.msra.mxu0 %v3384
    %4962 = vmatprep.subr.mxu0 %v3393
    %4963 = vmatpush1.msra.mxu0 %v3392
    %4964 = vmatprep.subr.mxu0 %v3401
    %4965 = vmatpush1.msra.mxu0 %v3400
    %4966 = vmatprep.subr.mxu0 %v3409
    %4967 = vmatpush1.msra.mxu0 %v3408
    %4968 = vmatprep.subr.mxu0 %v3417
    %4969 = vmatpush1.msra.mxu0 %v3416
    %4970 = vmatprep.subr.mxu0 %v3425
    %4971 = vmatpush1.msra.mxu0 %v3424
    %4972 = vmatprep.mubr.f32.mxu0 %v1924
    %4973 = vmatmul.mubr.f32.gmra.mrb[0].mxu0 %v1923
    %v4974 = vpop.f32.mrb[0].mxu0
    %v4975 = vadd.f32 0.0, %v4974
    %v4976 = vpop.f32.mrb[0].mxu0
    %v4977 = vadd.f32 0.0, %v4976
    %4978 = vmatprep.mubr.f32.mxu0 %v1932
    %4979 = vmatmul.mubr.f32.gmra.mrb[0].mxu0 %v1931
    %v4980 = vpop.f32.mrb[0].mxu0
    %v4981 = vadd.f32 0.0, %v4980
    %v4982 = vpop.f32.mrb[0].mxu0
    %v4983 = vadd.f32 0.0, %v4982
    %4984 = vmatprep.mubr.f32.mxu0 %v1940
    %4985 = vmatmul.mubr.f32.gmra.mrb[0].mxu0 %v1939
    %v4986 = vpop.f32.mrb[0].mxu0
    %v4987 = vadd.f32 0.0, %v4986
    %v4988 = vpop.f32.mrb[0].mxu0
    %v4989 = vadd.f32 0.0, %v4988
    %4990 = vmatprep.mubr.f32.mxu0 %v1948
    %4991 = vmatmul.mubr.f32.gmra.mrb[0].mxu0 %v1947
    %v4992 = vpop.f32.mrb[0].mxu0
    %v4993 = vadd.f32 0.0, %v4992
    %v4994 = vpop.f32.mrb[0].mxu0
    %v4995 = vadd.f32 0.0, %v4994
    %4996 = vdwg.mxu0
    %4997 = vmatprep.subr.mxu0 %v3433
    %4998 = vmatpush1.msra.mxu0 %v3432
    %4999 = vmatprep.subr.mxu0 %v3441
    %5000 = vmatpush1.msra.mxu0 %v3440
    %5001 = vmatprep.subr.mxu0 %v3449
    %5002 = vmatpush1.msra.mxu0 %v3448
    %5003 = vmatprep.subr.mxu0 %v3457
    %5004 = vmatpush1.msra.mxu0 %v3456
    %5005 = vmatprep.subr.mxu0 %v3465
    %5006 = vmatpush1.msra.mxu0 %v3464
    %5007 = vmatprep.subr.mxu0 %v3473
    %5008 = vmatpush1.msra.mxu0 %v3472
    %5009 = vmatprep.subr.mxu0 %v3481
    %5010 = vmatpush1.msra.mxu0 %v3480
    %5011 = vmatprep.subr.mxu0 %v3489
    %5012 = vmatpush1.msra.mxu0 %v3488
    %5013 = vmatprep.subr.mxu0 %v3497
    %5014 = vmatpush1.msra.mxu0 %v3496
    %5015 = vmatprep.subr.mxu0 %v3505
    %5016 = vmatpush1.msra.mxu0 %v3504
    %5017 = vmatprep.subr.mxu0 %v3513
    %5018 = vmatpush1.msra.mxu0 %v3512
    %5019 = vmatprep.subr.mxu0 %v3521
    %5020 = vmatpush1.msra.mxu0 %v3520
    %5021 = vmatprep.subr.mxu0 %v3529
    %5022 = vmatpush1.msra.mxu0 %v3528
    %5023 = vmatprep.subr.mxu0 %v3537
    %5024 = vmatpush1.msra.mxu0 %v3536
    %5025 = vmatprep.subr.mxu0 %v3545
    %5026 = vmatpush1.msra.mxu0 %v3544
    %5027 = vmatprep.subr.mxu0 %v3553
    %5028 = vmatpush1.msra.mxu0 %v3552
    %5029 = vmatprep.subr.mxu0 %v3561
    %5030 = vmatpush1.msra.mxu0 %v3560
    %5031 = vmatprep.subr.mxu0 %v3569
    %5032 = vmatpush1.msra.mxu0 %v3568
    %5033 = vmatprep.subr.mxu0 %v3577
    %5034 = vmatpush1.msra.mxu0 %v3576
    %5035 = vmatprep.subr.mxu0 %v3585
    %5036 = vmatpush1.msra.mxu0 %v3584
    %5037 = vmatprep.subr.mxu0 %v3593
    %5038 = vmatpush1.msra.mxu0 %v3592
    %5039 = vmatprep.subr.mxu0 %v3601
    %5040 = vmatpush1.msra.mxu0 %v3600
    %5041 = vmatprep.subr.mxu0 %v3609
    %5042 = vmatpush1.msra.mxu0 %v3608
    %5043 = vmatprep.subr.mxu0 %v3617
    %5044 = vmatpush1.msra.mxu0 %v3616
    %5045 = vmatprep.subr.mxu0 %v3625
    %5046 = vmatpush1.msra.mxu0 %v3624
    %5047 = vmatprep.subr.mxu0 %v3633
    %5048 = vmatpush1.msra.mxu0 %v3632
    %5049 = vmatprep.subr.mxu0 %v3641
    %5050 = vmatpush1.msra.mxu0 %v3640
    %5051 = vmatprep.subr.mxu0 %v3649
    %5052 = vmatpush1.msra.mxu0 %v3648
    %5053 = vmatprep.subr.mxu0 %v3657
    %5054 = vmatpush1.msra.mxu0 %v3656
    %5055 = vmatprep.subr.mxu0 %v3665
    %5056 = vmatpush1.msra.mxu0 %v3664
    %5057 = vmatprep.subr.mxu0 %v3673
    %5058 = vmatpush1.msra.mxu0 %v3672
    %5059 = vmatprep.subr.mxu0 %v3681
    %5060 = vmatpush1.msra.mxu0 %v3680
    %5061 = vmatprep.mubr.f32.mxu0 %v1926
    %5062 = vmatmul.mubr.f32.gmra.mrb[0].mxu0 %v1925
    %v5063 = vpop.f32.mrb[0].mxu0
    %v5064 = vadd.f32 %v4975, %v5063
    %v5065 = vpop.f32.mrb[0].mxu0
    %v5066 = vadd.f32 %v4977, %v5065
    %5067 = vmatprep.mubr.f32.mxu0 %v1934
    %5068 = vmatmul.mubr.f32.gmra.mrb[0].mxu0 %v1933
    %v5069 = vpop.f32.mrb[0].mxu0
    %v5070 = vadd.f32 %v4981, %v5069
    %v5071 = vpop.f32.mrb[0].mxu0
    %v5072 = vadd.f32 %v4983, %v5071
    %5073 = vmatprep.mubr.f32.mxu0 %v1942
    %5074 = vmatmul.mubr.f32.gmra.mrb[0].mxu0 %v1941
    %v5075 = vpop.f32.mrb[0].mxu0
    %v5076 = vadd.f32 %v4987, %v5075
    %v5077 = vpop.f32.mrb[0].mxu0
    %v5078 = vadd.f32 %v4989, %v5077
    %5079 = vmatprep.mubr.f32.mxu0 %v1950
    %5080 = vmatmul.mubr.f32.gmra.mrb[0].mxu0 %v1949
    %v5081 = vpop.f32.mrb[0].mxu0
    %v5082 = vadd.f32 %v4993, %v5081
    %v5083 = vpop.f32.mrb[0].mxu0
    %v5084 = vadd.f32 %v4995, %v5083
    %5085 = vdwg.mxu0
    %5086 = vmatprep.subr.mxu0 %v3689
    %5087 = vmatpush1.msra.mxu0 %v3688
    %5088 = vmatprep.subr.mxu0 %v3697
    %5089 = vmatpush1.msra.mxu0 %v3696
    %5090 = vmatprep.subr.mxu0 %v3705
    %5091 = vmatpush1.msra.mxu0 %v3704
    %5092 = vmatprep.subr.mxu0 %v3713
    %5093 = vmatpush1.msra.mxu0 %v3712
    %5094 = vmatprep.subr.mxu0 %v3721
    %5095 = vmatpush1.msra.mxu0 %v3720
    %5096 = vmatprep.subr.mxu0 %v3729
    %5097 = vmatpush1.msra.mxu0 %v3728
    %5098 = vmatprep.subr.mxu0 %v3737
    %5099 = vmatpush1.msra.mxu0 %v3736
    %5100 = vmatprep.subr.mxu0 %v3745
    %5101 = vmatpush1.msra.mxu0 %v3744
    %5102 = vmatprep.subr.mxu0 %v3753
    %5103 = vmatpush1.msra.mxu0 %v3752
    %5104 = vmatprep.subr.mxu0 %v3761
    %5105 = vmatpush1.msra.mxu0 %v3760
    %5106 = vmatprep.subr.mxu0 %v3769
    %5107 = vmatpush1.msra.mxu0 %v3768
    %5108 = vmatprep.subr.mxu0 %v3777
    %5109 = vmatpush1.msra.mxu0 %v3776
    %5110 = vmatprep.subr.mxu0 %v3785
    %5111 = vmatpush1.msra.mxu0 %v3784
    %5112 = vmatprep.subr.mxu0 %v3793
    %5113 = vmatpush1.msra.mxu0 %v3792
    %5114 = vmatprep.subr.mxu0 %v3801
    %5115 = vmatpush1.msra.mxu0 %v3800
    %5116 = vmatprep.subr.mxu0 %v3809
    %5117 = vmatpush1.msra.mxu0 %v3808
    %5118 = vmatprep.subr.mxu0 %v3817
    %5119 = vmatpush1.msra.mxu0 %v3816
    %5120 = vmatprep.subr.mxu0 %v3825
    %5121 = vmatpush1.msra.mxu0 %v3824
    %5122 = vmatprep.subr.mxu0 %v3833
    %5123 = vmatpush1.msra.mxu0 %v3832
    %5124 = vmatprep.subr.mxu0 %v3841
    %5125 = vmatpush1.msra.mxu0 %v3840
    %5126 = vmatprep.subr.mxu0 %v3849
    %5127 = vmatpush1.msra.mxu0 %v3848
    %5128 = vmatprep.subr.mxu0 %v3857
    %5129 = vmatpush1.msra.mxu0 %v3856
    %5130 = vmatprep.subr.mxu0 %v3865
    %5131 = vmatpush1.msra.mxu0 %v3864
    %5132 = vmatprep.subr.mxu0 %v3873
    %5133 = vmatpush1.msra.mxu0 %v3872
    %5134 = vmatprep.subr.mxu0 %v3881
    %5135 = vmatpush1.msra.mxu0 %v3880
    %5136 = vmatprep.subr.mxu0 %v3889
    %5137 = vmatpush1.msra.mxu0 %v3888
    %5138 = vmatprep.subr.mxu0 %v3897
    %5139 = vmatpush1.msra.mxu0 %v3896
    %5140 = vmatprep.subr.mxu0 %v3905
    %5141 = vmatpush1.msra.mxu0 %v3904
    %5142 = vmatprep.subr.mxu0 %v3913
    %5143 = vmatpush1.msra.mxu0 %v3912
    %5144 = vmatprep.subr.mxu0 %v3921
    %5145 = vmatpush1.msra.mxu0 %v3920
    %5146 = vmatprep.subr.mxu0 %v3929
    %5147 = vmatpush1.msra.mxu0 %v3928
    %5148 = vmatprep.subr.mxu0 %v3937
    %5149 = vmatpush1.msra.mxu0 %v3936
    %5150 = vmatprep.mubr.f32.mxu0 %v1928
    %5151 = vmatmul.mubr.f32.gmra.mrb[0].mxu0 %v1927
    %v5152 = vpop.f32.mrb[0].mxu0
    %v5153 = vadd.f32 %v5064, %v5152
    %v5154 = vpop.f32.mrb[0].mxu0
    %v5155 = vadd.f32 %v5066, %v5154
    %5156 = vmatprep.mubr.f32.mxu0 %v1936
    %5157 = vmatmul.mubr.f32.gmra.mrb[0].mxu0 %v1935
    %v5158 = vpop.f32.mrb[0].mxu0
    %v5159 = vadd.f32 %v5070, %v5158
    %v5160 = vpop.f32.mrb[0].mxu0
    %v5161 = vadd.f32 %v5072, %v5160
    %5162 = vmatprep.mubr.f32.mxu0 %v1944
    %5163 = vmatmul.mubr.f32.gmra.mrb[0].mxu0 %v1943
    %v5164 = vpop.f32.mrb[0].mxu0
    %v5165 = vadd.f32 %v5076, %v5164
    %v5166 = vpop.f32.mrb[0].mxu0
    %v5167 = vadd.f32 %v5078, %v5166
    %5168 = vmatprep.mubr.f32.mxu0 %v1952
    %5169 = vmatmul.mubr.f32.gmra.mrb[0].mxu0 %v1951
    %v5170 = vpop.f32.mrb[0].mxu0
    %v5171 = vadd.f32 %v5082, %v5170
    %v5172 = vpop.f32.mrb[0].mxu0
    %v5173 = vadd.f32 %v5084, %v5172
    %5174 = vdwg.mxu0
    %5175 = vmatprep.subr.mxu0 %v3945
    %5176 = vmatpush1.msra.mxu0 %v3944
    %5177 = vmatprep.subr.mxu0 %v3953
    %5178 = vmatpush1.msra.mxu0 %v3952
    %5179 = vmatprep.subr.mxu0 %v3961
    %5180 = vmatpush1.msra.mxu0 %v3960
    %5181 = vmatprep.subr.mxu0 %v3969
    %5182 = vmatpush1.msra.mxu0 %v3968
    %5183 = vmatprep.subr.mxu0 %v3977
    %5184 = vmatpush1.msra.mxu0 %v3976
    %5185 = vmatprep.subr.mxu0 %v3985
    %5186 = vmatpush1.msra.mxu0 %v3984
    %5187 = vmatprep.subr.mxu0 %v3993
    %5188 = vmatpush1.msra.mxu0 %v3992
    %5189 = vmatprep.subr.mxu0 %v4001
    %5190 = vmatpush1.msra.mxu0 %v4000
    %5191 = vmatprep.subr.mxu0 %v4009
    %5192 = vmatpush1.msra.mxu0 %v4008
    %5193 = vmatprep.subr.mxu0 %v4017
    %5194 = vmatpush1.msra.mxu0 %v4016
    %5195 = vmatprep.subr.mxu0 %v4025
    %5196 = vmatpush1.msra.mxu0 %v4024
    %5197 = vmatprep.subr.mxu0 %v4033
    %5198 = vmatpush1.msra.mxu0 %v4032
    %5199 = vmatprep.subr.mxu0 %v4041
    %5200 = vmatpush1.msra.mxu0 %v4040
    %5201 = vmatprep.subr.mxu0 %v4049
    %5202 = vmatpush1.msra.mxu0 %v4048
    %5203 = vmatprep.subr.mxu0 %v4057
    %5204 = vmatpush1.msra.mxu0 %v4056
    %5205 = vmatprep.subr.mxu0 %v4065
    %5206 = vmatpush1.msra.mxu0 %v4064
    %5207 = vmatprep.subr.mxu0 %v4073
    %5208 = vmatpush1.msra.mxu0 %v4072
    %5209 = vmatprep.subr.mxu0 %v4081
    %5210 = vmatpush1.msra.mxu0 %v4080
    %5211 = vmatprep.subr.mxu0 %v4089
    %5212 = vmatpush1.msra.mxu0 %v4088
    %5213 = vmatprep.subr.mxu0 %v4097
    %5214 = vmatpush1.msra.mxu0 %v4096
    %5215 = vmatprep.subr.mxu0 %v4105
    %5216 = vmatpush1.msra.mxu0 %v4104
    %5217 = vmatprep.subr.mxu0 %v4113
    %5218 = vmatpush1.msra.mxu0 %v4112
    %5219 = vmatprep.subr.mxu0 %v4121
    %5220 = vmatpush1.msra.mxu0 %v4120
    %5221 = vmatprep.subr.mxu0 %v4129
    %5222 = vmatpush1.msra.mxu0 %v4128
    %5223 = vmatprep.subr.mxu0 %v4137
    %5224 = vmatpush1.msra.mxu0 %v4136
    %5225 = vmatprep.subr.mxu0 %v4145
    %5226 = vmatpush1.msra.mxu0 %v4144
    %5227 = vmatprep.subr.mxu0 %v4153
    %5228 = vmatpush1.msra.mxu0 %v4152
    %5229 = vmatprep.subr.mxu0 %v4161
    %5230 = vmatpush1.msra.mxu0 %v4160
    %5231 = vmatprep.subr.mxu0 %v4169
    %5232 = vmatpush1.msra.mxu0 %v4168
    %5233 = vmatprep.subr.mxu0 %v4177
    %5234 = vmatpush1.msra.mxu0 %v4176
    %5235 = vmatprep.subr.mxu0 %v4185
    %5236 = vmatpush1.msra.mxu0 %v4184
    %5237 = vmatprep.subr.mxu0 %v4193
    %5238 = vmatpush1.msra.mxu0 %v4192
    %5239 = vmatprep.mubr.f32.mxu0 %v1930
    %5240 = vmatmul.mubr.f32.gmra.mrb[0].mxu0 %v1929
    %v5241 = vpop.f32.mrb[0].mxu0
    %v5242 = vadd.f32 %v5153, %v5241
    %v5243 = vpop.f32.mrb[0].mxu0
    %v5244 = vadd.f32 %v5155, %v5243
    %5245 = vmatprep.mubr.f32.mxu0 %v1938
    %5246 = vmatmul.mubr.f32.gmra.mrb[0].mxu0 %v1937
    %v5247 = vpop.f32.mrb[0].mxu0
    %v5248 = vadd.f32 %v5159, %v5247
    %v5249 = vpop.f32.mrb[0].mxu0
    %v5250 = vadd.f32 %v5161, %v5249
    %5251 = vmatprep.mubr.f32.mxu0 %v1946
    %5252 = vmatmul.mubr.f32.gmra.mrb[0].mxu0 %v1945
    %v5253 = vpop.f32.mrb[0].mxu0
    %v5254 = vadd.f32 %v5165, %v5253
    %v5255 = vpop.f32.mrb[0].mxu0
    %v5256 = vadd.f32 %v5167, %v5255
    %5257 = vmatprep.mubr.f32.mxu0 %v1954
    %5258 = vmatmul.mubr.f32.gmra.mrb[0].mxu0 %v1953
    %v5259 = vpop.f32.mrb[0].mxu0
    %v5260 = vadd.f32 %v5171, %v5259
    %v5261 = vpop.f32.mrb[0].mxu0
    %v5262 = vadd.f32 %v5173, %v5261
    %5263 = vdwg.mxu0
    %5264 = vmatprep.subr.mxu0 %v3179
    %5265 = vmatpush1.msra.mxu0 %v3178
    %5266 = vmatprep.subr.mxu0 %v3187
    %5267 = vmatpush1.msra.mxu0 %v3186
    %5268 = vmatprep.subr.mxu0 %v3195
    %5269 = vmatpush1.msra.mxu0 %v3194
    %5270 = vmatprep.subr.mxu0 %v3203
    %5271 = vmatpush1.msra.mxu0 %v3202
    %5272 = vmatprep.subr.mxu0 %v3211
    %5273 = vmatpush1.msra.mxu0 %v3210
    %5274 = vmatprep.subr.mxu0 %v3219
    %5275 = vmatpush1.msra.mxu0 %v3218
    %5276 = vmatprep.subr.mxu0 %v3227
    %5277 = vmatpush1.msra.mxu0 %v3226
    %5278 = vmatprep.subr.mxu0 %v3235
    %5279 = vmatpush1.msra.mxu0 %v3234
    %5280 = vmatprep.subr.mxu0 %v3243
    %5281 = vmatpush1.msra.mxu0 %v3242
    %5282 = vmatprep.subr.mxu0 %v3251
    %5283 = vmatpush1.msra.mxu0 %v3250
    %5284 = vmatprep.subr.mxu0 %v3259
    %5285 = vmatpush1.msra.mxu0 %v3258
    %5286 = vmatprep.subr.mxu0 %v3267
    %5287 = vmatpush1.msra.mxu0 %v3266
    %5288 = vmatprep.subr.mxu0 %v3275
    %5289 = vmatpush1.msra.mxu0 %v3274
    %5290 = vmatprep.subr.mxu0 %v3283
    %5291 = vmatpush1.msra.mxu0 %v3282
    %5292 = vmatprep.subr.mxu0 %v3291
    %5293 = vmatpush1.msra.mxu0 %v3290
    %5294 = vmatprep.subr.mxu0 %v3299
    %5295 = vmatpush1.msra.mxu0 %v3298
    %5296 = vmatprep.subr.mxu0 %v3307
    %5297 = vmatpush1.msra.mxu0 %v3306
    %5298 = vmatprep.subr.mxu0 %v3315
    %5299 = vmatpush1.msra.mxu0 %v3314
    %5300 = vmatprep.subr.mxu0 %v3323
    %5301 = vmatpush1.msra.mxu0 %v3322
    %5302 = vmatprep.subr.mxu0 %v3331
    %5303 = vmatpush1.msra.mxu0 %v3330
    %5304 = vmatprep.subr.mxu0 %v3339
    %5305 = vmatpush1.msra.mxu0 %v3338
    %5306 = vmatprep.subr.mxu0 %v3347
    %5307 = vmatpush1.msra.mxu0 %v3346
    %5308 = vmatprep.subr.mxu0 %v3355
    %5309 = vmatpush1.msra.mxu0 %v3354
    %5310 = vmatprep.subr.mxu0 %v3363
    %5311 = vmatpush1.msra.mxu0 %v3362
    %5312 = vmatprep.subr.mxu0 %v3371
    %5313 = vmatpush1.msra.mxu0 %v3370
    %5314 = vmatprep.subr.mxu0 %v3379
    %5315 = vmatpush1.msra.mxu0 %v3378
    %5316 = vmatprep.subr.mxu0 %v3387
    %5317 = vmatpush1.msra.mxu0 %v3386
    %5318 = vmatprep.subr.mxu0 %v3395
    %5319 = vmatpush1.msra.mxu0 %v3394
    %5320 = vmatprep.subr.mxu0 %v3403
    %5321 = vmatpush1.msra.mxu0 %v3402
    %5322 = vmatprep.subr.mxu0 %v3411
    %5323 = vmatpush1.msra.mxu0 %v3410
    %5324 = vmatprep.subr.mxu0 %v3419
    %5325 = vmatpush1.msra.mxu0 %v3418
    %5326 = vmatprep.subr.mxu0 %v3427
    %5327 = vmatpush1.msra.mxu0 %v3426
    %5328 = vmatprep.mubr.f32.mxu0 %v1924
    %5329 = vmatmul.mubr.f32.gmra.mrb[0].mxu0 %v1923
    %v5330 = vpop.f32.mrb[0].mxu0
    %v5331 = vadd.f32 0.0, %v5330
    %v5332 = vpop.f32.mrb[0].mxu0
    %v5333 = vadd.f32 0.0, %v5332
    %5334 = vmatprep.mubr.f32.mxu0 %v1932
    %5335 = vmatmul.mubr.f32.gmra.mrb[0].mxu0 %v1931
    %v5336 = vpop.f32.mrb[0].mxu0
    %v5337 = vadd.f32 0.0, %v5336
    %v5338 = vpop.f32.mrb[0].mxu0
    %v5339 = vadd.f32 0.0, %v5338
    %5340 = vmatprep.mubr.f32.mxu0 %v1940
    %5341 = vmatmul.mubr.f32.gmra.mrb[0].mxu0 %v1939
    %v5342 = vpop.f32.mrb[0].mxu0
    %v5343 = vadd.f32 0.0, %v5342
    %v5344 = vpop.f32.mrb[0].mxu0
    %v5345 = vadd.f32 0.0, %v5344
    %5346 = vmatprep.mubr.f32.mxu0 %v1948
    %5347 = vmatmul.mubr.f32.gmra.mrb[0].mxu0 %v1947
    %v5348 = vpop.f32.mrb[0].mxu0
    %v5349 = vadd.f32 0.0, %v5348
    %v5350 = vpop.f32.mrb[0].mxu0
    %v5351 = vadd.f32 0.0, %v5350
    %5352 = vdwg.mxu0
    %5353 = vmatprep.subr.mxu0 %v3435
    %5354 = vmatpush1.msra.mxu0 %v3434
    %5355 = vmatprep.subr.mxu0 %v3443
    %5356 = vmatpush1.msra.mxu0 %v3442
    %5357 = vmatprep.subr.mxu0 %v3451
    %5358 = vmatpush1.msra.mxu0 %v3450
    %5359 = vmatprep.subr.mxu0 %v3459
    %5360 = vmatpush1.msra.mxu0 %v3458
    %5361 = vmatprep.subr.mxu0 %v3467
    %5362 = vmatpush1.msra.mxu0 %v3466
    %5363 = vmatprep.subr.mxu0 %v3475
    %5364 = vmatpush1.msra.mxu0 %v3474
    %5365 = vmatprep.subr.mxu0 %v3483
    %5366 = vmatpush1.msra.mxu0 %v3482
    %5367 = vmatprep.subr.mxu0 %v3491
    %5368 = vmatpush1.msra.mxu0 %v3490
    %5369 = vmatprep.subr.mxu0 %v3499
    %5370 = vmatpush1.msra.mxu0 %v3498
    %5371 = vmatprep.subr.mxu0 %v3507
    %5372 = vmatpush1.msra.mxu0 %v3506
    %5373 = vmatprep.subr.mxu0 %v3515
    %5374 = vmatpush1.msra.mxu0 %v3514
    %5375 = vmatprep.subr.mxu0 %v3523
    %5376 = vmatpush1.msra.mxu0 %v3522
    %5377 = vmatprep.subr.mxu0 %v3531
    %5378 = vmatpush1.msra.mxu0 %v3530
    %5379 = vmatprep.subr.mxu0 %v3539
    %5380 = vmatpush1.msra.mxu0 %v3538
    %5381 = vmatprep.subr.mxu0 %v3547
    %5382 = vmatpush1.msra.mxu0 %v3546
    %5383 = vmatprep.subr.mxu0 %v3555
    %5384 = vmatpush1.msra.mxu0 %v3554
    %5385 = vmatprep.subr.mxu0 %v3563
    %5386 = vmatpush1.msra.mxu0 %v3562
    %5387 = vmatprep.subr.mxu0 %v3571
    %5388 = vmatpush1.msra.mxu0 %v3570
    %5389 = vmatprep.subr.mxu0 %v3579
    %5390 = vmatpush1.msra.mxu0 %v3578
    %5391 = vmatprep.subr.mxu0 %v3587
    %5392 = vmatpush1.msra.mxu0 %v3586
    %5393 = vmatprep.subr.mxu0 %v3595
    %5394 = vmatpush1.msra.mxu0 %v3594
    %5395 = vmatprep.subr.mxu0 %v3603
    %5396 = vmatpush1.msra.mxu0 %v3602
    %5397 = vmatprep.subr.mxu0 %v3611
    %5398 = vmatpush1.msra.mxu0 %v3610
    %5399 = vmatprep.subr.mxu0 %v3619
    %5400 = vmatpush1.msra.mxu0 %v3618
    %5401 = vmatprep.subr.mxu0 %v3627
    %5402 = vmatpush1.msra.mxu0 %v3626
    %5403 = vmatprep.subr.mxu0 %v3635
    %5404 = vmatpush1.msra.mxu0 %v3634
    %5405 = vmatprep.subr.mxu0 %v3643
    %5406 = vmatpush1.msra.mxu0 %v3642
    %5407 = vmatprep.subr.mxu0 %v3651
    %5408 = vmatpush1.msra.mxu0 %v3650
    %5409 = vmatprep.subr.mxu0 %v3659
    %5410 = vmatpush1.msra.mxu0 %v3658
    %5411 = vmatprep.subr.mxu0 %v3667
    %5412 = vmatpush1.msra.mxu0 %v3666
    %5413 = vmatprep.subr.mxu0 %v3675
    %5414 = vmatpush1.msra.mxu0 %v3674
    %5415 = vmatprep.subr.mxu0 %v3683
    %5416 = vmatpush1.msra.mxu0 %v3682
    %5417 = vmatprep.mubr.f32.mxu0 %v1926
    %5418 = vmatmul.mubr.f32.gmra.mrb[0].mxu0 %v1925
    %v5419 = vpop.f32.mrb[0].mxu0
    %v5420 = vadd.f32 %v5331, %v5419
    %v5421 = vpop.f32.mrb[0].mxu0
    %v5422 = vadd.f32 %v5333, %v5421
    %5423 = vmatprep.mubr.f32.mxu0 %v1934
    %5424 = vmatmul.mubr.f32.gmra.mrb[0].mxu0 %v1933
    %v5425 = vpop.f32.mrb[0].mxu0
    %v5426 = vadd.f32 %v5337, %v5425
    %v5427 = vpop.f32.mrb[0].mxu0
    %v5428 = vadd.f32 %v5339, %v5427
    %5429 = vmatprep.mubr.f32.mxu0 %v1942
    %5430 = vmatmul.mubr.f32.gmra.mrb[0].mxu0 %v1941
    %v5431 = vpop.f32.mrb[0].mxu0
    %v5432 = vadd.f32 %v5343, %v5431
    %v5433 = vpop.f32.mrb[0].mxu0
    %v5434 = vadd.f32 %v5345, %v5433
    %5435 = vmatprep.mubr.f32.mxu0 %v1950
    %5436 = vmatmul.mubr.f32.gmra.mrb[0].mxu0 %v1949
    %v5437 = vpop.f32.mrb[0].mxu0
    %v5438 = vadd.f32 %v5349, %v5437
    %v5439 = vpop.f32.mrb[0].mxu0
    %v5440 = vadd.f32 %v5351, %v5439
    %5441 = vdwg.mxu0
    %5442 = vmatprep.subr.mxu0 %v3691
    %5443 = vmatpush1.msra.mxu0 %v3690
    %5444 = vmatprep.subr.mxu0 %v3699
    %5445 = vmatpush1.msra.mxu0 %v3698
    %5446 = vmatprep.subr.mxu0 %v3707
    %5447 = vmatpush1.msra.mxu0 %v3706
    %5448 = vmatprep.subr.mxu0 %v3715
    %5449 = vmatpush1.msra.mxu0 %v3714
    %5450 = vmatprep.subr.mxu0 %v3723
    %5451 = vmatpush1.msra.mxu0 %v3722
    %5452 = vmatprep.subr.mxu0 %v3731
    %5453 = vmatpush1.msra.mxu0 %v3730
    %5454 = vmatprep.subr.mxu0 %v3739
    %5455 = vmatpush1.msra.mxu0 %v3738
    %5456 = vmatprep.subr.mxu0 %v3747
    %5457 = vmatpush1.msra.mxu0 %v3746
    %5458 = vmatprep.subr.mxu0 %v3755
    %5459 = vmatpush1.msra.mxu0 %v3754
    %5460 = vmatprep.subr.mxu0 %v3763
    %5461 = vmatpush1.msra.mxu0 %v3762
    %5462 = vmatprep.subr.mxu0 %v3771
    %5463 = vmatpush1.msra.mxu0 %v3770
    %5464 = vmatprep.subr.mxu0 %v3779
    %5465 = vmatpush1.msra.mxu0 %v3778
    %5466 = vmatprep.subr.mxu0 %v3787
    %5467 = vmatpush1.msra.mxu0 %v3786
    %5468 = vmatprep.subr.mxu0 %v3795
    %5469 = vmatpush1.msra.mxu0 %v3794
    %5470 = vmatprep.subr.mxu0 %v3803
    %5471 = vmatpush1.msra.mxu0 %v3802
    %5472 = vmatprep.subr.mxu0 %v3811
    %5473 = vmatpush1.msra.mxu0 %v3810
    %5474 = vmatprep.subr.mxu0 %v3819
    %5475 = vmatpush1.msra.mxu0 %v3818
    %5476 = vmatprep.subr.mxu0 %v3827
    %5477 = vmatpush1.msra.mxu0 %v3826
    %5478 = vmatprep.subr.mxu0 %v3835
    %5479 = vmatpush1.msra.mxu0 %v3834
    %5480 = vmatprep.subr.mxu0 %v3843
    %5481 = vmatpush1.msra.mxu0 %v3842
    %5482 = vmatprep.subr.mxu0 %v3851
    %5483 = vmatpush1.msra.mxu0 %v3850
    %5484 = vmatprep.subr.mxu0 %v3859
    %5485 = vmatpush1.msra.mxu0 %v3858
    %5486 = vmatprep.subr.mxu0 %v3867
    %5487 = vmatpush1.msra.mxu0 %v3866
    %5488 = vmatprep.subr.mxu0 %v3875
    %5489 = vmatpush1.msra.mxu0 %v3874
    %5490 = vmatprep.subr.mxu0 %v3883
    %5491 = vmatpush1.msra.mxu0 %v3882
    %5492 = vmatprep.subr.mxu0 %v3891
    %5493 = vmatpush1.msra.mxu0 %v3890
    %5494 = vmatprep.subr.mxu0 %v3899
    %5495 = vmatpush1.msra.mxu0 %v3898
    %5496 = vmatprep.subr.mxu0 %v3907
    %5497 = vmatpush1.msra.mxu0 %v3906
    %5498 = vmatprep.subr.mxu0 %v3915
    %5499 = vmatpush1.msra.mxu0 %v3914
    %5500 = vmatprep.subr.mxu0 %v3923
    %5501 = vmatpush1.msra.mxu0 %v3922
    %5502 = vmatprep.subr.mxu0 %v3931
    %5503 = vmatpush1.msra.mxu0 %v3930
    %5504 = vmatprep.subr.mxu0 %v3939
    %5505 = vmatpush1.msra.mxu0 %v3938
    %5506 = vmatprep.mubr.f32.mxu0 %v1928
    %5507 = vmatmul.mubr.f32.gmra.mrb[0].mxu0 %v1927
    %v5508 = vpop.f32.mrb[0].mxu0
    %v5509 = vadd.f32 %v5420, %v5508
    %v5510 = vpop.f32.mrb[0].mxu0
    %v5511 = vadd.f32 %v5422, %v5510
    %5512 = vmatprep.mubr.f32.mxu0 %v1936
    %5513 = vmatmul.mubr.f32.gmra.mrb[0].mxu0 %v1935
    %v5514 = vpop.f32.mrb[0].mxu0
    %v5515 = vadd.f32 %v5426, %v5514
    %v5516 = vpop.f32.mrb[0].mxu0
    %v5517 = vadd.f32 %v5428, %v5516
    %5518 = vmatprep.mubr.f32.mxu0 %v1944
    %5519 = vmatmul.mubr.f32.gmra.mrb[0].mxu0 %v1943
    %v5520 = vpop.f32.mrb[0].mxu0
    %v5521 = vadd.f32 %v5432, %v5520
    %v5522 = vpop.f32.mrb[0].mxu0
    %v5523 = vadd.f32 %v5434, %v5522
    %5524 = vmatprep.mubr.f32.mxu0 %v1952
    %5525 = vmatmul.mubr.f32.gmra.mrb[0].mxu0 %v1951
    %v5526 = vpop.f32.mrb[0].mxu0
    %v5527 = vadd.f32 %v5438, %v5526
    %v5528 = vpop.f32.mrb[0].mxu0
    %v5529 = vadd.f32 %v5440, %v5528
    %5530 = vdwg.mxu0
    %5531 = vmatprep.subr.mxu0 %v3947
    %5532 = vmatpush1.msra.mxu0 %v3946
    %5533 = vmatprep.subr.mxu0 %v3955
    %5534 = vmatpush1.msra.mxu0 %v3954
    %5535 = vmatprep.subr.mxu0 %v3963
    %5536 = vmatpush1.msra.mxu0 %v3962
    %5537 = vmatprep.subr.mxu0 %v3971
    %5538 = vmatpush1.msra.mxu0 %v3970
    %5539 = vmatprep.subr.mxu0 %v3979
    %5540 = vmatpush1.msra.mxu0 %v3978
    %5541 = vmatprep.subr.mxu0 %v3987
    %5542 = vmatpush1.msra.mxu0 %v3986
    %5543 = vmatprep.subr.mxu0 %v3995
    %5544 = vmatpush1.msra.mxu0 %v3994
    %5545 = vmatprep.subr.mxu0 %v4003
    %5546 = vmatpush1.msra.mxu0 %v4002
    %5547 = vmatprep.subr.mxu0 %v4011
    %5548 = vmatpush1.msra.mxu0 %v4010
    %5549 = vmatprep.subr.mxu0 %v4019
    %5550 = vmatpush1.msra.mxu0 %v4018
    %5551 = vmatprep.subr.mxu0 %v4027
    %5552 = vmatpush1.msra.mxu0 %v4026
    %5553 = vmatprep.subr.mxu0 %v4035
    %5554 = vmatpush1.msra.mxu0 %v4034
    %5555 = vmatprep.subr.mxu0 %v4043
    %5556 = vmatpush1.msra.mxu0 %v4042
    %5557 = vmatprep.subr.mxu0 %v4051
    %5558 = vmatpush1.msra.mxu0 %v4050
    %5559 = vmatprep.subr.mxu0 %v4059
    %5560 = vmatpush1.msra.mxu0 %v4058
    %5561 = vmatprep.subr.mxu0 %v4067
    %5562 = vmatpush1.msra.mxu0 %v4066
    %5563 = vmatprep.subr.mxu0 %v4075
    %5564 = vmatpush1.msra.mxu0 %v4074
    %5565 = vmatprep.subr.mxu0 %v4083
    %5566 = vmatpush1.msra.mxu0 %v4082
    %5567 = vmatprep.subr.mxu0 %v4091
    %5568 = vmatpush1.msra.mxu0 %v4090
    %5569 = vmatprep.subr.mxu0 %v4099
    %5570 = vmatpush1.msra.mxu0 %v4098
    %5571 = vmatprep.subr.mxu0 %v4107
    %5572 = vmatpush1.msra.mxu0 %v4106
    %5573 = vmatprep.subr.mxu0 %v4115
    %5574 = vmatpush1.msra.mxu0 %v4114
    %5575 = vmatprep.subr.mxu0 %v4123
    %5576 = vmatpush1.msra.mxu0 %v4122
    %5577 = vmatprep.subr.mxu0 %v4131
    %5578 = vmatpush1.msra.mxu0 %v4130
    %5579 = vmatprep.subr.mxu0 %v4139
    %5580 = vmatpush1.msra.mxu0 %v4138
    %5581 = vmatprep.subr.mxu0 %v4147
    %5582 = vmatpush1.msra.mxu0 %v4146
    %5583 = vmatprep.subr.mxu0 %v4155
    %5584 = vmatpush1.msra.mxu0 %v4154
    %5585 = vmatprep.subr.mxu0 %v4163
    %5586 = vmatpush1.msra.mxu0 %v4162
    %5587 = vmatprep.subr.mxu0 %v4171
    %5588 = vmatpush1.msra.mxu0 %v4170
    %5589 = vmatprep.subr.mxu0 %v4179
    %5590 = vmatpush1.msra.mxu0 %v4178
    %5591 = vmatprep.subr.mxu0 %v4187
    %5592 = vmatpush1.msra.mxu0 %v4186
    %5593 = vmatprep.subr.mxu0 %v4195
    %5594 = vmatpush1.msra.mxu0 %v4194
    %5595 = vmatprep.mubr.f32.mxu0 %v1930
    %5596 = vmatmul.mubr.f32.gmra.mrb[0].mxu0 %v1929
    %v5597 = vpop.f32.mrb[0].mxu0
    %v5598 = vadd.f32 %v5509, %v5597
    %v5599 = vpop.f32.mrb[0].mxu0
    %v5600 = vadd.f32 %v5511, %v5599
    %5601 = vmatprep.mubr.f32.mxu0 %v1938
    %5602 = vmatmul.mubr.f32.gmra.mrb[0].mxu0 %v1937
    %v5603 = vpop.f32.mrb[0].mxu0
    %v5604 = vadd.f32 %v5515, %v5603
    %v5605 = vpop.f32.mrb[0].mxu0
    %v5606 = vadd.f32 %v5517, %v5605
    %5607 = vmatprep.mubr.f32.mxu0 %v1946
    %5608 = vmatmul.mubr.f32.gmra.mrb[0].mxu0 %v1945
    %v5609 = vpop.f32.mrb[0].mxu0
    %v5610 = vadd.f32 %v5521, %v5609
    %v5611 = vpop.f32.mrb[0].mxu0
    %v5612 = vadd.f32 %v5523, %v5611
    %5613 = vmatprep.mubr.f32.mxu0 %v1954
    %5614 = vmatmul.mubr.f32.gmra.mrb[0].mxu0 %v1953
    %v5615 = vpop.f32.mrb[0].mxu0
    %v5616 = vadd.f32 %v5527, %v5615
    %v5617 = vpop.f32.mrb[0].mxu0
    %v5618 = vadd.f32 %v5529, %v5617
    %5619 = vdwg.mxu0
    %5620 = vmatprep.subr.mxu0 %v2148
    %5621 = vmatpush1.msra.mxu0 %v2147
    %5622 = vmatprep.subr.mxu0 %v2156
    %5623 = vmatpush1.msra.mxu0 %v2155
    %5624 = vmatprep.subr.mxu0 %v2164
    %5625 = vmatpush1.msra.mxu0 %v2163
    %5626 = vmatprep.subr.mxu0 %v2172
    %5627 = vmatpush1.msra.mxu0 %v2171
    %5628 = vmatprep.subr.mxu0 %v2180
    %5629 = vmatpush1.msra.mxu0 %v2179
    %5630 = vmatprep.subr.mxu0 %v2188
    %5631 = vmatpush1.msra.mxu0 %v2187
    %5632 = vmatprep.subr.mxu0 %v2196
    %5633 = vmatpush1.msra.mxu0 %v2195
    %5634 = vmatprep.subr.mxu0 %v2204
    %5635 = vmatpush1.msra.mxu0 %v2203
    %5636 = vmatprep.subr.mxu0 %v2212
    %5637 = vmatpush1.msra.mxu0 %v2211
    %5638 = vmatprep.subr.mxu0 %v2220
    %5639 = vmatpush1.msra.mxu0 %v2219
    %5640 = vmatprep.subr.mxu0 %v2228
    %5641 = vmatpush1.msra.mxu0 %v2227
    %5642 = vmatprep.subr.mxu0 %v2236
    %5643 = vmatpush1.msra.mxu0 %v2235
    %5644 = vmatprep.subr.mxu0 %v2244
    %5645 = vmatpush1.msra.mxu0 %v2243
    %5646 = vmatprep.subr.mxu0 %v2252
    %5647 = vmatpush1.msra.mxu0 %v2251
    %5648 = vmatprep.subr.mxu0 %v2260
    %5649 = vmatpush1.msra.mxu0 %v2259
    %5650 = vmatprep.subr.mxu0 %v2268
    %5651 = vmatpush1.msra.mxu0 %v2267
    %5652 = vmatprep.subr.mxu0 %v2276
    %5653 = vmatpush1.msra.mxu0 %v2275
    %5654 = vmatprep.subr.mxu0 %v2284
    %5655 = vmatpush1.msra.mxu0 %v2283
    %5656 = vmatprep.subr.mxu0 %v2292
    %5657 = vmatpush1.msra.mxu0 %v2291
    %5658 = vmatprep.subr.mxu0 %v2300
    %5659 = vmatpush1.msra.mxu0 %v2299
    %5660 = vmatprep.subr.mxu0 %v2308
    %5661 = vmatpush1.msra.mxu0 %v2307
    %5662 = vmatprep.subr.mxu0 %v2316
    %5663 = vmatpush1.msra.mxu0 %v2315
    %5664 = vmatprep.subr.mxu0 %v2324
    %5665 = vmatpush1.msra.mxu0 %v2323
    %5666 = vmatprep.subr.mxu0 %v2332
    %5667 = vmatpush1.msra.mxu0 %v2331
    %5668 = vmatprep.subr.mxu0 %v2340
    %5669 = vmatpush1.msra.mxu0 %v2339
    %5670 = vmatprep.subr.mxu0 %v2348
    %5671 = vmatpush1.msra.mxu0 %v2347
    %5672 = vmatprep.subr.mxu0 %v2356
    %5673 = vmatpush1.msra.mxu0 %v2355
    %5674 = vmatprep.subr.mxu0 %v2364
    %5675 = vmatpush1.msra.mxu0 %v2363
    %5676 = vmatprep.subr.mxu0 %v2372
    %5677 = vmatpush1.msra.mxu0 %v2371
    %5678 = vmatprep.subr.mxu0 %v2380
    %5679 = vmatpush1.msra.mxu0 %v2379
    %5680 = vmatprep.subr.mxu0 %v2388
    %5681 = vmatpush1.msra.mxu0 %v2387
    %5682 = vmatprep.subr.mxu0 %v2396
    %5683 = vmatpush1.msra.mxu0 %v2395
    %5684 = vmatprep.mubr.f32.mxu0 %v2020
    %5685 = vmatmul.mubr.f32.gmra.mrb[0].mxu0 %v2019
    %v5686 = vpop.f32.mrb[0].mxu0
    %v5687 = vadd.f32 %v4530, %v5686
    %v5688 = vpop.f32.mrb[0].mxu0
    %v5689 = vadd.f32 %v4532, %v5688
    %5690 = vmatprep.mubr.f32.mxu0 %v2028
    %5691 = vmatmul.mubr.f32.gmra.mrb[0].mxu0 %v2027
    %v5692 = vpop.f32.mrb[0].mxu0
    %v5693 = vadd.f32 %v4536, %v5692
    %v5694 = vpop.f32.mrb[0].mxu0
    %v5695 = vadd.f32 %v4538, %v5694
    %5696 = vmatprep.mubr.f32.mxu0 %v2036
    %5697 = vmatmul.mubr.f32.gmra.mrb[0].mxu0 %v2035
    %v5698 = vpop.f32.mrb[0].mxu0
    %v5699 = vadd.f32 %v4542, %v5698
    %v5700 = vpop.f32.mrb[0].mxu0
    %v5701 = vadd.f32 %v4544, %v5700
    %5702 = vmatprep.mubr.f32.mxu0 %v2044
    %5703 = vmatmul.mubr.f32.gmra.mrb[0].mxu0 %v2043
    %v5704 = vpop.f32.mrb[0].mxu0
    %v5705 = vadd.f32 %v4548, %v5704
    %v5706 = vpop.f32.mrb[0].mxu0
    %v5707 = vadd.f32 %v4550, %v5706
    %5708 = vdwg.mxu0
    %5709 = vmatprep.subr.mxu0 %v2404
    %5710 = vmatpush1.msra.mxu0 %v2403
    %5711 = vmatprep.subr.mxu0 %v2412
    %5712 = vmatpush1.msra.mxu0 %v2411
    %5713 = vmatprep.subr.mxu0 %v2420
    %5714 = vmatpush1.msra.mxu0 %v2419
    %5715 = vmatprep.subr.mxu0 %v2428
    %5716 = vmatpush1.msra.mxu0 %v2427
    %5717 = vmatprep.subr.mxu0 %v2436
    %5718 = vmatpush1.msra.mxu0 %v2435
    %5719 = vmatprep.subr.mxu0 %v2444
    %5720 = vmatpush1.msra.mxu0 %v2443
    %5721 = vmatprep.subr.mxu0 %v2452
    %5722 = vmatpush1.msra.mxu0 %v2451
    %5723 = vmatprep.subr.mxu0 %v2460
    %5724 = vmatpush1.msra.mxu0 %v2459
    %5725 = vmatprep.subr.mxu0 %v2468
    %5726 = vmatpush1.msra.mxu0 %v2467
    %5727 = vmatprep.subr.mxu0 %v2476
    %5728 = vmatpush1.msra.mxu0 %v2475
    %5729 = vmatprep.subr.mxu0 %v2484
    %5730 = vmatpush1.msra.mxu0 %v2483
    %5731 = vmatprep.subr.mxu0 %v2492
    %5732 = vmatpush1.msra.mxu0 %v2491
    %5733 = vmatprep.subr.mxu0 %v2500
    %5734 = vmatpush1.msra.mxu0 %v2499
    %5735 = vmatprep.subr.mxu0 %v2508
    %5736 = vmatpush1.msra.mxu0 %v2507
    %5737 = vmatprep.subr.mxu0 %v2516
    %5738 = vmatpush1.msra.mxu0 %v2515
    %5739 = vmatprep.subr.mxu0 %v2524
    %5740 = vmatpush1.msra.mxu0 %v2523
    %5741 = vmatprep.subr.mxu0 %v2532
    %5742 = vmatpush1.msra.mxu0 %v2531
    %5743 = vmatprep.subr.mxu0 %v2540
    %5744 = vmatpush1.msra.mxu0 %v2539
    %5745 = vmatprep.subr.mxu0 %v2548
    %5746 = vmatpush1.msra.mxu0 %v2547
    %5747 = vmatprep.subr.mxu0 %v2556
    %5748 = vmatpush1.msra.mxu0 %v2555
    %5749 = vmatprep.subr.mxu0 %v2564
    %5750 = vmatpush1.msra.mxu0 %v2563
    %5751 = vmatprep.subr.mxu0 %v2572
    %5752 = vmatpush1.msra.mxu0 %v2571
    %5753 = vmatprep.subr.mxu0 %v2580
    %5754 = vmatpush1.msra.mxu0 %v2579
    %5755 = vmatprep.subr.mxu0 %v2588
    %5756 = vmatpush1.msra.mxu0 %v2587
    %5757 = vmatprep.subr.mxu0 %v2596
    %5758 = vmatpush1.msra.mxu0 %v2595
    %5759 = vmatprep.subr.mxu0 %v2604
    %5760 = vmatpush1.msra.mxu0 %v2603
    %5761 = vmatprep.subr.mxu0 %v2612
    %5762 = vmatpush1.msra.mxu0 %v2611
    %5763 = vmatprep.subr.mxu0 %v2620
    %5764 = vmatpush1.msra.mxu0 %v2619
    %5765 = vmatprep.subr.mxu0 %v2628
    %5766 = vmatpush1.msra.mxu0 %v2627
    %5767 = vmatprep.subr.mxu0 %v2636
    %5768 = vmatpush1.msra.mxu0 %v2635
    %5769 = vmatprep.subr.mxu0 %v2644
    %5770 = vmatpush1.msra.mxu0 %v2643
    %5771 = vmatprep.subr.mxu0 %v2652
    %5772 = vmatpush1.msra.mxu0 %v2651
    %5773 = vmatprep.mubr.f32.mxu0 %v2022
    %5774 = vmatmul.mubr.f32.gmra.mrb[0].mxu0 %v2021
    %v5775 = vpop.f32.mrb[0].mxu0
    %v5776 = vadd.f32 %v5687, %v5775
    %v5777 = vpop.f32.mrb[0].mxu0
    %v5778 = vadd.f32 %v5689, %v5777
    %5779 = vmatprep.mubr.f32.mxu0 %v2030
    %5780 = vmatmul.mubr.f32.gmra.mrb[0].mxu0 %v2029
    %v5781 = vpop.f32.mrb[0].mxu0
    %v5782 = vadd.f32 %v5693, %v5781
    %v5783 = vpop.f32.mrb[0].mxu0
    %v5784 = vadd.f32 %v5695, %v5783
    %5785 = vmatprep.mubr.f32.mxu0 %v2038
    %5786 = vmatmul.mubr.f32.gmra.mrb[0].mxu0 %v2037
    %v5787 = vpop.f32.mrb[0].mxu0
    %v5788 = vadd.f32 %v5699, %v5787
    %v5789 = vpop.f32.mrb[0].mxu0
    %v5790 = vadd.f32 %v5701, %v5789
    %5791 = vmatprep.mubr.f32.mxu0 %v2046
    %5792 = vmatmul.mubr.f32.gmra.mrb[0].mxu0 %v2045
    %v5793 = vpop.f32.mrb[0].mxu0
    %v5794 = vadd.f32 %v5705, %v5793
    %v5795 = vpop.f32.mrb[0].mxu0
    %v5796 = vadd.f32 %v5707, %v5795
    %5797 = vdwg.mxu0
    %5798 = vmatprep.subr.mxu0 %v2660
    %5799 = vmatpush1.msra.mxu0 %v2659
    %5800 = vmatprep.subr.mxu0 %v2668
    %5801 = vmatpush1.msra.mxu0 %v2667
    %5802 = vmatprep.subr.mxu0 %v2676
    %5803 = vmatpush1.msra.mxu0 %v2675
    %5804 = vmatprep.subr.mxu0 %v2684
    %5805 = vmatpush1.msra.mxu0 %v2683
    %5806 = vmatprep.subr.mxu0 %v2692
    %5807 = vmatpush1.msra.mxu0 %v2691
    %5808 = vmatprep.subr.mxu0 %v2700
    %5809 = vmatpush1.msra.mxu0 %v2699
    %5810 = vmatprep.subr.mxu0 %v2708
    %5811 = vmatpush1.msra.mxu0 %v2707
    %5812 = vmatprep.subr.mxu0 %v2716
    %5813 = vmatpush1.msra.mxu0 %v2715
    %5814 = vmatprep.subr.mxu0 %v2724
    %5815 = vmatpush1.msra.mxu0 %v2723
    %5816 = vmatprep.subr.mxu0 %v2732
    %5817 = vmatpush1.msra.mxu0 %v2731
    %5818 = vmatprep.subr.mxu0 %v2740
    %5819 = vmatpush1.msra.mxu0 %v2739
    %5820 = vmatprep.subr.mxu0 %v2748
    %5821 = vmatpush1.msra.mxu0 %v2747
    %5822 = vmatprep.subr.mxu0 %v2756
    %5823 = vmatpush1.msra.mxu0 %v2755
    %5824 = vmatprep.subr.mxu0 %v2764
    %5825 = vmatpush1.msra.mxu0 %v2763
    %5826 = vmatprep.subr.mxu0 %v2772
    %5827 = vmatpush1.msra.mxu0 %v2771
    %5828 = vmatprep.subr.mxu0 %v2780
    %5829 = vmatpush1.msra.mxu0 %v2779
    %5830 = vmatprep.subr.mxu0 %v2788
    %5831 = vmatpush1.msra.mxu0 %v2787
    %5832 = vmatprep.subr.mxu0 %v2796
    %5833 = vmatpush1.msra.mxu0 %v2795
    %5834 = vmatprep.subr.mxu0 %v2804
    %5835 = vmatpush1.msra.mxu0 %v2803
    %5836 = vmatprep.subr.mxu0 %v2812
    %5837 = vmatpush1.msra.mxu0 %v2811
    %5838 = vmatprep.subr.mxu0 %v2820
    %5839 = vmatpush1.msra.mxu0 %v2819
    %5840 = vmatprep.subr.mxu0 %v2828
    %5841 = vmatpush1.msra.mxu0 %v2827
    %5842 = vmatprep.subr.mxu0 %v2836
    %5843 = vmatpush1.msra.mxu0 %v2835
    %5844 = vmatprep.subr.mxu0 %v2844
    %5845 = vmatpush1.msra.mxu0 %v2843
    %5846 = vmatprep.subr.mxu0 %v2852
    %5847 = vmatpush1.msra.mxu0 %v2851
    %5848 = vmatprep.subr.mxu0 %v2860
    %5849 = vmatpush1.msra.mxu0 %v2859
    %5850 = vmatprep.subr.mxu0 %v2868
    %5851 = vmatpush1.msra.mxu0 %v2867
    %5852 = vmatprep.subr.mxu0 %v2876
    %5853 = vmatpush1.msra.mxu0 %v2875
    %5854 = vmatprep.subr.mxu0 %v2884
    %5855 = vmatpush1.msra.mxu0 %v2883
    %5856 = vmatprep.subr.mxu0 %v2892
    %5857 = vmatpush1.msra.mxu0 %v2891
    %5858 = vmatprep.subr.mxu0 %v2900
    %5859 = vmatpush1.msra.mxu0 %v2899
    %5860 = vmatprep.subr.mxu0 %v2908
    %5861 = vmatpush1.msra.mxu0 %v2907
    %5862 = vmatprep.mubr.f32.mxu0 %v2024
    %5863 = vmatmul.mubr.f32.gmra.mrb[0].mxu0 %v2023
    %v5864 = vpop.f32.mrb[0].mxu0
    %v5865 = vadd.f32 %v5776, %v5864
    %v5866 = vpop.f32.mrb[0].mxu0
    %v5867 = vadd.f32 %v5778, %v5866
    %5868 = vmatprep.mubr.f32.mxu0 %v2032
    %5869 = vmatmul.mubr.f32.gmra.mrb[0].mxu0 %v2031
    %v5870 = vpop.f32.mrb[0].mxu0
    %v5871 = vadd.f32 %v5782, %v5870
    %v5872 = vpop.f32.mrb[0].mxu0
    %v5873 = vadd.f32 %v5784, %v5872
    %5874 = vmatprep.mubr.f32.mxu0 %v2040
    %5875 = vmatmul.mubr.f32.gmra.mrb[0].mxu0 %v2039
    %v5876 = vpop.f32.mrb[0].mxu0
    %v5877 = vadd.f32 %v5788, %v5876
    %v5878 = vpop.f32.mrb[0].mxu0
    %v5879 = vadd.f32 %v5790, %v5878
    %5880 = vmatprep.mubr.f32.mxu0 %v2048
    %5881 = vmatmul.mubr.f32.gmra.mrb[0].mxu0 %v2047
    %v5882 = vpop.f32.mrb[0].mxu0
    %v5883 = vadd.f32 %v5794, %v5882
    %v5884 = vpop.f32.mrb[0].mxu0
    %v5885 = vadd.f32 %v5796, %v5884
    %5886 = vdwg.mxu0
    %5887 = vmatprep.subr.mxu0 %v2916
    %5888 = vmatpush1.msra.mxu0 %v2915
    %5889 = vmatprep.subr.mxu0 %v2924
    %5890 = vmatpush1.msra.mxu0 %v2923
    %5891 = vmatprep.subr.mxu0 %v2932
    %5892 = vmatpush1.msra.mxu0 %v2931
    %5893 = vmatprep.subr.mxu0 %v2940
    %5894 = vmatpush1.msra.mxu0 %v2939
    %5895 = vmatprep.subr.mxu0 %v2948
    %5896 = vmatpush1.msra.mxu0 %v2947
    %5897 = vmatprep.subr.mxu0 %v2956
    %5898 = vmatpush1.msra.mxu0 %v2955
    %5899 = vmatprep.subr.mxu0 %v2964
    %5900 = vmatpush1.msra.mxu0 %v2963
    %5901 = vmatprep.subr.mxu0 %v2972
    %5902 = vmatpush1.msra.mxu0 %v2971
    %5903 = vmatprep.subr.mxu0 %v2980
    %5904 = vmatpush1.msra.mxu0 %v2979
    %5905 = vmatprep.subr.mxu0 %v2988
    %5906 = vmatpush1.msra.mxu0 %v2987
    %5907 = vmatprep.subr.mxu0 %v2996
    %5908 = vmatpush1.msra.mxu0 %v2995
    %5909 = vmatprep.subr.mxu0 %v3004
    %5910 = vmatpush1.msra.mxu0 %v3003
    %5911 = vmatprep.subr.mxu0 %v3012
    %5912 = vmatpush1.msra.mxu0 %v3011
    %5913 = vmatprep.subr.mxu0 %v3020
    %5914 = vmatpush1.msra.mxu0 %v3019
    %5915 = vmatprep.subr.mxu0 %v3028
    %5916 = vmatpush1.msra.mxu0 %v3027
    %5917 = vmatprep.subr.mxu0 %v3036
    %5918 = vmatpush1.msra.mxu0 %v3035
    %5919 = vmatprep.subr.mxu0 %v3044
    %5920 = vmatpush1.msra.mxu0 %v3043
    %5921 = vmatprep.subr.mxu0 %v3052
    %5922 = vmatpush1.msra.mxu0 %v3051
    %5923 = vmatprep.subr.mxu0 %v3060
    %5924 = vmatpush1.msra.mxu0 %v3059
    %5925 = vmatprep.subr.mxu0 %v3068
    %5926 = vmatpush1.msra.mxu0 %v3067
    %5927 = vmatprep.subr.mxu0 %v3076
    %5928 = vmatpush1.msra.mxu0 %v3075
    %5929 = vmatprep.subr.mxu0 %v3084
    %5930 = vmatpush1.msra.mxu0 %v3083
    %5931 = vmatprep.subr.mxu0 %v3092
    %5932 = vmatpush1.msra.mxu0 %v3091
    %5933 = vmatprep.subr.mxu0 %v3100
    %5934 = vmatpush1.msra.mxu0 %v3099
    %5935 = vmatprep.subr.mxu0 %v3108
    %5936 = vmatpush1.msra.mxu0 %v3107
    %5937 = vmatprep.subr.mxu0 %v3116
    %5938 = vmatpush1.msra.mxu0 %v3115
    %5939 = vmatprep.subr.mxu0 %v3124
    %5940 = vmatpush1.msra.mxu0 %v3123
    %5941 = vmatprep.subr.mxu0 %v3132
    %5942 = vmatpush1.msra.mxu0 %v3131
    %5943 = vmatprep.subr.mxu0 %v3140
    %5944 = vmatpush1.msra.mxu0 %v3139
    %5945 = vmatprep.subr.mxu0 %v3148
    %5946 = vmatpush1.msra.mxu0 %v3147
    %5947 = vmatprep.subr.mxu0 %v3156
    %5948 = vmatpush1.msra.mxu0 %v3155
    %5949 = vmatprep.subr.mxu0 %v3164
    %5950 = vmatpush1.msra.mxu0 %v3163
    %5951 = vmatprep.mubr.f32.mxu0 %v2026
    %5952 = vmatmul.mubr.f32.gmra.mrb[0].mxu0 %v2025
    %v5953 = vpop.f32.mrb[0].mxu0
    %v5954 = vadd.f32 %v5865, %v5953
    %v5955 = vpop.f32.mrb[0].mxu0
    %v5956 = vadd.f32 %v5867, %v5955
    %5957 = vmatprep.mubr.f32.mxu0 %v2034
    %5958 = vmatmul.mubr.f32.gmra.mrb[0].mxu0 %v2033
    %v5959 = vpop.f32.mrb[0].mxu0
    %v5960 = vadd.f32 %v5871, %v5959
    %v5961 = vpop.f32.mrb[0].mxu0
    %v5962 = vadd.f32 %v5873, %v5961
    %5963 = vmatprep.mubr.f32.mxu0 %v2042
    %5964 = vmatmul.mubr.f32.gmra.mrb[0].mxu0 %v2041
    %v5965 = vpop.f32.mrb[0].mxu0
    %v5966 = vadd.f32 %v5877, %v5965
    %v5967 = vpop.f32.mrb[0].mxu0
    %v5968 = vadd.f32 %v5879, %v5967
    %5969 = vmatprep.mubr.f32.mxu0 %v2050
    %5970 = vmatmul.mubr.f32.gmra.mrb[0].mxu0 %v2049
    %v5971 = vpop.f32.mrb[0].mxu0
    %v5972 = vadd.f32 %v5883, %v5971
    %v5973 = vpop.f32.mrb[0].mxu0
    %v5974 = vadd.f32 %v5885, %v5973
    %5975 = vdwg.mxu0
    %5976 = vmatprep.subr.mxu0 %v2150
    %5977 = vmatpush1.msra.mxu0 %v2149
    %5978 = vmatprep.subr.mxu0 %v2158
    %5979 = vmatpush1.msra.mxu0 %v2157
    %5980 = vmatprep.subr.mxu0 %v2166
    %5981 = vmatpush1.msra.mxu0 %v2165
    %5982 = vmatprep.subr.mxu0 %v2174
    %5983 = vmatpush1.msra.mxu0 %v2173
    %5984 = vmatprep.subr.mxu0 %v2182
    %5985 = vmatpush1.msra.mxu0 %v2181
    %5986 = vmatprep.subr.mxu0 %v2190
    %5987 = vmatpush1.msra.mxu0 %v2189
    %5988 = vmatprep.subr.mxu0 %v2198
    %5989 = vmatpush1.msra.mxu0 %v2197
    %5990 = vmatprep.subr.mxu0 %v2206
    %5991 = vmatpush1.msra.mxu0 %v2205
    %5992 = vmatprep.subr.mxu0 %v2214
    %5993 = vmatpush1.msra.mxu0 %v2213
    %5994 = vmatprep.subr.mxu0 %v2222
    %5995 = vmatpush1.msra.mxu0 %v2221
    %5996 = vmatprep.subr.mxu0 %v2230
    %5997 = vmatpush1.msra.mxu0 %v2229
    %5998 = vmatprep.subr.mxu0 %v2238
    %5999 = vmatpush1.msra.mxu0 %v2237
    %6000 = vmatprep.subr.mxu0 %v2246
    %6001 = vmatpush1.msra.mxu0 %v2245
    %6002 = vmatprep.subr.mxu0 %v2254
    %6003 = vmatpush1.msra.mxu0 %v2253
    %6004 = vmatprep.subr.mxu0 %v2262
    %6005 = vmatpush1.msra.mxu0 %v2261
    %6006 = vmatprep.subr.mxu0 %v2270
    %6007 = vmatpush1.msra.mxu0 %v2269
    %6008 = vmatprep.subr.mxu0 %v2278
    %6009 = vmatpush1.msra.mxu0 %v2277
    %6010 = vmatprep.subr.mxu0 %v2286
    %6011 = vmatpush1.msra.mxu0 %v2285
    %6012 = vmatprep.subr.mxu0 %v2294
    %6013 = vmatpush1.msra.mxu0 %v2293
    %6014 = vmatprep.subr.mxu0 %v2302
    %6015 = vmatpush1.msra.mxu0 %v2301
    %6016 = vmatprep.subr.mxu0 %v2310
    %6017 = vmatpush1.msra.mxu0 %v2309
    %6018 = vmatprep.subr.mxu0 %v2318
    %6019 = vmatpush1.msra.mxu0 %v2317
    %6020 = vmatprep.subr.mxu0 %v2326
    %6021 = vmatpush1.msra.mxu0 %v2325
    %6022 = vmatprep.subr.mxu0 %v2334
    %6023 = vmatpush1.msra.mxu0 %v2333
    %6024 = vmatprep.subr.mxu0 %v2342
    %6025 = vmatpush1.msra.mxu0 %v2341
    %6026 = vmatprep.subr.mxu0 %v2350
    %6027 = vmatpush1.msra.mxu0 %v2349
    %6028 = vmatprep.subr.mxu0 %v2358
    %6029 = vmatpush1.msra.mxu0 %v2357
    %6030 = vmatprep.subr.mxu0 %v2366
    %6031 = vmatpush1.msra.mxu0 %v2365
    %6032 = vmatprep.subr.mxu0 %v2374
    %6033 = vmatpush1.msra.mxu0 %v2373
    %6034 = vmatprep.subr.mxu0 %v2382
    %6035 = vmatpush1.msra.mxu0 %v2381
    %6036 = vmatprep.subr.mxu0 %v2390
    %6037 = vmatpush1.msra.mxu0 %v2389
    %6038 = vmatprep.subr.mxu0 %v2398
    %6039 = vmatpush1.msra.mxu0 %v2397
    %6040 = vmatprep.mubr.f32.mxu0 %v2020
    %6041 = vmatmul.mubr.f32.gmra.mrb[0].mxu0 %v2019
    %v6042 = vpop.f32.mrb[0].mxu0
    %v6043 = vadd.f32 %v4886, %v6042
    %v6044 = vpop.f32.mrb[0].mxu0
    %v6045 = vadd.f32 %v4888, %v6044
    %6046 = vmatprep.mubr.f32.mxu0 %v2028
    %6047 = vmatmul.mubr.f32.gmra.mrb[0].mxu0 %v2027
    %v6048 = vpop.f32.mrb[0].mxu0
    %v6049 = vadd.f32 %v4892, %v6048
    %v6050 = vpop.f32.mrb[0].mxu0
    %v6051 = vadd.f32 %v4894, %v6050
    %6052 = vmatprep.mubr.f32.mxu0 %v2036
    %6053 = vmatmul.mubr.f32.gmra.mrb[0].mxu0 %v2035
    %v6054 = vpop.f32.mrb[0].mxu0
    %v6055 = vadd.f32 %v4898, %v6054
    %v6056 = vpop.f32.mrb[0].mxu0
    %v6057 = vadd.f32 %v4900, %v6056
    %6058 = vmatprep.mubr.f32.mxu0 %v2044
    %6059 = vmatmul.mubr.f32.gmra.mrb[0].mxu0 %v2043
    %v6060 = vpop.f32.mrb[0].mxu0
    %v6061 = vadd.f32 %v4904, %v6060
    %v6062 = vpop.f32.mrb[0].mxu0
    %v6063 = vadd.f32 %v4906, %v6062
    %6064 = vdwg.mxu0
    %6065 = vmatprep.subr.mxu0 %v2406
    %6066 = vmatpush1.msra.mxu0 %v2405
    %6067 = vmatprep.subr.mxu0 %v2414
    %6068 = vmatpush1.msra.mxu0 %v2413
    %6069 = vmatprep.subr.mxu0 %v2422
    %6070 = vmatpush1.msra.mxu0 %v2421
    %6071 = vmatprep.subr.mxu0 %v2430
    %6072 = vmatpush1.msra.mxu0 %v2429
    %6073 = vmatprep.subr.mxu0 %v2438
    %6074 = vmatpush1.msra.mxu0 %v2437
    %6075 = vmatprep.subr.mxu0 %v2446
    %6076 = vmatpush1.msra.mxu0 %v2445
    %6077 = vmatprep.subr.mxu0 %v2454
    %6078 = vmatpush1.msra.mxu0 %v2453
    %6079 = vmatprep.subr.mxu0 %v2462
    %6080 = vmatpush1.msra.mxu0 %v2461
    %6081 = vmatprep.subr.mxu0 %v2470
    %6082 = vmatpush1.msra.mxu0 %v2469
    %6083 = vmatprep.subr.mxu0 %v2478
    %6084 = vmatpush1.msra.mxu0 %v2477
    %6085 = vmatprep.subr.mxu0 %v2486
    %6086 = vmatpush1.msra.mxu0 %v2485
    %6087 = vmatprep.subr.mxu0 %v2494
    %6088 = vmatpush1.msra.mxu0 %v2493
    %6089 = vmatprep.subr.mxu0 %v2502
    %6090 = vmatpush1.msra.mxu0 %v2501
    %6091 = vmatprep.subr.mxu0 %v2510
    %6092 = vmatpush1.msra.mxu0 %v2509
    %6093 = vmatprep.subr.mxu0 %v2518
    %6094 = vmatpush1.msra.mxu0 %v2517
    %6095 = vmatprep.subr.mxu0 %v2526
    %6096 = vmatpush1.msra.mxu0 %v2525
    %6097 = vmatprep.subr.mxu0 %v2534
    %6098 = vmatpush1.msra.mxu0 %v2533
    %6099 = vmatprep.subr.mxu0 %v2542
    %6100 = vmatpush1.msra.mxu0 %v2541
    %6101 = vmatprep.subr.mxu0 %v2550
    %6102 = vmatpush1.msra.mxu0 %v2549
    %6103 = vmatprep.subr.mxu0 %v2558
    %6104 = vmatpush1.msra.mxu0 %v2557
    %6105 = vmatprep.subr.mxu0 %v2566
    %6106 = vmatpush1.msra.mxu0 %v2565
    %6107 = vmatprep.subr.mxu0 %v2574
    %6108 = vmatpush1.msra.mxu0 %v2573
    %6109 = vmatprep.subr.mxu0 %v2582
    %6110 = vmatpush1.msra.mxu0 %v2581
    %6111 = vmatprep.subr.mxu0 %v2590
    %6112 = vmatpush1.msra.mxu0 %v2589
    %6113 = vmatprep.subr.mxu0 %v2598
    %6114 = vmatpush1.msra.mxu0 %v2597
    %6115 = vmatprep.subr.mxu0 %v2606
    %6116 = vmatpush1.msra.mxu0 %v2605
    %6117 = vmatprep.subr.mxu0 %v2614
    %6118 = vmatpush1.msra.mxu0 %v2613
    %6119 = vmatprep.subr.mxu0 %v2622
    %6120 = vmatpush1.msra.mxu0 %v2621
    %6121 = vmatprep.subr.mxu0 %v2630
    %6122 = vmatpush1.msra.mxu0 %v2629
    %6123 = vmatprep.subr.mxu0 %v2638
    %6124 = vmatpush1.msra.mxu0 %v2637
    %6125 = vmatprep.subr.mxu0 %v2646
    %6126 = vmatpush1.msra.mxu0 %v2645
    %6127 = vmatprep.subr.mxu0 %v2654
    %6128 = vmatpush1.msra.mxu0 %v2653
    %6129 = vmatprep.mubr.f32.mxu0 %v2022
    %6130 = vmatmul.mubr.f32.gmra.mrb[0].mxu0 %v2021
    %v6131 = vpop.f32.mrb[0].mxu0
    %v6132 = vadd.f32 %v6043, %v6131
    %v6133 = vpop.f32.mrb[0].mxu0
    %v6134 = vadd.f32 %v6045, %v6133
    %6135 = vmatprep.mubr.f32.mxu0 %v2030
    %6136 = vmatmul.mubr.f32.gmra.mrb[0].mxu0 %v2029
    %v6137 = vpop.f32.mrb[0].mxu0
    %v6138 = vadd.f32 %v6049, %v6137
    %v6139 = vpop.f32.mrb[0].mxu0
    %v6140 = vadd.f32 %v6051, %v6139
    %6141 = vmatprep.mubr.f32.mxu0 %v2038
    %6142 = vmatmul.mubr.f32.gmra.mrb[0].mxu0 %v2037
    %v6143 = vpop.f32.mrb[0].mxu0
    %v6144 = vadd.f32 %v6055, %v6143
    %v6145 = vpop.f32.mrb[0].mxu0
    %v6146 = vadd.f32 %v6057, %v6145
    %6147 = vmatprep.mubr.f32.mxu0 %v2046
    %6148 = vmatmul.mubr.f32.gmra.mrb[0].mxu0 %v2045
    %v6149 = vpop.f32.mrb[0].mxu0
    %v6150 = vadd.f32 %v6061, %v6149
    %v6151 = vpop.f32.mrb[0].mxu0
    %v6152 = vadd.f32 %v6063, %v6151
    %6153 = vdwg.mxu0
    %6154 = vmatprep.subr.mxu0 %v2662
    %6155 = vmatpush1.msra.mxu0 %v2661
    %6156 = vmatprep.subr.mxu0 %v2670
    %6157 = vmatpush1.msra.mxu0 %v2669
    %6158 = vmatprep.subr.mxu0 %v2678
    %6159 = vmatpush1.msra.mxu0 %v2677
    %6160 = vmatprep.subr.mxu0 %v2686
    %6161 = vmatpush1.msra.mxu0 %v2685
    %6162 = vmatprep.subr.mxu0 %v2694
    %6163 = vmatpush1.msra.mxu0 %v2693
    %6164 = vmatprep.subr.mxu0 %v2702
    %6165 = vmatpush1.msra.mxu0 %v2701
    %6166 = vmatprep.subr.mxu0 %v2710
    %6167 = vmatpush1.msra.mxu0 %v2709
    %6168 = vmatprep.subr.mxu0 %v2718
    %6169 = vmatpush1.msra.mxu0 %v2717
    %6170 = vmatprep.subr.mxu0 %v2726
    %6171 = vmatpush1.msra.mxu0 %v2725
    %6172 = vmatprep.subr.mxu0 %v2734
    %6173 = vmatpush1.msra.mxu0 %v2733
    %6174 = vmatprep.subr.mxu0 %v2742
    %6175 = vmatpush1.msra.mxu0 %v2741
    %6176 = vmatprep.subr.mxu0 %v2750
    %6177 = vmatpush1.msra.mxu0 %v2749
    %6178 = vmatprep.subr.mxu0 %v2758
    %6179 = vmatpush1.msra.mxu0 %v2757
    %6180 = vmatprep.subr.mxu0 %v2766
    %6181 = vmatpush1.msra.mxu0 %v2765
    %6182 = vmatprep.subr.mxu0 %v2774
    %6183 = vmatpush1.msra.mxu0 %v2773
    %6184 = vmatprep.subr.mxu0 %v2782
    %6185 = vmatpush1.msra.mxu0 %v2781
    %6186 = vmatprep.subr.mxu0 %v2790
    %6187 = vmatpush1.msra.mxu0 %v2789
    %6188 = vmatprep.subr.mxu0 %v2798
    %6189 = vmatpush1.msra.mxu0 %v2797
    %6190 = vmatprep.subr.mxu0 %v2806
    %6191 = vmatpush1.msra.mxu0 %v2805
    %6192 = vmatprep.subr.mxu0 %v2814
    %6193 = vmatpush1.msra.mxu0 %v2813
    %6194 = vmatprep.subr.mxu0 %v2822
    %6195 = vmatpush1.msra.mxu0 %v2821
    %6196 = vmatprep.subr.mxu0 %v2830
    %6197 = vmatpush1.msra.mxu0 %v2829
    %6198 = vmatprep.subr.mxu0 %v2838
    %6199 = vmatpush1.msra.mxu0 %v2837
    %6200 = vmatprep.subr.mxu0 %v2846
    %6201 = vmatpush1.msra.mxu0 %v2845
    %6202 = vmatprep.subr.mxu0 %v2854
    %6203 = vmatpush1.msra.mxu0 %v2853
    %6204 = vmatprep.subr.mxu0 %v2862
    %6205 = vmatpush1.msra.mxu0 %v2861
    %6206 = vmatprep.subr.mxu0 %v2870
    %6207 = vmatpush1.msra.mxu0 %v2869
    %6208 = vmatprep.subr.mxu0 %v2878
    %6209 = vmatpush1.msra.mxu0 %v2877
    %6210 = vmatprep.subr.mxu0 %v2886
    %6211 = vmatpush1.msra.mxu0 %v2885
    %6212 = vmatprep.subr.mxu0 %v2894
    %6213 = vmatpush1.msra.mxu0 %v2893
    %6214 = vmatprep.subr.mxu0 %v2902
    %6215 = vmatpush1.msra.mxu0 %v2901
    %6216 = vmatprep.subr.mxu0 %v2910
    %6217 = vmatpush1.msra.mxu0 %v2909
    %6218 = vmatprep.mubr.f32.mxu0 %v2024
    %6219 = vmatmul.mubr.f32.gmra.mrb[0].mxu0 %v2023
    %v6220 = vpop.f32.mrb[0].mxu0
    %v6221 = vadd.f32 %v6132, %v6220
    %v6222 = vpop.f32.mrb[0].mxu0
    %v6223 = vadd.f32 %v6134, %v6222
    %6224 = vmatprep.mubr.f32.mxu0 %v2032
    %6225 = vmatmul.mubr.f32.gmra.mrb[0].mxu0 %v2031
    %v6226 = vpop.f32.mrb[0].mxu0
    %v6227 = vadd.f32 %v6138, %v6226
    %v6228 = vpop.f32.mrb[0].mxu0
    %v6229 = vadd.f32 %v6140, %v6228
    %6230 = vmatprep.mubr.f32.mxu0 %v2040
    %6231 = vmatmul.mubr.f32.gmra.mrb[0].mxu0 %v2039
    %v6232 = vpop.f32.mrb[0].mxu0
    %v6233 = vadd.f32 %v6144, %v6232
    %v6234 = vpop.f32.mrb[0].mxu0
    %v6235 = vadd.f32 %v6146, %v6234
    %6236 = vmatprep.mubr.f32.mxu0 %v2048
    %6237 = vmatmul.mubr.f32.gmra.mrb[0].mxu0 %v2047
    %v6238 = vpop.f32.mrb[0].mxu0
    %v6239 = vadd.f32 %v6150, %v6238
    %v6240 = vpop.f32.mrb[0].mxu0
    %v6241 = vadd.f32 %v6152, %v6240
    %6242 = vdwg.mxu0
    %6243 = vmatprep.subr.mxu0 %v2918
    %6244 = vmatpush1.msra.mxu0 %v2917
    %6245 = vmatprep.subr.mxu0 %v2926
    %6246 = vmatpush1.msra.mxu0 %v2925
    %6247 = vmatprep.subr.mxu0 %v2934
    %6248 = vmatpush1.msra.mxu0 %v2933
    %6249 = vmatprep.subr.mxu0 %v2942
    %6250 = vmatpush1.msra.mxu0 %v2941
    %6251 = vmatprep.subr.mxu0 %v2950
    %6252 = vmatpush1.msra.mxu0 %v2949
    %6253 = vmatprep.subr.mxu0 %v2958
    %6254 = vmatpush1.msra.mxu0 %v2957
    %6255 = vmatprep.subr.mxu0 %v2966
    %6256 = vmatpush1.msra.mxu0 %v2965
    %6257 = vmatprep.subr.mxu0 %v2974
    %6258 = vmatpush1.msra.mxu0 %v2973
    %6259 = vmatprep.subr.mxu0 %v2982
    %6260 = vmatpush1.msra.mxu0 %v2981
    %6261 = vmatprep.subr.mxu0 %v2990
    %6262 = vmatpush1.msra.mxu0 %v2989
    %6263 = vmatprep.subr.mxu0 %v2998
    %6264 = vmatpush1.msra.mxu0 %v2997
    %6265 = vmatprep.subr.mxu0 %v3006
    %6266 = vmatpush1.msra.mxu0 %v3005
    %6267 = vmatprep.subr.mxu0 %v3014
    %6268 = vmatpush1.msra.mxu0 %v3013
    %6269 = vmatprep.subr.mxu0 %v3022
    %6270 = vmatpush1.msra.mxu0 %v3021
    %6271 = vmatprep.subr.mxu0 %v3030
    %6272 = vmatpush1.msra.mxu0 %v3029
    %6273 = vmatprep.subr.mxu0 %v3038
    %6274 = vmatpush1.msra.mxu0 %v3037
    %6275 = vmatprep.subr.mxu0 %v3046
    %6276 = vmatpush1.msra.mxu0 %v3045
    %6277 = vmatprep.subr.mxu0 %v3054
    %6278 = vmatpush1.msra.mxu0 %v3053
    %6279 = vmatprep.subr.mxu0 %v3062
    %6280 = vmatpush1.msra.mxu0 %v3061
    %6281 = vmatprep.subr.mxu0 %v3070
    %6282 = vmatpush1.msra.mxu0 %v3069
    %6283 = vmatprep.subr.mxu0 %v3078
    %6284 = vmatpush1.msra.mxu0 %v3077
    %6285 = vmatprep.subr.mxu0 %v3086
    %6286 = vmatpush1.msra.mxu0 %v3085
    %6287 = vmatprep.subr.mxu0 %v3094
    %6288 = vmatpush1.msra.mxu0 %v3093
    %6289 = vmatprep.subr.mxu0 %v3102
    %6290 = vmatpush1.msra.mxu0 %v3101
    %6291 = vmatprep.subr.mxu0 %v3110
    %6292 = vmatpush1.msra.mxu0 %v3109
    %6293 = vmatprep.subr.mxu0 %v3118
    %6294 = vmatpush1.msra.mxu0 %v3117
    %6295 = vmatprep.subr.mxu0 %v3126
    %6296 = vmatpush1.msra.mxu0 %v3125
    %6297 = vmatprep.subr.mxu0 %v3134
    %6298 = vmatpush1.msra.mxu0 %v3133
    %6299 = vmatprep.subr.mxu0 %v3142
    %6300 = vmatpush1.msra.mxu0 %v3141
    %6301 = vmatprep.subr.mxu0 %v3150
    %6302 = vmatpush1.msra.mxu0 %v3149
    %6303 = vmatprep.subr.mxu0 %v3158
    %6304 = vmatpush1.msra.mxu0 %v3157
    %6305 = vmatprep.subr.mxu0 %v3166
    %6306 = vmatpush1.msra.mxu0 %v3165
    %6307 = vmatprep.mubr.f32.mxu0 %v2026
    %6308 = vmatmul.mubr.f32.gmra.mrb[0].mxu0 %v2025
    %v6309 = vpop.f32.mrb[0].mxu0
    %v6310 = vadd.f32 %v6221, %v6309
    %v6311 = vpop.f32.mrb[0].mxu0
    %v6312 = vadd.f32 %v6223, %v6311
    %6313 = vmatprep.mubr.f32.mxu0 %v2034
    %6314 = vmatmul.mubr.f32.gmra.mrb[0].mxu0 %v2033
    %v6315 = vpop.f32.mrb[0].mxu0
    %v6316 = vadd.f32 %v6227, %v6315
    %v6317 = vpop.f32.mrb[0].mxu0
    %v6318 = vadd.f32 %v6229, %v6317
    %6319 = vmatprep.mubr.f32.mxu0 %v2042
    %6320 = vmatmul.mubr.f32.gmra.mrb[0].mxu0 %v2041
    %v6321 = vpop.f32.mrb[0].mxu0
    %v6322 = vadd.f32 %v6233, %v6321
    %v6323 = vpop.f32.mrb[0].mxu0
    %v6324 = vadd.f32 %v6235, %v6323
    %6325 = vmatprep.mubr.f32.mxu0 %v2050
    %6326 = vmatmul.mubr.f32.gmra.mrb[0].mxu0 %v2049
    %v6327 = vpop.f32.mrb[0].mxu0
    %v6328 = vadd.f32 %v6239, %v6327
    %v6329 = vpop.f32.mrb[0].mxu0
    %v6330 = vadd.f32 %v6241, %v6329
    %6331 = vdwg.mxu0
    %6332 = vmatprep.subr.mxu0 %v2152
    %6333 = vmatpush1.msra.mxu0 %v2151
    %6334 = vmatprep.subr.mxu0 %v2160
    %6335 = vmatpush1.msra.mxu0 %v2159
    %6336 = vmatprep.subr.mxu0 %v2168
    %6337 = vmatpush1.msra.mxu0 %v2167
    %6338 = vmatprep.subr.mxu0 %v2176
    %6339 = vmatpush1.msra.mxu0 %v2175
    %6340 = vmatprep.subr.mxu0 %v2184
    %6341 = vmatpush1.msra.mxu0 %v2183
    %6342 = vmatprep.subr.mxu0 %v2192
    %6343 = vmatpush1.msra.mxu0 %v2191
    %6344 = vmatprep.subr.mxu0 %v2200
    %6345 = vmatpush1.msra.mxu0 %v2199
    %6346 = vmatprep.subr.mxu0 %v2208
    %6347 = vmatpush1.msra.mxu0 %v2207
    %6348 = vmatprep.subr.mxu0 %v2216
    %6349 = vmatpush1.msra.mxu0 %v2215
    %6350 = vmatprep.subr.mxu0 %v2224
    %6351 = vmatpush1.msra.mxu0 %v2223
    %6352 = vmatprep.subr.mxu0 %v2232
    %6353 = vmatpush1.msra.mxu0 %v2231
    %6354 = vmatprep.subr.mxu0 %v2240
    %6355 = vmatpush1.msra.mxu0 %v2239
    %6356 = vmatprep.subr.mxu0 %v2248
    %6357 = vmatpush1.msra.mxu0 %v2247
    %6358 = vmatprep.subr.mxu0 %v2256
    %6359 = vmatpush1.msra.mxu0 %v2255
    %6360 = vmatprep.subr.mxu0 %v2264
    %6361 = vmatpush1.msra.mxu0 %v2263
    %6362 = vmatprep.subr.mxu0 %v2272
    %6363 = vmatpush1.msra.mxu0 %v2271
    %6364 = vmatprep.subr.mxu0 %v2280
    %6365 = vmatpush1.msra.mxu0 %v2279
    %6366 = vmatprep.subr.mxu0 %v2288
    %6367 = vmatpush1.msra.mxu0 %v2287
    %6368 = vmatprep.subr.mxu0 %v2296
    %6369 = vmatpush1.msra.mxu0 %v2295
    %6370 = vmatprep.subr.mxu0 %v2304
    %6371 = vmatpush1.msra.mxu0 %v2303
    %6372 = vmatprep.subr.mxu0 %v2312
    %6373 = vmatpush1.msra.mxu0 %v2311
    %6374 = vmatprep.subr.mxu0 %v2320
    %6375 = vmatpush1.msra.mxu0 %v2319
    %6376 = vmatprep.subr.mxu0 %v2328
    %6377 = vmatpush1.msra.mxu0 %v2327
    %6378 = vmatprep.subr.mxu0 %v2336
    %6379 = vmatpush1.msra.mxu0 %v2335
    %6380 = vmatprep.subr.mxu0 %v2344
    %6381 = vmatpush1.msra.mxu0 %v2343
    %6382 = vmatprep.subr.mxu0 %v2352
    %6383 = vmatpush1.msra.mxu0 %v2351
    %6384 = vmatprep.subr.mxu0 %v2360
    %6385 = vmatpush1.msra.mxu0 %v2359
    %6386 = vmatprep.subr.mxu0 %v2368
    %6387 = vmatpush1.msra.mxu0 %v2367
    %6388 = vmatprep.subr.mxu0 %v2376
    %6389 = vmatpush1.msra.mxu0 %v2375
    %6390 = vmatprep.subr.mxu0 %v2384
    %6391 = vmatpush1.msra.mxu0 %v2383
    %6392 = vmatprep.subr.mxu0 %v2392
    %6393 = vmatpush1.msra.mxu0 %v2391
    %6394 = vmatprep.subr.mxu0 %v2400
    %6395 = vmatpush1.msra.mxu0 %v2399
    %6396 = vmatprep.mubr.f32.mxu0 %v2020
    %6397 = vmatmul.mubr.f32.gmra.mrb[0].mxu0 %v2019
    %v6398 = vpop.f32.mrb[0].mxu0
    %v6399 = vadd.f32 %v5242, %v6398
    %v6400 = vpop.f32.mrb[0].mxu0
    %v6401 = vadd.f32 %v5244, %v6400
    %6402 = vmatprep.mubr.f32.mxu0 %v2028
    %6403 = vmatmul.mubr.f32.gmra.mrb[0].mxu0 %v2027
    %v6404 = vpop.f32.mrb[0].mxu0
    %v6405 = vadd.f32 %v5248, %v6404
    %v6406 = vpop.f32.mrb[0].mxu0
    %v6407 = vadd.f32 %v5250, %v6406
    %6408 = vmatprep.mubr.f32.mxu0 %v2036
    %6409 = vmatmul.mubr.f32.gmra.mrb[0].mxu0 %v2035
    %v6410 = vpop.f32.mrb[0].mxu0
    %v6411 = vadd.f32 %v5254, %v6410
    %v6412 = vpop.f32.mrb[0].mxu0
    %v6413 = vadd.f32 %v5256, %v6412
    %6414 = vmatprep.mubr.f32.mxu0 %v2044
    %6415 = vmatmul.mubr.f32.gmra.mrb[0].mxu0 %v2043
    %v6416 = vpop.f32.mrb[0].mxu0
    %v6417 = vadd.f32 %v5260, %v6416
    %v6418 = vpop.f32.mrb[0].mxu0
    %v6419 = vadd.f32 %v5262, %v6418
    %6420 = vdwg.mxu0
    %6421 = vmatprep.subr.mxu0 %v2408
    %6422 = vmatpush1.msra.mxu0 %v2407
    %6423 = vmatprep.subr.mxu0 %v2416
    %6424 = vmatpush1.msra.mxu0 %v2415
    %6425 = vmatprep.subr.mxu0 %v2424
    %6426 = vmatpush1.msra.mxu0 %v2423
    %6427 = vmatprep.subr.mxu0 %v2432
    %6428 = vmatpush1.msra.mxu0 %v2431
    %6429 = vmatprep.subr.mxu0 %v2440
    %6430 = vmatpush1.msra.mxu0 %v2439
    %6431 = vmatprep.subr.mxu0 %v2448
    %6432 = vmatpush1.msra.mxu0 %v2447
    %6433 = vmatprep.subr.mxu0 %v2456
    %6434 = vmatpush1.msra.mxu0 %v2455
    %6435 = vmatprep.subr.mxu0 %v2464
    %6436 = vmatpush1.msra.mxu0 %v2463
    %6437 = vmatprep.subr.mxu0 %v2472
    %6438 = vmatpush1.msra.mxu0 %v2471
    %6439 = vmatprep.subr.mxu0 %v2480
    %6440 = vmatpush1.msra.mxu0 %v2479
    %6441 = vmatprep.subr.mxu0 %v2488
    %6442 = vmatpush1.msra.mxu0 %v2487
    %6443 = vmatprep.subr.mxu0 %v2496
    %6444 = vmatpush1.msra.mxu0 %v2495
    %6445 = vmatprep.subr.mxu0 %v2504
    %6446 = vmatpush1.msra.mxu0 %v2503
    %6447 = vmatprep.subr.mxu0 %v2512
    %6448 = vmatpush1.msra.mxu0 %v2511
    %6449 = vmatprep.subr.mxu0 %v2520
    %6450 = vmatpush1.msra.mxu0 %v2519
    %6451 = vmatprep.subr.mxu0 %v2528
    %6452 = vmatpush1.msra.mxu0 %v2527
    %6453 = vmatprep.subr.mxu0 %v2536
    %6454 = vmatpush1.msra.mxu0 %v2535
    %6455 = vmatprep.subr.mxu0 %v2544
    %6456 = vmatpush1.msra.mxu0 %v2543
    %6457 = vmatprep.subr.mxu0 %v2552
    %6458 = vmatpush1.msra.mxu0 %v2551
    %6459 = vmatprep.subr.mxu0 %v2560
    %6460 = vmatpush1.msra.mxu0 %v2559
    %6461 = vmatprep.subr.mxu0 %v2568
    %6462 = vmatpush1.msra.mxu0 %v2567
    %6463 = vmatprep.subr.mxu0 %v2576
    %6464 = vmatpush1.msra.mxu0 %v2575
    %6465 = vmatprep.subr.mxu0 %v2584
    %6466 = vmatpush1.msra.mxu0 %v2583
    %6467 = vmatprep.subr.mxu0 %v2592
    %6468 = vmatpush1.msra.mxu0 %v2591
    %6469 = vmatprep.subr.mxu0 %v2600
    %6470 = vmatpush1.msra.mxu0 %v2599
    %6471 = vmatprep.subr.mxu0 %v2608
    %6472 = vmatpush1.msra.mxu0 %v2607
    %6473 = vmatprep.subr.mxu0 %v2616
    %6474 = vmatpush1.msra.mxu0 %v2615
    %6475 = vmatprep.subr.mxu0 %v2624
    %6476 = vmatpush1.msra.mxu0 %v2623
    %6477 = vmatprep.subr.mxu0 %v2632
    %6478 = vmatpush1.msra.mxu0 %v2631
    %6479 = vmatprep.subr.mxu0 %v2640
    %6480 = vmatpush1.msra.mxu0 %v2639
    %6481 = vmatprep.subr.mxu0 %v2648
    %6482 = vmatpush1.msra.mxu0 %v2647
    %6483 = vmatprep.subr.mxu0 %v2656
    %6484 = vmatpush1.msra.mxu0 %v2655
    %6485 = vmatprep.mubr.f32.mxu0 %v2022
    %6486 = vmatmul.mubr.f32.gmra.mrb[0].mxu0 %v2021
    %v6487 = vpop.f32.mrb[0].mxu0
    %v6488 = vadd.f32 %v6399, %v6487
    %v6489 = vpop.f32.mrb[0].mxu0
    %v6490 = vadd.f32 %v6401, %v6489
    %6491 = vmatprep.mubr.f32.mxu0 %v2030
    %6492 = vmatmul.mubr.f32.gmra.mrb[0].mxu0 %v2029
    %v6493 = vpop.f32.mrb[0].mxu0
    %v6494 = vadd.f32 %v6405, %v6493
    %v6495 = vpop.f32.mrb[0].mxu0
    %v6496 = vadd.f32 %v6407, %v6495
    %6497 = vmatprep.mubr.f32.mxu0 %v2038
    %6498 = vmatmul.mubr.f32.gmra.mrb[0].mxu0 %v2037
    %v6499 = vpop.f32.mrb[0].mxu0
    %v6500 = vadd.f32 %v6411, %v6499
    %v6501 = vpop.f32.mrb[0].mxu0
    %v6502 = vadd.f32 %v6413, %v6501
    %6503 = vmatprep.mubr.f32.mxu0 %v2046
    %6504 = vmatmul.mubr.f32.gmra.mrb[0].mxu0 %v2045
    %v6505 = vpop.f32.mrb[0].mxu0
    %v6506 = vadd.f32 %v6417, %v6505
    %v6507 = vpop.f32.mrb[0].mxu0
    %v6508 = vadd.f32 %v6419, %v6507
    %6509 = vdwg.mxu0
    %6510 = vmatprep.subr.mxu0 %v2664
    %6511 = vmatpush1.msra.mxu0 %v2663
    %6512 = vmatprep.subr.mxu0 %v2672
    %6513 = vmatpush1.msra.mxu0 %v2671
    %6514 = vmatprep.subr.mxu0 %v2680
    %6515 = vmatpush1.msra.mxu0 %v2679
    %6516 = vmatprep.subr.mxu0 %v2688
    %6517 = vmatpush1.msra.mxu0 %v2687
    %6518 = vmatprep.subr.mxu0 %v2696
    %6519 = vmatpush1.msra.mxu0 %v2695
    %6520 = vmatprep.subr.mxu0 %v2704
    %6521 = vmatpush1.msra.mxu0 %v2703
    %6522 = vmatprep.subr.mxu0 %v2712
    %6523 = vmatpush1.msra.mxu0 %v2711
    %6524 = vmatprep.subr.mxu0 %v2720
    %6525 = vmatpush1.msra.mxu0 %v2719
    %6526 = vmatprep.subr.mxu0 %v2728
    %6527 = vmatpush1.msra.mxu0 %v2727
    %6528 = vmatprep.subr.mxu0 %v2736
    %6529 = vmatpush1.msra.mxu0 %v2735
    %6530 = vmatprep.subr.mxu0 %v2744
    %6531 = vmatpush1.msra.mxu0 %v2743
    %6532 = vmatprep.subr.mxu0 %v2752
    %6533 = vmatpush1.msra.mxu0 %v2751
    %6534 = vmatprep.subr.mxu0 %v2760
    %6535 = vmatpush1.msra.mxu0 %v2759
    %6536 = vmatprep.subr.mxu0 %v2768
    %6537 = vmatpush1.msra.mxu0 %v2767
    %6538 = vmatprep.subr.mxu0 %v2776
    %6539 = vmatpush1.msra.mxu0 %v2775
    %6540 = vmatprep.subr.mxu0 %v2784
    %6541 = vmatpush1.msra.mxu0 %v2783
    %6542 = vmatprep.subr.mxu0 %v2792
    %6543 = vmatpush1.msra.mxu0 %v2791
    %6544 = vmatprep.subr.mxu0 %v2800
    %6545 = vmatpush1.msra.mxu0 %v2799
    %6546 = vmatprep.subr.mxu0 %v2808
    %6547 = vmatpush1.msra.mxu0 %v2807
    %6548 = vmatprep.subr.mxu0 %v2816
    %6549 = vmatpush1.msra.mxu0 %v2815
    %6550 = vmatprep.subr.mxu0 %v2824
    %6551 = vmatpush1.msra.mxu0 %v2823
    %6552 = vmatprep.subr.mxu0 %v2832
    %6553 = vmatpush1.msra.mxu0 %v2831
    %6554 = vmatprep.subr.mxu0 %v2840
    %6555 = vmatpush1.msra.mxu0 %v2839
    %6556 = vmatprep.subr.mxu0 %v2848
    %6557 = vmatpush1.msra.mxu0 %v2847
    %6558 = vmatprep.subr.mxu0 %v2856
    %6559 = vmatpush1.msra.mxu0 %v2855
    %6560 = vmatprep.subr.mxu0 %v2864
    %6561 = vmatpush1.msra.mxu0 %v2863
    %6562 = vmatprep.subr.mxu0 %v2872
    %6563 = vmatpush1.msra.mxu0 %v2871
    %6564 = vmatprep.subr.mxu0 %v2880
    %6565 = vmatpush1.msra.mxu0 %v2879
    %6566 = vmatprep.subr.mxu0 %v2888
    %6567 = vmatpush1.msra.mxu0 %v2887
    %6568 = vmatprep.subr.mxu0 %v2896
    %6569 = vmatpush1.msra.mxu0 %v2895
    %6570 = vmatprep.subr.mxu0 %v2904
    %6571 = vmatpush1.msra.mxu0 %v2903
    %6572 = vmatprep.subr.mxu0 %v2912
    %6573 = vmatpush1.msra.mxu0 %v2911
    %6574 = vmatprep.mubr.f32.mxu0 %v2024
    %6575 = vmatmul.mubr.f32.gmra.mrb[0].mxu0 %v2023
    %v6576 = vpop.f32.mrb[0].mxu0
    %v6577 = vadd.f32 %v6488, %v6576
    %v6578 = vpop.f32.mrb[0].mxu0
    %v6579 = vadd.f32 %v6490, %v6578
    %6580 = vmatprep.mubr.f32.mxu0 %v2032
    %6581 = vmatmul.mubr.f32.gmra.mrb[0].mxu0 %v2031
    %v6582 = vpop.f32.mrb[0].mxu0
    %v6583 = vadd.f32 %v6494, %v6582
    %v6584 = vpop.f32.mrb[0].mxu0
    %v6585 = vadd.f32 %v6496, %v6584
    %6586 = vmatprep.mubr.f32.mxu0 %v2040
    %6587 = vmatmul.mubr.f32.gmra.mrb[0].mxu0 %v2039
    %v6588 = vpop.f32.mrb[0].mxu0
    %v6589 = vadd.f32 %v6500, %v6588
    %v6590 = vpop.f32.mrb[0].mxu0
    %v6591 = vadd.f32 %v6502, %v6590
    %6592 = vmatprep.mubr.f32.mxu0 %v2048
    %6593 = vmatmul.mubr.f32.gmra.mrb[0].mxu0 %v2047
    %v6594 = vpop.f32.mrb[0].mxu0
    %v6595 = vadd.f32 %v6506, %v6594
    %v6596 = vpop.f32.mrb[0].mxu0
    %v6597 = vadd.f32 %v6508, %v6596
    %6598 = vdwg.mxu0
    %6599 = vmatprep.subr.mxu0 %v2920
    %6600 = vmatpush1.msra.mxu0 %v2919
    %6601 = vmatprep.subr.mxu0 %v2928
    %6602 = vmatpush1.msra.mxu0 %v2927
    %6603 = vmatprep.subr.mxu0 %v2936
    %6604 = vmatpush1.msra.mxu0 %v2935
    %6605 = vmatprep.subr.mxu0 %v2944
    %6606 = vmatpush1.msra.mxu0 %v2943
    %6607 = vmatprep.subr.mxu0 %v2952
    %6608 = vmatpush1.msra.mxu0 %v2951
    %6609 = vmatprep.subr.mxu0 %v2960
    %6610 = vmatpush1.msra.mxu0 %v2959
    %6611 = vmatprep.subr.mxu0 %v2968
    %6612 = vmatpush1.msra.mxu0 %v2967
    %6613 = vmatprep.subr.mxu0 %v2976
    %6614 = vmatpush1.msra.mxu0 %v2975
    %6615 = vmatprep.subr.mxu0 %v2984
    %6616 = vmatpush1.msra.mxu0 %v2983
    %6617 = vmatprep.subr.mxu0 %v2992
    %6618 = vmatpush1.msra.mxu0 %v2991
    %6619 = vmatprep.subr.mxu0 %v3000
    %6620 = vmatpush1.msra.mxu0 %v2999
    %6621 = vmatprep.subr.mxu0 %v3008
    %6622 = vmatpush1.msra.mxu0 %v3007
    %6623 = vmatprep.subr.mxu0 %v3016
    %6624 = vmatpush1.msra.mxu0 %v3015
    %6625 = vmatprep.subr.mxu0 %v3024
    %6626 = vmatpush1.msra.mxu0 %v3023
    %6627 = vmatprep.subr.mxu0 %v3032
    %6628 = vmatpush1.msra.mxu0 %v3031
    %6629 = vmatprep.subr.mxu0 %v3040
    %6630 = vmatpush1.msra.mxu0 %v3039
    %6631 = vmatprep.subr.mxu0 %v3048
    %6632 = vmatpush1.msra.mxu0 %v3047
    %6633 = vmatprep.subr.mxu0 %v3056
    %6634 = vmatpush1.msra.mxu0 %v3055
    %6635 = vmatprep.subr.mxu0 %v3064
    %6636 = vmatpush1.msra.mxu0 %v3063
    %6637 = vmatprep.subr.mxu0 %v3072
    %6638 = vmatpush1.msra.mxu0 %v3071
    %6639 = vmatprep.subr.mxu0 %v3080
    %6640 = vmatpush1.msra.mxu0 %v3079
    %6641 = vmatprep.subr.mxu0 %v3088
    %6642 = vmatpush1.msra.mxu0 %v3087
    %6643 = vmatprep.subr.mxu0 %v3096
    %6644 = vmatpush1.msra.mxu0 %v3095
    %6645 = vmatprep.subr.mxu0 %v3104
    %6646 = vmatpush1.msra.mxu0 %v3103
    %6647 = vmatprep.subr.mxu0 %v3112
    %6648 = vmatpush1.msra.mxu0 %v3111
    %6649 = vmatprep.subr.mxu0 %v3120
    %6650 = vmatpush1.msra.mxu0 %v3119
    %6651 = vmatprep.subr.mxu0 %v3128
    %6652 = vmatpush1.msra.mxu0 %v3127
    %6653 = vmatprep.subr.mxu0 %v3136
    %6654 = vmatpush1.msra.mxu0 %v3135
    %6655 = vmatprep.subr.mxu0 %v3144
    %6656 = vmatpush1.msra.mxu0 %v3143
    %6657 = vmatprep.subr.mxu0 %v3152
    %6658 = vmatpush1.msra.mxu0 %v3151
    %6659 = vmatprep.subr.mxu0 %v3160
    %6660 = vmatpush1.msra.mxu0 %v3159
    %6661 = vmatprep.subr.mxu0 %v3168
    %6662 = vmatpush1.msra.mxu0 %v3167
    %6663 = vmatprep.mubr.f32.mxu0 %v2026
    %6664 = vmatmul.mubr.f32.gmra.mrb[0].mxu0 %v2025
    %v6665 = vpop.f32.mrb[0].mxu0
    %v6666 = vadd.f32 %v6577, %v6665
    %v6667 = vpop.f32.mrb[0].mxu0
    %v6668 = vadd.f32 %v6579, %v6667
    %6669 = vmatprep.mubr.f32.mxu0 %v2034
    %6670 = vmatmul.mubr.f32.gmra.mrb[0].mxu0 %v2033
    %v6671 = vpop.f32.mrb[0].mxu0
    %v6672 = vadd.f32 %v6583, %v6671
    %v6673 = vpop.f32.mrb[0].mxu0
    %v6674 = vadd.f32 %v6585, %v6673
    %6675 = vmatprep.mubr.f32.mxu0 %v2042
    %6676 = vmatmul.mubr.f32.gmra.mrb[0].mxu0 %v2041
    %v6677 = vpop.f32.mrb[0].mxu0
    %v6678 = vadd.f32 %v6589, %v6677
    %v6679 = vpop.f32.mrb[0].mxu0
    %v6680 = vadd.f32 %v6591, %v6679
    %6681 = vmatprep.mubr.f32.mxu0 %v2050
    %6682 = vmatmul.mubr.f32.gmra.mrb[0].mxu0 %v2049
    %v6683 = vpop.f32.mrb[0].mxu0
    %v6684 = vadd.f32 %v6595, %v6683
    %v6685 = vpop.f32.mrb[0].mxu0
    %v6686 = vadd.f32 %v6597, %v6685
    %6687 = vdwg.mxu0
    %6688 = vmatprep.subr.mxu0 %v2154
    %6689 = vmatpush1.msra.mxu0 %v2153
    %6690 = vmatprep.subr.mxu0 %v2162
    %6691 = vmatpush1.msra.mxu0 %v2161
    %6692 = vmatprep.subr.mxu0 %v2170
    %6693 = vmatpush1.msra.mxu0 %v2169
    %6694 = vmatprep.subr.mxu0 %v2178
    %6695 = vmatpush1.msra.mxu0 %v2177
    %6696 = vmatprep.subr.mxu0 %v2186
    %6697 = vmatpush1.msra.mxu0 %v2185
    %6698 = vmatprep.subr.mxu0 %v2194
    %6699 = vmatpush1.msra.mxu0 %v2193
    %6700 = vmatprep.subr.mxu0 %v2202
    %6701 = vmatpush1.msra.mxu0 %v2201
    %6702 = vmatprep.subr.mxu0 %v2210
    %6703 = vmatpush1.msra.mxu0 %v2209
    %6704 = vmatprep.subr.mxu0 %v2218
    %6705 = vmatpush1.msra.mxu0 %v2217
    %6706 = vmatprep.subr.mxu0 %v2226
    %6707 = vmatpush1.msra.mxu0 %v2225
    %6708 = vmatprep.subr.mxu0 %v2234
    %6709 = vmatpush1.msra.mxu0 %v2233
    %6710 = vmatprep.subr.mxu0 %v2242
    %6711 = vmatpush1.msra.mxu0 %v2241
    %6712 = vmatprep.subr.mxu0 %v2250
    %6713 = vmatpush1.msra.mxu0 %v2249
    %6714 = vmatprep.subr.mxu0 %v2258
    %6715 = vmatpush1.msra.mxu0 %v2257
    %6716 = vmatprep.subr.mxu0 %v2266
    %6717 = vmatpush1.msra.mxu0 %v2265
    %6718 = vmatprep.subr.mxu0 %v2274
    %6719 = vmatpush1.msra.mxu0 %v2273
    %6720 = vmatprep.subr.mxu0 %v2282
    %6721 = vmatpush1.msra.mxu0 %v2281
    %6722 = vmatprep.subr.mxu0 %v2290
    %6723 = vmatpush1.msra.mxu0 %v2289
    %6724 = vmatprep.subr.mxu0 %v2298
    %6725 = vmatpush1.msra.mxu0 %v2297
    %6726 = vmatprep.subr.mxu0 %v2306
    %6727 = vmatpush1.msra.mxu0 %v2305
    %6728 = vmatprep.subr.mxu0 %v2314
    %6729 = vmatpush1.msra.mxu0 %v2313
    %6730 = vmatprep.subr.mxu0 %v2322
    %6731 = vmatpush1.msra.mxu0 %v2321
    %6732 = vmatprep.subr.mxu0 %v2330
    %6733 = vmatpush1.msra.mxu0 %v2329
    %6734 = vmatprep.subr.mxu0 %v2338
    %6735 = vmatpush1.msra.mxu0 %v2337
    %6736 = vmatprep.subr.mxu0 %v2346
    %6737 = vmatpush1.msra.mxu0 %v2345
    %6738 = vmatprep.subr.mxu0 %v2354
    %6739 = vmatpush1.msra.mxu0 %v2353
    %6740 = vmatprep.subr.mxu0 %v2362
    %6741 = vmatpush1.msra.mxu0 %v2361
    %6742 = vmatprep.subr.mxu0 %v2370
    %6743 = vmatpush1.msra.mxu0 %v2369
    %6744 = vmatprep.subr.mxu0 %v2378
    %6745 = vmatpush1.msra.mxu0 %v2377
    %6746 = vmatprep.subr.mxu0 %v2386
    %6747 = vmatpush1.msra.mxu0 %v2385
    %6748 = vmatprep.subr.mxu0 %v2394
    %6749 = vmatpush1.msra.mxu0 %v2393
    %6750 = vmatprep.subr.mxu0 %v2402
    %6751 = vmatpush1.msra.mxu0 %v2401
    %6752 = vmatprep.mubr.f32.mxu0 %v2020
    %6753 = vmatmul.mubr.f32.gmra.mrb[0].mxu0 %v2019
    %v6754 = vpop.f32.mrb[0].mxu0
    %v6755 = vadd.f32 %v5598, %v6754
    %v6756 = vpop.f32.mrb[0].mxu0
    %v6757 = vadd.f32 %v5600, %v6756
    %6758 = vmatprep.mubr.f32.mxu0 %v2028
    %6759 = vmatmul.mubr.f32.gmra.mrb[0].mxu0 %v2027
    %v6760 = vpop.f32.mrb[0].mxu0
    %v6761 = vadd.f32 %v5604, %v6760
    %v6762 = vpop.f32.mrb[0].mxu0
    %v6763 = vadd.f32 %v5606, %v6762
    %6764 = vmatprep.mubr.f32.mxu0 %v2036
    %6765 = vmatmul.mubr.f32.gmra.mrb[0].mxu0 %v2035
    %v6766 = vpop.f32.mrb[0].mxu0
    %v6767 = vadd.f32 %v5610, %v6766
    %v6768 = vpop.f32.mrb[0].mxu0
    %v6769 = vadd.f32 %v5612, %v6768
    %6770 = vmatprep.mubr.f32.mxu0 %v2044
    %6771 = vmatmul.mubr.f32.gmra.mrb[0].mxu0 %v2043
    %v6772 = vpop.f32.mrb[0].mxu0
    %v6773 = vadd.f32 %v5616, %v6772
    %v6774 = vpop.f32.mrb[0].mxu0
    %v6775 = vadd.f32 %v5618, %v6774
    %6776 = vdwg.mxu0
    %6777 = vmatprep.subr.mxu0 %v2410
    %6778 = vmatpush1.msra.mxu0 %v2409
    %6779 = vmatprep.subr.mxu0 %v2418
    %6780 = vmatpush1.msra.mxu0 %v2417
    %6781 = vmatprep.subr.mxu0 %v2426
    %6782 = vmatpush1.msra.mxu0 %v2425
    %6783 = vmatprep.subr.mxu0 %v2434
    %6784 = vmatpush1.msra.mxu0 %v2433
    %6785 = vmatprep.subr.mxu0 %v2442
    %6786 = vmatpush1.msra.mxu0 %v2441
    %6787 = vmatprep.subr.mxu0 %v2450
    %6788 = vmatpush1.msra.mxu0 %v2449
    %6789 = vmatprep.subr.mxu0 %v2458
    %6790 = vmatpush1.msra.mxu0 %v2457
    %6791 = vmatprep.subr.mxu0 %v2466
    %6792 = vmatpush1.msra.mxu0 %v2465
    %6793 = vmatprep.subr.mxu0 %v2474
    %6794 = vmatpush1.msra.mxu0 %v2473
    %6795 = vmatprep.subr.mxu0 %v2482
    %6796 = vmatpush1.msra.mxu0 %v2481
    %6797 = vmatprep.subr.mxu0 %v2490
    %6798 = vmatpush1.msra.mxu0 %v2489
    %6799 = vmatprep.subr.mxu0 %v2498
    %6800 = vmatpush1.msra.mxu0 %v2497
    %6801 = vmatprep.subr.mxu0 %v2506
    %6802 = vmatpush1.msra.mxu0 %v2505
    %6803 = vmatprep.subr.mxu0 %v2514
    %6804 = vmatpush1.msra.mxu0 %v2513
    %6805 = vmatprep.subr.mxu0 %v2522
    %6806 = vmatpush1.msra.mxu0 %v2521
    %6807 = vmatprep.subr.mxu0 %v2530
    %6808 = vmatpush1.msra.mxu0 %v2529
    %6809 = vmatprep.subr.mxu0 %v2538
    %6810 = vmatpush1.msra.mxu0 %v2537
    %6811 = vmatprep.subr.mxu0 %v2546
    %6812 = vmatpush1.msra.mxu0 %v2545
    %6813 = vmatprep.subr.mxu0 %v2554
    %6814 = vmatpush1.msra.mxu0 %v2553
    %6815 = vmatprep.subr.mxu0 %v2562
    %6816 = vmatpush1.msra.mxu0 %v2561
    %6817 = vmatprep.subr.mxu0 %v2570
    %6818 = vmatpush1.msra.mxu0 %v2569
    %6819 = vmatprep.subr.mxu0 %v2578
    %6820 = vmatpush1.msra.mxu0 %v2577
    %6821 = vmatprep.subr.mxu0 %v2586
    %6822 = vmatpush1.msra.mxu0 %v2585
    %6823 = vmatprep.subr.mxu0 %v2594
    %6824 = vmatpush1.msra.mxu0 %v2593
    %6825 = vmatprep.subr.mxu0 %v2602
    %6826 = vmatpush1.msra.mxu0 %v2601
    %6827 = vmatprep.subr.mxu0 %v2610
    %6828 = vmatpush1.msra.mxu0 %v2609
    %6829 = vmatprep.subr.mxu0 %v2618
    %6830 = vmatpush1.msra.mxu0 %v2617
    %6831 = vmatprep.subr.mxu0 %v2626
    %6832 = vmatpush1.msra.mxu0 %v2625
    %6833 = vmatprep.subr.mxu0 %v2634
    %6834 = vmatpush1.msra.mxu0 %v2633
    %6835 = vmatprep.subr.mxu0 %v2642
    %6836 = vmatpush1.msra.mxu0 %v2641
    %6837 = vmatprep.subr.mxu0 %v2650
    %6838 = vmatpush1.msra.mxu0 %v2649
    %6839 = vmatprep.subr.mxu0 %v2658
    %6840 = vmatpush1.msra.mxu0 %v2657
    %6841 = vmatprep.mubr.f32.mxu0 %v2022
    %6842 = vmatmul.mubr.f32.gmra.mrb[0].mxu0 %v2021
    %v6843 = vpop.f32.mrb[0].mxu0
    %v6844 = vadd.f32 %v6755, %v6843
    %v6845 = vpop.f32.mrb[0].mxu0
    %v6846 = vadd.f32 %v6757, %v6845
    %6847 = vmatprep.mubr.f32.mxu0 %v2030
    %6848 = vmatmul.mubr.f32.gmra.mrb[0].mxu0 %v2029
    %v6849 = vpop.f32.mrb[0].mxu0
    %v6850 = vadd.f32 %v6761, %v6849
    %v6851 = vpop.f32.mrb[0].mxu0
    %v6852 = vadd.f32 %v6763, %v6851
    %6853 = vmatprep.mubr.f32.mxu0 %v2038
    %6854 = vmatmul.mubr.f32.gmra.mrb[0].mxu0 %v2037
    %v6855 = vpop.f32.mrb[0].mxu0
    %v6856 = vadd.f32 %v6767, %v6855
    %v6857 = vpop.f32.mrb[0].mxu0
    %v6858 = vadd.f32 %v6769, %v6857
    %6859 = vmatprep.mubr.f32.mxu0 %v2046
    %6860 = vmatmul.mubr.f32.gmra.mrb[0].mxu0 %v2045
    %v6861 = vpop.f32.mrb[0].mxu0
    %v6862 = vadd.f32 %v6773, %v6861
    %v6863 = vpop.f32.mrb[0].mxu0
    %v6864 = vadd.f32 %v6775, %v6863
    %6865 = vdwg.mxu0
    %6866 = vmatprep.subr.mxu0 %v2666
    %6867 = vmatpush1.msra.mxu0 %v2665
    %6868 = vmatprep.subr.mxu0 %v2674
    %6869 = vmatpush1.msra.mxu0 %v2673
    %6870 = vmatprep.subr.mxu0 %v2682
    %6871 = vmatpush1.msra.mxu0 %v2681
    %6872 = vmatprep.subr.mxu0 %v2690
    %6873 = vmatpush1.msra.mxu0 %v2689
    %6874 = vmatprep.subr.mxu0 %v2698
    %6875 = vmatpush1.msra.mxu0 %v2697
    %6876 = vmatprep.subr.mxu0 %v2706
    %6877 = vmatpush1.msra.mxu0 %v2705
    %6878 = vmatprep.subr.mxu0 %v2714
    %6879 = vmatpush1.msra.mxu0 %v2713
    %6880 = vmatprep.subr.mxu0 %v2722
    %6881 = vmatpush1.msra.mxu0 %v2721
    %6882 = vmatprep.subr.mxu0 %v2730
    %6883 = vmatpush1.msra.mxu0 %v2729
    %6884 = vmatprep.subr.mxu0 %v2738
    %6885 = vmatpush1.msra.mxu0 %v2737
    %6886 = vmatprep.subr.mxu0 %v2746
    %6887 = vmatpush1.msra.mxu0 %v2745
    %6888 = vmatprep.subr.mxu0 %v2754
    %6889 = vmatpush1.msra.mxu0 %v2753
    %6890 = vmatprep.subr.mxu0 %v2762
    %6891 = vmatpush1.msra.mxu0 %v2761
    %6892 = vmatprep.subr.mxu0 %v2770
    %6893 = vmatpush1.msra.mxu0 %v2769
    %6894 = vmatprep.subr.mxu0 %v2778
    %6895 = vmatpush1.msra.mxu0 %v2777
    %6896 = vmatprep.subr.mxu0 %v2786
    %6897 = vmatpush1.msra.mxu0 %v2785
    %6898 = vmatprep.subr.mxu0 %v2794
    %6899 = vmatpush1.msra.mxu0 %v2793
    %6900 = vmatprep.subr.mxu0 %v2802
    %6901 = vmatpush1.msra.mxu0 %v2801
    %6902 = vmatprep.subr.mxu0 %v2810
    %6903 = vmatpush1.msra.mxu0 %v2809
    %6904 = vmatprep.subr.mxu0 %v2818
    %6905 = vmatpush1.msra.mxu0 %v2817
    %6906 = vmatprep.subr.mxu0 %v2826
    %6907 = vmatpush1.msra.mxu0 %v2825
    %6908 = vmatprep.subr.mxu0 %v2834
    %6909 = vmatpush1.msra.mxu0 %v2833
    %6910 = vmatprep.subr.mxu0 %v2842
    %6911 = vmatpush1.msra.mxu0 %v2841
    %6912 = vmatprep.subr.mxu0 %v2850
    %6913 = vmatpush1.msra.mxu0 %v2849
    %6914 = vmatprep.subr.mxu0 %v2858
    %6915 = vmatpush1.msra.mxu0 %v2857
    %6916 = vmatprep.subr.mxu0 %v2866
    %6917 = vmatpush1.msra.mxu0 %v2865
    %6918 = vmatprep.subr.mxu0 %v2874
    %6919 = vmatpush1.msra.mxu0 %v2873
    %6920 = vmatprep.subr.mxu0 %v2882
    %6921 = vmatpush1.msra.mxu0 %v2881
    %6922 = vmatprep.subr.mxu0 %v2890
    %6923 = vmatpush1.msra.mxu0 %v2889
    %6924 = vmatprep.subr.mxu0 %v2898
    %6925 = vmatpush1.msra.mxu0 %v2897
    %6926 = vmatprep.subr.mxu0 %v2906
    %6927 = vmatpush1.msra.mxu0 %v2905
    %6928 = vmatprep.subr.mxu0 %v2914
    %6929 = vmatpush1.msra.mxu0 %v2913
    %6930 = vmatprep.mubr.f32.mxu0 %v2024
    %6931 = vmatmul.mubr.f32.gmra.mrb[0].mxu0 %v2023
    %v6932 = vpop.f32.mrb[0].mxu0
    %v6933 = vadd.f32 %v6844, %v6932
    %v6934 = vpop.f32.mrb[0].mxu0
    %v6935 = vadd.f32 %v6846, %v6934
    %6936 = vmatprep.mubr.f32.mxu0 %v2032
    %6937 = vmatmul.mubr.f32.gmra.mrb[0].mxu0 %v2031
    %v6938 = vpop.f32.mrb[0].mxu0
    %v6939 = vadd.f32 %v6850, %v6938
    %v6940 = vpop.f32.mrb[0].mxu0
    %v6941 = vadd.f32 %v6852, %v6940
    %6942 = vmatprep.mubr.f32.mxu0 %v2040
    %6943 = vmatmul.mubr.f32.gmra.mrb[0].mxu0 %v2039
    %v6944 = vpop.f32.mrb[0].mxu0
    %v6945 = vadd.f32 %v6856, %v6944
    %v6946 = vpop.f32.mrb[0].mxu0
    %v6947 = vadd.f32 %v6858, %v6946
    %6948 = vmatprep.mubr.f32.mxu0 %v2048
    %6949 = vmatmul.mubr.f32.gmra.mrb[0].mxu0 %v2047
    %v6950 = vpop.f32.mrb[0].mxu0
    %v6951 = vadd.f32 %v6862, %v6950
    %v6952 = vpop.f32.mrb[0].mxu0
    %v6953 = vadd.f32 %v6864, %v6952
    %6954 = vdwg.mxu0
    %6955 = vmatprep.subr.mxu0 %v2922
    %6956 = vmatpush1.msra.mxu0 %v2921
    %6957 = vmatprep.subr.mxu0 %v2930
    %6958 = vmatpush1.msra.mxu0 %v2929
    %6959 = vmatprep.subr.mxu0 %v2938
    %6960 = vmatpush1.msra.mxu0 %v2937
    %6961 = vmatprep.subr.mxu0 %v2946
    %6962 = vmatpush1.msra.mxu0 %v2945
    %6963 = vmatprep.subr.mxu0 %v2954
    %6964 = vmatpush1.msra.mxu0 %v2953
    %6965 = vmatprep.subr.mxu0 %v2962
    %6966 = vmatpush1.msra.mxu0 %v2961
    %6967 = vmatprep.subr.mxu0 %v2970
    %6968 = vmatpush1.msra.mxu0 %v2969
    %6969 = vmatprep.subr.mxu0 %v2978
    %6970 = vmatpush1.msra.mxu0 %v2977
    %6971 = vmatprep.subr.mxu0 %v2986
    %6972 = vmatpush1.msra.mxu0 %v2985
    %6973 = vmatprep.subr.mxu0 %v2994
    %6974 = vmatpush1.msra.mxu0 %v2993
    %6975 = vmatprep.subr.mxu0 %v3002
    %6976 = vmatpush1.msra.mxu0 %v3001
    %6977 = vmatprep.subr.mxu0 %v3010
    %6978 = vmatpush1.msra.mxu0 %v3009
    %6979 = vmatprep.subr.mxu0 %v3018
    %6980 = vmatpush1.msra.mxu0 %v3017
    %6981 = vmatprep.subr.mxu0 %v3026
    %6982 = vmatpush1.msra.mxu0 %v3025
    %6983 = vmatprep.subr.mxu0 %v3034
    %6984 = vmatpush1.msra.mxu0 %v3033
    %6985 = vmatprep.subr.mxu0 %v3042
    %6986 = vmatpush1.msra.mxu0 %v3041
    %6987 = vmatprep.subr.mxu0 %v3050
    %6988 = vmatpush1.msra.mxu0 %v3049
    %6989 = vmatprep.subr.mxu0 %v3058
    %6990 = vmatpush1.msra.mxu0 %v3057
    %6991 = vmatprep.subr.mxu0 %v3066
    %6992 = vmatpush1.msra.mxu0 %v3065
    %6993 = vmatprep.subr.mxu0 %v3074
    %6994 = vmatpush1.msra.mxu0 %v3073
    %6995 = vmatprep.subr.mxu0 %v3082
    %6996 = vmatpush1.msra.mxu0 %v3081
    %6997 = vmatprep.subr.mxu0 %v3090
    %6998 = vmatpush1.msra.mxu0 %v3089
    %6999 = vmatprep.subr.mxu0 %v3098
    %7000 = vmatpush1.msra.mxu0 %v3097
    %7001 = vmatprep.subr.mxu0 %v3106
    %7002 = vmatpush1.msra.mxu0 %v3105
    %7003 = vmatprep.subr.mxu0 %v3114
    %7004 = vmatpush1.msra.mxu0 %v3113
    %7005 = vmatprep.subr.mxu0 %v3122
    %7006 = vmatpush1.msra.mxu0 %v3121
    %7007 = vmatprep.subr.mxu0 %v3130
    %7008 = vmatpush1.msra.mxu0 %v3129
    %7009 = vmatprep.subr.mxu0 %v3138
    %7010 = vmatpush1.msra.mxu0 %v3137
    %7011 = vmatprep.subr.mxu0 %v3146
    %7012 = vmatpush1.msra.mxu0 %v3145
    %7013 = vmatprep.subr.mxu0 %v3154
    %7014 = vmatpush1.msra.mxu0 %v3153
    %7015 = vmatprep.subr.mxu0 %v3162
    %7016 = vmatpush1.msra.mxu0 %v3161
    %7017 = vmatprep.subr.mxu0 %v3170
    %7018 = vmatpush1.msra.mxu0 %v3169
    %7019 = vmatprep.mubr.f32.mxu0 %v2026
    %7020 = vmatmul.mubr.f32.gmra.mrb[0].mxu0 %v2025
    %v7021 = vpop.f32.mrb[0].mxu0
    %v7022 = vadd.f32 %v6933, %v7021
    %v7023 = vpop.f32.mrb[0].mxu0
    %v7024 = vadd.f32 %v6935, %v7023
    %7025 = vmatprep.mubr.f32.mxu0 %v2034
    %7026 = vmatmul.mubr.f32.gmra.mrb[0].mxu0 %v2033
    %v7027 = vpop.f32.mrb[0].mxu0
    %v7028 = vadd.f32 %v6939, %v7027
    %v7029 = vpop.f32.mrb[0].mxu0
    %v7030 = vadd.f32 %v6941, %v7029
    %7031 = vmatprep.mubr.f32.mxu0 %v2042
    %7032 = vmatmul.mubr.f32.gmra.mrb[0].mxu0 %v2041
    %v7033 = vpop.f32.mrb[0].mxu0
    %v7034 = vadd.f32 %v6945, %v7033
    %v7035 = vpop.f32.mrb[0].mxu0
    %v7036 = vadd.f32 %v6947, %v7035
    %7037 = vmatprep.mubr.f32.mxu0 %v2050
    %7038 = vmatmul.mubr.f32.gmra.mrb[0].mxu0 %v2049
    %v7039 = vpop.f32.mrb[0].mxu0
    %v7040 = vadd.f32 %v6951, %v7039
    %v7041 = vpop.f32.mrb[0].mxu0
    %v7042 = vadd.f32 %v6953, %v7041
    %7043 = vdwg.mxu0
    %s7044 = scalar_lea.vmem [#allocation10], 16384
    %v7045 = vld [vmem:[%s7044] sm:$0xff]
    %v7046 = vld [vmem:[%s7044 + $0x8] sm:$0xff]
    %v7047 = vld [vmem:[%s7044 + $0x10] sm:$0xff]
    %v7048 = vld [vmem:[%s7044 + $0x18] sm:$0xff]
    %v7049 = vld [vmem:[%s7044 + $0x20] sm:$0xff]
    %v7050 = vld [vmem:[%s7044 + $0x28] sm:$0xff]
    %v7051 = vld [vmem:[%s7044 + $0x30] sm:$0xff]
    %v7052 = vld [vmem:[%s7044 + $0x38] sm:$0xff]
    %v7053 = vld [vmem:[%s7044 + $0x40] sm:$0xff]
    %v7054 = vld [vmem:[%s7044 + $0x48] sm:$0xff]
    %v7055 = vld [vmem:[%s7044 + $0x50] sm:$0xff]
    %v7056 = vld [vmem:[%s7044 + $0x58] sm:$0xff]
    %v7057 = vld [vmem:[%s7044 + $0x60] sm:$0xff]
    %v7058 = vld [vmem:[%s7044 + $0x68] sm:$0xff]
    %v7059 = vld [vmem:[%s7044 + $0x70] sm:$0xff]
    %v7060 = vld [vmem:[%s7044 + $0x78] sm:$0xff]
    %v7061 = vld [vmem:[%s7044 + $0x80] sm:$0xff]
    %v7062 = vld [vmem:[%s7044 + $0x88] sm:$0xff]
    %v7063 = vld [vmem:[%s7044 + $0x90] sm:$0xff]
    %v7064 = vld [vmem:[%s7044 + $0x98] sm:$0xff]
    %v7065 = vld [vmem:[%s7044 + $0xa0] sm:$0xff]
    %v7066 = vld [vmem:[%s7044 + $0xa8] sm:$0xff]
    %v7067 = vld [vmem:[%s7044 + $0xb0] sm:$0xff]
    %v7068 = vld [vmem:[%s7044 + $0xb8] sm:$0xff]
    %v7069 = vld [vmem:[%s7044 + $0xc0] sm:$0xff]
    %v7070 = vld [vmem:[%s7044 + $0xc8] sm:$0xff]
    %v7071 = vld [vmem:[%s7044 + $0xd0] sm:$0xff]
    %v7072 = vld [vmem:[%s7044 + $0xd8] sm:$0xff]
    %v7073 = vld [vmem:[%s7044 + $0xe0] sm:$0xff]
    %v7074 = vld [vmem:[%s7044 + $0xe8] sm:$0xff]
    %v7075 = vld [vmem:[%s7044 + $0xf0] sm:$0xff]
    %v7076 = vld [vmem:[%s7044 + $0xf8] sm:$0xff]
    %v7077 = vld [vmem:[%s7044 + $0x100] sm:$0xff]
    %v7078 = vld [vmem:[%s7044 + $0x108] sm:$0xff]
    %v7079 = vld [vmem:[%s7044 + $0x110] sm:$0xff]
    %v7080 = vld [vmem:[%s7044 + $0x118] sm:$0xff]
    %v7081 = vld [vmem:[%s7044 + $0x120] sm:$0xff]
    %v7082 = vld [vmem:[%s7044 + $0x128] sm:$0xff]
    %v7083 = vld [vmem:[%s7044 + $0x130] sm:$0xff]
    %v7084 = vld [vmem:[%s7044 + $0x138] sm:$0xff]
    %v7085 = vld [vmem:[%s7044 + $0x140] sm:$0xff]
    %v7086 = vld [vmem:[%s7044 + $0x148] sm:$0xff]
    %v7087 = vld [vmem:[%s7044 + $0x150] sm:$0xff]
    %v7088 = vld [vmem:[%s7044 + $0x158] sm:$0xff]
    %v7089 = vld [vmem:[%s7044 + $0x160] sm:$0xff]
    %v7090 = vld [vmem:[%s7044 + $0x168] sm:$0xff]
    %v7091 = vld [vmem:[%s7044 + $0x170] sm:$0xff]
    %v7092 = vld [vmem:[%s7044 + $0x178] sm:$0xff]
    %v7093 = vld [vmem:[%s7044 + $0x180] sm:$0xff]
    %v7094 = vld [vmem:[%s7044 + $0x188] sm:$0xff]
    %v7095 = vld [vmem:[%s7044 + $0x190] sm:$0xff]
    %v7096 = vld [vmem:[%s7044 + $0x198] sm:$0xff]
    %v7097 = vld [vmem:[%s7044 + $0x1a0] sm:$0xff]
    %v7098 = vld [vmem:[%s7044 + $0x1a8] sm:$0xff]
    %v7099 = vld [vmem:[%s7044 + $0x1b0] sm:$0xff]
    %v7100 = vld [vmem:[%s7044 + $0x1b8] sm:$0xff]
    %v7101 = vld [vmem:[%s7044 + $0x1c0] sm:$0xff]
    %v7102 = vld [vmem:[%s7044 + $0x1c8] sm:$0xff]
    %v7103 = vld [vmem:[%s7044 + $0x1d0] sm:$0xff]
    %v7104 = vld [vmem:[%s7044 + $0x1d8] sm:$0xff]
    %v7105 = vld [vmem:[%s7044 + $0x1e0] sm:$0xff]
    %v7106 = vld [vmem:[%s7044 + $0x1e8] sm:$0xff]
    %v7107 = vld [vmem:[%s7044 + $0x1f0] sm:$0xff]
    %v7108 = vld [vmem:[%s7044 + $0x1f8] sm:$0xff]
    %v7109 = vld [vmem:[%s7044 + $0x200] sm:$0xff]
    %v7110 = vld [vmem:[%s7044 + $0x208] sm:$0xff]
    %v7111 = vld [vmem:[%s7044 + $0x210] sm:$0xff]
    %v7112 = vld [vmem:[%s7044 + $0x218] sm:$0xff]
    %v7113 = vld [vmem:[%s7044 + $0x220] sm:$0xff]
    %v7114 = vld [vmem:[%s7044 + $0x228] sm:$0xff]
    %v7115 = vld [vmem:[%s7044 + $0x230] sm:$0xff]
    %v7116 = vld [vmem:[%s7044 + $0x238] sm:$0xff]
    %v7117 = vld [vmem:[%s7044 + $0x240] sm:$0xff]
    %v7118 = vld [vmem:[%s7044 + $0x248] sm:$0xff]
    %v7119 = vld [vmem:[%s7044 + $0x250] sm:$0xff]
    %v7120 = vld [vmem:[%s7044 + $0x258] sm:$0xff]
    %v7121 = vld [vmem:[%s7044 + $0x260] sm:$0xff]
    %v7122 = vld [vmem:[%s7044 + $0x268] sm:$0xff]
    %v7123 = vld [vmem:[%s7044 + $0x270] sm:$0xff]
    %v7124 = vld [vmem:[%s7044 + $0x278] sm:$0xff]
    %v7125 = vld [vmem:[%s7044 + $0x280] sm:$0xff]
    %v7126 = vld [vmem:[%s7044 + $0x288] sm:$0xff]
    %v7127 = vld [vmem:[%s7044 + $0x290] sm:$0xff]
    %v7128 = vld [vmem:[%s7044 + $0x298] sm:$0xff]
    %v7129 = vld [vmem:[%s7044 + $0x2a0] sm:$0xff]
    %v7130 = vld [vmem:[%s7044 + $0x2a8] sm:$0xff]
    %v7131 = vld [vmem:[%s7044 + $0x2b0] sm:$0xff]
    %v7132 = vld [vmem:[%s7044 + $0x2b8] sm:$0xff]
    %v7133 = vld [vmem:[%s7044 + $0x2c0] sm:$0xff]
    %v7134 = vld [vmem:[%s7044 + $0x2c8] sm:$0xff]
    %v7135 = vld [vmem:[%s7044 + $0x2d0] sm:$0xff]
    %v7136 = vld [vmem:[%s7044 + $0x2d8] sm:$0xff]
    %v7137 = vld [vmem:[%s7044 + $0x2e0] sm:$0xff]
    %v7138 = vld [vmem:[%s7044 + $0x2e8] sm:$0xff]
    %v7139 = vld [vmem:[%s7044 + $0x2f0] sm:$0xff]
    %v7140 = vld [vmem:[%s7044 + $0x2f8] sm:$0xff]
    %v7141 = vld [vmem:[%s7044 + $0x300] sm:$0xff]
    %v7142 = vld [vmem:[%s7044 + $0x308] sm:$0xff]
    %v7143 = vld [vmem:[%s7044 + $0x310] sm:$0xff]
    %v7144 = vld [vmem:[%s7044 + $0x318] sm:$0xff]
    %v7145 = vld [vmem:[%s7044 + $0x320] sm:$0xff]
    %v7146 = vld [vmem:[%s7044 + $0x328] sm:$0xff]
    %v7147 = vld [vmem:[%s7044 + $0x330] sm:$0xff]
    %v7148 = vld [vmem:[%s7044 + $0x338] sm:$0xff]
    %v7149 = vld [vmem:[%s7044 + $0x340] sm:$0xff]
    %v7150 = vld [vmem:[%s7044 + $0x348] sm:$0xff]
    %v7151 = vld [vmem:[%s7044 + $0x350] sm:$0xff]
    %v7152 = vld [vmem:[%s7044 + $0x358] sm:$0xff]
    %v7153 = vld [vmem:[%s7044 + $0x360] sm:$0xff]
    %v7154 = vld [vmem:[%s7044 + $0x368] sm:$0xff]
    %v7155 = vld [vmem:[%s7044 + $0x370] sm:$0xff]
    %v7156 = vld [vmem:[%s7044 + $0x378] sm:$0xff]
    %v7157 = vld [vmem:[%s7044 + $0x380] sm:$0xff]
    %v7158 = vld [vmem:[%s7044 + $0x388] sm:$0xff]
    %v7159 = vld [vmem:[%s7044 + $0x390] sm:$0xff]
    %v7160 = vld [vmem:[%s7044 + $0x398] sm:$0xff]
    %v7161 = vld [vmem:[%s7044 + $0x3a0] sm:$0xff]
    %v7162 = vld [vmem:[%s7044 + $0x3a8] sm:$0xff]
    %v7163 = vld [vmem:[%s7044 + $0x3b0] sm:$0xff]
    %v7164 = vld [vmem:[%s7044 + $0x3b8] sm:$0xff]
    %v7165 = vld [vmem:[%s7044 + $0x3c0] sm:$0xff]
    %v7166 = vld [vmem:[%s7044 + $0x3c8] sm:$0xff]
    %v7167 = vld [vmem:[%s7044 + $0x3d0] sm:$0xff]
    %v7168 = vld [vmem:[%s7044 + $0x3d8] sm:$0xff]
    %v7169 = vld [vmem:[%s7044 + $0x3e0] sm:$0xff]
    %v7170 = vld [vmem:[%s7044 + $0x3e8] sm:$0xff]
    %v7171 = vld [vmem:[%s7044 + $0x3f0] sm:$0xff]
    %v7172 = vld [vmem:[%s7044 + $0x3f8] sm:$0xff]
    %v7173 = vld [vmem:[%s7044 + $0x400] sm:$0xff]
    %v7174 = vld [vmem:[%s7044 + $0x408] sm:$0xff]
    %v7175 = vld [vmem:[%s7044 + $0x410] sm:$0xff]
    %v7176 = vld [vmem:[%s7044 + $0x418] sm:$0xff]
    %v7177 = vld [vmem:[%s7044 + $0x420] sm:$0xff]
    %v7178 = vld [vmem:[%s7044 + $0x428] sm:$0xff]
    %v7179 = vld [vmem:[%s7044 + $0x430] sm:$0xff]
    %v7180 = vld [vmem:[%s7044 + $0x438] sm:$0xff]
    %v7181 = vld [vmem:[%s7044 + $0x440] sm:$0xff]
    %v7182 = vld [vmem:[%s7044 + $0x448] sm:$0xff]
    %v7183 = vld [vmem:[%s7044 + $0x450] sm:$0xff]
    %v7184 = vld [vmem:[%s7044 + $0x458] sm:$0xff]
    %v7185 = vld [vmem:[%s7044 + $0x460] sm:$0xff]
    %v7186 = vld [vmem:[%s7044 + $0x468] sm:$0xff]
    %v7187 = vld [vmem:[%s7044 + $0x470] sm:$0xff]
    %v7188 = vld [vmem:[%s7044 + $0x478] sm:$0xff]
    %v7189 = vld [vmem:[%s7044 + $0x480] sm:$0xff]
    %v7190 = vld [vmem:[%s7044 + $0x488] sm:$0xff]
    %v7191 = vld [vmem:[%s7044 + $0x490] sm:$0xff]
    %v7192 = vld [vmem:[%s7044 + $0x498] sm:$0xff]
    %v7193 = vld [vmem:[%s7044 + $0x4a0] sm:$0xff]
    %v7194 = vld [vmem:[%s7044 + $0x4a8] sm:$0xff]
    %v7195 = vld [vmem:[%s7044 + $0x4b0] sm:$0xff]
    %v7196 = vld [vmem:[%s7044 + $0x4b8] sm:$0xff]
    %v7197 = vld [vmem:[%s7044 + $0x4c0] sm:$0xff]
    %v7198 = vld [vmem:[%s7044 + $0x4c8] sm:$0xff]
    %v7199 = vld [vmem:[%s7044 + $0x4d0] sm:$0xff]
    %v7200 = vld [vmem:[%s7044 + $0x4d8] sm:$0xff]
    %v7201 = vld [vmem:[%s7044 + $0x4e0] sm:$0xff]
    %v7202 = vld [vmem:[%s7044 + $0x4e8] sm:$0xff]
    %v7203 = vld [vmem:[%s7044 + $0x4f0] sm:$0xff]
    %v7204 = vld [vmem:[%s7044 + $0x4f8] sm:$0xff]
    %v7205 = vld [vmem:[%s7044 + $0x500] sm:$0xff]
    %v7206 = vld [vmem:[%s7044 + $0x508] sm:$0xff]
    %v7207 = vld [vmem:[%s7044 + $0x510] sm:$0xff]
    %v7208 = vld [vmem:[%s7044 + $0x518] sm:$0xff]
    %v7209 = vld [vmem:[%s7044 + $0x520] sm:$0xff]
    %v7210 = vld [vmem:[%s7044 + $0x528] sm:$0xff]
    %v7211 = vld [vmem:[%s7044 + $0x530] sm:$0xff]
    %v7212 = vld [vmem:[%s7044 + $0x538] sm:$0xff]
    %v7213 = vld [vmem:[%s7044 + $0x540] sm:$0xff]
    %v7214 = vld [vmem:[%s7044 + $0x548] sm:$0xff]
    %v7215 = vld [vmem:[%s7044 + $0x550] sm:$0xff]
    %v7216 = vld [vmem:[%s7044 + $0x558] sm:$0xff]
    %v7217 = vld [vmem:[%s7044 + $0x560] sm:$0xff]
    %v7218 = vld [vmem:[%s7044 + $0x568] sm:$0xff]
    %v7219 = vld [vmem:[%s7044 + $0x570] sm:$0xff]
    %v7220 = vld [vmem:[%s7044 + $0x578] sm:$0xff]
    %v7221 = vld [vmem:[%s7044 + $0x580] sm:$0xff]
    %v7222 = vld [vmem:[%s7044 + $0x588] sm:$0xff]
    %v7223 = vld [vmem:[%s7044 + $0x590] sm:$0xff]
    %v7224 = vld [vmem:[%s7044 + $0x598] sm:$0xff]
    %v7225 = vld [vmem:[%s7044 + $0x5a0] sm:$0xff]
    %v7226 = vld [vmem:[%s7044 + $0x5a8] sm:$0xff]
    %v7227 = vld [vmem:[%s7044 + $0x5b0] sm:$0xff]
    %v7228 = vld [vmem:[%s7044 + $0x5b8] sm:$0xff]
    %v7229 = vld [vmem:[%s7044 + $0x5c0] sm:$0xff]
    %v7230 = vld [vmem:[%s7044 + $0x5c8] sm:$0xff]
    %v7231 = vld [vmem:[%s7044 + $0x5d0] sm:$0xff]
    %v7232 = vld [vmem:[%s7044 + $0x5d8] sm:$0xff]
    %v7233 = vld [vmem:[%s7044 + $0x5e0] sm:$0xff]
    %v7234 = vld [vmem:[%s7044 + $0x5e8] sm:$0xff]
    %v7235 = vld [vmem:[%s7044 + $0x5f0] sm:$0xff]
    %v7236 = vld [vmem:[%s7044 + $0x5f8] sm:$0xff]
    %v7237 = vld [vmem:[%s7044 + $0x600] sm:$0xff]
    %v7238 = vld [vmem:[%s7044 + $0x608] sm:$0xff]
    %v7239 = vld [vmem:[%s7044 + $0x610] sm:$0xff]
    %v7240 = vld [vmem:[%s7044 + $0x618] sm:$0xff]
    %v7241 = vld [vmem:[%s7044 + $0x620] sm:$0xff]
    %v7242 = vld [vmem:[%s7044 + $0x628] sm:$0xff]
    %v7243 = vld [vmem:[%s7044 + $0x630] sm:$0xff]
    %v7244 = vld [vmem:[%s7044 + $0x638] sm:$0xff]
    %v7245 = vld [vmem:[%s7044 + $0x640] sm:$0xff]
    %v7246 = vld [vmem:[%s7044 + $0x648] sm:$0xff]
    %v7247 = vld [vmem:[%s7044 + $0x650] sm:$0xff]
    %v7248 = vld [vmem:[%s7044 + $0x658] sm:$0xff]
    %v7249 = vld [vmem:[%s7044 + $0x660] sm:$0xff]
    %v7250 = vld [vmem:[%s7044 + $0x668] sm:$0xff]
    %v7251 = vld [vmem:[%s7044 + $0x670] sm:$0xff]
    %v7252 = vld [vmem:[%s7044 + $0x678] sm:$0xff]
    %v7253 = vld [vmem:[%s7044 + $0x680] sm:$0xff]
    %v7254 = vld [vmem:[%s7044 + $0x688] sm:$0xff]
    %v7255 = vld [vmem:[%s7044 + $0x690] sm:$0xff]
    %v7256 = vld [vmem:[%s7044 + $0x698] sm:$0xff]
    %v7257 = vld [vmem:[%s7044 + $0x6a0] sm:$0xff]
    %v7258 = vld [vmem:[%s7044 + $0x6a8] sm:$0xff]
    %v7259 = vld [vmem:[%s7044 + $0x6b0] sm:$0xff]
    %v7260 = vld [vmem:[%s7044 + $0x6b8] sm:$0xff]
    %v7261 = vld [vmem:[%s7044 + $0x6c0] sm:$0xff]
    %v7262 = vld [vmem:[%s7044 + $0x6c8] sm:$0xff]
    %v7263 = vld [vmem:[%s7044 + $0x6d0] sm:$0xff]
    %v7264 = vld [vmem:[%s7044 + $0x6d8] sm:$0xff]
    %v7265 = vld [vmem:[%s7044 + $0x6e0] sm:$0xff]
    %v7266 = vld [vmem:[%s7044 + $0x6e8] sm:$0xff]
    %v7267 = vld [vmem:[%s7044 + $0x6f0] sm:$0xff]
    %v7268 = vld [vmem:[%s7044 + $0x6f8] sm:$0xff]
    %v7269 = vld [vmem:[%s7044 + $0x700] sm:$0xff]
    %v7270 = vld [vmem:[%s7044 + $0x708] sm:$0xff]
    %v7271 = vld [vmem:[%s7044 + $0x710] sm:$0xff]
    %v7272 = vld [vmem:[%s7044 + $0x718] sm:$0xff]
    %v7273 = vld [vmem:[%s7044 + $0x720] sm:$0xff]
    %v7274 = vld [vmem:[%s7044 + $0x728] sm:$0xff]
    %v7275 = vld [vmem:[%s7044 + $0x730] sm:$0xff]
    %v7276 = vld [vmem:[%s7044 + $0x738] sm:$0xff]
    %v7277 = vld [vmem:[%s7044 + $0x740] sm:$0xff]
    %v7278 = vld [vmem:[%s7044 + $0x748] sm:$0xff]
    %v7279 = vld [vmem:[%s7044 + $0x750] sm:$0xff]
    %v7280 = vld [vmem:[%s7044 + $0x758] sm:$0xff]
    %v7281 = vld [vmem:[%s7044 + $0x760] sm:$0xff]
    %v7282 = vld [vmem:[%s7044 + $0x768] sm:$0xff]
    %v7283 = vld [vmem:[%s7044 + $0x770] sm:$0xff]
    %v7284 = vld [vmem:[%s7044 + $0x778] sm:$0xff]
    %v7285 = vld [vmem:[%s7044 + $0x780] sm:$0xff]
    %v7286 = vld [vmem:[%s7044 + $0x788] sm:$0xff]
    %v7287 = vld [vmem:[%s7044 + $0x790] sm:$0xff]
    %v7288 = vld [vmem:[%s7044 + $0x798] sm:$0xff]
    %v7289 = vld [vmem:[%s7044 + $0x7a0] sm:$0xff]
    %v7290 = vld [vmem:[%s7044 + $0x7a8] sm:$0xff]
    %v7291 = vld [vmem:[%s7044 + $0x7b0] sm:$0xff]
    %v7292 = vld [vmem:[%s7044 + $0x7b8] sm:$0xff]
    %v7293 = vld [vmem:[%s7044 + $0x7c0] sm:$0xff]
    %v7294 = vld [vmem:[%s7044 + $0x7c8] sm:$0xff]
    %v7295 = vld [vmem:[%s7044 + $0x7d0] sm:$0xff]
    %v7296 = vld [vmem:[%s7044 + $0x7d8] sm:$0xff]
    %v7297 = vld [vmem:[%s7044 + $0x7e0] sm:$0xff]
    %v7298 = vld [vmem:[%s7044 + $0x7e8] sm:$0xff]
    %v7299 = vld [vmem:[%s7044 + $0x7f0] sm:$0xff]
    %v7300 = vld [vmem:[%s7044 + $0x7f8] sm:$0xff]
    %v7301 = vld [vmem:[%s7044 + $0x800] sm:$0xff]
    %v7302 = vld [vmem:[%s7044 + $0x808] sm:$0xff]
    %v7303 = vld [vmem:[%s7044 + $0x810] sm:$0xff]
    %v7304 = vld [vmem:[%s7044 + $0x818] sm:$0xff]
    %v7305 = vld [vmem:[%s7044 + $0x820] sm:$0xff]
    %v7306 = vld [vmem:[%s7044 + $0x828] sm:$0xff]
    %v7307 = vld [vmem:[%s7044 + $0x830] sm:$0xff]
    %v7308 = vld [vmem:[%s7044 + $0x838] sm:$0xff]
    %v7309 = vld [vmem:[%s7044 + $0x840] sm:$0xff]
    %v7310 = vld [vmem:[%s7044 + $0x848] sm:$0xff]
    %v7311 = vld [vmem:[%s7044 + $0x850] sm:$0xff]
    %v7312 = vld [vmem:[%s7044 + $0x858] sm:$0xff]
    %v7313 = vld [vmem:[%s7044 + $0x860] sm:$0xff]
    %v7314 = vld [vmem:[%s7044 + $0x868] sm:$0xff]
    %v7315 = vld [vmem:[%s7044 + $0x870] sm:$0xff]
    %v7316 = vld [vmem:[%s7044 + $0x878] sm:$0xff]
    %v7317 = vld [vmem:[%s7044 + $0x880] sm:$0xff]
    %v7318 = vld [vmem:[%s7044 + $0x888] sm:$0xff]
    %v7319 = vld [vmem:[%s7044 + $0x890] sm:$0xff]
    %v7320 = vld [vmem:[%s7044 + $0x898] sm:$0xff]
    %v7321 = vld [vmem:[%s7044 + $0x8a0] sm:$0xff]
    %v7322 = vld [vmem:[%s7044 + $0x8a8] sm:$0xff]
    %v7323 = vld [vmem:[%s7044 + $0x8b0] sm:$0xff]
    %v7324 = vld [vmem:[%s7044 + $0x8b8] sm:$0xff]
    %v7325 = vld [vmem:[%s7044 + $0x8c0] sm:$0xff]
    %v7326 = vld [vmem:[%s7044 + $0x8c8] sm:$0xff]
    %v7327 = vld [vmem:[%s7044 + $0x8d0] sm:$0xff]
    %v7328 = vld [vmem:[%s7044 + $0x8d8] sm:$0xff]
    %v7329 = vld [vmem:[%s7044 + $0x8e0] sm:$0xff]
    %v7330 = vld [vmem:[%s7044 + $0x8e8] sm:$0xff]
    %v7331 = vld [vmem:[%s7044 + $0x8f0] sm:$0xff]
    %v7332 = vld [vmem:[%s7044 + $0x8f8] sm:$0xff]
    %v7333 = vld [vmem:[%s7044 + $0x900] sm:$0xff]
    %v7334 = vld [vmem:[%s7044 + $0x908] sm:$0xff]
    %v7335 = vld [vmem:[%s7044 + $0x910] sm:$0xff]
    %v7336 = vld [vmem:[%s7044 + $0x918] sm:$0xff]
    %v7337 = vld [vmem:[%s7044 + $0x920] sm:$0xff]
    %v7338 = vld [vmem:[%s7044 + $0x928] sm:$0xff]
    %v7339 = vld [vmem:[%s7044 + $0x930] sm:$0xff]
    %v7340 = vld [vmem:[%s7044 + $0x938] sm:$0xff]
    %v7341 = vld [vmem:[%s7044 + $0x940] sm:$0xff]
    %v7342 = vld [vmem:[%s7044 + $0x948] sm:$0xff]
    %v7343 = vld [vmem:[%s7044 + $0x950] sm:$0xff]
    %v7344 = vld [vmem:[%s7044 + $0x958] sm:$0xff]
    %v7345 = vld [vmem:[%s7044 + $0x960] sm:$0xff]
    %v7346 = vld [vmem:[%s7044 + $0x968] sm:$0xff]
    %v7347 = vld [vmem:[%s7044 + $0x970] sm:$0xff]
    %v7348 = vld [vmem:[%s7044 + $0x978] sm:$0xff]
    %v7349 = vld [vmem:[%s7044 + $0x980] sm:$0xff]
    %v7350 = vld [vmem:[%s7044 + $0x988] sm:$0xff]
    %v7351 = vld [vmem:[%s7044 + $0x990] sm:$0xff]
    %v7352 = vld [vmem:[%s7044 + $0x998] sm:$0xff]
    %v7353 = vld [vmem:[%s7044 + $0x9a0] sm:$0xff]
    %v7354 = vld [vmem:[%s7044 + $0x9a8] sm:$0xff]
    %v7355 = vld [vmem:[%s7044 + $0x9b0] sm:$0xff]
    %v7356 = vld [vmem:[%s7044 + $0x9b8] sm:$0xff]
    %v7357 = vld [vmem:[%s7044 + $0x9c0] sm:$0xff]
    %v7358 = vld [vmem:[%s7044 + $0x9c8] sm:$0xff]
    %v7359 = vld [vmem:[%s7044 + $0x9d0] sm:$0xff]
    %v7360 = vld [vmem:[%s7044 + $0x9d8] sm:$0xff]
    %v7361 = vld [vmem:[%s7044 + $0x9e0] sm:$0xff]
    %v7362 = vld [vmem:[%s7044 + $0x9e8] sm:$0xff]
    %v7363 = vld [vmem:[%s7044 + $0x9f0] sm:$0xff]
    %v7364 = vld [vmem:[%s7044 + $0x9f8] sm:$0xff]
    %v7365 = vld [vmem:[%s7044 + $0xa00] sm:$0xff]
    %v7366 = vld [vmem:[%s7044 + $0xa08] sm:$0xff]
    %v7367 = vld [vmem:[%s7044 + $0xa10] sm:$0xff]
    %v7368 = vld [vmem:[%s7044 + $0xa18] sm:$0xff]
    %v7369 = vld [vmem:[%s7044 + $0xa20] sm:$0xff]
    %v7370 = vld [vmem:[%s7044 + $0xa28] sm:$0xff]
    %v7371 = vld [vmem:[%s7044 + $0xa30] sm:$0xff]
    %v7372 = vld [vmem:[%s7044 + $0xa38] sm:$0xff]
    %v7373 = vld [vmem:[%s7044 + $0xa40] sm:$0xff]
    %v7374 = vld [vmem:[%s7044 + $0xa48] sm:$0xff]
    %v7375 = vld [vmem:[%s7044 + $0xa50] sm:$0xff]
    %v7376 = vld [vmem:[%s7044 + $0xa58] sm:$0xff]
    %v7377 = vld [vmem:[%s7044 + $0xa60] sm:$0xff]
    %v7378 = vld [vmem:[%s7044 + $0xa68] sm:$0xff]
    %v7379 = vld [vmem:[%s7044 + $0xa70] sm:$0xff]
    %v7380 = vld [vmem:[%s7044 + $0xa78] sm:$0xff]
    %v7381 = vld [vmem:[%s7044 + $0xa80] sm:$0xff]
    %v7382 = vld [vmem:[%s7044 + $0xa88] sm:$0xff]
    %v7383 = vld [vmem:[%s7044 + $0xa90] sm:$0xff]
    %v7384 = vld [vmem:[%s7044 + $0xa98] sm:$0xff]
    %v7385 = vld [vmem:[%s7044 + $0xaa0] sm:$0xff]
    %v7386 = vld [vmem:[%s7044 + $0xaa8] sm:$0xff]
    %v7387 = vld [vmem:[%s7044 + $0xab0] sm:$0xff]
    %v7388 = vld [vmem:[%s7044 + $0xab8] sm:$0xff]
    %v7389 = vld [vmem:[%s7044 + $0xac0] sm:$0xff]
    %v7390 = vld [vmem:[%s7044 + $0xac8] sm:$0xff]
    %v7391 = vld [vmem:[%s7044 + $0xad0] sm:$0xff]
    %v7392 = vld [vmem:[%s7044 + $0xad8] sm:$0xff]
    %v7393 = vld [vmem:[%s7044 + $0xae0] sm:$0xff]
    %v7394 = vld [vmem:[%s7044 + $0xae8] sm:$0xff]
    %v7395 = vld [vmem:[%s7044 + $0xaf0] sm:$0xff]
    %v7396 = vld [vmem:[%s7044 + $0xaf8] sm:$0xff]
    %v7397 = vld [vmem:[%s7044 + $0xb00] sm:$0xff]
    %v7398 = vld [vmem:[%s7044 + $0xb08] sm:$0xff]
    %v7399 = vld [vmem:[%s7044 + $0xb10] sm:$0xff]
    %v7400 = vld [vmem:[%s7044 + $0xb18] sm:$0xff]
    %v7401 = vld [vmem:[%s7044 + $0xb20] sm:$0xff]
    %v7402 = vld [vmem:[%s7044 + $0xb28] sm:$0xff]
    %v7403 = vld [vmem:[%s7044 + $0xb30] sm:$0xff]
    %v7404 = vld [vmem:[%s7044 + $0xb38] sm:$0xff]
    %v7405 = vld [vmem:[%s7044 + $0xb40] sm:$0xff]
    %v7406 = vld [vmem:[%s7044 + $0xb48] sm:$0xff]
    %v7407 = vld [vmem:[%s7044 + $0xb50] sm:$0xff]
    %v7408 = vld [vmem:[%s7044 + $0xb58] sm:$0xff]
    %v7409 = vld [vmem:[%s7044 + $0xb60] sm:$0xff]
    %v7410 = vld [vmem:[%s7044 + $0xb68] sm:$0xff]
    %v7411 = vld [vmem:[%s7044 + $0xb70] sm:$0xff]
    %v7412 = vld [vmem:[%s7044 + $0xb78] sm:$0xff]
    %v7413 = vld [vmem:[%s7044 + $0xb80] sm:$0xff]
    %v7414 = vld [vmem:[%s7044 + $0xb88] sm:$0xff]
    %v7415 = vld [vmem:[%s7044 + $0xb90] sm:$0xff]
    %v7416 = vld [vmem:[%s7044 + $0xb98] sm:$0xff]
    %v7417 = vld [vmem:[%s7044 + $0xba0] sm:$0xff]
    %v7418 = vld [vmem:[%s7044 + $0xba8] sm:$0xff]
    %v7419 = vld [vmem:[%s7044 + $0xbb0] sm:$0xff]
    %v7420 = vld [vmem:[%s7044 + $0xbb8] sm:$0xff]
    %v7421 = vld [vmem:[%s7044 + $0xbc0] sm:$0xff]
    %v7422 = vld [vmem:[%s7044 + $0xbc8] sm:$0xff]
    %v7423 = vld [vmem:[%s7044 + $0xbd0] sm:$0xff]
    %v7424 = vld [vmem:[%s7044 + $0xbd8] sm:$0xff]
    %v7425 = vld [vmem:[%s7044 + $0xbe0] sm:$0xff]
    %v7426 = vld [vmem:[%s7044 + $0xbe8] sm:$0xff]
    %v7427 = vld [vmem:[%s7044 + $0xbf0] sm:$0xff]
    %v7428 = vld [vmem:[%s7044 + $0xbf8] sm:$0xff]
    %v7429 = vld [vmem:[%s7044 + $0xc00] sm:$0xff]
    %v7430 = vld [vmem:[%s7044 + $0xc08] sm:$0xff]
    %v7431 = vld [vmem:[%s7044 + $0xc10] sm:$0xff]
    %v7432 = vld [vmem:[%s7044 + $0xc18] sm:$0xff]
    %v7433 = vld [vmem:[%s7044 + $0xc20] sm:$0xff]
    %v7434 = vld [vmem:[%s7044 + $0xc28] sm:$0xff]
    %v7435 = vld [vmem:[%s7044 + $0xc30] sm:$0xff]
    %v7436 = vld [vmem:[%s7044 + $0xc38] sm:$0xff]
    %v7437 = vld [vmem:[%s7044 + $0xc40] sm:$0xff]
    %v7438 = vld [vmem:[%s7044 + $0xc48] sm:$0xff]
    %v7439 = vld [vmem:[%s7044 + $0xc50] sm:$0xff]
    %v7440 = vld [vmem:[%s7044 + $0xc58] sm:$0xff]
    %v7441 = vld [vmem:[%s7044 + $0xc60] sm:$0xff]
    %v7442 = vld [vmem:[%s7044 + $0xc68] sm:$0xff]
    %v7443 = vld [vmem:[%s7044 + $0xc70] sm:$0xff]
    %v7444 = vld [vmem:[%s7044 + $0xc78] sm:$0xff]
    %v7445 = vld [vmem:[%s7044 + $0xc80] sm:$0xff]
    %v7446 = vld [vmem:[%s7044 + $0xc88] sm:$0xff]
    %v7447 = vld [vmem:[%s7044 + $0xc90] sm:$0xff]
    %v7448 = vld [vmem:[%s7044 + $0xc98] sm:$0xff]
    %v7449 = vld [vmem:[%s7044 + $0xca0] sm:$0xff]
    %v7450 = vld [vmem:[%s7044 + $0xca8] sm:$0xff]
    %v7451 = vld [vmem:[%s7044 + $0xcb0] sm:$0xff]
    %v7452 = vld [vmem:[%s7044 + $0xcb8] sm:$0xff]
    %v7453 = vld [vmem:[%s7044 + $0xcc0] sm:$0xff]
    %v7454 = vld [vmem:[%s7044 + $0xcc8] sm:$0xff]
    %v7455 = vld [vmem:[%s7044 + $0xcd0] sm:$0xff]
    %v7456 = vld [vmem:[%s7044 + $0xcd8] sm:$0xff]
    %v7457 = vld [vmem:[%s7044 + $0xce0] sm:$0xff]
    %v7458 = vld [vmem:[%s7044 + $0xce8] sm:$0xff]
    %v7459 = vld [vmem:[%s7044 + $0xcf0] sm:$0xff]
    %v7460 = vld [vmem:[%s7044 + $0xcf8] sm:$0xff]
    %v7461 = vld [vmem:[%s7044 + $0xd00] sm:$0xff]
    %v7462 = vld [vmem:[%s7044 + $0xd08] sm:$0xff]
    %v7463 = vld [vmem:[%s7044 + $0xd10] sm:$0xff]
    %v7464 = vld [vmem:[%s7044 + $0xd18] sm:$0xff]
    %v7465 = vld [vmem:[%s7044 + $0xd20] sm:$0xff]
    %v7466 = vld [vmem:[%s7044 + $0xd28] sm:$0xff]
    %v7467 = vld [vmem:[%s7044 + $0xd30] sm:$0xff]
    %v7468 = vld [vmem:[%s7044 + $0xd38] sm:$0xff]
    %v7469 = vld [vmem:[%s7044 + $0xd40] sm:$0xff]
    %v7470 = vld [vmem:[%s7044 + $0xd48] sm:$0xff]
    %v7471 = vld [vmem:[%s7044 + $0xd50] sm:$0xff]
    %v7472 = vld [vmem:[%s7044 + $0xd58] sm:$0xff]
    %v7473 = vld [vmem:[%s7044 + $0xd60] sm:$0xff]
    %v7474 = vld [vmem:[%s7044 + $0xd68] sm:$0xff]
    %v7475 = vld [vmem:[%s7044 + $0xd70] sm:$0xff]
    %v7476 = vld [vmem:[%s7044 + $0xd78] sm:$0xff]
    %v7477 = vld [vmem:[%s7044 + $0xd80] sm:$0xff]
    %v7478 = vld [vmem:[%s7044 + $0xd88] sm:$0xff]
    %v7479 = vld [vmem:[%s7044 + $0xd90] sm:$0xff]
    %v7480 = vld [vmem:[%s7044 + $0xd98] sm:$0xff]
    %v7481 = vld [vmem:[%s7044 + $0xda0] sm:$0xff]
    %v7482 = vld [vmem:[%s7044 + $0xda8] sm:$0xff]
    %v7483 = vld [vmem:[%s7044 + $0xdb0] sm:$0xff]
    %v7484 = vld [vmem:[%s7044 + $0xdb8] sm:$0xff]
    %v7485 = vld [vmem:[%s7044 + $0xdc0] sm:$0xff]
    %v7486 = vld [vmem:[%s7044 + $0xdc8] sm:$0xff]
    %v7487 = vld [vmem:[%s7044 + $0xdd0] sm:$0xff]
    %v7488 = vld [vmem:[%s7044 + $0xdd8] sm:$0xff]
    %v7489 = vld [vmem:[%s7044 + $0xde0] sm:$0xff]
    %v7490 = vld [vmem:[%s7044 + $0xde8] sm:$0xff]
    %v7491 = vld [vmem:[%s7044 + $0xdf0] sm:$0xff]
    %v7492 = vld [vmem:[%s7044 + $0xdf8] sm:$0xff]
    %v7493 = vld [vmem:[%s7044 + $0xe00] sm:$0xff]
    %v7494 = vld [vmem:[%s7044 + $0xe08] sm:$0xff]
    %v7495 = vld [vmem:[%s7044 + $0xe10] sm:$0xff]
    %v7496 = vld [vmem:[%s7044 + $0xe18] sm:$0xff]
    %v7497 = vld [vmem:[%s7044 + $0xe20] sm:$0xff]
    %v7498 = vld [vmem:[%s7044 + $0xe28] sm:$0xff]
    %v7499 = vld [vmem:[%s7044 + $0xe30] sm:$0xff]
    %v7500 = vld [vmem:[%s7044 + $0xe38] sm:$0xff]
    %v7501 = vld [vmem:[%s7044 + $0xe40] sm:$0xff]
    %v7502 = vld [vmem:[%s7044 + $0xe48] sm:$0xff]
    %v7503 = vld [vmem:[%s7044 + $0xe50] sm:$0xff]
    %v7504 = vld [vmem:[%s7044 + $0xe58] sm:$0xff]
    %v7505 = vld [vmem:[%s7044 + $0xe60] sm:$0xff]
    %v7506 = vld [vmem:[%s7044 + $0xe68] sm:$0xff]
    %v7507 = vld [vmem:[%s7044 + $0xe70] sm:$0xff]
    %v7508 = vld [vmem:[%s7044 + $0xe78] sm:$0xff]
    %v7509 = vld [vmem:[%s7044 + $0xe80] sm:$0xff]
    %v7510 = vld [vmem:[%s7044 + $0xe88] sm:$0xff]
    %v7511 = vld [vmem:[%s7044 + $0xe90] sm:$0xff]
    %v7512 = vld [vmem:[%s7044 + $0xe98] sm:$0xff]
    %v7513 = vld [vmem:[%s7044 + $0xea0] sm:$0xff]
    %v7514 = vld [vmem:[%s7044 + $0xea8] sm:$0xff]
    %v7515 = vld [vmem:[%s7044 + $0xeb0] sm:$0xff]
    %v7516 = vld [vmem:[%s7044 + $0xeb8] sm:$0xff]
    %v7517 = vld [vmem:[%s7044 + $0xec0] sm:$0xff]
    %v7518 = vld [vmem:[%s7044 + $0xec8] sm:$0xff]
    %v7519 = vld [vmem:[%s7044 + $0xed0] sm:$0xff]
    %v7520 = vld [vmem:[%s7044 + $0xed8] sm:$0xff]
    %v7521 = vld [vmem:[%s7044 + $0xee0] sm:$0xff]
    %v7522 = vld [vmem:[%s7044 + $0xee8] sm:$0xff]
    %v7523 = vld [vmem:[%s7044 + $0xef0] sm:$0xff]
    %v7524 = vld [vmem:[%s7044 + $0xef8] sm:$0xff]
    %v7525 = vld [vmem:[%s7044 + $0xf00] sm:$0xff]
    %v7526 = vld [vmem:[%s7044 + $0xf08] sm:$0xff]
    %v7527 = vld [vmem:[%s7044 + $0xf10] sm:$0xff]
    %v7528 = vld [vmem:[%s7044 + $0xf18] sm:$0xff]
    %v7529 = vld [vmem:[%s7044 + $0xf20] sm:$0xff]
    %v7530 = vld [vmem:[%s7044 + $0xf28] sm:$0xff]
    %v7531 = vld [vmem:[%s7044 + $0xf30] sm:$0xff]
    %v7532 = vld [vmem:[%s7044 + $0xf38] sm:$0xff]
    %v7533 = vld [vmem:[%s7044 + $0xf40] sm:$0xff]
    %v7534 = vld [vmem:[%s7044 + $0xf48] sm:$0xff]
    %v7535 = vld [vmem:[%s7044 + $0xf50] sm:$0xff]
    %v7536 = vld [vmem:[%s7044 + $0xf58] sm:$0xff]
    %v7537 = vld [vmem:[%s7044 + $0xf60] sm:$0xff]
    %v7538 = vld [vmem:[%s7044 + $0xf68] sm:$0xff]
    %v7539 = vld [vmem:[%s7044 + $0xf70] sm:$0xff]
    %v7540 = vld [vmem:[%s7044 + $0xf78] sm:$0xff]
    %v7541 = vld [vmem:[%s7044 + $0xf80] sm:$0xff]
    %v7542 = vld [vmem:[%s7044 + $0xf88] sm:$0xff]
    %v7543 = vld [vmem:[%s7044 + $0xf90] sm:$0xff]
    %v7544 = vld [vmem:[%s7044 + $0xf98] sm:$0xff]
    %v7545 = vld [vmem:[%s7044 + $0xfa0] sm:$0xff]
    %v7546 = vld [vmem:[%s7044 + $0xfa8] sm:$0xff]
    %v7547 = vld [vmem:[%s7044 + $0xfb0] sm:$0xff]
    %v7548 = vld [vmem:[%s7044 + $0xfb8] sm:$0xff]
    %v7549 = vld [vmem:[%s7044 + $0xfc0] sm:$0xff]
    %v7550 = vld [vmem:[%s7044 + $0xfc8] sm:$0xff]
    %v7551 = vld [vmem:[%s7044 + $0xfd0] sm:$0xff]
    %v7552 = vld [vmem:[%s7044 + $0xfd8] sm:$0xff]
    %v7553 = vld [vmem:[%s7044 + $0xfe0] sm:$0xff]
    %v7554 = vld [vmem:[%s7044 + $0xfe8] sm:$0xff]
    %v7555 = vld [vmem:[%s7044 + $0xff0] sm:$0xff]
    %v7556 = vld [vmem:[%s7044 + $0xff8] sm:$0xff]
    %v7557 = vld [vmem:[%s7044 + $0x1000] sm:$0xff]
    %v7558 = vld [vmem:[%s7044 + $0x1008] sm:$0xff]
    %v7559 = vld [vmem:[%s7044 + $0x1010] sm:$0xff]
    %v7560 = vld [vmem:[%s7044 + $0x1018] sm:$0xff]
    %v7561 = vld [vmem:[%s7044 + $0x1020] sm:$0xff]
    %v7562 = vld [vmem:[%s7044 + $0x1028] sm:$0xff]
    %v7563 = vld [vmem:[%s7044 + $0x1030] sm:$0xff]
    %v7564 = vld [vmem:[%s7044 + $0x1038] sm:$0xff]
    %v7565 = vld [vmem:[%s7044 + $0x1040] sm:$0xff]
    %v7566 = vld [vmem:[%s7044 + $0x1048] sm:$0xff]
    %v7567 = vld [vmem:[%s7044 + $0x1050] sm:$0xff]
    %v7568 = vld [vmem:[%s7044 + $0x1058] sm:$0xff]
    %v7569 = vld [vmem:[%s7044 + $0x1060] sm:$0xff]
    %v7570 = vld [vmem:[%s7044 + $0x1068] sm:$0xff]
    %v7571 = vld [vmem:[%s7044 + $0x1070] sm:$0xff]
    %v7572 = vld [vmem:[%s7044 + $0x1078] sm:$0xff]
    %v7573 = vld [vmem:[%s7044 + $0x1080] sm:$0xff]
    %v7574 = vld [vmem:[%s7044 + $0x1088] sm:$0xff]
    %v7575 = vld [vmem:[%s7044 + $0x1090] sm:$0xff]
    %v7576 = vld [vmem:[%s7044 + $0x1098] sm:$0xff]
    %v7577 = vld [vmem:[%s7044 + $0x10a0] sm:$0xff]
    %v7578 = vld [vmem:[%s7044 + $0x10a8] sm:$0xff]
    %v7579 = vld [vmem:[%s7044 + $0x10b0] sm:$0xff]
    %v7580 = vld [vmem:[%s7044 + $0x10b8] sm:$0xff]
    %v7581 = vld [vmem:[%s7044 + $0x10c0] sm:$0xff]
    %v7582 = vld [vmem:[%s7044 + $0x10c8] sm:$0xff]
    %v7583 = vld [vmem:[%s7044 + $0x10d0] sm:$0xff]
    %v7584 = vld [vmem:[%s7044 + $0x10d8] sm:$0xff]
    %v7585 = vld [vmem:[%s7044 + $0x10e0] sm:$0xff]
    %v7586 = vld [vmem:[%s7044 + $0x10e8] sm:$0xff]
    %v7587 = vld [vmem:[%s7044 + $0x10f0] sm:$0xff]
    %v7588 = vld [vmem:[%s7044 + $0x10f8] sm:$0xff]
    %v7589 = vld [vmem:[%s7044 + $0x1100] sm:$0xff]
    %v7590 = vld [vmem:[%s7044 + $0x1108] sm:$0xff]
    %v7591 = vld [vmem:[%s7044 + $0x1110] sm:$0xff]
    %v7592 = vld [vmem:[%s7044 + $0x1118] sm:$0xff]
    %v7593 = vld [vmem:[%s7044 + $0x1120] sm:$0xff]
    %v7594 = vld [vmem:[%s7044 + $0x1128] sm:$0xff]
    %v7595 = vld [vmem:[%s7044 + $0x1130] sm:$0xff]
    %v7596 = vld [vmem:[%s7044 + $0x1138] sm:$0xff]
    %v7597 = vld [vmem:[%s7044 + $0x1140] sm:$0xff]
    %v7598 = vld [vmem:[%s7044 + $0x1148] sm:$0xff]
    %v7599 = vld [vmem:[%s7044 + $0x1150] sm:$0xff]
    %v7600 = vld [vmem:[%s7044 + $0x1158] sm:$0xff]
    %v7601 = vld [vmem:[%s7044 + $0x1160] sm:$0xff]
    %v7602 = vld [vmem:[%s7044 + $0x1168] sm:$0xff]
    %v7603 = vld [vmem:[%s7044 + $0x1170] sm:$0xff]
    %v7604 = vld [vmem:[%s7044 + $0x1178] sm:$0xff]
    %v7605 = vld [vmem:[%s7044 + $0x1180] sm:$0xff]
    %v7606 = vld [vmem:[%s7044 + $0x1188] sm:$0xff]
    %v7607 = vld [vmem:[%s7044 + $0x1190] sm:$0xff]
    %v7608 = vld [vmem:[%s7044 + $0x1198] sm:$0xff]
    %v7609 = vld [vmem:[%s7044 + $0x11a0] sm:$0xff]
    %v7610 = vld [vmem:[%s7044 + $0x11a8] sm:$0xff]
    %v7611 = vld [vmem:[%s7044 + $0x11b0] sm:$0xff]
    %v7612 = vld [vmem:[%s7044 + $0x11b8] sm:$0xff]
    %v7613 = vld [vmem:[%s7044 + $0x11c0] sm:$0xff]
    %v7614 = vld [vmem:[%s7044 + $0x11c8] sm:$0xff]
    %v7615 = vld [vmem:[%s7044 + $0x11d0] sm:$0xff]
    %v7616 = vld [vmem:[%s7044 + $0x11d8] sm:$0xff]
    %v7617 = vld [vmem:[%s7044 + $0x11e0] sm:$0xff]
    %v7618 = vld [vmem:[%s7044 + $0x11e8] sm:$0xff]
    %v7619 = vld [vmem:[%s7044 + $0x11f0] sm:$0xff]
    %v7620 = vld [vmem:[%s7044 + $0x11f8] sm:$0xff]
    %v7621 = vld [vmem:[%s7044 + $0x1200] sm:$0xff]
    %v7622 = vld [vmem:[%s7044 + $0x1208] sm:$0xff]
    %v7623 = vld [vmem:[%s7044 + $0x1210] sm:$0xff]
    %v7624 = vld [vmem:[%s7044 + $0x1218] sm:$0xff]
    %v7625 = vld [vmem:[%s7044 + $0x1220] sm:$0xff]
    %v7626 = vld [vmem:[%s7044 + $0x1228] sm:$0xff]
    %v7627 = vld [vmem:[%s7044 + $0x1230] sm:$0xff]
    %v7628 = vld [vmem:[%s7044 + $0x1238] sm:$0xff]
    %v7629 = vld [vmem:[%s7044 + $0x1240] sm:$0xff]
    %v7630 = vld [vmem:[%s7044 + $0x1248] sm:$0xff]
    %v7631 = vld [vmem:[%s7044 + $0x1250] sm:$0xff]
    %v7632 = vld [vmem:[%s7044 + $0x1258] sm:$0xff]
    %v7633 = vld [vmem:[%s7044 + $0x1260] sm:$0xff]
    %v7634 = vld [vmem:[%s7044 + $0x1268] sm:$0xff]
    %v7635 = vld [vmem:[%s7044 + $0x1270] sm:$0xff]
    %v7636 = vld [vmem:[%s7044 + $0x1278] sm:$0xff]
    %v7637 = vld [vmem:[%s7044 + $0x1280] sm:$0xff]
    %v7638 = vld [vmem:[%s7044 + $0x1288] sm:$0xff]
    %v7639 = vld [vmem:[%s7044 + $0x1290] sm:$0xff]
    %v7640 = vld [vmem:[%s7044 + $0x1298] sm:$0xff]
    %v7641 = vld [vmem:[%s7044 + $0x12a0] sm:$0xff]
    %v7642 = vld [vmem:[%s7044 + $0x12a8] sm:$0xff]
    %v7643 = vld [vmem:[%s7044 + $0x12b0] sm:$0xff]
    %v7644 = vld [vmem:[%s7044 + $0x12b8] sm:$0xff]
    %v7645 = vld [vmem:[%s7044 + $0x12c0] sm:$0xff]
    %v7646 = vld [vmem:[%s7044 + $0x12c8] sm:$0xff]
    %v7647 = vld [vmem:[%s7044 + $0x12d0] sm:$0xff]
    %v7648 = vld [vmem:[%s7044 + $0x12d8] sm:$0xff]
    %v7649 = vld [vmem:[%s7044 + $0x12e0] sm:$0xff]
    %v7650 = vld [vmem:[%s7044 + $0x12e8] sm:$0xff]
    %v7651 = vld [vmem:[%s7044 + $0x12f0] sm:$0xff]
    %v7652 = vld [vmem:[%s7044 + $0x12f8] sm:$0xff]
    %v7653 = vld [vmem:[%s7044 + $0x1300] sm:$0xff]
    %v7654 = vld [vmem:[%s7044 + $0x1308] sm:$0xff]
    %v7655 = vld [vmem:[%s7044 + $0x1310] sm:$0xff]
    %v7656 = vld [vmem:[%s7044 + $0x1318] sm:$0xff]
    %v7657 = vld [vmem:[%s7044 + $0x1320] sm:$0xff]
    %v7658 = vld [vmem:[%s7044 + $0x1328] sm:$0xff]
    %v7659 = vld [vmem:[%s7044 + $0x1330] sm:$0xff]
    %v7660 = vld [vmem:[%s7044 + $0x1338] sm:$0xff]
    %v7661 = vld [vmem:[%s7044 + $0x1340] sm:$0xff]
    %v7662 = vld [vmem:[%s7044 + $0x1348] sm:$0xff]
    %v7663 = vld [vmem:[%s7044 + $0x1350] sm:$0xff]
    %v7664 = vld [vmem:[%s7044 + $0x1358] sm:$0xff]
    %v7665 = vld [vmem:[%s7044 + $0x1360] sm:$0xff]
    %v7666 = vld [vmem:[%s7044 + $0x1368] sm:$0xff]
    %v7667 = vld [vmem:[%s7044 + $0x1370] sm:$0xff]
    %v7668 = vld [vmem:[%s7044 + $0x1378] sm:$0xff]
    %v7669 = vld [vmem:[%s7044 + $0x1380] sm:$0xff]
    %v7670 = vld [vmem:[%s7044 + $0x1388] sm:$0xff]
    %v7671 = vld [vmem:[%s7044 + $0x1390] sm:$0xff]
    %v7672 = vld [vmem:[%s7044 + $0x1398] sm:$0xff]
    %v7673 = vld [vmem:[%s7044 + $0x13a0] sm:$0xff]
    %v7674 = vld [vmem:[%s7044 + $0x13a8] sm:$0xff]
    %v7675 = vld [vmem:[%s7044 + $0x13b0] sm:$0xff]
    %v7676 = vld [vmem:[%s7044 + $0x13b8] sm:$0xff]
    %v7677 = vld [vmem:[%s7044 + $0x13c0] sm:$0xff]
    %v7678 = vld [vmem:[%s7044 + $0x13c8] sm:$0xff]
    %v7679 = vld [vmem:[%s7044 + $0x13d0] sm:$0xff]
    %v7680 = vld [vmem:[%s7044 + $0x13d8] sm:$0xff]
    %v7681 = vld [vmem:[%s7044 + $0x13e0] sm:$0xff]
    %v7682 = vld [vmem:[%s7044 + $0x13e8] sm:$0xff]
    %v7683 = vld [vmem:[%s7044 + $0x13f0] sm:$0xff]
    %v7684 = vld [vmem:[%s7044 + $0x13f8] sm:$0xff]
    %v7685 = vld [vmem:[%s7044 + $0x1400] sm:$0xff]
    %v7686 = vld [vmem:[%s7044 + $0x1408] sm:$0xff]
    %v7687 = vld [vmem:[%s7044 + $0x1410] sm:$0xff]
    %v7688 = vld [vmem:[%s7044 + $0x1418] sm:$0xff]
    %v7689 = vld [vmem:[%s7044 + $0x1420] sm:$0xff]
    %v7690 = vld [vmem:[%s7044 + $0x1428] sm:$0xff]
    %v7691 = vld [vmem:[%s7044 + $0x1430] sm:$0xff]
    %v7692 = vld [vmem:[%s7044 + $0x1438] sm:$0xff]
    %v7693 = vld [vmem:[%s7044 + $0x1440] sm:$0xff]
    %v7694 = vld [vmem:[%s7044 + $0x1448] sm:$0xff]
    %v7695 = vld [vmem:[%s7044 + $0x1450] sm:$0xff]
    %v7696 = vld [vmem:[%s7044 + $0x1458] sm:$0xff]
    %v7697 = vld [vmem:[%s7044 + $0x1460] sm:$0xff]
    %v7698 = vld [vmem:[%s7044 + $0x1468] sm:$0xff]
    %v7699 = vld [vmem:[%s7044 + $0x1470] sm:$0xff]
    %v7700 = vld [vmem:[%s7044 + $0x1478] sm:$0xff]
    %v7701 = vld [vmem:[%s7044 + $0x1480] sm:$0xff]
    %v7702 = vld [vmem:[%s7044 + $0x1488] sm:$0xff]
    %v7703 = vld [vmem:[%s7044 + $0x1490] sm:$0xff]
    %v7704 = vld [vmem:[%s7044 + $0x1498] sm:$0xff]
    %v7705 = vld [vmem:[%s7044 + $0x14a0] sm:$0xff]
    %v7706 = vld [vmem:[%s7044 + $0x14a8] sm:$0xff]
    %v7707 = vld [vmem:[%s7044 + $0x14b0] sm:$0xff]
    %v7708 = vld [vmem:[%s7044 + $0x14b8] sm:$0xff]
    %v7709 = vld [vmem:[%s7044 + $0x14c0] sm:$0xff]
    %v7710 = vld [vmem:[%s7044 + $0x14c8] sm:$0xff]
    %v7711 = vld [vmem:[%s7044 + $0x14d0] sm:$0xff]
    %v7712 = vld [vmem:[%s7044 + $0x14d8] sm:$0xff]
    %v7713 = vld [vmem:[%s7044 + $0x14e0] sm:$0xff]
    %v7714 = vld [vmem:[%s7044 + $0x14e8] sm:$0xff]
    %v7715 = vld [vmem:[%s7044 + $0x14f0] sm:$0xff]
    %v7716 = vld [vmem:[%s7044 + $0x14f8] sm:$0xff]
    %v7717 = vld [vmem:[%s7044 + $0x1500] sm:$0xff]
    %v7718 = vld [vmem:[%s7044 + $0x1508] sm:$0xff]
    %v7719 = vld [vmem:[%s7044 + $0x1510] sm:$0xff]
    %v7720 = vld [vmem:[%s7044 + $0x1518] sm:$0xff]
    %v7721 = vld [vmem:[%s7044 + $0x1520] sm:$0xff]
    %v7722 = vld [vmem:[%s7044 + $0x1528] sm:$0xff]
    %v7723 = vld [vmem:[%s7044 + $0x1530] sm:$0xff]
    %v7724 = vld [vmem:[%s7044 + $0x1538] sm:$0xff]
    %v7725 = vld [vmem:[%s7044 + $0x1540] sm:$0xff]
    %v7726 = vld [vmem:[%s7044 + $0x1548] sm:$0xff]
    %v7727 = vld [vmem:[%s7044 + $0x1550] sm:$0xff]
    %v7728 = vld [vmem:[%s7044 + $0x1558] sm:$0xff]
    %v7729 = vld [vmem:[%s7044 + $0x1560] sm:$0xff]
    %v7730 = vld [vmem:[%s7044 + $0x1568] sm:$0xff]
    %v7731 = vld [vmem:[%s7044 + $0x1570] sm:$0xff]
    %v7732 = vld [vmem:[%s7044 + $0x1578] sm:$0xff]
    %v7733 = vld [vmem:[%s7044 + $0x1580] sm:$0xff]
    %v7734 = vld [vmem:[%s7044 + $0x1588] sm:$0xff]
    %v7735 = vld [vmem:[%s7044 + $0x1590] sm:$0xff]
    %v7736 = vld [vmem:[%s7044 + $0x1598] sm:$0xff]
    %v7737 = vld [vmem:[%s7044 + $0x15a0] sm:$0xff]
    %v7738 = vld [vmem:[%s7044 + $0x15a8] sm:$0xff]
    %v7739 = vld [vmem:[%s7044 + $0x15b0] sm:$0xff]
    %v7740 = vld [vmem:[%s7044 + $0x15b8] sm:$0xff]
    %v7741 = vld [vmem:[%s7044 + $0x15c0] sm:$0xff]
    %v7742 = vld [vmem:[%s7044 + $0x15c8] sm:$0xff]
    %v7743 = vld [vmem:[%s7044 + $0x15d0] sm:$0xff]
    %v7744 = vld [vmem:[%s7044 + $0x15d8] sm:$0xff]
    %v7745 = vld [vmem:[%s7044 + $0x15e0] sm:$0xff]
    %v7746 = vld [vmem:[%s7044 + $0x15e8] sm:$0xff]
    %v7747 = vld [vmem:[%s7044 + $0x15f0] sm:$0xff]
    %v7748 = vld [vmem:[%s7044 + $0x15f8] sm:$0xff]
    %v7749 = vld [vmem:[%s7044 + $0x1600] sm:$0xff]
    %v7750 = vld [vmem:[%s7044 + $0x1608] sm:$0xff]
    %v7751 = vld [vmem:[%s7044 + $0x1610] sm:$0xff]
    %v7752 = vld [vmem:[%s7044 + $0x1618] sm:$0xff]
    %v7753 = vld [vmem:[%s7044 + $0x1620] sm:$0xff]
    %v7754 = vld [vmem:[%s7044 + $0x1628] sm:$0xff]
    %v7755 = vld [vmem:[%s7044 + $0x1630] sm:$0xff]
    %v7756 = vld [vmem:[%s7044 + $0x1638] sm:$0xff]
    %v7757 = vld [vmem:[%s7044 + $0x1640] sm:$0xff]
    %v7758 = vld [vmem:[%s7044 + $0x1648] sm:$0xff]
    %v7759 = vld [vmem:[%s7044 + $0x1650] sm:$0xff]
    %v7760 = vld [vmem:[%s7044 + $0x1658] sm:$0xff]
    %v7761 = vld [vmem:[%s7044 + $0x1660] sm:$0xff]
    %v7762 = vld [vmem:[%s7044 + $0x1668] sm:$0xff]
    %v7763 = vld [vmem:[%s7044 + $0x1670] sm:$0xff]
    %v7764 = vld [vmem:[%s7044 + $0x1678] sm:$0xff]
    %v7765 = vld [vmem:[%s7044 + $0x1680] sm:$0xff]
    %v7766 = vld [vmem:[%s7044 + $0x1688] sm:$0xff]
    %v7767 = vld [vmem:[%s7044 + $0x1690] sm:$0xff]
    %v7768 = vld [vmem:[%s7044 + $0x1698] sm:$0xff]
    %v7769 = vld [vmem:[%s7044 + $0x16a0] sm:$0xff]
    %v7770 = vld [vmem:[%s7044 + $0x16a8] sm:$0xff]
    %v7771 = vld [vmem:[%s7044 + $0x16b0] sm:$0xff]
    %v7772 = vld [vmem:[%s7044 + $0x16b8] sm:$0xff]
    %v7773 = vld [vmem:[%s7044 + $0x16c0] sm:$0xff]
    %v7774 = vld [vmem:[%s7044 + $0x16c8] sm:$0xff]
    %v7775 = vld [vmem:[%s7044 + $0x16d0] sm:$0xff]
    %v7776 = vld [vmem:[%s7044 + $0x16d8] sm:$0xff]
    %v7777 = vld [vmem:[%s7044 + $0x16e0] sm:$0xff]
    %v7778 = vld [vmem:[%s7044 + $0x16e8] sm:$0xff]
    %v7779 = vld [vmem:[%s7044 + $0x16f0] sm:$0xff]
    %v7780 = vld [vmem:[%s7044 + $0x16f8] sm:$0xff]
    %v7781 = vld [vmem:[%s7044 + $0x1700] sm:$0xff]
    %v7782 = vld [vmem:[%s7044 + $0x1708] sm:$0xff]
    %v7783 = vld [vmem:[%s7044 + $0x1710] sm:$0xff]
    %v7784 = vld [vmem:[%s7044 + $0x1718] sm:$0xff]
    %v7785 = vld [vmem:[%s7044 + $0x1720] sm:$0xff]
    %v7786 = vld [vmem:[%s7044 + $0x1728] sm:$0xff]
    %v7787 = vld [vmem:[%s7044 + $0x1730] sm:$0xff]
    %v7788 = vld [vmem:[%s7044 + $0x1738] sm:$0xff]
    %v7789 = vld [vmem:[%s7044 + $0x1740] sm:$0xff]
    %v7790 = vld [vmem:[%s7044 + $0x1748] sm:$0xff]
    %v7791 = vld [vmem:[%s7044 + $0x1750] sm:$0xff]
    %v7792 = vld [vmem:[%s7044 + $0x1758] sm:$0xff]
    %v7793 = vld [vmem:[%s7044 + $0x1760] sm:$0xff]
    %v7794 = vld [vmem:[%s7044 + $0x1768] sm:$0xff]
    %v7795 = vld [vmem:[%s7044 + $0x1770] sm:$0xff]
    %v7796 = vld [vmem:[%s7044 + $0x1778] sm:$0xff]
    %v7797 = vld [vmem:[%s7044 + $0x1780] sm:$0xff]
    %v7798 = vld [vmem:[%s7044 + $0x1788] sm:$0xff]
    %v7799 = vld [vmem:[%s7044 + $0x1790] sm:$0xff]
    %v7800 = vld [vmem:[%s7044 + $0x1798] sm:$0xff]
    %v7801 = vld [vmem:[%s7044 + $0x17a0] sm:$0xff]
    %v7802 = vld [vmem:[%s7044 + $0x17a8] sm:$0xff]
    %v7803 = vld [vmem:[%s7044 + $0x17b0] sm:$0xff]
    %v7804 = vld [vmem:[%s7044 + $0x17b8] sm:$0xff]
    %v7805 = vld [vmem:[%s7044 + $0x17c0] sm:$0xff]
    %v7806 = vld [vmem:[%s7044 + $0x17c8] sm:$0xff]
    %v7807 = vld [vmem:[%s7044 + $0x17d0] sm:$0xff]
    %v7808 = vld [vmem:[%s7044 + $0x17d8] sm:$0xff]
    %v7809 = vld [vmem:[%s7044 + $0x17e0] sm:$0xff]
    %v7810 = vld [vmem:[%s7044 + $0x17e8] sm:$0xff]
    %v7811 = vld [vmem:[%s7044 + $0x17f0] sm:$0xff]
    %v7812 = vld [vmem:[%s7044 + $0x17f8] sm:$0xff]
    %v7813 = vld [vmem:[%s7044 + $0x1800] sm:$0xff]
    %v7814 = vld [vmem:[%s7044 + $0x1808] sm:$0xff]
    %v7815 = vld [vmem:[%s7044 + $0x1810] sm:$0xff]
    %v7816 = vld [vmem:[%s7044 + $0x1818] sm:$0xff]
    %v7817 = vld [vmem:[%s7044 + $0x1820] sm:$0xff]
    %v7818 = vld [vmem:[%s7044 + $0x1828] sm:$0xff]
    %v7819 = vld [vmem:[%s7044 + $0x1830] sm:$0xff]
    %v7820 = vld [vmem:[%s7044 + $0x1838] sm:$0xff]
    %v7821 = vld [vmem:[%s7044 + $0x1840] sm:$0xff]
    %v7822 = vld [vmem:[%s7044 + $0x1848] sm:$0xff]
    %v7823 = vld [vmem:[%s7044 + $0x1850] sm:$0xff]
    %v7824 = vld [vmem:[%s7044 + $0x1858] sm:$0xff]
    %v7825 = vld [vmem:[%s7044 + $0x1860] sm:$0xff]
    %v7826 = vld [vmem:[%s7044 + $0x1868] sm:$0xff]
    %v7827 = vld [vmem:[%s7044 + $0x1870] sm:$0xff]
    %v7828 = vld [vmem:[%s7044 + $0x1878] sm:$0xff]
    %v7829 = vld [vmem:[%s7044 + $0x1880] sm:$0xff]
    %v7830 = vld [vmem:[%s7044 + $0x1888] sm:$0xff]
    %v7831 = vld [vmem:[%s7044 + $0x1890] sm:$0xff]
    %v7832 = vld [vmem:[%s7044 + $0x1898] sm:$0xff]
    %v7833 = vld [vmem:[%s7044 + $0x18a0] sm:$0xff]
    %v7834 = vld [vmem:[%s7044 + $0x18a8] sm:$0xff]
    %v7835 = vld [vmem:[%s7044 + $0x18b0] sm:$0xff]
    %v7836 = vld [vmem:[%s7044 + $0x18b8] sm:$0xff]
    %v7837 = vld [vmem:[%s7044 + $0x18c0] sm:$0xff]
    %v7838 = vld [vmem:[%s7044 + $0x18c8] sm:$0xff]
    %v7839 = vld [vmem:[%s7044 + $0x18d0] sm:$0xff]
    %v7840 = vld [vmem:[%s7044 + $0x18d8] sm:$0xff]
    %v7841 = vld [vmem:[%s7044 + $0x18e0] sm:$0xff]
    %v7842 = vld [vmem:[%s7044 + $0x18e8] sm:$0xff]
    %v7843 = vld [vmem:[%s7044 + $0x18f0] sm:$0xff]
    %v7844 = vld [vmem:[%s7044 + $0x18f8] sm:$0xff]
    %v7845 = vld [vmem:[%s7044 + $0x1900] sm:$0xff]
    %v7846 = vld [vmem:[%s7044 + $0x1908] sm:$0xff]
    %v7847 = vld [vmem:[%s7044 + $0x1910] sm:$0xff]
    %v7848 = vld [vmem:[%s7044 + $0x1918] sm:$0xff]
    %v7849 = vld [vmem:[%s7044 + $0x1920] sm:$0xff]
    %v7850 = vld [vmem:[%s7044 + $0x1928] sm:$0xff]
    %v7851 = vld [vmem:[%s7044 + $0x1930] sm:$0xff]
    %v7852 = vld [vmem:[%s7044 + $0x1938] sm:$0xff]
    %v7853 = vld [vmem:[%s7044 + $0x1940] sm:$0xff]
    %v7854 = vld [vmem:[%s7044 + $0x1948] sm:$0xff]
    %v7855 = vld [vmem:[%s7044 + $0x1950] sm:$0xff]
    %v7856 = vld [vmem:[%s7044 + $0x1958] sm:$0xff]
    %v7857 = vld [vmem:[%s7044 + $0x1960] sm:$0xff]
    %v7858 = vld [vmem:[%s7044 + $0x1968] sm:$0xff]
    %v7859 = vld [vmem:[%s7044 + $0x1970] sm:$0xff]
    %v7860 = vld [vmem:[%s7044 + $0x1978] sm:$0xff]
    %v7861 = vld [vmem:[%s7044 + $0x1980] sm:$0xff]
    %v7862 = vld [vmem:[%s7044 + $0x1988] sm:$0xff]
    %v7863 = vld [vmem:[%s7044 + $0x1990] sm:$0xff]
    %v7864 = vld [vmem:[%s7044 + $0x1998] sm:$0xff]
    %v7865 = vld [vmem:[%s7044 + $0x19a0] sm:$0xff]
    %v7866 = vld [vmem:[%s7044 + $0x19a8] sm:$0xff]
    %v7867 = vld [vmem:[%s7044 + $0x19b0] sm:$0xff]
    %v7868 = vld [vmem:[%s7044 + $0x19b8] sm:$0xff]
    %v7869 = vld [vmem:[%s7044 + $0x19c0] sm:$0xff]
    %v7870 = vld [vmem:[%s7044 + $0x19c8] sm:$0xff]
    %v7871 = vld [vmem:[%s7044 + $0x19d0] sm:$0xff]
    %v7872 = vld [vmem:[%s7044 + $0x19d8] sm:$0xff]
    %v7873 = vld [vmem:[%s7044 + $0x19e0] sm:$0xff]
    %v7874 = vld [vmem:[%s7044 + $0x19e8] sm:$0xff]
    %v7875 = vld [vmem:[%s7044 + $0x19f0] sm:$0xff]
    %v7876 = vld [vmem:[%s7044 + $0x19f8] sm:$0xff]
    %v7877 = vld [vmem:[%s7044 + $0x1a00] sm:$0xff]
    %v7878 = vld [vmem:[%s7044 + $0x1a08] sm:$0xff]
    %v7879 = vld [vmem:[%s7044 + $0x1a10] sm:$0xff]
    %v7880 = vld [vmem:[%s7044 + $0x1a18] sm:$0xff]
    %v7881 = vld [vmem:[%s7044 + $0x1a20] sm:$0xff]
    %v7882 = vld [vmem:[%s7044 + $0x1a28] sm:$0xff]
    %v7883 = vld [vmem:[%s7044 + $0x1a30] sm:$0xff]
    %v7884 = vld [vmem:[%s7044 + $0x1a38] sm:$0xff]
    %v7885 = vld [vmem:[%s7044 + $0x1a40] sm:$0xff]
    %v7886 = vld [vmem:[%s7044 + $0x1a48] sm:$0xff]
    %v7887 = vld [vmem:[%s7044 + $0x1a50] sm:$0xff]
    %v7888 = vld [vmem:[%s7044 + $0x1a58] sm:$0xff]
    %v7889 = vld [vmem:[%s7044 + $0x1a60] sm:$0xff]
    %v7890 = vld [vmem:[%s7044 + $0x1a68] sm:$0xff]
    %v7891 = vld [vmem:[%s7044 + $0x1a70] sm:$0xff]
    %v7892 = vld [vmem:[%s7044 + $0x1a78] sm:$0xff]
    %v7893 = vld [vmem:[%s7044 + $0x1a80] sm:$0xff]
    %v7894 = vld [vmem:[%s7044 + $0x1a88] sm:$0xff]
    %v7895 = vld [vmem:[%s7044 + $0x1a90] sm:$0xff]
    %v7896 = vld [vmem:[%s7044 + $0x1a98] sm:$0xff]
    %v7897 = vld [vmem:[%s7044 + $0x1aa0] sm:$0xff]
    %v7898 = vld [vmem:[%s7044 + $0x1aa8] sm:$0xff]
    %v7899 = vld [vmem:[%s7044 + $0x1ab0] sm:$0xff]
    %v7900 = vld [vmem:[%s7044 + $0x1ab8] sm:$0xff]
    %v7901 = vld [vmem:[%s7044 + $0x1ac0] sm:$0xff]
    %v7902 = vld [vmem:[%s7044 + $0x1ac8] sm:$0xff]
    %v7903 = vld [vmem:[%s7044 + $0x1ad0] sm:$0xff]
    %v7904 = vld [vmem:[%s7044 + $0x1ad8] sm:$0xff]
    %v7905 = vld [vmem:[%s7044 + $0x1ae0] sm:$0xff]
    %v7906 = vld [vmem:[%s7044 + $0x1ae8] sm:$0xff]
    %v7907 = vld [vmem:[%s7044 + $0x1af0] sm:$0xff]
    %v7908 = vld [vmem:[%s7044 + $0x1af8] sm:$0xff]
    %v7909 = vld [vmem:[%s7044 + $0x1b00] sm:$0xff]
    %v7910 = vld [vmem:[%s7044 + $0x1b08] sm:$0xff]
    %v7911 = vld [vmem:[%s7044 + $0x1b10] sm:$0xff]
    %v7912 = vld [vmem:[%s7044 + $0x1b18] sm:$0xff]
    %v7913 = vld [vmem:[%s7044 + $0x1b20] sm:$0xff]
    %v7914 = vld [vmem:[%s7044 + $0x1b28] sm:$0xff]
    %v7915 = vld [vmem:[%s7044 + $0x1b30] sm:$0xff]
    %v7916 = vld [vmem:[%s7044 + $0x1b38] sm:$0xff]
    %v7917 = vld [vmem:[%s7044 + $0x1b40] sm:$0xff]
    %v7918 = vld [vmem:[%s7044 + $0x1b48] sm:$0xff]
    %v7919 = vld [vmem:[%s7044 + $0x1b50] sm:$0xff]
    %v7920 = vld [vmem:[%s7044 + $0x1b58] sm:$0xff]
    %v7921 = vld [vmem:[%s7044 + $0x1b60] sm:$0xff]
    %v7922 = vld [vmem:[%s7044 + $0x1b68] sm:$0xff]
    %v7923 = vld [vmem:[%s7044 + $0x1b70] sm:$0xff]
    %v7924 = vld [vmem:[%s7044 + $0x1b78] sm:$0xff]
    %v7925 = vld [vmem:[%s7044 + $0x1b80] sm:$0xff]
    %v7926 = vld [vmem:[%s7044 + $0x1b88] sm:$0xff]
    %v7927 = vld [vmem:[%s7044 + $0x1b90] sm:$0xff]
    %v7928 = vld [vmem:[%s7044 + $0x1b98] sm:$0xff]
    %v7929 = vld [vmem:[%s7044 + $0x1ba0] sm:$0xff]
    %v7930 = vld [vmem:[%s7044 + $0x1ba8] sm:$0xff]
    %v7931 = vld [vmem:[%s7044 + $0x1bb0] sm:$0xff]
    %v7932 = vld [vmem:[%s7044 + $0x1bb8] sm:$0xff]
    %v7933 = vld [vmem:[%s7044 + $0x1bc0] sm:$0xff]
    %v7934 = vld [vmem:[%s7044 + $0x1bc8] sm:$0xff]
    %v7935 = vld [vmem:[%s7044 + $0x1bd0] sm:$0xff]
    %v7936 = vld [vmem:[%s7044 + $0x1bd8] sm:$0xff]
    %v7937 = vld [vmem:[%s7044 + $0x1be0] sm:$0xff]
    %v7938 = vld [vmem:[%s7044 + $0x1be8] sm:$0xff]
    %v7939 = vld [vmem:[%s7044 + $0x1bf0] sm:$0xff]
    %v7940 = vld [vmem:[%s7044 + $0x1bf8] sm:$0xff]
    %v7941 = vld [vmem:[%s7044 + $0x1c00] sm:$0xff]
    %v7942 = vld [vmem:[%s7044 + $0x1c08] sm:$0xff]
    %v7943 = vld [vmem:[%s7044 + $0x1c10] sm:$0xff]
    %v7944 = vld [vmem:[%s7044 + $0x1c18] sm:$0xff]
    %v7945 = vld [vmem:[%s7044 + $0x1c20] sm:$0xff]
    %v7946 = vld [vmem:[%s7044 + $0x1c28] sm:$0xff]
    %v7947 = vld [vmem:[%s7044 + $0x1c30] sm:$0xff]
    %v7948 = vld [vmem:[%s7044 + $0x1c38] sm:$0xff]
    %v7949 = vld [vmem:[%s7044 + $0x1c40] sm:$0xff]
    %v7950 = vld [vmem:[%s7044 + $0x1c48] sm:$0xff]
    %v7951 = vld [vmem:[%s7044 + $0x1c50] sm:$0xff]
    %v7952 = vld [vmem:[%s7044 + $0x1c58] sm:$0xff]
    %v7953 = vld [vmem:[%s7044 + $0x1c60] sm:$0xff]
    %v7954 = vld [vmem:[%s7044 + $0x1c68] sm:$0xff]
    %v7955 = vld [vmem:[%s7044 + $0x1c70] sm:$0xff]
    %v7956 = vld [vmem:[%s7044 + $0x1c78] sm:$0xff]
    %v7957 = vld [vmem:[%s7044 + $0x1c80] sm:$0xff]
    %v7958 = vld [vmem:[%s7044 + $0x1c88] sm:$0xff]
    %v7959 = vld [vmem:[%s7044 + $0x1c90] sm:$0xff]
    %v7960 = vld [vmem:[%s7044 + $0x1c98] sm:$0xff]
    %v7961 = vld [vmem:[%s7044 + $0x1ca0] sm:$0xff]
    %v7962 = vld [vmem:[%s7044 + $0x1ca8] sm:$0xff]
    %v7963 = vld [vmem:[%s7044 + $0x1cb0] sm:$0xff]
    %v7964 = vld [vmem:[%s7044 + $0x1cb8] sm:$0xff]
    %v7965 = vld [vmem:[%s7044 + $0x1cc0] sm:$0xff]
    %v7966 = vld [vmem:[%s7044 + $0x1cc8] sm:$0xff]
    %v7967 = vld [vmem:[%s7044 + $0x1cd0] sm:$0xff]
    %v7968 = vld [vmem:[%s7044 + $0x1cd8] sm:$0xff]
    %v7969 = vld [vmem:[%s7044 + $0x1ce0] sm:$0xff]
    %v7970 = vld [vmem:[%s7044 + $0x1ce8] sm:$0xff]
    %v7971 = vld [vmem:[%s7044 + $0x1cf0] sm:$0xff]
    %v7972 = vld [vmem:[%s7044 + $0x1cf8] sm:$0xff]
    %v7973 = vld [vmem:[%s7044 + $0x1d00] sm:$0xff]
    %v7974 = vld [vmem:[%s7044 + $0x1d08] sm:$0xff]
    %v7975 = vld [vmem:[%s7044 + $0x1d10] sm:$0xff]
    %v7976 = vld [vmem:[%s7044 + $0x1d18] sm:$0xff]
    %v7977 = vld [vmem:[%s7044 + $0x1d20] sm:$0xff]
    %v7978 = vld [vmem:[%s7044 + $0x1d28] sm:$0xff]
    %v7979 = vld [vmem:[%s7044 + $0x1d30] sm:$0xff]
    %v7980 = vld [vmem:[%s7044 + $0x1d38] sm:$0xff]
    %v7981 = vld [vmem:[%s7044 + $0x1d40] sm:$0xff]
    %v7982 = vld [vmem:[%s7044 + $0x1d48] sm:$0xff]
    %v7983 = vld [vmem:[%s7044 + $0x1d50] sm:$0xff]
    %v7984 = vld [vmem:[%s7044 + $0x1d58] sm:$0xff]
    %v7985 = vld [vmem:[%s7044 + $0x1d60] sm:$0xff]
    %v7986 = vld [vmem:[%s7044 + $0x1d68] sm:$0xff]
    %v7987 = vld [vmem:[%s7044 + $0x1d70] sm:$0xff]
    %v7988 = vld [vmem:[%s7044 + $0x1d78] sm:$0xff]
    %v7989 = vld [vmem:[%s7044 + $0x1d80] sm:$0xff]
    %v7990 = vld [vmem:[%s7044 + $0x1d88] sm:$0xff]
    %v7991 = vld [vmem:[%s7044 + $0x1d90] sm:$0xff]
    %v7992 = vld [vmem:[%s7044 + $0x1d98] sm:$0xff]
    %v7993 = vld [vmem:[%s7044 + $0x1da0] sm:$0xff]
    %v7994 = vld [vmem:[%s7044 + $0x1da8] sm:$0xff]
    %v7995 = vld [vmem:[%s7044 + $0x1db0] sm:$0xff]
    %v7996 = vld [vmem:[%s7044 + $0x1db8] sm:$0xff]
    %v7997 = vld [vmem:[%s7044 + $0x1dc0] sm:$0xff]
    %v7998 = vld [vmem:[%s7044 + $0x1dc8] sm:$0xff]
    %v7999 = vld [vmem:[%s7044 + $0x1dd0] sm:$0xff]
    %v8000 = vld [vmem:[%s7044 + $0x1dd8] sm:$0xff]
    %v8001 = vld [vmem:[%s7044 + $0x1de0] sm:$0xff]
    %v8002 = vld [vmem:[%s7044 + $0x1de8] sm:$0xff]
    %v8003 = vld [vmem:[%s7044 + $0x1df0] sm:$0xff]
    %v8004 = vld [vmem:[%s7044 + $0x1df8] sm:$0xff]
    %v8005 = vld [vmem:[%s7044 + $0x1e00] sm:$0xff]
    %v8006 = vld [vmem:[%s7044 + $0x1e08] sm:$0xff]
    %v8007 = vld [vmem:[%s7044 + $0x1e10] sm:$0xff]
    %v8008 = vld [vmem:[%s7044 + $0x1e18] sm:$0xff]
    %v8009 = vld [vmem:[%s7044 + $0x1e20] sm:$0xff]
    %v8010 = vld [vmem:[%s7044 + $0x1e28] sm:$0xff]
    %v8011 = vld [vmem:[%s7044 + $0x1e30] sm:$0xff]
    %v8012 = vld [vmem:[%s7044 + $0x1e38] sm:$0xff]
    %v8013 = vld [vmem:[%s7044 + $0x1e40] sm:$0xff]
    %v8014 = vld [vmem:[%s7044 + $0x1e48] sm:$0xff]
    %v8015 = vld [vmem:[%s7044 + $0x1e50] sm:$0xff]
    %v8016 = vld [vmem:[%s7044 + $0x1e58] sm:$0xff]
    %v8017 = vld [vmem:[%s7044 + $0x1e60] sm:$0xff]
    %v8018 = vld [vmem:[%s7044 + $0x1e68] sm:$0xff]
    %v8019 = vld [vmem:[%s7044 + $0x1e70] sm:$0xff]
    %v8020 = vld [vmem:[%s7044 + $0x1e78] sm:$0xff]
    %v8021 = vld [vmem:[%s7044 + $0x1e80] sm:$0xff]
    %v8022 = vld [vmem:[%s7044 + $0x1e88] sm:$0xff]
    %v8023 = vld [vmem:[%s7044 + $0x1e90] sm:$0xff]
    %v8024 = vld [vmem:[%s7044 + $0x1e98] sm:$0xff]
    %v8025 = vld [vmem:[%s7044 + $0x1ea0] sm:$0xff]
    %v8026 = vld [vmem:[%s7044 + $0x1ea8] sm:$0xff]
    %v8027 = vld [vmem:[%s7044 + $0x1eb0] sm:$0xff]
    %v8028 = vld [vmem:[%s7044 + $0x1eb8] sm:$0xff]
    %v8029 = vld [vmem:[%s7044 + $0x1ec0] sm:$0xff]
    %v8030 = vld [vmem:[%s7044 + $0x1ec8] sm:$0xff]
    %v8031 = vld [vmem:[%s7044 + $0x1ed0] sm:$0xff]
    %v8032 = vld [vmem:[%s7044 + $0x1ed8] sm:$0xff]
    %v8033 = vld [vmem:[%s7044 + $0x1ee0] sm:$0xff]
    %v8034 = vld [vmem:[%s7044 + $0x1ee8] sm:$0xff]
    %v8035 = vld [vmem:[%s7044 + $0x1ef0] sm:$0xff]
    %v8036 = vld [vmem:[%s7044 + $0x1ef8] sm:$0xff]
    %v8037 = vld [vmem:[%s7044 + $0x1f00] sm:$0xff]
    %v8038 = vld [vmem:[%s7044 + $0x1f08] sm:$0xff]
    %v8039 = vld [vmem:[%s7044 + $0x1f10] sm:$0xff]
    %v8040 = vld [vmem:[%s7044 + $0x1f18] sm:$0xff]
    %v8041 = vld [vmem:[%s7044 + $0x1f20] sm:$0xff]
    %v8042 = vld [vmem:[%s7044 + $0x1f28] sm:$0xff]
    %v8043 = vld [vmem:[%s7044 + $0x1f30] sm:$0xff]
    %v8044 = vld [vmem:[%s7044 + $0x1f38] sm:$0xff]
    %v8045 = vld [vmem:[%s7044 + $0x1f40] sm:$0xff]
    %v8046 = vld [vmem:[%s7044 + $0x1f48] sm:$0xff]
    %v8047 = vld [vmem:[%s7044 + $0x1f50] sm:$0xff]
    %v8048 = vld [vmem:[%s7044 + $0x1f58] sm:$0xff]
    %v8049 = vld [vmem:[%s7044 + $0x1f60] sm:$0xff]
    %v8050 = vld [vmem:[%s7044 + $0x1f68] sm:$0xff]
    %v8051 = vld [vmem:[%s7044 + $0x1f70] sm:$0xff]
    %v8052 = vld [vmem:[%s7044 + $0x1f78] sm:$0xff]
    %v8053 = vld [vmem:[%s7044 + $0x1f80] sm:$0xff]
    %v8054 = vld [vmem:[%s7044 + $0x1f88] sm:$0xff]
    %v8055 = vld [vmem:[%s7044 + $0x1f90] sm:$0xff]
    %v8056 = vld [vmem:[%s7044 + $0x1f98] sm:$0xff]
    %v8057 = vld [vmem:[%s7044 + $0x1fa0] sm:$0xff]
    %v8058 = vld [vmem:[%s7044 + $0x1fa8] sm:$0xff]
    %v8059 = vld [vmem:[%s7044 + $0x1fb0] sm:$0xff]
    %v8060 = vld [vmem:[%s7044 + $0x1fb8] sm:$0xff]
    %v8061 = vld [vmem:[%s7044 + $0x1fc0] sm:$0xff]
    %v8062 = vld [vmem:[%s7044 + $0x1fc8] sm:$0xff]
    %v8063 = vld [vmem:[%s7044 + $0x1fd0] sm:$0xff]
    %v8064 = vld [vmem:[%s7044 + $0x1fd8] sm:$0xff]
    %v8065 = vld [vmem:[%s7044 + $0x1fe0] sm:$0xff]
    %v8066 = vld [vmem:[%s7044 + $0x1fe8] sm:$0xff]
    %v8067 = vld [vmem:[%s7044 + $0x1ff0] sm:$0xff]
    %v8068 = vld [vmem:[%s7044 + $0x1ff8] sm:$0xff]
    %8069 = vmatprep.subr.mxu0 %v7046
    %8070 = vmatpush1.msra.mxu0 %v7045
    %8071 = vmatprep.subr.mxu0 %v7054
    %8072 = vmatpush1.msra.mxu0 %v7053
    %8073 = vmatprep.subr.mxu0 %v7062
    %8074 = vmatpush1.msra.mxu0 %v7061
    %8075 = vmatprep.subr.mxu0 %v7070
    %8076 = vmatpush1.msra.mxu0 %v7069
    %8077 = vmatprep.subr.mxu0 %v7078
    %8078 = vmatpush1.msra.mxu0 %v7077
    %8079 = vmatprep.subr.mxu0 %v7086
    %8080 = vmatpush1.msra.mxu0 %v7085
    %8081 = vmatprep.subr.mxu0 %v7094
    %8082 = vmatpush1.msra.mxu0 %v7093
    %8083 = vmatprep.subr.mxu0 %v7102
    %8084 = vmatpush1.msra.mxu0 %v7101
    %8085 = vmatprep.subr.mxu0 %v7110
    %8086 = vmatpush1.msra.mxu0 %v7109
    %8087 = vmatprep.subr.mxu0 %v7118
    %8088 = vmatpush1.msra.mxu0 %v7117
    %8089 = vmatprep.subr.mxu0 %v7126
    %8090 = vmatpush1.msra.mxu0 %v7125
    %8091 = vmatprep.subr.mxu0 %v7134
    %8092 = vmatpush1.msra.mxu0 %v7133
    %8093 = vmatprep.subr.mxu0 %v7142
    %8094 = vmatpush1.msra.mxu0 %v7141
    %8095 = vmatprep.subr.mxu0 %v7150
    %8096 = vmatpush1.msra.mxu0 %v7149
    %8097 = vmatprep.subr.mxu0 %v7158
    %8098 = vmatpush1.msra.mxu0 %v7157
    %8099 = vmatprep.subr.mxu0 %v7166
    %8100 = vmatpush1.msra.mxu0 %v7165
    %8101 = vmatprep.subr.mxu0 %v7174
    %8102 = vmatpush1.msra.mxu0 %v7173
    %8103 = vmatprep.subr.mxu0 %v7182
    %8104 = vmatpush1.msra.mxu0 %v7181
    %8105 = vmatprep.subr.mxu0 %v7190
    %8106 = vmatpush1.msra.mxu0 %v7189
    %8107 = vmatprep.subr.mxu0 %v7198
    %8108 = vmatpush1.msra.mxu0 %v7197
    %8109 = vmatprep.subr.mxu0 %v7206
    %8110 = vmatpush1.msra.mxu0 %v7205
    %8111 = vmatprep.subr.mxu0 %v7214
    %8112 = vmatpush1.msra.mxu0 %v7213
    %8113 = vmatprep.subr.mxu0 %v7222
    %8114 = vmatpush1.msra.mxu0 %v7221
    %8115 = vmatprep.subr.mxu0 %v7230
    %8116 = vmatpush1.msra.mxu0 %v7229
    %8117 = vmatprep.subr.mxu0 %v7238
    %8118 = vmatpush1.msra.mxu0 %v7237
    %8119 = vmatprep.subr.mxu0 %v7246
    %8120 = vmatpush1.msra.mxu0 %v7245
    %8121 = vmatprep.subr.mxu0 %v7254
    %8122 = vmatpush1.msra.mxu0 %v7253
    %8123 = vmatprep.subr.mxu0 %v7262
    %8124 = vmatpush1.msra.mxu0 %v7261
    %8125 = vmatprep.subr.mxu0 %v7270
    %8126 = vmatpush1.msra.mxu0 %v7269
    %8127 = vmatprep.subr.mxu0 %v7278
    %8128 = vmatpush1.msra.mxu0 %v7277
    %8129 = vmatprep.subr.mxu0 %v7286
    %8130 = vmatpush1.msra.mxu0 %v7285
    %8131 = vmatprep.subr.mxu0 %v7294
    %8132 = vmatpush1.msra.mxu0 %v7293
    %8133 = vmatprep.mubr.f32.mxu0 %v2116
    %8134 = vmatmul.mubr.f32.gmra.mrb[0].mxu0 %v2115
    %v8135 = vpop.f32.mrb[0].mxu0
    %v8136 = vadd.f32 0.0, %v8135
    %v8137 = vpop.f32.mrb[0].mxu0
    %v8138 = vadd.f32 0.0, %v8137
    %8139 = vmatprep.mubr.f32.mxu0 %v2124
    %8140 = vmatmul.mubr.f32.gmra.mrb[0].mxu0 %v2123
    %v8141 = vpop.f32.mrb[0].mxu0
    %v8142 = vadd.f32 0.0, %v8141
    %v8143 = vpop.f32.mrb[0].mxu0
    %v8144 = vadd.f32 0.0, %v8143
    %8145 = vmatprep.mubr.f32.mxu0 %v2132
    %8146 = vmatmul.mubr.f32.gmra.mrb[0].mxu0 %v2131
    %v8147 = vpop.f32.mrb[0].mxu0
    %v8148 = vadd.f32 0.0, %v8147
    %v8149 = vpop.f32.mrb[0].mxu0
    %v8150 = vadd.f32 0.0, %v8149
    %8151 = vmatprep.mubr.f32.mxu0 %v2140
    %8152 = vmatmul.mubr.f32.gmra.mrb[0].mxu0 %v2139
    %v8153 = vpop.f32.mrb[0].mxu0
    %v8154 = vadd.f32 0.0, %v8153
    %v8155 = vpop.f32.mrb[0].mxu0
    %v8156 = vadd.f32 0.0, %v8155
    %8157 = vdwg.mxu0
    %8158 = vmatprep.subr.mxu0 %v7302
    %8159 = vmatpush1.msra.mxu0 %v7301
    %8160 = vmatprep.subr.mxu0 %v7310
    %8161 = vmatpush1.msra.mxu0 %v7309
    %8162 = vmatprep.subr.mxu0 %v7318
    %8163 = vmatpush1.msra.mxu0 %v7317
    %8164 = vmatprep.subr.mxu0 %v7326
    %8165 = vmatpush1.msra.mxu0 %v7325
    %8166 = vmatprep.subr.mxu0 %v7334
    %8167 = vmatpush1.msra.mxu0 %v7333
    %8168 = vmatprep.subr.mxu0 %v7342
    %8169 = vmatpush1.msra.mxu0 %v7341
    %8170 = vmatprep.subr.mxu0 %v7350
    %8171 = vmatpush1.msra.mxu0 %v7349
    %8172 = vmatprep.subr.mxu0 %v7358
    %8173 = vmatpush1.msra.mxu0 %v7357
    %8174 = vmatprep.subr.mxu0 %v7366
    %8175 = vmatpush1.msra.mxu0 %v7365
    %8176 = vmatprep.subr.mxu0 %v7374
    %8177 = vmatpush1.msra.mxu0 %v7373
    %8178 = vmatprep.subr.mxu0 %v7382
    %8179 = vmatpush1.msra.mxu0 %v7381
    %8180 = vmatprep.subr.mxu0 %v7390
    %8181 = vmatpush1.msra.mxu0 %v7389
    %8182 = vmatprep.subr.mxu0 %v7398
    %8183 = vmatpush1.msra.mxu0 %v7397
    %8184 = vmatprep.subr.mxu0 %v7406
    %8185 = vmatpush1.msra.mxu0 %v7405
    %8186 = vmatprep.subr.mxu0 %v7414
    %8187 = vmatpush1.msra.mxu0 %v7413
    %8188 = vmatprep.subr.mxu0 %v7422
    %8189 = vmatpush1.msra.mxu0 %v7421
    %8190 = vmatprep.subr.mxu0 %v7430
    %8191 = vmatpush1.msra.mxu0 %v7429
    %8192 = vmatprep.subr.mxu0 %v7438
    %8193 = vmatpush1.msra.mxu0 %v7437
    %8194 = vmatprep.subr.mxu0 %v7446
    %8195 = vmatpush1.msra.mxu0 %v7445
    %8196 = vmatprep.subr.mxu0 %v7454
    %8197 = vmatpush1.msra.mxu0 %v7453
    %8198 = vmatprep.subr.mxu0 %v7462
    %8199 = vmatpush1.msra.mxu0 %v7461
    %8200 = vmatprep.subr.mxu0 %v7470
    %8201 = vmatpush1.msra.mxu0 %v7469
    %8202 = vmatprep.subr.mxu0 %v7478
    %8203 = vmatpush1.msra.mxu0 %v7477
    %8204 = vmatprep.subr.mxu0 %v7486
    %8205 = vmatpush1.msra.mxu0 %v7485
    %8206 = vmatprep.subr.mxu0 %v7494
    %8207 = vmatpush1.msra.mxu0 %v7493
    %8208 = vmatprep.subr.mxu0 %v7502
    %8209 = vmatpush1.msra.mxu0 %v7501
    %8210 = vmatprep.subr.mxu0 %v7510
    %8211 = vmatpush1.msra.mxu0 %v7509
    %8212 = vmatprep.subr.mxu0 %v7518
    %8213 = vmatpush1.msra.mxu0 %v7517
    %8214 = vmatprep.subr.mxu0 %v7526
    %8215 = vmatpush1.msra.mxu0 %v7525
    %8216 = vmatprep.subr.mxu0 %v7534
    %8217 = vmatpush1.msra.mxu0 %v7533
    %8218 = vmatprep.subr.mxu0 %v7542
    %8219 = vmatpush1.msra.mxu0 %v7541
    %8220 = vmatprep.subr.mxu0 %v7550
    %8221 = vmatpush1.msra.mxu0 %v7549
    %8222 = vmatprep.mubr.f32.mxu0 %v2118
    %8223 = vmatmul.mubr.f32.gmra.mrb[0].mxu0 %v2117
    %v8224 = vpop.f32.mrb[0].mxu0
    %v8225 = vadd.f32 %v8136, %v8224
    %v8226 = vpop.f32.mrb[0].mxu0
    %v8227 = vadd.f32 %v8138, %v8226
    %8228 = vmatprep.mubr.f32.mxu0 %v2126
    %8229 = vmatmul.mubr.f32.gmra.mrb[0].mxu0 %v2125
    %v8230 = vpop.f32.mrb[0].mxu0
    %v8231 = vadd.f32 %v8142, %v8230
    %v8232 = vpop.f32.mrb[0].mxu0
    %v8233 = vadd.f32 %v8144, %v8232
    %8234 = vmatprep.mubr.f32.mxu0 %v2134
    %8235 = vmatmul.mubr.f32.gmra.mrb[0].mxu0 %v2133
    %v8236 = vpop.f32.mrb[0].mxu0
    %v8237 = vadd.f32 %v8148, %v8236
    %v8238 = vpop.f32.mrb[0].mxu0
    %v8239 = vadd.f32 %v8150, %v8238
    %8240 = vmatprep.mubr.f32.mxu0 %v2142
    %8241 = vmatmul.mubr.f32.gmra.mrb[0].mxu0 %v2141
    %v8242 = vpop.f32.mrb[0].mxu0
    %v8243 = vadd.f32 %v8154, %v8242
    %v8244 = vpop.f32.mrb[0].mxu0
    %v8245 = vadd.f32 %v8156, %v8244
    %8246 = vdwg.mxu0
    %8247 = vmatprep.subr.mxu0 %v7558
    %8248 = vmatpush1.msra.mxu0 %v7557
    %8249 = vmatprep.subr.mxu0 %v7566
    %8250 = vmatpush1.msra.mxu0 %v7565
    %8251 = vmatprep.subr.mxu0 %v7574
    %8252 = vmatpush1.msra.mxu0 %v7573
    %8253 = vmatprep.subr.mxu0 %v7582
    %8254 = vmatpush1.msra.mxu0 %v7581
    %8255 = vmatprep.subr.mxu0 %v7590
    %8256 = vmatpush1.msra.mxu0 %v7589
    %8257 = vmatprep.subr.mxu0 %v7598
    %8258 = vmatpush1.msra.mxu0 %v7597
    %8259 = vmatprep.subr.mxu0 %v7606
    %8260 = vmatpush1.msra.mxu0 %v7605
    %8261 = vmatprep.subr.mxu0 %v7614
    %8262 = vmatpush1.msra.mxu0 %v7613
    %8263 = vmatprep.subr.mxu0 %v7622
    %8264 = vmatpush1.msra.mxu0 %v7621
    %8265 = vmatprep.subr.mxu0 %v7630
    %8266 = vmatpush1.msra.mxu0 %v7629
    %8267 = vmatprep.subr.mxu0 %v7638
    %8268 = vmatpush1.msra.mxu0 %v7637
    %8269 = vmatprep.subr.mxu0 %v7646
    %8270 = vmatpush1.msra.mxu0 %v7645
    %8271 = vmatprep.subr.mxu0 %v7654
    %8272 = vmatpush1.msra.mxu0 %v7653
    %8273 = vmatprep.subr.mxu0 %v7662
    %8274 = vmatpush1.msra.mxu0 %v7661
    %8275 = vmatprep.subr.mxu0 %v7670
    %8276 = vmatpush1.msra.mxu0 %v7669
    %8277 = vmatprep.subr.mxu0 %v7678
    %8278 = vmatpush1.msra.mxu0 %v7677
    %8279 = vmatprep.subr.mxu0 %v7686
    %8280 = vmatpush1.msra.mxu0 %v7685
    %8281 = vmatprep.subr.mxu0 %v7694
    %8282 = vmatpush1.msra.mxu0 %v7693
    %8283 = vmatprep.subr.mxu0 %v7702
    %8284 = vmatpush1.msra.mxu0 %v7701
    %8285 = vmatprep.subr.mxu0 %v7710
    %8286 = vmatpush1.msra.mxu0 %v7709
    %8287 = vmatprep.subr.mxu0 %v7718
    %8288 = vmatpush1.msra.mxu0 %v7717
    %8289 = vmatprep.subr.mxu0 %v7726
    %8290 = vmatpush1.msra.mxu0 %v7725
    %8291 = vmatprep.subr.mxu0 %v7734
    %8292 = vmatpush1.msra.mxu0 %v7733
    %8293 = vmatprep.subr.mxu0 %v7742
    %8294 = vmatpush1.msra.mxu0 %v7741
    %8295 = vmatprep.subr.mxu0 %v7750
    %8296 = vmatpush1.msra.mxu0 %v7749
    %8297 = vmatprep.subr.mxu0 %v7758
    %8298 = vmatpush1.msra.mxu0 %v7757
    %8299 = vmatprep.subr.mxu0 %v7766
    %8300 = vmatpush1.msra.mxu0 %v7765
    %8301 = vmatprep.subr.mxu0 %v7774
    %8302 = vmatpush1.msra.mxu0 %v7773
    %8303 = vmatprep.subr.mxu0 %v7782
    %8304 = vmatpush1.msra.mxu0 %v7781
    %8305 = vmatprep.subr.mxu0 %v7790
    %8306 = vmatpush1.msra.mxu0 %v7789
    %8307 = vmatprep.subr.mxu0 %v7798
    %8308 = vmatpush1.msra.mxu0 %v7797
    %8309 = vmatprep.subr.mxu0 %v7806
    %8310 = vmatpush1.msra.mxu0 %v7805
    %8311 = vmatprep.mubr.f32.mxu0 %v2120
    %8312 = vmatmul.mubr.f32.gmra.mrb[0].mxu0 %v2119
    %v8313 = vpop.f32.mrb[0].mxu0
    %v8314 = vadd.f32 %v8225, %v8313
    %v8315 = vpop.f32.mrb[0].mxu0
    %v8316 = vadd.f32 %v8227, %v8315
    %8317 = vmatprep.mubr.f32.mxu0 %v2128
    %8318 = vmatmul.mubr.f32.gmra.mrb[0].mxu0 %v2127
    %v8319 = vpop.f32.mrb[0].mxu0
    %v8320 = vadd.f32 %v8231, %v8319
    %v8321 = vpop.f32.mrb[0].mxu0
    %v8322 = vadd.f32 %v8233, %v8321
    %8323 = vmatprep.mubr.f32.mxu0 %v2136
    %8324 = vmatmul.mubr.f32.gmra.mrb[0].mxu0 %v2135
    %v8325 = vpop.f32.mrb[0].mxu0
    %v8326 = vadd.f32 %v8237, %v8325
    %v8327 = vpop.f32.mrb[0].mxu0
    %v8328 = vadd.f32 %v8239, %v8327
    %8329 = vmatprep.mubr.f32.mxu0 %v2144
    %8330 = vmatmul.mubr.f32.gmra.mrb[0].mxu0 %v2143
    %v8331 = vpop.f32.mrb[0].mxu0
    %v8332 = vadd.f32 %v8243, %v8331
    %v8333 = vpop.f32.mrb[0].mxu0
    %v8334 = vadd.f32 %v8245, %v8333
    %8335 = vdwg.mxu0
    %8336 = vmatprep.subr.mxu0 %v7814
    %8337 = vmatpush1.msra.mxu0 %v7813
    %8338 = vmatprep.subr.mxu0 %v7822
    %8339 = vmatpush1.msra.mxu0 %v7821
    %8340 = vmatprep.subr.mxu0 %v7830
    %8341 = vmatpush1.msra.mxu0 %v7829
    %8342 = vmatprep.subr.mxu0 %v7838
    %8343 = vmatpush1.msra.mxu0 %v7837
    %8344 = vmatprep.subr.mxu0 %v7846
    %8345 = vmatpush1.msra.mxu0 %v7845
    %8346 = vmatprep.subr.mxu0 %v7854
    %8347 = vmatpush1.msra.mxu0 %v7853
    %8348 = vmatprep.subr.mxu0 %v7862
    %8349 = vmatpush1.msra.mxu0 %v7861
    %8350 = vmatprep.subr.mxu0 %v7870
    %8351 = vmatpush1.msra.mxu0 %v7869
    %8352 = vmatprep.subr.mxu0 %v7878
    %8353 = vmatpush1.msra.mxu0 %v7877
    %8354 = vmatprep.subr.mxu0 %v7886
    %8355 = vmatpush1.msra.mxu0 %v7885
    %8356 = vmatprep.subr.mxu0 %v7894
    %8357 = vmatpush1.msra.mxu0 %v7893
    %8358 = vmatprep.subr.mxu0 %v7902
    %8359 = vmatpush1.msra.mxu0 %v7901
    %8360 = vmatprep.subr.mxu0 %v7910
    %8361 = vmatpush1.msra.mxu0 %v7909
    %8362 = vmatprep.subr.mxu0 %v7918
    %8363 = vmatpush1.msra.mxu0 %v7917
    %8364 = vmatprep.subr.mxu0 %v7926
    %8365 = vmatpush1.msra.mxu0 %v7925
    %8366 = vmatprep.subr.mxu0 %v7934
    %8367 = vmatpush1.msra.mxu0 %v7933
    %8368 = vmatprep.subr.mxu0 %v7942
    %8369 = vmatpush1.msra.mxu0 %v7941
    %8370 = vmatprep.subr.mxu0 %v7950
    %8371 = vmatpush1.msra.mxu0 %v7949
    %8372 = vmatprep.subr.mxu0 %v7958
    %8373 = vmatpush1.msra.mxu0 %v7957
    %8374 = vmatprep.subr.mxu0 %v7966
    %8375 = vmatpush1.msra.mxu0 %v7965
    %8376 = vmatprep.subr.mxu0 %v7974
    %8377 = vmatpush1.msra.mxu0 %v7973
    %8378 = vmatprep.subr.mxu0 %v7982
    %8379 = vmatpush1.msra.mxu0 %v7981
    %8380 = vmatprep.subr.mxu0 %v7990
    %8381 = vmatpush1.msra.mxu0 %v7989
    %8382 = vmatprep.subr.mxu0 %v7998
    %8383 = vmatpush1.msra.mxu0 %v7997
    %8384 = vmatprep.subr.mxu0 %v8006
    %8385 = vmatpush1.msra.mxu0 %v8005
    %8386 = vmatprep.subr.mxu0 %v8014
    %8387 = vmatpush1.msra.mxu0 %v8013
    %8388 = vmatprep.subr.mxu0 %v8022
    %8389 = vmatpush1.msra.mxu0 %v8021
    %8390 = vmatprep.subr.mxu0 %v8030
    %8391 = vmatpush1.msra.mxu0 %v8029
    %8392 = vmatprep.subr.mxu0 %v8038
    %8393 = vmatpush1.msra.mxu0 %v8037
    %8394 = vmatprep.subr.mxu0 %v8046
    %8395 = vmatpush1.msra.mxu0 %v8045
    %8396 = vmatprep.subr.mxu0 %v8054
    %8397 = vmatpush1.msra.mxu0 %v8053
    %8398 = vmatprep.subr.mxu0 %v8062
    %8399 = vmatpush1.msra.mxu0 %v8061
    %8400 = vmatprep.mubr.f32.mxu0 %v2122
    %8401 = vmatmul.mubr.f32.gmra.mrb[0].mxu0 %v2121
    %v8402 = vpop.f32.mrb[0].mxu0
    %v8403 = vadd.f32 %v8314, %v8402
    %v8404 = vpop.f32.mrb[0].mxu0
    %v8405 = vadd.f32 %v8316, %v8404
    %8406 = vmatprep.mubr.f32.mxu0 %v2130
    %8407 = vmatmul.mubr.f32.gmra.mrb[0].mxu0 %v2129
    %v8408 = vpop.f32.mrb[0].mxu0
    %v8409 = vadd.f32 %v8320, %v8408
    %v8410 = vpop.f32.mrb[0].mxu0
    %v8411 = vadd.f32 %v8322, %v8410
    %8412 = vmatprep.mubr.f32.mxu0 %v2138
    %8413 = vmatmul.mubr.f32.gmra.mrb[0].mxu0 %v2137
    %v8414 = vpop.f32.mrb[0].mxu0
    %v8415 = vadd.f32 %v8326, %v8414
    %v8416 = vpop.f32.mrb[0].mxu0
    %v8417 = vadd.f32 %v8328, %v8416
    %8418 = vmatprep.mubr.f32.mxu0 %v2146
    %8419 = vmatmul.mubr.f32.gmra.mrb[0].mxu0 %v2145
    %v8420 = vpop.f32.mrb[0].mxu0
    %v8421 = vadd.f32 %v8332, %v8420
    %v8422 = vpop.f32.mrb[0].mxu0
    %v8423 = vadd.f32 %v8334, %v8422
    %8424 = vdwg.mxu0
    %8425 = vmatprep.subr.mxu0 %v7048
    %8426 = vmatpush1.msra.mxu0 %v7047
    %8427 = vmatprep.subr.mxu0 %v7056
    %8428 = vmatpush1.msra.mxu0 %v7055
    %8429 = vmatprep.subr.mxu0 %v7064
    %8430 = vmatpush1.msra.mxu0 %v7063
    %8431 = vmatprep.subr.mxu0 %v7072
    %8432 = vmatpush1.msra.mxu0 %v7071
    %8433 = vmatprep.subr.mxu0 %v7080
    %8434 = vmatpush1.msra.mxu0 %v7079
    %8435 = vmatprep.subr.mxu0 %v7088
    %8436 = vmatpush1.msra.mxu0 %v7087
    %8437 = vmatprep.subr.mxu0 %v7096
    %8438 = vmatpush1.msra.mxu0 %v7095
    %8439 = vmatprep.subr.mxu0 %v7104
    %8440 = vmatpush1.msra.mxu0 %v7103
    %8441 = vmatprep.subr.mxu0 %v7112
    %8442 = vmatpush1.msra.mxu0 %v7111
    %8443 = vmatprep.subr.mxu0 %v7120
    %8444 = vmatpush1.msra.mxu0 %v7119
    %8445 = vmatprep.subr.mxu0 %v7128
    %8446 = vmatpush1.msra.mxu0 %v7127
    %8447 = vmatprep.subr.mxu0 %v7136
    %8448 = vmatpush1.msra.mxu0 %v7135
    %8449 = vmatprep.subr.mxu0 %v7144
    %8450 = vmatpush1.msra.mxu0 %v7143
    %8451 = vmatprep.subr.mxu0 %v7152
    %8452 = vmatpush1.msra.mxu0 %v7151
    %8453 = vmatprep.subr.mxu0 %v7160
    %8454 = vmatpush1.msra.mxu0 %v7159
    %8455 = vmatprep.subr.mxu0 %v7168
    %8456 = vmatpush1.msra.mxu0 %v7167
    %8457 = vmatprep.subr.mxu0 %v7176
    %8458 = vmatpush1.msra.mxu0 %v7175
    %8459 = vmatprep.subr.mxu0 %v7184
    %8460 = vmatpush1.msra.mxu0 %v7183
    %8461 = vmatprep.subr.mxu0 %v7192
    %8462 = vmatpush1.msra.mxu0 %v7191
    %8463 = vmatprep.subr.mxu0 %v7200
    %8464 = vmatpush1.msra.mxu0 %v7199
    %8465 = vmatprep.subr.mxu0 %v7208
    %8466 = vmatpush1.msra.mxu0 %v7207
    %8467 = vmatprep.subr.mxu0 %v7216
    %8468 = vmatpush1.msra.mxu0 %v7215
    %8469 = vmatprep.subr.mxu0 %v7224
    %8470 = vmatpush1.msra.mxu0 %v7223
    %8471 = vmatprep.subr.mxu0 %v7232
    %8472 = vmatpush1.msra.mxu0 %v7231
    %8473 = vmatprep.subr.mxu0 %v7240
    %8474 = vmatpush1.msra.mxu0 %v7239
    %8475 = vmatprep.subr.mxu0 %v7248
    %8476 = vmatpush1.msra.mxu0 %v7247
    %8477 = vmatprep.subr.mxu0 %v7256
    %8478 = vmatpush1.msra.mxu0 %v7255
    %8479 = vmatprep.subr.mxu0 %v7264
    %8480 = vmatpush1.msra.mxu0 %v7263
    %8481 = vmatprep.subr.mxu0 %v7272
    %8482 = vmatpush1.msra.mxu0 %v7271
    %8483 = vmatprep.subr.mxu0 %v7280
    %8484 = vmatpush1.msra.mxu0 %v7279
    %8485 = vmatprep.subr.mxu0 %v7288
    %8486 = vmatpush1.msra.mxu0 %v7287
    %8487 = vmatprep.subr.mxu0 %v7296
    %8488 = vmatpush1.msra.mxu0 %v7295
    %8489 = vmatprep.mubr.f32.mxu0 %v2116
    %8490 = vmatmul.mubr.f32.gmra.mrb[0].mxu0 %v2115
    %v8491 = vpop.f32.mrb[0].mxu0
    %v8492 = vadd.f32 0.0, %v8491
    %v8493 = vpop.f32.mrb[0].mxu0
    %v8494 = vadd.f32 0.0, %v8493
    %8495 = vmatprep.mubr.f32.mxu0 %v2124
    %8496 = vmatmul.mubr.f32.gmra.mrb[0].mxu0 %v2123
    %v8497 = vpop.f32.mrb[0].mxu0
    %v8498 = vadd.f32 0.0, %v8497
    %v8499 = vpop.f32.mrb[0].mxu0
    %v8500 = vadd.f32 0.0, %v8499
    %8501 = vmatprep.mubr.f32.mxu0 %v2132
    %8502 = vmatmul.mubr.f32.gmra.mrb[0].mxu0 %v2131
    %v8503 = vpop.f32.mrb[0].mxu0
    %v8504 = vadd.f32 0.0, %v8503
    %v8505 = vpop.f32.mrb[0].mxu0
    %v8506 = vadd.f32 0.0, %v8505
    %8507 = vmatprep.mubr.f32.mxu0 %v2140
    %8508 = vmatmul.mubr.f32.gmra.mrb[0].mxu0 %v2139
    %v8509 = vpop.f32.mrb[0].mxu0
    %v8510 = vadd.f32 0.0, %v8509
    %v8511 = vpop.f32.mrb[0].mxu0
    %v8512 = vadd.f32 0.0, %v8511
    %8513 = vdwg.mxu0
    %8514 = vmatprep.subr.mxu0 %v7304
    %8515 = vmatpush1.msra.mxu0 %v7303
    %8516 = vmatprep.subr.mxu0 %v7312
    %8517 = vmatpush1.msra.mxu0 %v7311
    %8518 = vmatprep.subr.mxu0 %v7320
    %8519 = vmatpush1.msra.mxu0 %v7319
    %8520 = vmatprep.subr.mxu0 %v7328
    %8521 = vmatpush1.msra.mxu0 %v7327
    %8522 = vmatprep.subr.mxu0 %v7336
    %8523 = vmatpush1.msra.mxu0 %v7335
    %8524 = vmatprep.subr.mxu0 %v7344
    %8525 = vmatpush1.msra.mxu0 %v7343
    %8526 = vmatprep.subr.mxu0 %v7352
    %8527 = vmatpush1.msra.mxu0 %v7351
    %8528 = vmatprep.subr.mxu0 %v7360
    %8529 = vmatpush1.msra.mxu0 %v7359
    %8530 = vmatprep.subr.mxu0 %v7368
    %8531 = vmatpush1.msra.mxu0 %v7367
    %8532 = vmatprep.subr.mxu0 %v7376
    %8533 = vmatpush1.msra.mxu0 %v7375
    %8534 = vmatprep.subr.mxu0 %v7384
    %8535 = vmatpush1.msra.mxu0 %v7383
    %8536 = vmatprep.subr.mxu0 %v7392
    %8537 = vmatpush1.msra.mxu0 %v7391
    %8538 = vmatprep.subr.mxu0 %v7400
    %8539 = vmatpush1.msra.mxu0 %v7399
    %8540 = vmatprep.subr.mxu0 %v7408
    %8541 = vmatpush1.msra.mxu0 %v7407
    %8542 = vmatprep.subr.mxu0 %v7416
    %8543 = vmatpush1.msra.mxu0 %v7415
    %8544 = vmatprep.subr.mxu0 %v7424
    %8545 = vmatpush1.msra.mxu0 %v7423
    %8546 = vmatprep.subr.mxu0 %v7432
    %8547 = vmatpush1.msra.mxu0 %v7431
    %8548 = vmatprep.subr.mxu0 %v7440
    %8549 = vmatpush1.msra.mxu0 %v7439
    %8550 = vmatprep.subr.mxu0 %v7448
    %8551 = vmatpush1.msra.mxu0 %v7447
    %8552 = vmatprep.subr.mxu0 %v7456
    %8553 = vmatpush1.msra.mxu0 %v7455
    %8554 = vmatprep.subr.mxu0 %v7464
    %8555 = vmatpush1.msra.mxu0 %v7463
    %8556 = vmatprep.subr.mxu0 %v7472
    %8557 = vmatpush1.msra.mxu0 %v7471
    %8558 = vmatprep.subr.mxu0 %v7480
    %8559 = vmatpush1.msra.mxu0 %v7479
    %8560 = vmatprep.subr.mxu0 %v7488
    %8561 = vmatpush1.msra.mxu0 %v7487
    %8562 = vmatprep.subr.mxu0 %v7496
    %8563 = vmatpush1.msra.mxu0 %v7495
    %8564 = vmatprep.subr.mxu0 %v7504
    %8565 = vmatpush1.msra.mxu0 %v7503
    %8566 = vmatprep.subr.mxu0 %v7512
    %8567 = vmatpush1.msra.mxu0 %v7511
    %8568 = vmatprep.subr.mxu0 %v7520
    %8569 = vmatpush1.msra.mxu0 %v7519
    %8570 = vmatprep.subr.mxu0 %v7528
    %8571 = vmatpush1.msra.mxu0 %v7527
    %8572 = vmatprep.subr.mxu0 %v7536
    %8573 = vmatpush1.msra.mxu0 %v7535
    %8574 = vmatprep.subr.mxu0 %v7544
    %8575 = vmatpush1.msra.mxu0 %v7543
    %8576 = vmatprep.subr.mxu0 %v7552
    %8577 = vmatpush1.msra.mxu0 %v7551
    %8578 = vmatprep.mubr.f32.mxu0 %v2118
    %8579 = vmatmul.mubr.f32.gmra.mrb[0].mxu0 %v2117
    %v8580 = vpop.f32.mrb[0].mxu0
    %v8581 = vadd.f32 %v8492, %v8580
    %v8582 = vpop.f32.mrb[0].mxu0
    %v8583 = vadd.f32 %v8494, %v8582
    %8584 = vmatprep.mubr.f32.mxu0 %v2126
    %8585 = vmatmul.mubr.f32.gmra.mrb[0].mxu0 %v2125
    %v8586 = vpop.f32.mrb[0].mxu0
    %v8587 = vadd.f32 %v8498, %v8586
    %v8588 = vpop.f32.mrb[0].mxu0
    %v8589 = vadd.f32 %v8500, %v8588
    %8590 = vmatprep.mubr.f32.mxu0 %v2134
    %8591 = vmatmul.mubr.f32.gmra.mrb[0].mxu0 %v2133
    %v8592 = vpop.f32.mrb[0].mxu0
    %v8593 = vadd.f32 %v8504, %v8592
    %v8594 = vpop.f32.mrb[0].mxu0
    %v8595 = vadd.f32 %v8506, %v8594
    %8596 = vmatprep.mubr.f32.mxu0 %v2142
    %8597 = vmatmul.mubr.f32.gmra.mrb[0].mxu0 %v2141
    %v8598 = vpop.f32.mrb[0].mxu0
    %v8599 = vadd.f32 %v8510, %v8598
    %v8600 = vpop.f32.mrb[0].mxu0
    %v8601 = vadd.f32 %v8512, %v8600
    %8602 = vdwg.mxu0
    %8603 = vmatprep.subr.mxu0 %v7560
    %8604 = vmatpush1.msra.mxu0 %v7559
    %8605 = vmatprep.subr.mxu0 %v7568
    %8606 = vmatpush1.msra.mxu0 %v7567
    %8607 = vmatprep.subr.mxu0 %v7576
    %8608 = vmatpush1.msra.mxu0 %v7575
    %8609 = vmatprep.subr.mxu0 %v7584
    %8610 = vmatpush1.msra.mxu0 %v7583
    %8611 = vmatprep.subr.mxu0 %v7592
    %8612 = vmatpush1.msra.mxu0 %v7591
    %8613 = vmatprep.subr.mxu0 %v7600
    %8614 = vmatpush1.msra.mxu0 %v7599
    %8615 = vmatprep.subr.mxu0 %v7608
    %8616 = vmatpush1.msra.mxu0 %v7607
    %8617 = vmatprep.subr.mxu0 %v7616
    %8618 = vmatpush1.msra.mxu0 %v7615
    %8619 = vmatprep.subr.mxu0 %v7624
    %8620 = vmatpush1.msra.mxu0 %v7623
    %8621 = vmatprep.subr.mxu0 %v7632
    %8622 = vmatpush1.msra.mxu0 %v7631
    %8623 = vmatprep.subr.mxu0 %v7640
    %8624 = vmatpush1.msra.mxu0 %v7639
    %8625 = vmatprep.subr.mxu0 %v7648
    %8626 = vmatpush1.msra.mxu0 %v7647
    %8627 = vmatprep.subr.mxu0 %v7656
    %8628 = vmatpush1.msra.mxu0 %v7655
    %8629 = vmatprep.subr.mxu0 %v7664
    %8630 = vmatpush1.msra.mxu0 %v7663
    %8631 = vmatprep.subr.mxu0 %v7672
    %8632 = vmatpush1.msra.mxu0 %v7671
    %8633 = vmatprep.subr.mxu0 %v7680
    %8634 = vmatpush1.msra.mxu0 %v7679
    %8635 = vmatprep.subr.mxu0 %v7688
    %8636 = vmatpush1.msra.mxu0 %v7687
    %8637 = vmatprep.subr.mxu0 %v7696
    %8638 = vmatpush1.msra.mxu0 %v7695
    %8639 = vmatprep.subr.mxu0 %v7704
    %8640 = vmatpush1.msra.mxu0 %v7703
    %8641 = vmatprep.subr.mxu0 %v7712
    %8642 = vmatpush1.msra.mxu0 %v7711
    %8643 = vmatprep.subr.mxu0 %v7720
    %8644 = vmatpush1.msra.mxu0 %v7719
    %8645 = vmatprep.subr.mxu0 %v7728
    %8646 = vmatpush1.msra.mxu0 %v7727
    %8647 = vmatprep.subr.mxu0 %v7736
    %8648 = vmatpush1.msra.mxu0 %v7735
    %8649 = vmatprep.subr.mxu0 %v7744
    %8650 = vmatpush1.msra.mxu0 %v7743
    %8651 = vmatprep.subr.mxu0 %v7752
    %8652 = vmatpush1.msra.mxu0 %v7751
    %8653 = vmatprep.subr.mxu0 %v7760
    %8654 = vmatpush1.msra.mxu0 %v7759
    %8655 = vmatprep.subr.mxu0 %v7768
    %8656 = vmatpush1.msra.mxu0 %v7767
    %8657 = vmatprep.subr.mxu0 %v7776
    %8658 = vmatpush1.msra.mxu0 %v7775
    %8659 = vmatprep.subr.mxu0 %v7784
    %8660 = vmatpush1.msra.mxu0 %v7783
    %8661 = vmatprep.subr.mxu0 %v7792
    %8662 = vmatpush1.msra.mxu0 %v7791
    %8663 = vmatprep.subr.mxu0 %v7800
    %8664 = vmatpush1.msra.mxu0 %v7799
    %8665 = vmatprep.subr.mxu0 %v7808
    %8666 = vmatpush1.msra.mxu0 %v7807
    %8667 = vmatprep.mubr.f32.mxu0 %v2120
    %8668 = vmatmul.mubr.f32.gmra.mrb[0].mxu0 %v2119
    %v8669 = vpop.f32.mrb[0].mxu0
    %v8670 = vadd.f32 %v8581, %v8669
    %v8671 = vpop.f32.mrb[0].mxu0
    %v8672 = vadd.f32 %v8583, %v8671
    %8673 = vmatprep.mubr.f32.mxu0 %v2128
    %8674 = vmatmul.mubr.f32.gmra.mrb[0].mxu0 %v2127
    %v8675 = vpop.f32.mrb[0].mxu0
    %v8676 = vadd.f32 %v8587, %v8675
    %v8677 = vpop.f32.mrb[0].mxu0
    %v8678 = vadd.f32 %v8589, %v8677
    %8679 = vmatprep.mubr.f32.mxu0 %v2136
    %8680 = vmatmul.mubr.f32.gmra.mrb[0].mxu0 %v2135
    %v8681 = vpop.f32.mrb[0].mxu0
    %v8682 = vadd.f32 %v8593, %v8681
    %v8683 = vpop.f32.mrb[0].mxu0
    %v8684 = vadd.f32 %v8595, %v8683
    %8685 = vmatprep.mubr.f32.mxu0 %v2144
    %8686 = vmatmul.mubr.f32.gmra.mrb[0].mxu0 %v2143
    %v8687 = vpop.f32.mrb[0].mxu0
    %v8688 = vadd.f32 %v8599, %v8687
    %v8689 = vpop.f32.mrb[0].mxu0
    %v8690 = vadd.f32 %v8601, %v8689
    %8691 = vdwg.mxu0
    %8692 = vmatprep.subr.mxu0 %v7816
    %8693 = vmatpush1.msra.mxu0 %v7815
    %8694 = vmatprep.subr.mxu0 %v7824
    %8695 = vmatpush1.msra.mxu0 %v7823
    %8696 = vmatprep.subr.mxu0 %v7832
    %8697 = vmatpush1.msra.mxu0 %v7831
    %8698 = vmatprep.subr.mxu0 %v7840
    %8699 = vmatpush1.msra.mxu0 %v7839
    %8700 = vmatprep.subr.mxu0 %v7848
    %8701 = vmatpush1.msra.mxu0 %v7847
    %8702 = vmatprep.subr.mxu0 %v7856
    %8703 = vmatpush1.msra.mxu0 %v7855
    %8704 = vmatprep.subr.mxu0 %v7864
    %8705 = vmatpush1.msra.mxu0 %v7863
    %8706 = vmatprep.subr.mxu0 %v7872
    %8707 = vmatpush1.msra.mxu0 %v7871
    %8708 = vmatprep.subr.mxu0 %v7880
    %8709 = vmatpush1.msra.mxu0 %v7879
    %8710 = vmatprep.subr.mxu0 %v7888
    %8711 = vmatpush1.msra.mxu0 %v7887
    %8712 = vmatprep.subr.mxu0 %v7896
    %8713 = vmatpush1.msra.mxu0 %v7895
    %8714 = vmatprep.subr.mxu0 %v7904
    %8715 = vmatpush1.msra.mxu0 %v7903
    %8716 = vmatprep.subr.mxu0 %v7912
    %8717 = vmatpush1.msra.mxu0 %v7911
    %8718 = vmatprep.subr.mxu0 %v7920
    %8719 = vmatpush1.msra.mxu0 %v7919
    %8720 = vmatprep.subr.mxu0 %v7928
    %8721 = vmatpush1.msra.mxu0 %v7927
    %8722 = vmatprep.subr.mxu0 %v7936
    %8723 = vmatpush1.msra.mxu0 %v7935
    %8724 = vmatprep.subr.mxu0 %v7944
    %8725 = vmatpush1.msra.mxu0 %v7943
    %8726 = vmatprep.subr.mxu0 %v7952
    %8727 = vmatpush1.msra.mxu0 %v7951
    %8728 = vmatprep.subr.mxu0 %v7960
    %8729 = vmatpush1.msra.mxu0 %v7959
    %8730 = vmatprep.subr.mxu0 %v7968
    %8731 = vmatpush1.msra.mxu0 %v7967
    %8732 = vmatprep.subr.mxu0 %v7976
    %8733 = vmatpush1.msra.mxu0 %v7975
    %8734 = vmatprep.subr.mxu0 %v7984
    %8735 = vmatpush1.msra.mxu0 %v7983
    %8736 = vmatprep.subr.mxu0 %v7992
    %8737 = vmatpush1.msra.mxu0 %v7991
    %8738 = vmatprep.subr.mxu0 %v8000
    %8739 = vmatpush1.msra.mxu0 %v7999
    %8740 = vmatprep.subr.mxu0 %v8008
    %8741 = vmatpush1.msra.mxu0 %v8007
    %8742 = vmatprep.subr.mxu0 %v8016
    %8743 = vmatpush1.msra.mxu0 %v8015
    %8744 = vmatprep.subr.mxu0 %v8024
    %8745 = vmatpush1.msra.mxu0 %v8023
    %8746 = vmatprep.subr.mxu0 %v8032
    %8747 = vmatpush1.msra.mxu0 %v8031
    %8748 = vmatprep.subr.mxu0 %v8040
    %8749 = vmatpush1.msra.mxu0 %v8039
    %8750 = vmatprep.subr.mxu0 %v8048
    %8751 = vmatpush1.msra.mxu0 %v8047
    %8752 = vmatprep.subr.mxu0 %v8056
    %8753 = vmatpush1.msra.mxu0 %v8055
    %8754 = vmatprep.subr.mxu0 %v8064
    %8755 = vmatpush1.msra.mxu0 %v8063
    %8756 = vmatprep.mubr.f32.mxu0 %v2122
    %8757 = vmatmul.mubr.f32.gmra.mrb[0].mxu0 %v2121
    %v8758 = vpop.f32.mrb[0].mxu0
    %v8759 = vadd.f32 %v8670, %v8758
    %v8760 = vpop.f32.mrb[0].mxu0
    %v8761 = vadd.f32 %v8672, %v8760
    %8762 = vmatprep.mubr.f32.mxu0 %v2130
    %8763 = vmatmul.mubr.f32.gmra.mrb[0].mxu0 %v2129
    %v8764 = vpop.f32.mrb[0].mxu0
    %v8765 = vadd.f32 %v8676, %v8764
    %v8766 = vpop.f32.mrb[0].mxu0
    %v8767 = vadd.f32 %v8678, %v8766
    %8768 = vmatprep.mubr.f32.mxu0 %v2138
    %8769 = vmatmul.mubr.f32.gmra.mrb[0].mxu0 %v2137
    %v8770 = vpop.f32.mrb[0].mxu0
    %v8771 = vadd.f32 %v8682, %v8770
    %v8772 = vpop.f32.mrb[0].mxu0
    %v8773 = vadd.f32 %v8684, %v8772
    %8774 = vmatprep.mubr.f32.mxu0 %v2146
    %8775 = vmatmul.mubr.f32.gmra.mrb[0].mxu0 %v2145
    %v8776 = vpop.f32.mrb[0].mxu0
    %v8777 = vadd.f32 %v8688, %v8776
    %v8778 = vpop.f32.mrb[0].mxu0
    %v8779 = vadd.f32 %v8690, %v8778
    %8780 = vdwg.mxu0
    %8781 = vmatprep.subr.mxu0 %v7050
    %8782 = vmatpush1.msra.mxu0 %v7049
    %8783 = vmatprep.subr.mxu0 %v7058
    %8784 = vmatpush1.msra.mxu0 %v7057
    %8785 = vmatprep.subr.mxu0 %v7066
    %8786 = vmatpush1.msra.mxu0 %v7065
    %8787 = vmatprep.subr.mxu0 %v7074
    %8788 = vmatpush1.msra.mxu0 %v7073
    %8789 = vmatprep.subr.mxu0 %v7082
    %8790 = vmatpush1.msra.mxu0 %v7081
    %8791 = vmatprep.subr.mxu0 %v7090
    %8792 = vmatpush1.msra.mxu0 %v7089
    %8793 = vmatprep.subr.mxu0 %v7098
    %8794 = vmatpush1.msra.mxu0 %v7097
    %8795 = vmatprep.subr.mxu0 %v7106
    %8796 = vmatpush1.msra.mxu0 %v7105
    %8797 = vmatprep.subr.mxu0 %v7114
    %8798 = vmatpush1.msra.mxu0 %v7113
    %8799 = vmatprep.subr.mxu0 %v7122
    %8800 = vmatpush1.msra.mxu0 %v7121
    %8801 = vmatprep.subr.mxu0 %v7130
    %8802 = vmatpush1.msra.mxu0 %v7129
    %8803 = vmatprep.subr.mxu0 %v7138
    %8804 = vmatpush1.msra.mxu0 %v7137
    %8805 = vmatprep.subr.mxu0 %v7146
    %8806 = vmatpush1.msra.mxu0 %v7145
    %8807 = vmatprep.subr.mxu0 %v7154
    %8808 = vmatpush1.msra.mxu0 %v7153
    %8809 = vmatprep.subr.mxu0 %v7162
    %8810 = vmatpush1.msra.mxu0 %v7161
    %8811 = vmatprep.subr.mxu0 %v7170
    %8812 = vmatpush1.msra.mxu0 %v7169
    %8813 = vmatprep.subr.mxu0 %v7178
    %8814 = vmatpush1.msra.mxu0 %v7177
    %8815 = vmatprep.subr.mxu0 %v7186
    %8816 = vmatpush1.msra.mxu0 %v7185
    %8817 = vmatprep.subr.mxu0 %v7194
    %8818 = vmatpush1.msra.mxu0 %v7193
    %8819 = vmatprep.subr.mxu0 %v7202
    %8820 = vmatpush1.msra.mxu0 %v7201
    %8821 = vmatprep.subr.mxu0 %v7210
    %8822 = vmatpush1.msra.mxu0 %v7209
    %8823 = vmatprep.subr.mxu0 %v7218
    %8824 = vmatpush1.msra.mxu0 %v7217
    %8825 = vmatprep.subr.mxu0 %v7226
    %8826 = vmatpush1.msra.mxu0 %v7225
    %8827 = vmatprep.subr.mxu0 %v7234
    %8828 = vmatpush1.msra.mxu0 %v7233
    %8829 = vmatprep.subr.mxu0 %v7242
    %8830 = vmatpush1.msra.mxu0 %v7241
    %8831 = vmatprep.subr.mxu0 %v7250
    %8832 = vmatpush1.msra.mxu0 %v7249
    %8833 = vmatprep.subr.mxu0 %v7258
    %8834 = vmatpush1.msra.mxu0 %v7257
    %8835 = vmatprep.subr.mxu0 %v7266
    %8836 = vmatpush1.msra.mxu0 %v7265
    %8837 = vmatprep.subr.mxu0 %v7274
    %8838 = vmatpush1.msra.mxu0 %v7273
    %8839 = vmatprep.subr.mxu0 %v7282
    %8840 = vmatpush1.msra.mxu0 %v7281
    %8841 = vmatprep.subr.mxu0 %v7290
    %8842 = vmatpush1.msra.mxu0 %v7289
    %8843 = vmatprep.subr.mxu0 %v7298
    %8844 = vmatpush1.msra.mxu0 %v7297
    %8845 = vmatprep.mubr.f32.mxu0 %v2116
    %8846 = vmatmul.mubr.f32.gmra.mrb[0].mxu0 %v2115
    %v8847 = vpop.f32.mrb[0].mxu0
    %v8848 = vadd.f32 0.0, %v8847
    %v8849 = vpop.f32.mrb[0].mxu0
    %v8850 = vadd.f32 0.0, %v8849
    %8851 = vmatprep.mubr.f32.mxu0 %v2124
    %8852 = vmatmul.mubr.f32.gmra.mrb[0].mxu0 %v2123
    %v8853 = vpop.f32.mrb[0].mxu0
    %v8854 = vadd.f32 0.0, %v8853
    %v8855 = vpop.f32.mrb[0].mxu0
    %v8856 = vadd.f32 0.0, %v8855
    %8857 = vmatprep.mubr.f32.mxu0 %v2132
    %8858 = vmatmul.mubr.f32.gmra.mrb[0].mxu0 %v2131
    %v8859 = vpop.f32.mrb[0].mxu0
    %v8860 = vadd.f32 0.0, %v8859
    %v8861 = vpop.f32.mrb[0].mxu0
    %v8862 = vadd.f32 0.0, %v8861
    %8863 = vmatprep.mubr.f32.mxu0 %v2140
    %8864 = vmatmul.mubr.f32.gmra.mrb[0].mxu0 %v2139
    %v8865 = vpop.f32.mrb[0].mxu0
    %v8866 = vadd.f32 0.0, %v8865
    %v8867 = vpop.f32.mrb[0].mxu0
    %v8868 = vadd.f32 0.0, %v8867
    %8869 = vdwg.mxu0
    %8870 = vmatprep.subr.mxu0 %v7306
    %8871 = vmatpush1.msra.mxu0 %v7305
    %8872 = vmatprep.subr.mxu0 %v7314
    %8873 = vmatpush1.msra.mxu0 %v7313
    %8874 = vmatprep.subr.mxu0 %v7322
    %8875 = vmatpush1.msra.mxu0 %v7321
    %8876 = vmatprep.subr.mxu0 %v7330
    %8877 = vmatpush1.msra.mxu0 %v7329
    %8878 = vmatprep.subr.mxu0 %v7338
    %8879 = vmatpush1.msra.mxu0 %v7337
    %8880 = vmatprep.subr.mxu0 %v7346
    %8881 = vmatpush1.msra.mxu0 %v7345
    %8882 = vmatprep.subr.mxu0 %v7354
    %8883 = vmatpush1.msra.mxu0 %v7353
    %8884 = vmatprep.subr.mxu0 %v7362
    %8885 = vmatpush1.msra.mxu0 %v7361
    %8886 = vmatprep.subr.mxu0 %v7370
    %8887 = vmatpush1.msra.mxu0 %v7369
    %8888 = vmatprep.subr.mxu0 %v7378
    %8889 = vmatpush1.msra.mxu0 %v7377
    %8890 = vmatprep.subr.mxu0 %v7386
    %8891 = vmatpush1.msra.mxu0 %v7385
    %8892 = vmatprep.subr.mxu0 %v7394
    %8893 = vmatpush1.msra.mxu0 %v7393
    %8894 = vmatprep.subr.mxu0 %v7402
    %8895 = vmatpush1.msra.mxu0 %v7401
    %8896 = vmatprep.subr.mxu0 %v7410
    %8897 = vmatpush1.msra.mxu0 %v7409
    %8898 = vmatprep.subr.mxu0 %v7418
    %8899 = vmatpush1.msra.mxu0 %v7417
    %8900 = vmatprep.subr.mxu0 %v7426
    %8901 = vmatpush1.msra.mxu0 %v7425
    %8902 = vmatprep.subr.mxu0 %v7434
    %8903 = vmatpush1.msra.mxu0 %v7433
    %8904 = vmatprep.subr.mxu0 %v7442
    %8905 = vmatpush1.msra.mxu0 %v7441
    %8906 = vmatprep.subr.mxu0 %v7450
    %8907 = vmatpush1.msra.mxu0 %v7449
    %8908 = vmatprep.subr.mxu0 %v7458
    %8909 = vmatpush1.msra.mxu0 %v7457
    %8910 = vmatprep.subr.mxu0 %v7466
    %8911 = vmatpush1.msra.mxu0 %v7465
    %8912 = vmatprep.subr.mxu0 %v7474
    %8913 = vmatpush1.msra.mxu0 %v7473
    %8914 = vmatprep.subr.mxu0 %v7482
    %8915 = vmatpush1.msra.mxu0 %v7481
    %8916 = vmatprep.subr.mxu0 %v7490
    %8917 = vmatpush1.msra.mxu0 %v7489
    %8918 = vmatprep.subr.mxu0 %v7498
    %8919 = vmatpush1.msra.mxu0 %v7497
    %8920 = vmatprep.subr.mxu0 %v7506
    %8921 = vmatpush1.msra.mxu0 %v7505
    %8922 = vmatprep.subr.mxu0 %v7514
    %8923 = vmatpush1.msra.mxu0 %v7513
    %8924 = vmatprep.subr.mxu0 %v7522
    %8925 = vmatpush1.msra.mxu0 %v7521
    %8926 = vmatprep.subr.mxu0 %v7530
    %8927 = vmatpush1.msra.mxu0 %v7529
    %8928 = vmatprep.subr.mxu0 %v7538
    %8929 = vmatpush1.msra.mxu0 %v7537
    %8930 = vmatprep.subr.mxu0 %v7546
    %8931 = vmatpush1.msra.mxu0 %v7545
    %8932 = vmatprep.subr.mxu0 %v7554
    %8933 = vmatpush1.msra.mxu0 %v7553
    %8934 = vmatprep.mubr.f32.mxu0 %v2118
    %8935 = vmatmul.mubr.f32.gmra.mrb[0].mxu0 %v2117
    %v8936 = vpop.f32.mrb[0].mxu0
    %v8937 = vadd.f32 %v8848, %v8936
    %v8938 = vpop.f32.mrb[0].mxu0
    %v8939 = vadd.f32 %v8850, %v8938
    %8940 = vmatprep.mubr.f32.mxu0 %v2126
    %8941 = vmatmul.mubr.f32.gmra.mrb[0].mxu0 %v2125
    %v8942 = vpop.f32.mrb[0].mxu0
    %v8943 = vadd.f32 %v8854, %v8942
    %v8944 = vpop.f32.mrb[0].mxu0
    %v8945 = vadd.f32 %v8856, %v8944
    %8946 = vmatprep.mubr.f32.mxu0 %v2134
    %8947 = vmatmul.mubr.f32.gmra.mrb[0].mxu0 %v2133
    %v8948 = vpop.f32.mrb[0].mxu0
    %v8949 = vadd.f32 %v8860, %v8948
    %v8950 = vpop.f32.mrb[0].mxu0
    %v8951 = vadd.f32 %v8862, %v8950
    %8952 = vmatprep.mubr.f32.mxu0 %v2142
    %8953 = vmatmul.mubr.f32.gmra.mrb[0].mxu0 %v2141
    %v8954 = vpop.f32.mrb[0].mxu0
    %v8955 = vadd.f32 %v8866, %v8954
    %v8956 = vpop.f32.mrb[0].mxu0
    %v8957 = vadd.f32 %v8868, %v8956
    %8958 = vdwg.mxu0
    %8959 = vmatprep.subr.mxu0 %v7562
    %8960 = vmatpush1.msra.mxu0 %v7561
    %8961 = vmatprep.subr.mxu0 %v7570
    %8962 = vmatpush1.msra.mxu0 %v7569
    %8963 = vmatprep.subr.mxu0 %v7578
    %8964 = vmatpush1.msra.mxu0 %v7577
    %8965 = vmatprep.subr.mxu0 %v7586
    %8966 = vmatpush1.msra.mxu0 %v7585
    %8967 = vmatprep.subr.mxu0 %v7594
    %8968 = vmatpush1.msra.mxu0 %v7593
    %8969 = vmatprep.subr.mxu0 %v7602
    %8970 = vmatpush1.msra.mxu0 %v7601
    %8971 = vmatprep.subr.mxu0 %v7610
    %8972 = vmatpush1.msra.mxu0 %v7609
    %8973 = vmatprep.subr.mxu0 %v7618
    %8974 = vmatpush1.msra.mxu0 %v7617
    %8975 = vmatprep.subr.mxu0 %v7626
    %8976 = vmatpush1.msra.mxu0 %v7625
    %8977 = vmatprep.subr.mxu0 %v7634
    %8978 = vmatpush1.msra.mxu0 %v7633
    %8979 = vmatprep.subr.mxu0 %v7642
    %8980 = vmatpush1.msra.mxu0 %v7641
    %8981 = vmatprep.subr.mxu0 %v7650
    %8982 = vmatpush1.msra.mxu0 %v7649
    %8983 = vmatprep.subr.mxu0 %v7658
    %8984 = vmatpush1.msra.mxu0 %v7657
    %8985 = vmatprep.subr.mxu0 %v7666
    %8986 = vmatpush1.msra.mxu0 %v7665
    %8987 = vmatprep.subr.mxu0 %v7674
    %8988 = vmatpush1.msra.mxu0 %v7673
    %8989 = vmatprep.subr.mxu0 %v7682
    %8990 = vmatpush1.msra.mxu0 %v7681
    %8991 = vmatprep.subr.mxu0 %v7690
    %8992 = vmatpush1.msra.mxu0 %v7689
    %8993 = vmatprep.subr.mxu0 %v7698
    %8994 = vmatpush1.msra.mxu0 %v7697
    %8995 = vmatprep.subr.mxu0 %v7706
    %8996 = vmatpush1.msra.mxu0 %v7705
    %8997 = vmatprep.subr.mxu0 %v7714
    %8998 = vmatpush1.msra.mxu0 %v7713
    %8999 = vmatprep.subr.mxu0 %v7722
    %9000 = vmatpush1.msra.mxu0 %v7721
    %9001 = vmatprep.subr.mxu0 %v7730
    %9002 = vmatpush1.msra.mxu0 %v7729
    %9003 = vmatprep.subr.mxu0 %v7738
    %9004 = vmatpush1.msra.mxu0 %v7737
    %9005 = vmatprep.subr.mxu0 %v7746
    %9006 = vmatpush1.msra.mxu0 %v7745
    %9007 = vmatprep.subr.mxu0 %v7754
    %9008 = vmatpush1.msra.mxu0 %v7753
    %9009 = vmatprep.subr.mxu0 %v7762
    %9010 = vmatpush1.msra.mxu0 %v7761
    %9011 = vmatprep.subr.mxu0 %v7770
    %9012 = vmatpush1.msra.mxu0 %v7769
    %9013 = vmatprep.subr.mxu0 %v7778
    %9014 = vmatpush1.msra.mxu0 %v7777
    %9015 = vmatprep.subr.mxu0 %v7786
    %9016 = vmatpush1.msra.mxu0 %v7785
    %9017 = vmatprep.subr.mxu0 %v7794
    %9018 = vmatpush1.msra.mxu0 %v7793
    %9019 = vmatprep.subr.mxu0 %v7802
    %9020 = vmatpush1.msra.mxu0 %v7801
    %9021 = vmatprep.subr.mxu0 %v7810
    %9022 = vmatpush1.msra.mxu0 %v7809
    %9023 = vmatprep.mubr.f32.mxu0 %v2120
    %9024 = vmatmul.mubr.f32.gmra.mrb[0].mxu0 %v2119
    %v9025 = vpop.f32.mrb[0].mxu0
    %v9026 = vadd.f32 %v8937, %v9025
    %v9027 = vpop.f32.mrb[0].mxu0
    %v9028 = vadd.f32 %v8939, %v9027
    %9029 = vmatprep.mubr.f32.mxu0 %v2128
    %9030 = vmatmul.mubr.f32.gmra.mrb[0].mxu0 %v2127
    %v9031 = vpop.f32.mrb[0].mxu0
    %v9032 = vadd.f32 %v8943, %v9031
    %v9033 = vpop.f32.mrb[0].mxu0
    %v9034 = vadd.f32 %v8945, %v9033
    %9035 = vmatprep.mubr.f32.mxu0 %v2136
    %9036 = vmatmul.mubr.f32.gmra.mrb[0].mxu0 %v2135
    %v9037 = vpop.f32.mrb[0].mxu0
    %v9038 = vadd.f32 %v8949, %v9037
    %v9039 = vpop.f32.mrb[0].mxu0
    %v9040 = vadd.f32 %v8951, %v9039
    %9041 = vmatprep.mubr.f32.mxu0 %v2144
    %9042 = vmatmul.mubr.f32.gmra.mrb[0].mxu0 %v2143
    %v9043 = vpop.f32.mrb[0].mxu0
    %v9044 = vadd.f32 %v8955, %v9043
    %v9045 = vpop.f32.mrb[0].mxu0
    %v9046 = vadd.f32 %v8957, %v9045
    %9047 = vdwg.mxu0
    %9048 = vmatprep.subr.mxu0 %v7818
    %9049 = vmatpush1.msra.mxu0 %v7817
    %9050 = vmatprep.subr.mxu0 %v7826
    %9051 = vmatpush1.msra.mxu0 %v7825
    %9052 = vmatprep.subr.mxu0 %v7834
    %9053 = vmatpush1.msra.mxu0 %v7833
    %9054 = vmatprep.subr.mxu0 %v7842
    %9055 = vmatpush1.msra.mxu0 %v7841
    %9056 = vmatprep.subr.mxu0 %v7850
    %9057 = vmatpush1.msra.mxu0 %v7849
    %9058 = vmatprep.subr.mxu0 %v7858
    %9059 = vmatpush1.msra.mxu0 %v7857
    %9060 = vmatprep.subr.mxu0 %v7866
    %9061 = vmatpush1.msra.mxu0 %v7865
    %9062 = vmatprep.subr.mxu0 %v7874
    %9063 = vmatpush1.msra.mxu0 %v7873
    %9064 = vmatprep.subr.mxu0 %v7882
    %9065 = vmatpush1.msra.mxu0 %v7881
    %9066 = vmatprep.subr.mxu0 %v7890
    %9067 = vmatpush1.msra.mxu0 %v7889
    %9068 = vmatprep.subr.mxu0 %v7898
    %9069 = vmatpush1.msra.mxu0 %v7897
    %9070 = vmatprep.subr.mxu0 %v7906
    %9071 = vmatpush1.msra.mxu0 %v7905
    %9072 = vmatprep.subr.mxu0 %v7914
    %9073 = vmatpush1.msra.mxu0 %v7913
    %9074 = vmatprep.subr.mxu0 %v7922
    %9075 = vmatpush1.msra.mxu0 %v7921
    %9076 = vmatprep.subr.mxu0 %v7930
    %9077 = vmatpush1.msra.mxu0 %v7929
    %9078 = vmatprep.subr.mxu0 %v7938
    %9079 = vmatpush1.msra.mxu0 %v7937
    %9080 = vmatprep.subr.mxu0 %v7946
    %9081 = vmatpush1.msra.mxu0 %v7945
    %9082 = vmatprep.subr.mxu0 %v7954
    %9083 = vmatpush1.msra.mxu0 %v7953
    %9084 = vmatprep.subr.mxu0 %v7962
    %9085 = vmatpush1.msra.mxu0 %v7961
    %9086 = vmatprep.subr.mxu0 %v7970
    %9087 = vmatpush1.msra.mxu0 %v7969
    %9088 = vmatprep.subr.mxu0 %v7978
    %9089 = vmatpush1.msra.mxu0 %v7977
    %9090 = vmatprep.subr.mxu0 %v7986
    %9091 = vmatpush1.msra.mxu0 %v7985
    %9092 = vmatprep.subr.mxu0 %v7994
    %9093 = vmatpush1.msra.mxu0 %v7993
    %9094 = vmatprep.subr.mxu0 %v8002
    %9095 = vmatpush1.msra.mxu0 %v8001
    %9096 = vmatprep.subr.mxu0 %v8010
    %9097 = vmatpush1.msra.mxu0 %v8009
    %9098 = vmatprep.subr.mxu0 %v8018
    %9099 = vmatpush1.msra.mxu0 %v8017
    %9100 = vmatprep.subr.mxu0 %v8026
    %9101 = vmatpush1.msra.mxu0 %v8025
    %9102 = vmatprep.subr.mxu0 %v8034
    %9103 = vmatpush1.msra.mxu0 %v8033
    %9104 = vmatprep.subr.mxu0 %v8042
    %9105 = vmatpush1.msra.mxu0 %v8041
    %9106 = vmatprep.subr.mxu0 %v8050
    %9107 = vmatpush1.msra.mxu0 %v8049
    %9108 = vmatprep.subr.mxu0 %v8058
    %9109 = vmatpush1.msra.mxu0 %v8057
    %9110 = vmatprep.subr.mxu0 %v8066
    %9111 = vmatpush1.msra.mxu0 %v8065
    %9112 = vmatprep.mubr.f32.mxu0 %v2122
    %9113 = vmatmul.mubr.f32.gmra.mrb[0].mxu0 %v2121
    %v9114 = vpop.f32.mrb[0].mxu0
    %v9115 = vadd.f32 %v9026, %v9114
    %v9116 = vpop.f32.mrb[0].mxu0
    %v9117 = vadd.f32 %v9028, %v9116
    %9118 = vmatprep.mubr.f32.mxu0 %v2130
    %9119 = vmatmul.mubr.f32.gmra.mrb[0].mxu0 %v2129
    %v9120 = vpop.f32.mrb[0].mxu0
    %v9121 = vadd.f32 %v9032, %v9120
    %v9122 = vpop.f32.mrb[0].mxu0
    %v9123 = vadd.f32 %v9034, %v9122
    %9124 = vmatprep.mubr.f32.mxu0 %v2138
    %9125 = vmatmul.mubr.f32.gmra.mrb[0].mxu0 %v2137
    %v9126 = vpop.f32.mrb[0].mxu0
    %v9127 = vadd.f32 %v9038, %v9126
    %v9128 = vpop.f32.mrb[0].mxu0
    %v9129 = vadd.f32 %v9040, %v9128
    %9130 = vmatprep.mubr.f32.mxu0 %v2146
    %9131 = vmatmul.mubr.f32.gmra.mrb[0].mxu0 %v2145
    %v9132 = vpop.f32.mrb[0].mxu0
    %v9133 = vadd.f32 %v9044, %v9132
    %v9134 = vpop.f32.mrb[0].mxu0
    %v9135 = vadd.f32 %v9046, %v9134
    %9136 = vdwg.mxu0
    %9137 = vmatprep.subr.mxu0 %v7052
    %9138 = vmatpush1.msra.mxu0 %v7051
    %9139 = vmatprep.subr.mxu0 %v7060
    %9140 = vmatpush1.msra.mxu0 %v7059
    %9141 = vmatprep.subr.mxu0 %v7068
    %9142 = vmatpush1.msra.mxu0 %v7067
    %9143 = vmatprep.subr.mxu0 %v7076
    %9144 = vmatpush1.msra.mxu0 %v7075
    %9145 = vmatprep.subr.mxu0 %v7084
    %9146 = vmatpush1.msra.mxu0 %v7083
    %9147 = vmatprep.subr.mxu0 %v7092
    %9148 = vmatpush1.msra.mxu0 %v7091
    %9149 = vmatprep.subr.mxu0 %v7100
    %9150 = vmatpush1.msra.mxu0 %v7099
    %9151 = vmatprep.subr.mxu0 %v7108
    %9152 = vmatpush1.msra.mxu0 %v7107
    %9153 = vmatprep.subr.mxu0 %v7116
    %9154 = vmatpush1.msra.mxu0 %v7115
    %9155 = vmatprep.subr.mxu0 %v7124
    %9156 = vmatpush1.msra.mxu0 %v7123
    %9157 = vmatprep.subr.mxu0 %v7132
    %9158 = vmatpush1.msra.mxu0 %v7131
    %9159 = vmatprep.subr.mxu0 %v7140
    %9160 = vmatpush1.msra.mxu0 %v7139
    %9161 = vmatprep.subr.mxu0 %v7148
    %9162 = vmatpush1.msra.mxu0 %v7147
    %9163 = vmatprep.subr.mxu0 %v7156
    %9164 = vmatpush1.msra.mxu0 %v7155
    %9165 = vmatprep.subr.mxu0 %v7164
    %9166 = vmatpush1.msra.mxu0 %v7163
    %9167 = vmatprep.subr.mxu0 %v7172
    %9168 = vmatpush1.msra.mxu0 %v7171
    %9169 = vmatprep.subr.mxu0 %v7180
    %9170 = vmatpush1.msra.mxu0 %v7179
    %9171 = vmatprep.subr.mxu0 %v7188
    %9172 = vmatpush1.msra.mxu0 %v7187
    %9173 = vmatprep.subr.mxu0 %v7196
    %9174 = vmatpush1.msra.mxu0 %v7195
    %9175 = vmatprep.subr.mxu0 %v7204
    %9176 = vmatpush1.msra.mxu0 %v7203
    %9177 = vmatprep.subr.mxu0 %v7212
    %9178 = vmatpush1.msra.mxu0 %v7211
    %9179 = vmatprep.subr.mxu0 %v7220
    %9180 = vmatpush1.msra.mxu0 %v7219
    %9181 = vmatprep.subr.mxu0 %v7228
    %9182 = vmatpush1.msra.mxu0 %v7227
    %9183 = vmatprep.subr.mxu0 %v7236
    %9184 = vmatpush1.msra.mxu0 %v7235
    %9185 = vmatprep.subr.mxu0 %v7244
    %9186 = vmatpush1.msra.mxu0 %v7243
    %9187 = vmatprep.subr.mxu0 %v7252
    %9188 = vmatpush1.msra.mxu0 %v7251
    %9189 = vmatprep.subr.mxu0 %v7260
    %9190 = vmatpush1.msra.mxu0 %v7259
    %9191 = vmatprep.subr.mxu0 %v7268
    %9192 = vmatpush1.msra.mxu0 %v7267
    %9193 = vmatprep.subr.mxu0 %v7276
    %9194 = vmatpush1.msra.mxu0 %v7275
    %9195 = vmatprep.subr.mxu0 %v7284
    %9196 = vmatpush1.msra.mxu0 %v7283
    %9197 = vmatprep.subr.mxu0 %v7292
    %9198 = vmatpush1.msra.mxu0 %v7291
    %9199 = vmatprep.subr.mxu0 %v7300
    %9200 = vmatpush1.msra.mxu0 %v7299
    %9201 = vmatprep.mubr.f32.mxu0 %v2116
    %9202 = vmatmul.mubr.f32.gmra.mrb[0].mxu0 %v2115
    %v9203 = vpop.f32.mrb[0].mxu0
    %v9204 = vadd.f32 0.0, %v9203
    %v9205 = vpop.f32.mrb[0].mxu0
    %v9206 = vadd.f32 0.0, %v9205
    %9207 = vmatprep.mubr.f32.mxu0 %v2124
    %9208 = vmatmul.mubr.f32.gmra.mrb[0].mxu0 %v2123
    %v9209 = vpop.f32.mrb[0].mxu0
    %v9210 = vadd.f32 0.0, %v9209
    %v9211 = vpop.f32.mrb[0].mxu0
    %v9212 = vadd.f32 0.0, %v9211
    %9213 = vmatprep.mubr.f32.mxu0 %v2132
    %9214 = vmatmul.mubr.f32.gmra.mrb[0].mxu0 %v2131
    %v9215 = vpop.f32.mrb[0].mxu0
    %v9216 = vadd.f32 0.0, %v9215
    %v9217 = vpop.f32.mrb[0].mxu0
    %v9218 = vadd.f32 0.0, %v9217
    %9219 = vmatprep.mubr.f32.mxu0 %v2140
    %9220 = vmatmul.mubr.f32.gmra.mrb[0].mxu0 %v2139
    %v9221 = vpop.f32.mrb[0].mxu0
    %v9222 = vadd.f32 0.0, %v9221
    %v9223 = vpop.f32.mrb[0].mxu0
    %v9224 = vadd.f32 0.0, %v9223
    %9225 = vdwg.mxu0
    %9226 = vmatprep.subr.mxu0 %v7308
    %9227 = vmatpush1.msra.mxu0 %v7307
    %9228 = vmatprep.subr.mxu0 %v7316
    %9229 = vmatpush1.msra.mxu0 %v7315
    %9230 = vmatprep.subr.mxu0 %v7324
    %9231 = vmatpush1.msra.mxu0 %v7323
    %9232 = vmatprep.subr.mxu0 %v7332
    %9233 = vmatpush1.msra.mxu0 %v7331
    %9234 = vmatprep.subr.mxu0 %v7340
    %9235 = vmatpush1.msra.mxu0 %v7339
    %9236 = vmatprep.subr.mxu0 %v7348
    %9237 = vmatpush1.msra.mxu0 %v7347
    %9238 = vmatprep.subr.mxu0 %v7356
    %9239 = vmatpush1.msra.mxu0 %v7355
    %9240 = vmatprep.subr.mxu0 %v7364
    %9241 = vmatpush1.msra.mxu0 %v7363
    %9242 = vmatprep.subr.mxu0 %v7372
    %9243 = vmatpush1.msra.mxu0 %v7371
    %9244 = vmatprep.subr.mxu0 %v7380
    %9245 = vmatpush1.msra.mxu0 %v7379
    %9246 = vmatprep.subr.mxu0 %v7388
    %9247 = vmatpush1.msra.mxu0 %v7387
    %9248 = vmatprep.subr.mxu0 %v7396
    %9249 = vmatpush1.msra.mxu0 %v7395
    %9250 = vmatprep.subr.mxu0 %v7404
    %9251 = vmatpush1.msra.mxu0 %v7403
    %9252 = vmatprep.subr.mxu0 %v7412
    %9253 = vmatpush1.msra.mxu0 %v7411
    %9254 = vmatprep.subr.mxu0 %v7420
    %9255 = vmatpush1.msra.mxu0 %v7419
    %9256 = vmatprep.subr.mxu0 %v7428
    %9257 = vmatpush1.msra.mxu0 %v7427
    %9258 = vmatprep.subr.mxu0 %v7436
    %9259 = vmatpush1.msra.mxu0 %v7435
    %9260 = vmatprep.subr.mxu0 %v7444
    %9261 = vmatpush1.msra.mxu0 %v7443
    %9262 = vmatprep.subr.mxu0 %v7452
    %9263 = vmatpush1.msra.mxu0 %v7451
    %9264 = vmatprep.subr.mxu0 %v7460
    %9265 = vmatpush1.msra.mxu0 %v7459
    %9266 = vmatprep.subr.mxu0 %v7468
    %9267 = vmatpush1.msra.mxu0 %v7467
    %9268 = vmatprep.subr.mxu0 %v7476
    %9269 = vmatpush1.msra.mxu0 %v7475
    %9270 = vmatprep.subr.mxu0 %v7484
    %9271 = vmatpush1.msra.mxu0 %v7483
    %9272 = vmatprep.subr.mxu0 %v7492
    %9273 = vmatpush1.msra.mxu0 %v7491
    %9274 = vmatprep.subr.mxu0 %v7500
    %9275 = vmatpush1.msra.mxu0 %v7499
    %9276 = vmatprep.subr.mxu0 %v7508
    %9277 = vmatpush1.msra.mxu0 %v7507
    %9278 = vmatprep.subr.mxu0 %v7516
    %9279 = vmatpush1.msra.mxu0 %v7515
    %9280 = vmatprep.subr.mxu0 %v7524
    %9281 = vmatpush1.msra.mxu0 %v7523
    %9282 = vmatprep.subr.mxu0 %v7532
    %9283 = vmatpush1.msra.mxu0 %v7531
    %9284 = vmatprep.subr.mxu0 %v7540
    %9285 = vmatpush1.msra.mxu0 %v7539
    %9286 = vmatprep.subr.mxu0 %v7548
    %9287 = vmatpush1.msra.mxu0 %v7547
    %9288 = vmatprep.subr.mxu0 %v7556
    %9289 = vmatpush1.msra.mxu0 %v7555
    %9290 = vmatprep.mubr.f32.mxu0 %v2118
    %9291 = vmatmul.mubr.f32.gmra.mrb[0].mxu0 %v2117
    %v9292 = vpop.f32.mrb[0].mxu0
    %v9293 = vadd.f32 %v9204, %v9292
    %v9294 = vpop.f32.mrb[0].mxu0
    %v9295 = vadd.f32 %v9206, %v9294
    %9296 = vmatprep.mubr.f32.mxu0 %v2126
    %9297 = vmatmul.mubr.f32.gmra.mrb[0].mxu0 %v2125
    %v9298 = vpop.f32.mrb[0].mxu0
    %v9299 = vadd.f32 %v9210, %v9298
    %v9300 = vpop.f32.mrb[0].mxu0
    %v9301 = vadd.f32 %v9212, %v9300
    %9302 = vmatprep.mubr.f32.mxu0 %v2134
    %9303 = vmatmul.mubr.f32.gmra.mrb[0].mxu0 %v2133
    %v9304 = vpop.f32.mrb[0].mxu0
    %v9305 = vadd.f32 %v9216, %v9304
    %v9306 = vpop.f32.mrb[0].mxu0
    %v9307 = vadd.f32 %v9218, %v9306
    %9308 = vmatprep.mubr.f32.mxu0 %v2142
    %9309 = vmatmul.mubr.f32.gmra.mrb[0].mxu0 %v2141
    %v9310 = vpop.f32.mrb[0].mxu0
    %v9311 = vadd.f32 %v9222, %v9310
    %v9312 = vpop.f32.mrb[0].mxu0
    %v9313 = vadd.f32 %v9224, %v9312
    %9314 = vdwg.mxu0
    %9315 = vmatprep.subr.mxu0 %v7564
    %9316 = vmatpush1.msra.mxu0 %v7563
    %9317 = vmatprep.subr.mxu0 %v7572
    %9318 = vmatpush1.msra.mxu0 %v7571
    %9319 = vmatprep.subr.mxu0 %v7580
    %9320 = vmatpush1.msra.mxu0 %v7579
    %9321 = vmatprep.subr.mxu0 %v7588
    %9322 = vmatpush1.msra.mxu0 %v7587
    %9323 = vmatprep.subr.mxu0 %v7596
    %9324 = vmatpush1.msra.mxu0 %v7595
    %9325 = vmatprep.subr.mxu0 %v7604
    %9326 = vmatpush1.msra.mxu0 %v7603
    %9327 = vmatprep.subr.mxu0 %v7612
    %9328 = vmatpush1.msra.mxu0 %v7611
    %9329 = vmatprep.subr.mxu0 %v7620
    %9330 = vmatpush1.msra.mxu0 %v7619
    %9331 = vmatprep.subr.mxu0 %v7628
    %9332 = vmatpush1.msra.mxu0 %v7627
    %9333 = vmatprep.subr.mxu0 %v7636
    %9334 = vmatpush1.msra.mxu0 %v7635
    %9335 = vmatprep.subr.mxu0 %v7644
    %9336 = vmatpush1.msra.mxu0 %v7643
    %9337 = vmatprep.subr.mxu0 %v7652
    %9338 = vmatpush1.msra.mxu0 %v7651
    %9339 = vmatprep.subr.mxu0 %v7660
    %9340 = vmatpush1.msra.mxu0 %v7659
    %9341 = vmatprep.subr.mxu0 %v7668
    %9342 = vmatpush1.msra.mxu0 %v7667
    %9343 = vmatprep.subr.mxu0 %v7676
    %9344 = vmatpush1.msra.mxu0 %v7675
    %9345 = vmatprep.subr.mxu0 %v7684
    %9346 = vmatpush1.msra.mxu0 %v7683
    %9347 = vmatprep.subr.mxu0 %v7692
    %9348 = vmatpush1.msra.mxu0 %v7691
    %9349 = vmatprep.subr.mxu0 %v7700
    %9350 = vmatpush1.msra.mxu0 %v7699
    %9351 = vmatprep.subr.mxu0 %v7708
    %9352 = vmatpush1.msra.mxu0 %v7707
    %9353 = vmatprep.subr.mxu0 %v7716
    %9354 = vmatpush1.msra.mxu0 %v7715
    %9355 = vmatprep.subr.mxu0 %v7724
    %9356 = vmatpush1.msra.mxu0 %v7723
    %9357 = vmatprep.subr.mxu0 %v7732
    %9358 = vmatpush1.msra.mxu0 %v7731
    %9359 = vmatprep.subr.mxu0 %v7740
    %9360 = vmatpush1.msra.mxu0 %v7739
    %9361 = vmatprep.subr.mxu0 %v7748
    %9362 = vmatpush1.msra.mxu0 %v7747
    %9363 = vmatprep.subr.mxu0 %v7756
    %9364 = vmatpush1.msra.mxu0 %v7755
    %9365 = vmatprep.subr.mxu0 %v7764
    %9366 = vmatpush1.msra.mxu0 %v7763
    %9367 = vmatprep.subr.mxu0 %v7772
    %9368 = vmatpush1.msra.mxu0 %v7771
    %9369 = vmatprep.subr.mxu0 %v7780
    %9370 = vmatpush1.msra.mxu0 %v7779
    %9371 = vmatprep.subr.mxu0 %v7788
    %9372 = vmatpush1.msra.mxu0 %v7787
    %9373 = vmatprep.subr.mxu0 %v7796
    %9374 = vmatpush1.msra.mxu0 %v7795
    %9375 = vmatprep.subr.mxu0 %v7804
    %9376 = vmatpush1.msra.mxu0 %v7803
    %9377 = vmatprep.subr.mxu0 %v7812
    %9378 = vmatpush1.msra.mxu0 %v7811
    %9379 = vmatprep.mubr.f32.mxu0 %v2120
    %9380 = vmatmul.mubr.f32.gmra.mrb[0].mxu0 %v2119
    %v9381 = vpop.f32.mrb[0].mxu0
    %v9382 = vadd.f32 %v9293, %v9381
    %v9383 = vpop.f32.mrb[0].mxu0
    %v9384 = vadd.f32 %v9295, %v9383
    %9385 = vmatprep.mubr.f32.mxu0 %v2128
    %9386 = vmatmul.mubr.f32.gmra.mrb[0].mxu0 %v2127
    %v9387 = vpop.f32.mrb[0].mxu0
    %v9388 = vadd.f32 %v9299, %v9387
    %v9389 = vpop.f32.mrb[0].mxu0
    %v9390 = vadd.f32 %v9301, %v9389
    %9391 = vmatprep.mubr.f32.mxu0 %v2136
    %9392 = vmatmul.mubr.f32.gmra.mrb[0].mxu0 %v2135
    %v9393 = vpop.f32.mrb[0].mxu0
    %v9394 = vadd.f32 %v9305, %v9393
    %v9395 = vpop.f32.mrb[0].mxu0
    %v9396 = vadd.f32 %v9307, %v9395
    %9397 = vmatprep.mubr.f32.mxu0 %v2144
    %9398 = vmatmul.mubr.f32.gmra.mrb[0].mxu0 %v2143
    %v9399 = vpop.f32.mrb[0].mxu0
    %v9400 = vadd.f32 %v9311, %v9399
    %v9401 = vpop.f32.mrb[0].mxu0
    %v9402 = vadd.f32 %v9313, %v9401
    %9403 = vdwg.mxu0
    %9404 = vmatprep.subr.mxu0 %v7820
    %9405 = vmatpush1.msra.mxu0 %v7819
    %9406 = vmatprep.subr.mxu0 %v7828
    %9407 = vmatpush1.msra.mxu0 %v7827
    %9408 = vmatprep.subr.mxu0 %v7836
    %9409 = vmatpush1.msra.mxu0 %v7835
    %9410 = vmatprep.subr.mxu0 %v7844
    %9411 = vmatpush1.msra.mxu0 %v7843
    %9412 = vmatprep.subr.mxu0 %v7852
    %9413 = vmatpush1.msra.mxu0 %v7851
    %9414 = vmatprep.subr.mxu0 %v7860
    %9415 = vmatpush1.msra.mxu0 %v7859
    %9416 = vmatprep.subr.mxu0 %v7868
    %9417 = vmatpush1.msra.mxu0 %v7867
    %9418 = vmatprep.subr.mxu0 %v7876
    %9419 = vmatpush1.msra.mxu0 %v7875
    %9420 = vmatprep.subr.mxu0 %v7884
    %9421 = vmatpush1.msra.mxu0 %v7883
    %9422 = vmatprep.subr.mxu0 %v7892
    %9423 = vmatpush1.msra.mxu0 %v7891
    %9424 = vmatprep.subr.mxu0 %v7900
    %9425 = vmatpush1.msra.mxu0 %v7899
    %9426 = vmatprep.subr.mxu0 %v7908
    %9427 = vmatpush1.msra.mxu0 %v7907
    %9428 = vmatprep.subr.mxu0 %v7916
    %9429 = vmatpush1.msra.mxu0 %v7915
    %9430 = vmatprep.subr.mxu0 %v7924
    %9431 = vmatpush1.msra.mxu0 %v7923
    %9432 = vmatprep.subr.mxu0 %v7932
    %9433 = vmatpush1.msra.mxu0 %v7931
    %9434 = vmatprep.subr.mxu0 %v7940
    %9435 = vmatpush1.msra.mxu0 %v7939
    %9436 = vmatprep.subr.mxu0 %v7948
    %9437 = vmatpush1.msra.mxu0 %v7947
    %9438 = vmatprep.subr.mxu0 %v7956
    %9439 = vmatpush1.msra.mxu0 %v7955
    %9440 = vmatprep.subr.mxu0 %v7964
    %9441 = vmatpush1.msra.mxu0 %v7963
    %9442 = vmatprep.subr.mxu0 %v7972
    %9443 = vmatpush1.msra.mxu0 %v7971
    %9444 = vmatprep.subr.mxu0 %v7980
    %9445 = vmatpush1.msra.mxu0 %v7979
    %9446 = vmatprep.subr.mxu0 %v7988
    %9447 = vmatpush1.msra.mxu0 %v7987
    %9448 = vmatprep.subr.mxu0 %v7996
    %9449 = vmatpush1.msra.mxu0 %v7995
    %9450 = vmatprep.subr.mxu0 %v8004
    %9451 = vmatpush1.msra.mxu0 %v8003
    %9452 = vmatprep.subr.mxu0 %v8012
    %9453 = vmatpush1.msra.mxu0 %v8011
    %9454 = vmatprep.subr.mxu0 %v8020
    %9455 = vmatpush1.msra.mxu0 %v8019
    %9456 = vmatprep.subr.mxu0 %v8028
    %9457 = vmatpush1.msra.mxu0 %v8027
    %9458 = vmatprep.subr.mxu0 %v8036
    %9459 = vmatpush1.msra.mxu0 %v8035
    %9460 = vmatprep.subr.mxu0 %v8044
    %9461 = vmatpush1.msra.mxu0 %v8043
    %9462 = vmatprep.subr.mxu0 %v8052
    %9463 = vmatpush1.msra.mxu0 %v8051
    %9464 = vmatprep.subr.mxu0 %v8060
    %9465 = vmatpush1.msra.mxu0 %v8059
    %9466 = vmatprep.subr.mxu0 %v8068
    %9467 = vmatpush1.msra.mxu0 %v8067
    %9468 = vmatprep.mubr.f32.mxu0 %v2122
    %9469 = vmatmul.mubr.f32.gmra.mrb[0].mxu0 %v2121
    %v9470 = vpop.f32.mrb[0].mxu0
    %v9471 = vadd.f32 %v9382, %v9470
    %v9472 = vpop.f32.mrb[0].mxu0
    %v9473 = vadd.f32 %v9384, %v9472
    %9474 = vmatprep.mubr.f32.mxu0 %v2130
    %9475 = vmatmul.mubr.f32.gmra.mrb[0].mxu0 %v2129
    %v9476 = vpop.f32.mrb[0].mxu0
    %v9477 = vadd.f32 %v9388, %v9476
    %v9478 = vpop.f32.mrb[0].mxu0
    %v9479 = vadd.f32 %v9390, %v9478
    %9480 = vmatprep.mubr.f32.mxu0 %v2138
    %9481 = vmatmul.mubr.f32.gmra.mrb[0].mxu0 %v2137
    %v9482 = vpop.f32.mrb[0].mxu0
    %v9483 = vadd.f32 %v9394, %v9482
    %v9484 = vpop.f32.mrb[0].mxu0
    %v9485 = vadd.f32 %v9396, %v9484
    %9486 = vmatprep.mubr.f32.mxu0 %v2146
    %9487 = vmatmul.mubr.f32.gmra.mrb[0].mxu0 %v2145
    %v9488 = vpop.f32.mrb[0].mxu0
    %v9489 = vadd.f32 %v9400, %v9488
    %v9490 = vpop.f32.mrb[0].mxu0
    %v9491 = vadd.f32 %v9402, %v9490
    %9492 = vdwg.mxu0
    %v9493 = vadd.f32 %v5954, %v8403
    %v9494 = vadd.f32 %v5956, %v8405
    %v9495 = vadd.f32 %v6310, %v8759
    %v9496 = vadd.f32 %v6312, %v8761
    %v9497 = vadd.f32 %v6666, %v9115
    %v9498 = vadd.f32 %v6668, %v9117
    %v9499 = vadd.f32 %v7022, %v9471
    %v9500 = vadd.f32 %v7024, %v9473
    %v9501 = vadd.f32 %v5960, %v8409
    %v9502 = vadd.f32 %v5962, %v8411
    %v9503 = vadd.f32 %v6316, %v8765
    %v9504 = vadd.f32 %v6318, %v8767
    %v9505 = vadd.f32 %v6672, %v9121
    %v9506 = vadd.f32 %v6674, %v9123
    %v9507 = vadd.f32 %v7028, %v9477
    %v9508 = vadd.f32 %v7030, %v9479
    %v9509 = vadd.f32 %v5966, %v8415
    %v9510 = vadd.f32 %v5968, %v8417
    %v9511 = vadd.f32 %v6322, %v8771
    %v9512 = vadd.f32 %v6324, %v8773
    %v9513 = vadd.f32 %v6678, %v9127
    %v9514 = vadd.f32 %v6680, %v9129
    %v9515 = vadd.f32 %v7034, %v9483
    %v9516 = vadd.f32 %v7036, %v9485
    %v9517 = vadd.f32 %v5972, %v8421
    %v9518 = vadd.f32 %v5974, %v8423
    %v9519 = vadd.f32 %v6328, %v8777
    %v9520 = vadd.f32 %v6330, %v8779
    %v9521 = vadd.f32 %v6684, %v9133
    %v9522 = vadd.f32 %v6686, %v9135
    %v9523 = vadd.f32 %v7040, %v9489
    %v9524 = vadd.f32 %v7042, %v9491
    %v9525 = vld [vmem:[#allocation11] sm:$0x1]
    %v9526 = vld [vmem:[#allocation13] sm:$0x1]
    %v9527 = vadd.f32 %v9493, %v9501
    %v9528 = vadd.f32 %v9527, %v9509
    %v9529 = vadd.f32 %v9528, %v9517
    %v9530 = vrot.slane %v9529, 4
    %v9531 = vadd.f32 %v9529, %v9530
    %v9532 = vrot.slane %v9531, 2
    %v9533 = vadd.f32 %v9531, %v9532
    %v9534 = vrot.slane %v9533, 1
    %v9535 = vadd.f32 %v9533, %v9534
    %v9536 = vadd.f32 %v9494, %v9502
    %v9537 = vadd.f32 %v9536, %v9510
    %v9538 = vadd.f32 %v9537, %v9518
    %v9539 = vrot.slane %v9538, 4
    %v9540 = vadd.f32 %v9538, %v9539
    %v9541 = vrot.slane %v9540, 2
    %v9542 = vadd.f32 %v9540, %v9541
    %v9543 = vrot.slane %v9542, 1
    %v9544 = vadd.f32 %v9542, %v9543
    %v9545 = vadd.f32 %v9495, %v9503
    %v9546 = vadd.f32 %v9545, %v9511
    %v9547 = vadd.f32 %v9546, %v9519
    %v9548 = vrot.slane %v9547, 4
    %v9549 = vadd.f32 %v9547, %v9548
    %v9550 = vrot.slane %v9549, 2
    %v9551 = vadd.f32 %v9549, %v9550
    %v9552 = vrot.slane %v9551, 1
    %v9553 = vadd.f32 %v9551, %v9552
    %v9554 = vadd.f32 %v9496, %v9504
    %v9555 = vadd.f32 %v9554, %v9512
    %v9556 = vadd.f32 %v9555, %v9520
    %v9557 = vrot.slane %v9556, 4
    %v9558 = vadd.f32 %v9556, %v9557
    %v9559 = vrot.slane %v9558, 2
    %v9560 = vadd.f32 %v9558, %v9559
    %v9561 = vrot.slane %v9560, 1
    %v9562 = vadd.f32 %v9560, %v9561
    %v9563 = vadd.f32 %v9497, %v9505
    %v9564 = vadd.f32 %v9563, %v9513
    %v9565 = vadd.f32 %v9564, %v9521
    %v9566 = vrot.slane %v9565, 4
    %v9567 = vadd.f32 %v9565, %v9566
    %v9568 = vrot.slane %v9567, 2
    %v9569 = vadd.f32 %v9567, %v9568
    %v9570 = vrot.slane %v9569, 1
    %v9571 = vadd.f32 %v9569, %v9570
    %v9572 = vadd.f32 %v9498, %v9506
    %v9573 = vadd.f32 %v9572, %v9514
    %v9574 = vadd.f32 %v9573, %v9522
    %v9575 = vrot.slane %v9574, 4
    %v9576 = vadd.f32 %v9574, %v9575
    %v9577 = vrot.slane %v9576, 2
    %v9578 = vadd.f32 %v9576, %v9577
    %v9579 = vrot.slane %v9578, 1
    %v9580 = vadd.f32 %v9578, %v9579
    %v9581 = vadd.f32 %v9499, %v9507
    %v9582 = vadd.f32 %v9581, %v9515
    %v9583 = vadd.f32 %v9582, %v9523
    %v9584 = vrot.slane %v9583, 4
    %v9585 = vadd.f32 %v9583, %v9584
    %v9586 = vrot.slane %v9585, 2
    %v9587 = vadd.f32 %v9585, %v9586
    %v9588 = vrot.slane %v9587, 1
    %v9589 = vadd.f32 %v9587, %v9588
    %v9590 = vadd.f32 %v9500, %v9508
    %v9591 = vadd.f32 %v9590, %v9516
    %v9592 = vadd.f32 %v9591, %v9524
    %v9593 = vrot.slane %v9592, 4
    %v9594 = vadd.f32 %v9592, %v9593
    %v9595 = vrot.slane %v9594, 2
    %v9596 = vadd.f32 %v9594, %v9595
    %v9597 = vrot.slane %v9596, 1
    %v9598 = vadd.f32 %v9596, %v9597
    %v9599 = vmul.f32 %v9493, %v9493
    %v9600 = vmul.f32 %v9494, %v9494
    %v9601 = vmul.f32 %v9495, %v9495
    %v9602 = vmul.f32 %v9496, %v9496
    %v9603 = vmul.f32 %v9497, %v9497
    %v9604 = vmul.f32 %v9498, %v9498
    %v9605 = vmul.f32 %v9499, %v9499
    %v9606 = vmul.f32 %v9500, %v9500
    %v9607 = vmul.f32 %v9501, %v9501
    %v9608 = vmul.f32 %v9502, %v9502
    %v9609 = vmul.f32 %v9503, %v9503
    %v9610 = vmul.f32 %v9504, %v9504
    %v9611 = vmul.f32 %v9505, %v9505
    %v9612 = vmul.f32 %v9506, %v9506
    %v9613 = vmul.f32 %v9507, %v9507
    %v9614 = vmul.f32 %v9508, %v9508
    %v9615 = vmul.f32 %v9509, %v9509
    %v9616 = vmul.f32 %v9510, %v9510
    %v9617 = vmul.f32 %v9511, %v9511
    %v9618 = vmul.f32 %v9512, %v9512
    %v9619 = vmul.f32 %v9513, %v9513
    %v9620 = vmul.f32 %v9514, %v9514
    %v9621 = vmul.f32 %v9515, %v9515
    %v9622 = vmul.f32 %v9516, %v9516
    %v9623 = vmul.f32 %v9517, %v9517
    %v9624 = vmul.f32 %v9518, %v9518
    %v9625 = vmul.f32 %v9519, %v9519
    %v9626 = vmul.f32 %v9520, %v9520
    %v9627 = vmul.f32 %v9521, %v9521
    %v9628 = vmul.f32 %v9522, %v9522
    %v9629 = vmul.f32 %v9523, %v9523
    %v9630 = vmul.f32 %v9524, %v9524
    %v9631 = vadd.f32 %v9599, %v9607
    %v9632 = vadd.f32 %v9631, %v9615
    %v9633 = vadd.f32 %v9632, %v9623
    %v9634 = vrot.slane %v9633, 4
    %v9635 = vadd.f32 %v9633, %v9634
    %v9636 = vrot.slane %v9635, 2
    %v9637 = vadd.f32 %v9635, %v9636
    %v9638 = vrot.slane %v9637, 1
    %v9639 = vadd.f32 %v9637, %v9638
    %v9640 = vadd.f32 %v9600, %v9608
    %v9641 = vadd.f32 %v9640, %v9616
    %v9642 = vadd.f32 %v9641, %v9624
    %v9643 = vrot.slane %v9642, 4
    %v9644 = vadd.f32 %v9642, %v9643
    %v9645 = vrot.slane %v9644, 2
    %v9646 = vadd.f32 %v9644, %v9645
    %v9647 = vrot.slane %v9646, 1
    %v9648 = vadd.f32 %v9646, %v9647
    %v9649 = vadd.f32 %v9601, %v9609
    %v9650 = vadd.f32 %v9649, %v9617
    %v9651 = vadd.f32 %v9650, %v9625
    %v9652 = vrot.slane %v9651, 4
    %v9653 = vadd.f32 %v9651, %v9652
    %v9654 = vrot.slane %v9653, 2
    %v9655 = vadd.f32 %v9653, %v9654
    %v9656 = vrot.slane %v9655, 1
    %v9657 = vadd.f32 %v9655, %v9656
    %v9658 = vadd.f32 %v9602, %v9610
    %v9659 = vadd.f32 %v9658, %v9618
    %v9660 = vadd.f32 %v9659, %v9626
    %v9661 = vrot.slane %v9660, 4
    %v9662 = vadd.f32 %v9660, %v9661
    %v9663 = vrot.slane %v9662, 2
    %v9664 = vadd.f32 %v9662, %v9663
    %v9665 = vrot.slane %v9664, 1
    %v9666 = vadd.f32 %v9664, %v9665
    %v9667 = vadd.f32 %v9603, %v9611
    %v9668 = vadd.f32 %v9667, %v9619
    %v9669 = vadd.f32 %v9668, %v9627
    %v9670 = vrot.slane %v9669, 4
    %v9671 = vadd.f32 %v9669, %v9670
    %v9672 = vrot.slane %v9671, 2
    %v9673 = vadd.f32 %v9671, %v9672
    %v9674 = vrot.slane %v9673, 1
    %v9675 = vadd.f32 %v9673, %v9674
    %v9676 = vadd.f32 %v9604, %v9612
    %v9677 = vadd.f32 %v9676, %v9620
    %v9678 = vadd.f32 %v9677, %v9628
    %v9679 = vrot.slane %v9678, 4
    %v9680 = vadd.f32 %v9678, %v9679
    %v9681 = vrot.slane %v9680, 2
    %v9682 = vadd.f32 %v9680, %v9681
    %v9683 = vrot.slane %v9682, 1
    %v9684 = vadd.f32 %v9682, %v9683
    %v9685 = vadd.f32 %v9605, %v9613
    %v9686 = vadd.f32 %v9685, %v9621
    %v9687 = vadd.f32 %v9686, %v9629
    %v9688 = vrot.slane %v9687, 4
    %v9689 = vadd.f32 %v9687, %v9688
    %v9690 = vrot.slane %v9689, 2
    %v9691 = vadd.f32 %v9689, %v9690
    %v9692 = vrot.slane %v9691, 1
    %v9693 = vadd.f32 %v9691, %v9692
    %v9694 = vadd.f32 %v9606, %v9614
    %v9695 = vadd.f32 %v9694, %v9622
    %v9696 = vadd.f32 %v9695, %v9630
    %v9697 = vrot.slane %v9696, 4
    %v9698 = vadd.f32 %v9696, %v9697
    %v9699 = vrot.slane %v9698, 2
    %v9700 = vadd.f32 %v9698, %v9699
    %v9701 = vrot.slane %v9700, 1
    %v9702 = vadd.f32 %v9700, %v9701
    %9704 = vrot.lane.b32.xlu0 %v9535, 64
    %v9705 = vpop.permute.xlu0 %9704
    %v9707 = vadd.f32 %v9535, %v9705
    %9709 = vrot.lane.b32.xlu0 %v9639, 64
    %v9710 = vpop.permute.xlu0 %9709
    %v9712 = vadd.f32 %v9639, %v9710
    %v9713 = vadd.f32 %v9707, %v9544
    %v9714 = vadd.f32 %v9712, %v9648
    %9716 = vrot.lane.b32.xlu0 %v9544, 64
    %v9717 = vpop.permute.xlu0 %9716
    %v9719 = vadd.f32 %v9713, %v9717
    %9721 = vrot.lane.b32.xlu0 %v9648, 64
    %v9722 = vpop.permute.xlu0 %9721
    %v9724 = vadd.f32 %v9714, %v9722
    %v9725 = vadd.f32 %v9719, %v9553
    %v9726 = vadd.f32 %v9724, %v9657
    %9728 = vrot.lane.b32.xlu0 %v9553, 64
    %v9729 = vpop.permute.xlu0 %9728
    %v9731 = vadd.f32 %v9725, %v9729
    %9733 = vrot.lane.b32.xlu0 %v9657, 64
    %v9734 = vpop.permute.xlu0 %9733
    %v9736 = vadd.f32 %v9726, %v9734
    %v9737 = vadd.f32 %v9731, %v9562
    %v9738 = vadd.f32 %v9736, %v9666
    %9740 = vrot.lane.b32.xlu0 %v9562, 64
    %v9741 = vpop.permute.xlu0 %9740
    %v9743 = vadd.f32 %v9737, %v9741
    %9745 = vrot.lane.b32.xlu0 %v9666, 64
    %v9746 = vpop.permute.xlu0 %9745
    %v9748 = vadd.f32 %v9738, %v9746
    %v9749 = vadd.f32 %v9743, %v9571
    %v9750 = vadd.f32 %v9748, %v9675
    %9752 = vrot.lane.b32.xlu0 %v9571, 64
    %v9753 = vpop.permute.xlu0 %9752
    %v9755 = vadd.f32 %v9749, %v9753
    %9757 = vrot.lane.b32.xlu0 %v9675, 64
    %v9758 = vpop.permute.xlu0 %9757
    %v9760 = vadd.f32 %v9750, %v9758
    %v9761 = vadd.f32 %v9755, %v9580
    %v9762 = vadd.f32 %v9760, %v9684
    %9764 = vrot.lane.b32.xlu0 %v9580, 64
    %v9765 = vpop.permute.xlu0 %9764
    %v9767 = vadd.f32 %v9761, %v9765
    %9769 = vrot.lane.b32.xlu0 %v9684, 64
    %v9770 = vpop.permute.xlu0 %9769
    %v9772 = vadd.f32 %v9762, %v9770
    %v9773 = vadd.f32 %v9767, %v9589
    %v9774 = vadd.f32 %v9772, %v9693
    %9776 = vrot.lane.b32.xlu0 %v9589, 64
    %v9777 = vpop.permute.xlu0 %9776
    %v9779 = vadd.f32 %v9773, %v9777
    %9781 = vrot.lane.b32.xlu0 %v9693, 64
    %v9782 = vpop.permute.xlu0 %9781
    %v9784 = vadd.f32 %v9774, %v9782
    %v9785 = vadd.f32 %v9779, %v9598
    %v9786 = vadd.f32 %v9784, %v9702
    %9788 = vrot.lane.b32.xlu0 %v9598, 64
    %v9789 = vpop.permute.xlu0 %9788
    %v9791 = vadd.f32 %v9785, %v9789
    %9793 = vrot.lane.b32.xlu0 %v9702, 64
    %v9794 = vpop.permute.xlu0 %9793
    %v9796 = vadd.f32 %v9786, %v9794
    %v9797 = vmul.f32 %v9791, 0.001953125
    %v9798 = vmul.f32 %v9796, 0.001953125
    %v9799 = vmul.f32 %v9797, %v9797
    %v9800 = vsub.f32 %v9798, %v9799
    %v9801 = vadd.f32 %v9800, 1e-05
    %v9802 = vrsqrt.pop %v9801
    %v9803 = vmul.f32 %v9525, %v9802
    %v9804 = vmul.f32 %v9797, %v9803
    %v9805 = vsub.f32 %v9526, %v9804
    %v9807 = vlaneseq
    %v9808 = vshrl.u32 %v9807, 7
    %v9809 = vsub.s32 0, %v9808
    %v9810 = vrot.slane %v9803, %v9809
    %9811 = vrot.lane.b32.xlu0 %v9810, 64
    %v9812 = vpop.permute.xlu0 %9811
    %v9814 = vsel %vm350, %v9803, %v9812
    %v9816 = vlaneseq
    %v9817 = vshrl.u32 %v9816, 7
    %v9818 = vsub.s32 0, %v9817
    %v9819 = vrot.slane %v9805, %v9818
    %9820 = vrot.lane.b32.xlu0 %v9819, 64
    %v9821 = vpop.permute.xlu0 %9820
    %v9823 = vsel %vm350, %v9805, %v9821
    %v9824 = vlaneseq
    %v9825 = vshrl.u32 %v9824, 7
    %v9826 = vsub.s32 0, %v9825
    %v9827 = vrot.slane %v9814, %v9826
    %v9828 = vmul.f32 %v9493, %v9827
    %v9829 = vmul.f32 %v9494, %v9827
    %v9830 = vmul.f32 %v9495, %v9827
    %v9831 = vmul.f32 %v9496, %v9827
    %v9832 = vmul.f32 %v9497, %v9827
    %v9833 = vmul.f32 %v9498, %v9827
    %v9834 = vmul.f32 %v9499, %v9827
    %v9835 = vmul.f32 %v9500, %v9827
    %v9836 = vmul.f32 %v9501, %v9827
    %v9837 = vmul.f32 %v9502, %v9827
    %v9838 = vmul.f32 %v9503, %v9827
    %v9839 = vmul.f32 %v9504, %v9827
    %v9840 = vmul.f32 %v9505, %v9827
    %v9841 = vmul.f32 %v9506, %v9827
    %v9842 = vmul.f32 %v9507, %v9827
    %v9843 = vmul.f32 %v9508, %v9827
    %v9844 = vmul.f32 %v9509, %v9827
    %v9845 = vmul.f32 %v9510, %v9827
    %v9846 = vmul.f32 %v9511, %v9827
    %v9847 = vmul.f32 %v9512, %v9827
    %v9848 = vmul.f32 %v9513, %v9827
    %v9849 = vmul.f32 %v9514, %v9827
    %v9850 = vmul.f32 %v9515, %v9827
    %v9851 = vmul.f32 %v9516, %v9827
    %v9852 = vmul.f32 %v9517, %v9827
    %v9853 = vmul.f32 %v9518, %v9827
    %v9854 = vmul.f32 %v9519, %v9827
    %v9855 = vmul.f32 %v9520, %v9827
    %v9856 = vmul.f32 %v9521, %v9827
    %v9857 = vmul.f32 %v9522, %v9827
    %v9858 = vmul.f32 %v9523, %v9827
    %v9859 = vmul.f32 %v9524, %v9827
    %v9860 = vlaneseq
    %v9861 = vshrl.u32 %v9860, 7
    %v9862 = vsub.s32 0, %v9861
    %v9863 = vrot.slane %v9823, %v9862
    %v9864 = vadd.f32 %v9828, %v9863
    %v9865 = vadd.f32 %v9829, %v9863
    %v9866 = vadd.f32 %v9830, %v9863
    %v9867 = vadd.f32 %v9831, %v9863
    %v9868 = vadd.f32 %v9832, %v9863
    %v9869 = vadd.f32 %v9833, %v9863
    %v9870 = vadd.f32 %v9834, %v9863
    %v9871 = vadd.f32 %v9835, %v9863
    %v9872 = vadd.f32 %v9836, %v9863
    %v9873 = vadd.f32 %v9837, %v9863
    %v9874 = vadd.f32 %v9838, %v9863
    %v9875 = vadd.f32 %v9839, %v9863
    %v9876 = vadd.f32 %v9840, %v9863
    %v9877 = vadd.f32 %v9841, %v9863
    %v9878 = vadd.f32 %v9842, %v9863
    %v9879 = vadd.f32 %v9843, %v9863
    %v9880 = vadd.f32 %v9844, %v9863
    %v9881 = vadd.f32 %v9845, %v9863
    %v9882 = vadd.f32 %v9846, %v9863
    %v9883 = vadd.f32 %v9847, %v9863
    %v9884 = vadd.f32 %v9848, %v9863
    %v9885 = vadd.f32 %v9849, %v9863
    %v9886 = vadd.f32 %v9850, %v9863
    %v9887 = vadd.f32 %v9851, %v9863
    %v9888 = vadd.f32 %v9852, %v9863
    %v9889 = vadd.f32 %v9853, %v9863
    %v9890 = vadd.f32 %v9854, %v9863
    %v9891 = vadd.f32 %v9855, %v9863
    %v9892 = vadd.f32 %v9856, %v9863
    %v9893 = vadd.f32 %v9857, %v9863
    %v9894 = vadd.f32 %v9858, %v9863
    %v9895 = vadd.f32 %v9859, %v9863
    %v9896 = vmax.f32 %v9864, 0.0
    %v9897 = vmax.f32 %v9865, 0.0
    %v9898 = vmax.f32 %v9866, 0.0
    %v9899 = vmax.f32 %v9867, 0.0
    %v9900 = vmax.f32 %v9868, 0.0
    %v9901 = vmax.f32 %v9869, 0.0
    %v9902 = vmax.f32 %v9870, 0.0
    %v9903 = vmax.f32 %v9871, 0.0
    %v9904 = vmax.f32 %v9872, 0.0
    %v9905 = vmax.f32 %v9873, 0.0
    %v9906 = vmax.f32 %v9874, 0.0
    %v9907 = vmax.f32 %v9875, 0.0
    %v9908 = vmax.f32 %v9876, 0.0
    %v9909 = vmax.f32 %v9877, 0.0
    %v9910 = vmax.f32 %v9878, 0.0
    %v9911 = vmax.f32 %v9879, 0.0
    %v9912 = vmax.f32 %v9880, 0.0
    %v9913 = vmax.f32 %v9881, 0.0
    %v9914 = vmax.f32 %v9882, 0.0
    %v9915 = vmax.f32 %v9883, 0.0
    %v9916 = vmax.f32 %v9884, 0.0
    %v9917 = vmax.f32 %v9885, 0.0
    %v9918 = vmax.f32 %v9886, 0.0
    %v9919 = vmax.f32 %v9887, 0.0
    %v9920 = vmax.f32 %v9888, 0.0
    %v9921 = vmax.f32 %v9889, 0.0
    %v9922 = vmax.f32 %v9890, 0.0
    %v9923 = vmax.f32 %v9891, 0.0
    %v9924 = vmax.f32 %v9892, 0.0
    %v9925 = vmax.f32 %v9893, 0.0
    %v9926 = vmax.f32 %v9894, 0.0
    %v9927 = vmax.f32 %v9895, 0.0
    %9928 = vst [vmem:[#allocation14] sm:$0xff] %v9896
    %9929 = vst [vmem:[#allocation14 + $0x8] sm:$0xff] %v9897
    %9930 = vst [vmem:[#allocation14 + $0x10] sm:$0xff] %v9898
    %9931 = vst [vmem:[#allocation14 + $0x18] sm:$0xff] %v9899
    %9932 = vst [vmem:[#allocation14 + $0x20] sm:$0xff] %v9900
    %9933 = vst [vmem:[#allocation14 + $0x28] sm:$0xff] %v9901
    %9934 = vst [vmem:[#allocation14 + $0x30] sm:$0xff] %v9902
    %9935 = vst [vmem:[#allocation14 + $0x38] sm:$0xff] %v9903
    %9936 = vst [vmem:[#allocation14 + $0x40] sm:$0xff] %v9904
    %9937 = vst [vmem:[#allocation14 + $0x48] sm:$0xff] %v9905
    %9938 = vst [vmem:[#allocation14 + $0x50] sm:$0xff] %v9906
    %9939 = vst [vmem:[#allocation14 + $0x58] sm:$0xff] %v9907
    %9940 = vst [vmem:[#allocation14 + $0x60] sm:$0xff] %v9908
    %9941 = vst [vmem:[#allocation14 + $0x68] sm:$0xff] %v9909
    %9942 = vst [vmem:[#allocation14 + $0x70] sm:$0xff] %v9910
    %9943 = vst [vmem:[#allocation14 + $0x78] sm:$0xff] %v9911
    %9944 = vst [vmem:[#allocation14 + $0x80] sm:$0xff] %v9912
    %9945 = vst [vmem:[#allocation14 + $0x88] sm:$0xff] %v9913
    %9946 = vst [vmem:[#allocation14 + $0x90] sm:$0xff] %v9914
    %9947 = vst [vmem:[#allocation14 + $0x98] sm:$0xff] %v9915
    %9948 = vst [vmem:[#allocation14 + $0xa0] sm:$0xff] %v9916
    %9949 = vst [vmem:[#allocation14 + $0xa8] sm:$0xff] %v9917
    %9950 = vst [vmem:[#allocation14 + $0xb0] sm:$0xff] %v9918
    %9951 = vst [vmem:[#allocation14 + $0xb8] sm:$0xff] %v9919
    %9952 = vst [vmem:[#allocation14 + $0xc0] sm:$0xff] %v9920
    %9953 = vst [vmem:[#allocation14 + $0xc8] sm:$0xff] %v9921
    %9954 = vst [vmem:[#allocation14 + $0xd0] sm:$0xff] %v9922
    %9955 = vst [vmem:[#allocation14 + $0xd8] sm:$0xff] %v9923
    %9956 = vst [vmem:[#allocation14 + $0xe0] sm:$0xff] %v9924
    %9957 = vst [vmem:[#allocation14 + $0xe8] sm:$0xff] %v9925
    %9958 = vst [vmem:[#allocation14 + $0xf0] sm:$0xff] %v9926
    %9959 = vst [vmem:[#allocation14 + $0xf8] sm:$0xff] %v9927
    // Predicated region
    $region58: #{tpu_custom_call.1} parent=1 // pred_check
      _
    $region59: #{tpu_custom_call.1} parent=1 // pred_check_branch
      %9961 = sbr.rel (0) target = $region61
    $region60: #{tpu_custom_call.1} parent=1 // pred_region
      %s9963 = ssub.s32 4096, 4096
      %9964 = vsyncadd [#allocation4], %s9963
      %s9965 = sshll.u32 [#allocation14], 4
      %s9966 = int_to_ptr.vmem [resolvable:$true] %s9965
      %9971 = dma.vmem_to_hbm [thread:$0]  %s9966, 4096, %s7, [#allocation4], 1024, 1024, 64
    $region61: #{tpu_custom_call.1} parent=1 // pred_fallthru
      _
    // Predicated region
    $region62: #{tpu_custom_call.1} parent=1 // pred_check
      _
    $region63: #{tpu_custom_call.1} parent=1 // pred_check_branch
      %9973 = sbr.rel (0) target = $region65
    $region64: #{tpu_custom_call.1} parent=1 // pred_region
      %9974 = dma.done [#allocation4], 4096
    $region65: #{tpu_custom_call.1} parent=1 // pred_fallthru
      _
    %9975 = vsyncpa [#allocation3], 1
    %9976 = vsyncpa [#allocation6], 1
    %9977 = vsyncpa [#allocation9], 1
    %9978 = vsyncpa [#allocation12], 1
    %9979 = vsyncpa [#allocation4], 1

</llo_original>
